<compile_context>
chip_gen: v7x
topology: tpu7x:2x2x1
jax: 0.10.0
libtpu: 0.0.40
codegen_flags: <defaults>
</compile_context>

<pallas_src>
import functools

import jax
import jax.numpy as jnp
from jax.experimental import pallas as pl
from jax.experimental.pallas import tpu as pltpu

EPS = 1e-5


# ----------------------------------------------------------------------------
# Pallas kernels
# ----------------------------------------------------------------------------
def _gemm_bn_act_kernel(a_ref, w_ref, g_ref, b_ref, o_ref, *, negative_slope):
    """P independent GEMMs sharing one BatchNorm, fused affine + (Leaky)ReLU.

    a_ref: [P, M, K]   im2col matrices (P=1 conv, P=4 convT phases)
    w_ref: [P, K, C]   per-phase weight matrices
    g_ref, b_ref: [1, C] BatchNorm gamma / beta
    o_ref: [P, M, C]
    """
    P = a_ref.shape[0]
    M = a_ref.shape[1]
    n_tot = float(P * M)

    ys = [jnp.dot(a_ref[p], w_ref[p], preferred_element_type=jnp.float32)
          for p in range(P)]

    # BatchNorm (training-mode) statistics over all rows of all phases.
    csum = jnp.sum(ys[0], axis=0, keepdims=True)
    for y in ys[1:]:
        csum = csum + jnp.sum(y, axis=0, keepdims=True)
    mean = csum * (1.0 / n_tot)

    vsum = None
    for y in ys:
        d = y - mean
        t = jnp.sum(d * d, axis=0, keepdims=True)
        vsum = t if vsum is None else vsum + t
    var = vsum * (1.0 / n_tot)                       # biased variance (PyTorch)

    scale = g_ref[...] * jax.lax.rsqrt(var + EPS)
    shift = b_ref[...] - mean * scale

    for p in range(P):
        z = ys[p] * scale + shift
        o_ref[p] = jnp.where(z >= 0, z, negative_slope * z)


def fused_gemm_bn_act(a, w, gamma, beta, negative_slope):
    """a: [P, M, K], w: [P, K, C] -> [P, M, C] with fused BN + activation."""
    P, M, K = a.shape
    C = w.shape[-1]
    kern = functools.partial(_gemm_bn_act_kernel, negative_slope=negative_slope)
    return pl.pallas_call(
        kern,
        out_shape=jax.ShapeDtypeStruct((P, M, C), jnp.float32),
        grid=(1,),
        in_specs=[pl.BlockSpec((P, M, K), lambda i: (0, 0, 0)),
                  pl.BlockSpec((P, K, C), lambda i: (0, 0, 0)),
                  pl.BlockSpec((1, C), lambda i: (0, 0)),
                  pl.BlockSpec((1, C), lambda i: (0, 0))],
        out_specs=pl.BlockSpec((P, M, C), lambda i: (0, 0, 0)),
        compiler_params=pltpu.CompilerParams(
            dimension_semantics=("arbitrary",)),
    )(a, w, gamma.reshape(1, C), beta.reshape(1, C))


def _matmul_kernel(a_ref, w_ref, o_ref):
    o_ref[...] = jnp.dot(a_ref[...], w_ref[...],
                         preferred_element_type=jnp.float32)


def pallas_matmul(a, w):
    """Single-block GEMM (used for the tiny final 1x1 conv)."""
    M, K = a.shape
    C = w.shape[1]
    return pl.pallas_call(
        _matmul_kernel,
        out_shape=jax.ShapeDtypeStruct((M, C), jnp.float32),
        grid=(1,),
        in_specs=[pl.BlockSpec((M, K), lambda i: (0, 0)),
                  pl.BlockSpec((K, C), lambda i: (0, 0))],
        out_specs=pl.BlockSpec((M, C), lambda i: (0, 0)),
        compiler_params=pltpu.CompilerParams(
            dimension_semantics=("arbitrary",)),
    )(a, w)


def _bilinear_tanh_kernel(x_ref, rh_ref, rwt_ref, o_ref):
    """Bilinear resize (separable matmuls) + tanh for all planes of one image.

    x_ref : (1, C, Hin, Win)   (bias already folded in)
    rh_ref: (Hout, Hin), rwt_ref: (Win, Wout)
    o_ref : (1, C, Hout, Wout)
    """
    rh = rh_ref[...]
    rwt = rwt_ref[...]
    C = x_ref.shape[1]
    for c in range(C):                              # static unroll (C = 3)
        # lane-dense order: (Hin, Wout) intermediate, then (Hout, Wout)
        t = jnp.dot(x_ref[0, c], rwt, preferred_element_type=jnp.float32)
        o = jnp.dot(rh, t, preferred_element_type=jnp.float32)
        o_ref[0, c] = jnp.tanh(o)


def pallas_bilinear_tanh(x_nchw, rh, rwt):
    N, C, Hin, Win = x_nchw.shape
    Hout = rh.shape[0]
    Wout = rwt.shape[1]
    return pl.pallas_call(
        _bilinear_tanh_kernel,
        out_shape=jax.ShapeDtypeStruct((N, C, Hout, Wout), jnp.float32),
        grid=(N,),
        in_specs=[pl.BlockSpec((1, C, Hin, Win), lambda n: (n, 0, 0, 0)),
                  pl.BlockSpec((Hout, Hin), lambda n: (0, 0)),
                  pl.BlockSpec((Win, Wout), lambda n: (0, 0))],
        out_specs=pl.BlockSpec((1, C, Hout, Wout), lambda n: (n, 0, 0, 0)),
        compiler_params=pltpu.CompilerParams(
            dimension_semantics=("parallel",)),   # v7x: shard batch over 2 TCs
    )(x_nchw, rh, rwt)


# ----------------------------------------------------------------------------
# JAX glue: im2col, phase decomposition, interpolation matrices
# ----------------------------------------------------------------------------
def im2col(xp, KH, KW, stride, Ho, Wo):
    """xp: [N, Hp, Wp, C] (already padded) -> [N*Ho*Wo, KH*KW*C]."""
    cols = []
    for kh in range(KH):
        for kw in range(KW):
            cols.append(xp[:, kh:kh + stride * (Ho - 1) + 1:stride,
                            kw:kw + stride * (Wo - 1) + 1:stride, :])
    p = jnp.stack(cols, axis=3)                      # [N, Ho, Wo, KH*KW, C]
    N = xp.shape[0]
    C = xp.shape[-1]
    return p.reshape(N * Ho * Wo, KH * KW * C)


def conv_down_bn_lrelu(x, w_oihw, gamma, beta, slope=0.2):
    """Conv2d(k=4, s=2, p=1, bias=False) + BatchNorm2d(train) + LeakyReLU(0.2)."""
    N, H, W, Cin = x.shape
    Cout = w_oihw.shape[0]
    Ho, Wo = H // 2, W // 2
    xp = jnp.pad(x, ((0, 0), (1, 1), (1, 1), (0, 0)))
    a = im2col(xp, 4, 4, 2, Ho, Wo)[None]                        # [1, M, 16Cin]
    w_mat = jnp.transpose(w_oihw, (2, 3, 1, 0)).reshape(1, 16 * Cin, Cout)
    z = fused_gemm_bn_act(a, w_mat, gamma, beta, slope)          # [1, M, Cout]
    return z.reshape(N, Ho, Wo, Cout)


def convT_up_bn_relu(x, w_iohw, gamma, beta):
    """ConvTranspose2d(k=4, s=2, p=1, bias=False) + BatchNorm2d(train) + ReLU.

    Sub-pixel (phase) decomposition: output pixel (2u+a, 2v+b) only sees the
    2x2 kernel slice wf[a::2, b::2], so each parity phase is a stride-1 2x2
    conv over the (appropriately 1-padded) un-dilated input — no zero work.
    """
    N, H, W, Cin = x.shape
    Cout = w_iohw.shape[1]
    # spatially flipped, in/out-swapped kernel in (kh, kw, cin, cout) order
    wf = jnp.transpose(w_iohw[:, :, ::-1, ::-1], (2, 3, 0, 1))
    a_phases, w_phases = [], []
    for a_par in (0, 1):
        for b_par in (0, 1):
            pad_r = (1, 0) if a_par == 0 else (0, 1)
            pad_c = (1, 0) if b_par == 0 else (0, 1)
            xp = jnp.pad(x, ((0, 0), pad_r, pad_c, (0, 0)))      # [N,H+1,W+1,C]
            a_phases.append(im2col(xp, 2, 2, 1, H, W))           # [N*H*W, 4Cin]
            w_phases.append(wf[a_par::2, b_par::2].reshape(4 * Cin, Cout))
    a4 = jnp.stack(a_phases, axis=0)                             # [4, M, 4Cin]
    w4 = jnp.stack(w_phases, axis=0)                             # [4, 4Cin, Cout]
    z = fused_gemm_bn_act(a4, w4, gamma, beta, 0.0)              # [4, M, Cout]
    # interleave phases: z[2a+b, (n,u,v), c] -> out[n, 2u+a, 2v+b, c]
    z = z.reshape(2, 2, N, H, W, Cout)
    return jnp.transpose(z, (2, 3, 0, 4, 1, 5)).reshape(N, 2 * H, 2 * W, Cout)


def bilinear_matrix(in_size, out_size):
    """Row matrix matching F.interpolate(mode='bilinear', align_corners=False)."""
    scale = in_size / out_size
    o = jnp.arange(out_size, dtype=jnp.float32)
    src = jnp.maximum((o + 0.5) * scale - 0.5, 0.0)
    x0f = jnp.floor(src)
    lam = src - x0f
    x0 = jnp.minimum(x0f.astype(jnp.int32), in_size - 1)
    x1 = jnp.minimum(x0 + 1, in_size - 1)
    r = jnp.zeros((out_size, in_size), jnp.float32)
    idx = jnp.arange(out_size)
    r = r.at[idx, x0].add(1.0 - lam)
    r = r.at[idx, x1].add(lam)
    return r


def final_and_upsample(x, w, b, Hout=256, Wout=256):
    """1x1 Conv2d (with bias) + bilinear resize to (256,256) + tanh."""
    N, H, W, Cin = x.shape
    Cout = w.shape[0]
    a = x.reshape(N * H * W, Cin)
    w_mat = w.reshape(Cout, Cin).T
    y = pallas_matmul(a, w_mat)                                  # [N*H*W, Cout]
    # bias add fuses into the tiny NHWC->NCHW relayout done by XLA here
    y = (y + b[None, :]).reshape(N, H, W, Cout).transpose(0, 3, 1, 2)
    rh = bilinear_matrix(H, Hout)
    rw = bilinear_matrix(W, Wout)
    return pallas_bilinear_tanh(y, rh, rw.T)                     # NCHW output


# ----------------------------------------------------------------------------
# Parameters + forward
# ----------------------------------------------------------------------------
def init_params(key, in_ch=3, out_ch=3, features=8):
    keys = jax.random.split(key, 16)
    ki = 0
    params = {"enc": [], "dec": []}
    for (ci, co) in [(in_ch, features), (features, 2 * features),
                     (2 * features, 4 * features), (4 * features, 8 * features)]:
        params["enc"].append({
            "w": 0.05 * jax.random.normal(keys[ki], (co, ci, 4, 4), jnp.float32),
            "gamma": jnp.ones((co,), jnp.float32),
            "beta": jnp.zeros((co,), jnp.float32),
        })
        ki += 1
    for (ci, co) in [(8 * features, 4 * features),
                     (8 * features, 2 * features),
                     (4 * features, features)]:
        params["dec"].append({
            "w": 0.05 * jax.random.normal(keys[ki], (ci, co, 4, 4), jnp.float32),
            "gamma": jnp.ones((co,), jnp.float32),
            "beta": jnp.zeros((co,), jnp.float32),
        })
        ki += 1
    params["final_w"] = 0.05 * jax.random.normal(
        keys[ki], (out_ch, 2 * features, 1, 1), jnp.float32)
    ki += 1
    params["final_b"] = 0.01 * jax.random.normal(keys[ki], (out_ch,), jnp.float32)
    return params


@jax.jit
def unet_forward(params, x_nchw):
    x = jnp.transpose(x_nchw, (0, 2, 3, 1)).astype(jnp.float32)   # NCHW -> NHWC
    e = params["enc"]
    enc1 = conv_down_bn_lrelu(x, e[0]["w"], e[0]["gamma"], e[0]["beta"])
    enc2 = conv_down_bn_lrelu(enc1, e[1]["w"], e[1]["gamma"], e[1]["beta"])
    enc3 = conv_down_bn_lrelu(enc2, e[2]["w"], e[2]["gamma"], e[2]["beta"])
    enc4 = conv_down_bn_lrelu(enc3, e[3]["w"], e[3]["gamma"], e[3]["beta"])
    d = params["dec"]
    dec1 = convT_up_bn_relu(enc4, d[0]["w"], d[0]["gamma"], d[0]["beta"])
    dec2 = convT_up_bn_relu(jnp.concatenate([dec1, enc3], axis=-1),
                            d[1]["w"], d[1]["gamma"], d[1]["beta"])
    dec3 = convT_up_bn_relu(jnp.concatenate([dec2, enc2], axis=-1),
                            d[2]["w"], d[2]["gamma"], d[2]["beta"])
    dec4 = jnp.concatenate([dec3, enc1], axis=-1)
    return final_and_upsample(dec4, params["final_w"], params["final_b"])


if __name__ == "__main__":
    key = jax.random.PRNGKey(0)
    pkey, xkey = jax.random.split(key)
    params = init_params(pkey, in_ch=3, out_ch=3, features=8)
    x = jax.random.normal(xkey, (2, 3, 32, 32), jnp.float32)      # NCHW like PyTorch
    out = unet_forward(params, x)
    out = jax.block_until_ready(out)
    assert out.shape == (2, 3, 256, 256), out.shape
    assert bool(jnp.isfinite(out).all())
    print("KERNEL_OK")
</pallas_src>

<mosaic_0001>
module attributes {stable_mosaic.version = 11 : i64} {
  func.func private @main(%arg0: i32) attributes {dimension_semantics = [#tpu.dimension_semantics<core_parallel>], iteration_bounds = array<i64: 2>, tpu.core_type = #tpu.core_type<sc_scalar_subcore>, window_params = []} {
    return
  }
}

module attributes {stable_mosaic.version = 11 : i64} {
  func.func private @main(%arg0: i32) attributes {dimension_semantics = [#tpu.dimension_semantics<core_parallel>], iteration_bounds = array<i64: 2>, tpu.core_type = #tpu.core_type<sc_scalar_subcore>, window_params = []} {
    return
  }
}

module attributes {stable_mosaic.version = 11 : i64} {
  func.func @_gemm_bn_act_kernel(%arg0: i32, %arg1: memref<1x512x48xf32, #tpu.memory_space<vmem>>, %arg2: memref<1x48x8xf32, #tpu.memory_space<vmem>>, %arg3: memref<1x8xf32, #tpu.memory_space<vmem>>, %arg4: memref<1x8xf32, #tpu.memory_space<vmem>>, %arg5: memref<1x512x8xf32, #tpu.memory_space<vmem>>) attributes {dimension_semantics = [#tpu.dimension_semantics<arbitrary>], iteration_bounds = array<i64: 1>, scalar_prefetch = 0 : i64, scratch_operands = 0 : i64, tpu.core_type = #tpu.core_type<tc>, window_params = [{pipeline_mode = #tpu.pipeline_mode<synchronous>, transform_indices = @transform_0, window_bounds = array<i64: 1, 512, 48>}, {pipeline_mode = #tpu.pipeline_mode<synchronous>, transform_indices = @transform_1, window_bounds = array<i64: 1, 48, 8>}, {pipeline_mode = #tpu.pipeline_mode<synchronous>, transform_indices = @transform_2, window_bounds = array<i64: 1, 8>}, {pipeline_mode = #tpu.pipeline_mode<synchronous>, transform_indices = @transform_3, window_bounds = array<i64: 1, 8>}, {pipeline_mode = #tpu.pipeline_mode<synchronous>, transform_indices = @transform_4, window_bounds = array<i64: 1, 512, 8>}]} {
    %c0 = arith.constant 0 : index
    %c0_0 = arith.constant 0 : index
    %c0_1 = arith.constant 0 : index
    %0 = vector.load %arg1[%c0, %c0_0, %c0_1] : memref<1x512x48xf32, #tpu.memory_space<vmem>>, vector<1x512x48xf32>
    %1 = vector.shape_cast %0 : vector<1x512x48xf32> to vector<512x48xf32>
    %c0_2 = arith.constant 0 : index
    %c0_3 = arith.constant 0 : index
    %c0_4 = arith.constant 0 : index
    %2 = vector.load %arg2[%c0_2, %c0_3, %c0_4] : memref<1x48x8xf32, #tpu.memory_space<vmem>>, vector<1x48x8xf32>
    %3 = vector.shape_cast %2 : vector<1x48x8xf32> to vector<48x8xf32>
    %cst = arith.constant dense<0.000000e+00> : vector<512x8xf32>
    %4 = tpu.matmul %1, %3, %cst {dimension_numbers = #tpu.dot_dimension_numbers<[1], [0], [0], [1], [0, 0, 1, 1], [], []>} : vector<512x48xf32>, vector<48x8xf32>, vector<512x8xf32> -> vector<512x8xf32>
    %cst_5 = arith.constant dense<0.000000e+00> : vector<8xf32>
    %5 = vector.multi_reduction <add>, %4, %cst_5 [0] : vector<512x8xf32> to vector<8xf32>
    %6 = vector.shape_cast %5 : vector<8xf32> to vector<1x8xf32>
    %cst_6 = arith.constant 0.001953125 : f32
    %7 = vector.broadcast %cst_6 : f32 to vector<1x8xf32>
    %8 = arith.mulf %6, %7 : vector<1x8xf32>
    %9 = vector.broadcast %8 : vector<1x8xf32> to vector<512x8xf32>
    %10 = arith.subf %4, %9 : vector<512x8xf32>
    %11 = arith.mulf %10, %10 : vector<512x8xf32>
    %cst_7 = arith.constant dense<0.000000e+00> : vector<8xf32>
    %12 = vector.multi_reduction <add>, %11, %cst_7 [0] : vector<512x8xf32> to vector<8xf32>
    %13 = vector.shape_cast %12 : vector<8xf32> to vector<1x8xf32>
    %cst_8 = arith.constant 0.001953125 : f32
    %14 = vector.broadcast %cst_8 : f32 to vector<1x8xf32>
    %15 = arith.mulf %13, %14 : vector<1x8xf32>
    %c0_9 = arith.constant 0 : index
    %c0_10 = arith.constant 0 : index
    %16 = vector.load %arg3[%c0_9, %c0_10] : memref<1x8xf32, #tpu.memory_space<vmem>>, vector<1x8xf32>
    %cst_11 = arith.constant 9.99999974E-6 : f32
    %17 = vector.broadcast %cst_11 : f32 to vector<1x8xf32>
    %18 = arith.addf %15, %17 : vector<1x8xf32>
    %19 = math.rsqrt %18 : vector<1x8xf32>
    %20 = arith.mulf %16, %19 : vector<1x8xf32>
    %c0_12 = arith.constant 0 : index
    %c0_13 = arith.constant 0 : index
    %21 = vector.load %arg4[%c0_12, %c0_13] : memref<1x8xf32, #tpu.memory_space<vmem>>, vector<1x8xf32>
    %22 = arith.mulf %8, %20 : vector<1x8xf32>
    %23 = arith.subf %21, %22 : vector<1x8xf32>
    %24 = vector.broadcast %20 : vector<1x8xf32> to vector<512x8xf32>
    %25 = arith.mulf %4, %24 : vector<512x8xf32>
    %26 = vector.broadcast %23 : vector<1x8xf32> to vector<512x8xf32>
    %27 = arith.addf %25, %26 : vector<512x8xf32>
    %cst_14 = arith.constant 0.000000e+00 : f32
    %28 = vector.broadcast %cst_14 : f32 to vector<512x8xf32>
    %29 = arith.cmpf oge, %27, %28 : vector<512x8xf32>
    %cst_15 = arith.constant 2.000000e-01 : f32
    %30 = vector.broadcast %cst_15 : f32 to vector<512x8xf32>
    %31 = arith.mulf %30, %27 : vector<512x8xf32>
    %32 = arith.select %29, %27, %31 : vector<512x8xi1>, vector<512x8xf32>
    %c0_16 = arith.constant 0 : index
    %c0_17 = arith.constant 0 : index
    %c0_18 = arith.constant 0 : index
    %33 = vector.load %arg5[%c0_16, %c0_17, %c0_18] : memref<1x512x8xf32, #tpu.memory_space<vmem>>, vector<1x512x8xf32>
    %34 = vector.shape_cast %33 : vector<1x512x8xf32> to vector<512x8xf32>
    %35 = vector.shape_cast %32 : vector<512x8xf32> to vector<1x512x8xf32>
    tpu.vector_store %arg5[%c0_16, %c0_17, %c0_18], %35 {strides = array<i32>} : memref<1x512x8xf32, #tpu.memory_space<vmem>>, vector<1x512x8xf32>,
    return
  }
  func.func @transform_0(%arg0: i32) -> (i32, i32, i32) {
    %c0_i32 = arith.constant 0 : i32
    %c0_i32_0 = arith.constant 0 : i32
    %c0_i32_1 = arith.constant 0 : i32
    %c0_i32_2 = arith.constant 0 : i32
    return %c0_i32, %c0_i32_0, %c0_i32_1 : i32, i32, i32
  }
  func.func @transform_1(%arg0: i32) -> (i32, i32, i32) {
    %c0_i32 = arith.constant 0 : i32
    %c0_i32_0 = arith.constant 0 : i32
    %c0_i32_1 = arith.constant 0 : i32
    %c0_i32_2 = arith.constant 0 : i32
    return %c0_i32, %c0_i32_0, %c0_i32_1 : i32, i32, i32
  }
  func.func @transform_2(%arg0: i32) -> (i32, i32) {
    %c0_i32 = arith.constant 0 : i32
    %c0_i32_0 = arith.constant 0 : i32
    %c0_i32_1 = arith.constant 0 : i32
    return %c0_i32, %c0_i32_0 : i32, i32
  }
  func.func @transform_3(%arg0: i32) -> (i32, i32) {
    %c0_i32 = arith.constant 0 : i32
    %c0_i32_0 = arith.constant 0 : i32
    %c0_i32_1 = arith.constant 0 : i32
    return %c0_i32, %c0_i32_0 : i32, i32
  }
  func.func @transform_4(%arg0: i32) -> (i32, i32, i32) {
    %c0_i32 = arith.constant 0 : i32
    %c0_i32_0 = arith.constant 0 : i32
    %c0_i32_1 = arith.constant 0 : i32
    %c0_i32_2 = arith.constant 0 : i32
    return %c0_i32, %c0_i32_0, %c0_i32_1 : i32, i32, i32
  }
}

module attributes {stable_mosaic.version = 11 : i64} {
  func.func @_gemm_bn_act_kernel(%arg0: i32, %arg1: memref<1x128x128xf32, #tpu.memory_space<vmem>>, %arg2: memref<1x128x16xf32, #tpu.memory_space<vmem>>, %arg3: memref<1x16xf32, #tpu.memory_space<vmem>>, %arg4: memref<1x16xf32, #tpu.memory_space<vmem>>, %arg5: memref<1x128x16xf32, #tpu.memory_space<vmem>>) attributes {dimension_semantics = [#tpu.dimension_semantics<arbitrary>], iteration_bounds = array<i64: 1>, scalar_prefetch = 0 : i64, scratch_operands = 0 : i64, tpu.core_type = #tpu.core_type<tc>, window_params = [{pipeline_mode = #tpu.pipeline_mode<synchronous>, transform_indices = @transform_0, window_bounds = array<i64: 1, 128, 128>}, {pipeline_mode = #tpu.pipeline_mode<synchronous>, transform_indices = @transform_1, window_bounds = array<i64: 1, 128, 16>}, {pipeline_mode = #tpu.pipeline_mode<synchronous>, transform_indices = @transform_2, window_bounds = array<i64: 1, 16>}, {pipeline_mode = #tpu.pipeline_mode<synchronous>, transform_indices = @transform_3, window_bounds = array<i64: 1, 16>}, {pipeline_mode = #tpu.pipeline_mode<synchronous>, transform_indices = @transform_4, window_bounds = array<i64: 1, 128, 16>}]} {
    %c0 = arith.constant 0 : index
    %c0_0 = arith.constant 0 : index
    %c0_1 = arith.constant 0 : index
    %0 = vector.load %arg1[%c0, %c0_0, %c0_1] : memref<1x128x128xf32, #tpu.memory_space<vmem>>, vector<1x128x128xf32>
    %1 = vector.shape_cast %0 : vector<1x128x128xf32> to vector<128x128xf32>
    %c0_2 = arith.constant 0 : index
    %c0_3 = arith.constant 0 : index
    %c0_4 = arith.constant 0 : index
    %2 = vector.load %arg2[%c0_2, %c0_3, %c0_4] : memref<1x128x16xf32, #tpu.memory_space<vmem>>, vector<1x128x16xf32>
    %3 = vector.shape_cast %2 : vector<1x128x16xf32> to vector<128x16xf32>
    %cst = arith.constant dense<0.000000e+00> : vector<128x16xf32>
    %4 = tpu.matmul %1, %3, %cst {dimension_numbers = #tpu.dot_dimension_numbers<[1], [0], [0], [1], [0, 0, 1, 1], [], []>} : vector<128x128xf32>, vector<128x16xf32>, vector<128x16xf32> -> vector<128x16xf32>
    %cst_5 = arith.constant dense<0.000000e+00> : vector<16xf32>
    %5 = vector.multi_reduction <add>, %4, %cst_5 [0] : vector<128x16xf32> to vector<16xf32>
    %6 = vector.shape_cast %5 : vector<16xf32> to vector<1x16xf32>
    %cst_6 = arith.constant 7.812500e-03 : f32
    %7 = vector.broadcast %cst_6 : f32 to vector<1x16xf32>
    %8 = arith.mulf %6, %7 : vector<1x16xf32>
    %9 = vector.broadcast %8 : vector<1x16xf32> to vector<128x16xf32>
    %10 = arith.subf %4, %9 : vector<128x16xf32>
    %11 = arith.mulf %10, %10 : vector<128x16xf32>
    %cst_7 = arith.constant dense<0.000000e+00> : vector<16xf32>
    %12 = vector.multi_reduction <add>, %11, %cst_7 [0] : vector<128x16xf32> to vector<16xf32>
    %13 = vector.shape_cast %12 : vector<16xf32> to vector<1x16xf32>
    %cst_8 = arith.constant 7.812500e-03 : f32
    %14 = vector.broadcast %cst_8 : f32 to vector<1x16xf32>
    %15 = arith.mulf %13, %14 : vector<1x16xf32>
    %c0_9 = arith.constant 0 : index
    %c0_10 = arith.constant 0 : index
    %16 = vector.load %arg3[%c0_9, %c0_10] : memref<1x16xf32, #tpu.memory_space<vmem>>, vector<1x16xf32>
    %cst_11 = arith.constant 9.99999974E-6 : f32
    %17 = vector.broadcast %cst_11 : f32 to vector<1x16xf32>
    %18 = arith.addf %15, %17 : vector<1x16xf32>
    %19 = math.rsqrt %18 : vector<1x16xf32>
    %20 = arith.mulf %16, %19 : vector<1x16xf32>
    %c0_12 = arith.constant 0 : index
    %c0_13 = arith.constant 0 : index
    %21 = vector.load %arg4[%c0_12, %c0_13] : memref<1x16xf32, #tpu.memory_space<vmem>>, vector<1x16xf32>
    %22 = arith.mulf %8, %20 : vector<1x16xf32>
    %23 = arith.subf %21, %22 : vector<1x16xf32>
    %24 = vector.broadcast %20 : vector<1x16xf32> to vector<128x16xf32>
    %25 = arith.mulf %4, %24 : vector<128x16xf32>
    %26 = vector.broadcast %23 : vector<1x16xf32> to vector<128x16xf32>
    %27 = arith.addf %25, %26 : vector<128x16xf32>
    %cst_14 = arith.constant 0.000000e+00 : f32
    %28 = vector.broadcast %cst_14 : f32 to vector<128x16xf32>
    %29 = arith.cmpf oge, %27, %28 : vector<128x16xf32>
    %cst_15 = arith.constant 2.000000e-01 : f32
    %30 = vector.broadcast %cst_15 : f32 to vector<128x16xf32>
    %31 = arith.mulf %30, %27 : vector<128x16xf32>
    %32 = arith.select %29, %27, %31 : vector<128x16xi1>, vector<128x16xf32>
    %c0_16 = arith.constant 0 : index
    %c0_17 = arith.constant 0 : index
    %c0_18 = arith.constant 0 : index
    %33 = vector.load %arg5[%c0_16, %c0_17, %c0_18] : memref<1x128x16xf32, #tpu.memory_space<vmem>>, vector<1x128x16xf32>
    %34 = vector.shape_cast %33 : vector<1x128x16xf32> to vector<128x16xf32>
    %35 = vector.shape_cast %32 : vector<128x16xf32> to vector<1x128x16xf32>
    tpu.vector_store %arg5[%c0_16, %c0_17, %c0_18], %35 {strides = array<i32>} : memref<1x128x16xf32, #tpu.memory_space<vmem>>, vector<1x128x16xf32>,
    return
  }
  func.func @transform_0(%arg0: i32) -> (i32, i32, i32) {
    %c0_i32 = arith.constant 0 : i32
    %c0_i32_0 = arith.constant 0 : i32
    %c0_i32_1 = arith.constant 0 : i32
    %c0_i32_2 = arith.constant 0 : i32
    return %c0_i32, %c0_i32_0, %c0_i32_1 : i32, i32, i32
  }
  func.func @transform_1(%arg0: i32) -> (i32, i32, i32) {
    %c0_i32 = arith.constant 0 : i32
    %c0_i32_0 = arith.constant 0 : i32
    %c0_i32_1 = arith.constant 0 : i32
    %c0_i32_2 = arith.constant 0 : i32
    return %c0_i32, %c0_i32_0, %c0_i32_1 : i32, i32, i32
  }
  func.func @transform_2(%arg0: i32) -> (i32, i32) {
    %c0_i32 = arith.constant 0 : i32
    %c0_i32_0 = arith.constant 0 : i32
    %c0_i32_1 = arith.constant 0 : i32
    return %c0_i32, %c0_i32_0 : i32, i32
  }
  func.func @transform_3(%arg0: i32) -> (i32, i32) {
    %c0_i32 = arith.constant 0 : i32
    %c0_i32_0 = arith.constant 0 : i32
    %c0_i32_1 = arith.constant 0 : i32
    return %c0_i32, %c0_i32_0 : i32, i32
  }
  func.func @transform_4(%arg0: i32) -> (i32, i32, i32) {
    %c0_i32 = arith.constant 0 : i32
    %c0_i32_0 = arith.constant 0 : i32
    %c0_i32_1 = arith.constant 0 : i32
    %c0_i32_2 = arith.constant 0 : i32
    return %c0_i32, %c0_i32_0, %c0_i32_1 : i32, i32, i32
  }
}

module attributes {stable_mosaic.version = 11 : i64} {
  func.func @_gemm_bn_act_kernel(%arg0: i32, %arg1: memref<1x32x256xf32, #tpu.memory_space<vmem>>, %arg2: memref<1x256x32xf32, #tpu.memory_space<vmem>>, %arg3: memref<1x32xf32, #tpu.memory_space<vmem>>, %arg4: memref<1x32xf32, #tpu.memory_space<vmem>>, %arg5: memref<1x32x32xf32, #tpu.memory_space<vmem>>) attributes {dimension_semantics = [#tpu.dimension_semantics<arbitrary>], iteration_bounds = array<i64: 1>, scalar_prefetch = 0 : i64, scratch_operands = 0 : i64, tpu.core_type = #tpu.core_type<tc>, window_params = [{pipeline_mode = #tpu.pipeline_mode<synchronous>, transform_indices = @transform_0, window_bounds = array<i64: 1, 32, 256>}, {pipeline_mode = #tpu.pipeline_mode<synchronous>, transform_indices = @transform_1, window_bounds = array<i64: 1, 256, 32>}, {pipeline_mode = #tpu.pipeline_mode<synchronous>, transform_indices = @transform_2, window_bounds = array<i64: 1, 32>}, {pipeline_mode = #tpu.pipeline_mode<synchronous>, transform_indices = @transform_3, window_bounds = array<i64: 1, 32>}, {pipeline_mode = #tpu.pipeline_mode<synchronous>, transform_indices = @transform_4, window_bounds = array<i64: 1, 32, 32>}]} {
    %c0 = arith.constant 0 : index
    %c0_0 = arith.constant 0 : index
    %c0_1 = arith.constant 0 : index
    %0 = vector.load %arg1[%c0, %c0_0, %c0_1] : memref<1x32x256xf32, #tpu.memory_space<vmem>>, vector<1x32x256xf32>
    %1 = vector.shape_cast %0 : vector<1x32x256xf32> to vector<32x256xf32>
    %c0_2 = arith.constant 0 : index
    %c0_3 = arith.constant 0 : index
    %c0_4 = arith.constant 0 : index
    %2 = vector.load %arg2[%c0_2, %c0_3, %c0_4] : memref<1x256x32xf32, #tpu.memory_space<vmem>>, vector<1x256x32xf32>
    %3 = vector.shape_cast %2 : vector<1x256x32xf32> to vector<256x32xf32>
    %cst = arith.constant dense<0.000000e+00> : vector<32x32xf32>
    %4 = tpu.matmul %1, %3, %cst {dimension_numbers = #tpu.dot_dimension_numbers<[1], [0], [0], [1], [0, 0, 1, 1], [], []>} : vector<32x256xf32>, vector<256x32xf32>, vector<32x32xf32> -> vector<32x32xf32>
    %cst_5 = arith.constant dense<0.000000e+00> : vector<32xf32>
    %5 = vector.multi_reduction <add>, %4, %cst_5 [0] : vector<32x32xf32> to vector<32xf32>
    %6 = vector.shape_cast %5 : vector<32xf32> to vector<1x32xf32>
    %cst_6 = arith.constant 3.125000e-02 : f32
    %7 = vector.broadcast %cst_6 : f32 to vector<1x32xf32>
    %8 = arith.mulf %6, %7 : vector<1x32xf32>
    %9 = vector.broadcast %8 : vector<1x32xf32> to vector<32x32xf32>
    %10 = arith.subf %4, %9 : vector<32x32xf32>
    %11 = arith.mulf %10, %10 : vector<32x32xf32>
    %cst_7 = arith.constant dense<0.000000e+00> : vector<32xf32>
    %12 = vector.multi_reduction <add>, %11, %cst_7 [0] : vector<32x32xf32> to vector<32xf32>
    %13 = vector.shape_cast %12 : vector<32xf32> to vector<1x32xf32>
    %cst_8 = arith.constant 3.125000e-02 : f32
    %14 = vector.broadcast %cst_8 : f32 to vector<1x32xf32>
    %15 = arith.mulf %13, %14 : vector<1x32xf32>
    %c0_9 = arith.constant 0 : index
    %c0_10 = arith.constant 0 : index
    %16 = vector.load %arg3[%c0_9, %c0_10] : memref<1x32xf32, #tpu.memory_space<vmem>>, vector<1x32xf32>
    %cst_11 = arith.constant 9.99999974E-6 : f32
    %17 = vector.broadcast %cst_11 : f32 to vector<1x32xf32>
    %18 = arith.addf %15, %17 : vector<1x32xf32>
    %19 = math.rsqrt %18 : vector<1x32xf32>
    %20 = arith.mulf %16, %19 : vector<1x32xf32>
    %c0_12 = arith.constant 0 : index
    %c0_13 = arith.constant 0 : index
    %21 = vector.load %arg4[%c0_12, %c0_13] : memref<1x32xf32, #tpu.memory_space<vmem>>, vector<1x32xf32>
    %22 = arith.mulf %8, %20 : vector<1x32xf32>
    %23 = arith.subf %21, %22 : vector<1x32xf32>
    %24 = vector.broadcast %20 : vector<1x32xf32> to vector<32x32xf32>
    %25 = arith.mulf %4, %24 : vector<32x32xf32>
    %26 = vector.broadcast %23 : vector<1x32xf32> to vector<32x32xf32>
    %27 = arith.addf %25, %26 : vector<32x32xf32>
    %cst_14 = arith.constant 0.000000e+00 : f32
    %28 = vector.broadcast %cst_14 : f32 to vector<32x32xf32>
    %29 = arith.cmpf oge, %27, %28 : vector<32x32xf32>
    %cst_15 = arith.constant 2.000000e-01 : f32
    %30 = vector.broadcast %cst_15 : f32 to vector<32x32xf32>
    %31 = arith.mulf %30, %27 : vector<32x32xf32>
    %32 = arith.select %29, %27, %31 : vector<32x32xi1>, vector<32x32xf32>
    %c0_16 = arith.constant 0 : index
    %c0_17 = arith.constant 0 : index
    %c0_18 = arith.constant 0 : index
    %33 = vector.load %arg5[%c0_16, %c0_17, %c0_18] : memref<1x32x32xf32, #tpu.memory_space<vmem>>, vector<1x32x32xf32>
    %34 = vector.shape_cast %33 : vector<1x32x32xf32> to vector<32x32xf32>
    %35 = vector.shape_cast %32 : vector<32x32xf32> to vector<1x32x32xf32>
    tpu.vector_store %arg5[%c0_16, %c0_17, %c0_18], %35 {strides = array<i32>} : memref<1x32x32xf32, #tpu.memory_space<vmem>>, vector<1x32x32xf32>,
    return
  }
  func.func @transform_0(%arg0: i32) -> (i32, i32, i32) {
    %c0_i32 = arith.constant 0 : i32
    %c0_i32_0 = arith.constant 0 : i32
    %c0_i32_1 = arith.constant 0 : i32
    %c0_i32_2 = arith.constant 0 : i32
    return %c0_i32, %c0_i32_0, %c0_i32_1 : i32, i32, i32
  }
  func.func @transform_1(%arg0: i32) -> (i32, i32, i32) {
    %c0_i32 = arith.constant 0 : i32
    %c0_i32_0 = arith.constant 0 : i32
    %c0_i32_1 = arith.constant 0 : i32
    %c0_i32_2 = arith.constant 0 : i32
    return %c0_i32, %c0_i32_0, %c0_i32_1 : i32, i32, i32
  }
  func.func @transform_2(%arg0: i32) -> (i32, i32) {
    %c0_i32 = arith.constant 0 : i32
    %c0_i32_0 = arith.constant 0 : i32
    %c0_i32_1 = arith.constant 0 : i32
    return %c0_i32, %c0_i32_0 : i32, i32
  }
  func.func @transform_3(%arg0: i32) -> (i32, i32) {
    %c0_i32 = arith.constant 0 : i32
    %c0_i32_0 = arith.constant 0 : i32
    %c0_i32_1 = arith.constant 0 : i32
    return %c0_i32, %c0_i32_0 : i32, i32
  }
  func.func @transform_4(%arg0: i32) -> (i32, i32, i32) {
    %c0_i32 = arith.constant 0 : i32
    %c0_i32_0 = arith.constant 0 : i32
    %c0_i32_1 = arith.constant 0 : i32
    %c0_i32_2 = arith.constant 0 : i32
    return %c0_i32, %c0_i32_0, %c0_i32_1 : i32, i32, i32
  }
}

module attributes {stable_mosaic.version = 11 : i64} {
  func.func @_gemm_bn_act_kernel(%arg0: i32, %arg1: memref<1x8x512xf32, #tpu.memory_space<vmem>>, %arg2: memref<1x512x64xf32, #tpu.memory_space<vmem>>, %arg3: memref<1x64xf32, #tpu.memory_space<vmem>>, %arg4: memref<1x64xf32, #tpu.memory_space<vmem>>, %arg5: memref<1x8x64xf32, #tpu.memory_space<vmem>>) attributes {dimension_semantics = [#tpu.dimension_semantics<arbitrary>], iteration_bounds = array<i64: 1>, scalar_prefetch = 0 : i64, scratch_operands = 0 : i64, tpu.core_type = #tpu.core_type<tc>, window_params = [{pipeline_mode = #tpu.pipeline_mode<synchronous>, transform_indices = @transform_0, window_bounds = array<i64: 1, 8, 512>}, {pipeline_mode = #tpu.pipeline_mode<synchronous>, transform_indices = @transform_1, window_bounds = array<i64: 1, 512, 64>}, {pipeline_mode = #tpu.pipeline_mode<synchronous>, transform_indices = @transform_2, window_bounds = array<i64: 1, 64>}, {pipeline_mode = #tpu.pipeline_mode<synchronous>, transform_indices = @transform_3, window_bounds = array<i64: 1, 64>}, {pipeline_mode = #tpu.pipeline_mode<synchronous>, transform_indices = @transform_4, window_bounds = array<i64: 1, 8, 64>}]} {
    %c0 = arith.constant 0 : index
    %c0_0 = arith.constant 0 : index
    %c0_1 = arith.constant 0 : index
    %0 = vector.load %arg1[%c0, %c0_0, %c0_1] : memref<1x8x512xf32, #tpu.memory_space<vmem>>, vector<1x8x512xf32>
    %1 = vector.shape_cast %0 : vector<1x8x512xf32> to vector<8x512xf32>
    %c0_2 = arith.constant 0 : index
    %c0_3 = arith.constant 0 : index
    %c0_4 = arith.constant 0 : index
    %2 = vector.load %arg2[%c0_2, %c0_3, %c0_4] : memref<1x512x64xf32, #tpu.memory_space<vmem>>, vector<1x512x64xf32>
    %3 = vector.shape_cast %2 : vector<1x512x64xf32> to vector<512x64xf32>
    %cst = arith.constant dense<0.000000e+00> : vector<8x64xf32>
    %4 = tpu.matmul %1, %3, %cst {dimension_numbers = #tpu.dot_dimension_numbers<[1], [0], [0], [1], [0, 0, 1, 1], [], []>} : vector<8x512xf32>, vector<512x64xf32>, vector<8x64xf32> -> vector<8x64xf32>
    %cst_5 = arith.constant dense<0.000000e+00> : vector<64xf32>
    %5 = vector.multi_reduction <add>, %4, %cst_5 [0] : vector<8x64xf32> to vector<64xf32>
    %6 = vector.shape_cast %5 : vector<64xf32> to vector<1x64xf32>
    %cst_6 = arith.constant 1.250000e-01 : f32
    %7 = vector.broadcast %cst_6 : f32 to vector<1x64xf32>
    %8 = arith.mulf %6, %7 : vector<1x64xf32>
    %9 = vector.broadcast %8 : vector<1x64xf32> to vector<8x64xf32>
    %10 = arith.subf %4, %9 : vector<8x64xf32>
    %11 = arith.mulf %10, %10 : vector<8x64xf32>
    %cst_7 = arith.constant dense<0.000000e+00> : vector<64xf32>
    %12 = vector.multi_reduction <add>, %11, %cst_7 [0] : vector<8x64xf32> to vector<64xf32>
    %13 = vector.shape_cast %12 : vector<64xf32> to vector<1x64xf32>
    %cst_8 = arith.constant 1.250000e-01 : f32
    %14 = vector.broadcast %cst_8 : f32 to vector<1x64xf32>
    %15 = arith.mulf %13, %14 : vector<1x64xf32>
    %c0_9 = arith.constant 0 : index
    %c0_10 = arith.constant 0 : index
    %16 = vector.load %arg3[%c0_9, %c0_10] : memref<1x64xf32, #tpu.memory_space<vmem>>, vector<1x64xf32>
    %cst_11 = arith.constant 9.99999974E-6 : f32
    %17 = vector.broadcast %cst_11 : f32 to vector<1x64xf32>
    %18 = arith.addf %15, %17 : vector<1x64xf32>
    %19 = math.rsqrt %18 : vector<1x64xf32>
    %20 = arith.mulf %16, %19 : vector<1x64xf32>
    %c0_12 = arith.constant 0 : index
    %c0_13 = arith.constant 0 : index
    %21 = vector.load %arg4[%c0_12, %c0_13] : memref<1x64xf32, #tpu.memory_space<vmem>>, vector<1x64xf32>
    %22 = arith.mulf %8, %20 : vector<1x64xf32>
    %23 = arith.subf %21, %22 : vector<1x64xf32>
    %24 = vector.broadcast %20 : vector<1x64xf32> to vector<8x64xf32>
    %25 = arith.mulf %4, %24 : vector<8x64xf32>
    %26 = vector.broadcast %23 : vector<1x64xf32> to vector<8x64xf32>
    %27 = arith.addf %25, %26 : vector<8x64xf32>
    %cst_14 = arith.constant 0.000000e+00 : f32
    %28 = vector.broadcast %cst_14 : f32 to vector<8x64xf32>
    %29 = arith.cmpf oge, %27, %28 : vector<8x64xf32>
    %cst_15 = arith.constant 2.000000e-01 : f32
    %30 = vector.broadcast %cst_15 : f32 to vector<8x64xf32>
    %31 = arith.mulf %30, %27 : vector<8x64xf32>
    %32 = arith.select %29, %27, %31 : vector<8x64xi1>, vector<8x64xf32>
    %c0_16 = arith.constant 0 : index
    %c0_17 = arith.constant 0 : index
    %c0_18 = arith.constant 0 : index
    %33 = vector.load %arg5[%c0_16, %c0_17, %c0_18] : memref<1x8x64xf32, #tpu.memory_space<vmem>>, vector<1x8x64xf32>
    %34 = vector.shape_cast %33 : vector<1x8x64xf32> to vector<8x64xf32>
    %35 = vector.shape_cast %32 : vector<8x64xf32> to vector<1x8x64xf32>
    tpu.vector_store %arg5[%c0_16, %c0_17, %c0_18], %35 {strides = array<i32>} : memref<1x8x64xf32, #tpu.memory_space<vmem>>, vector<1x8x64xf32>,
    return
  }
  func.func @transform_0(%arg0: i32) -> (i32, i32, i32) {
    %c0_i32 = arith.constant 0 : i32
    %c0_i32_0 = arith.constant 0 : i32
    %c0_i32_1 = arith.constant 0 : i32
    %c0_i32_2 = arith.constant 0 : i32
    return %c0_i32, %c0_i32_0, %c0_i32_1 : i32, i32, i32
  }
  func.func @transform_1(%arg0: i32) -> (i32, i32, i32) {
    %c0_i32 = arith.constant 0 : i32
    %c0_i32_0 = arith.constant 0 : i32
    %c0_i32_1 = arith.constant 0 : i32
    %c0_i32_2 = arith.constant 0 : i32
    return %c0_i32, %c0_i32_0, %c0_i32_1 : i32, i32, i32
  }
  func.func @transform_2(%arg0: i32) -> (i32, i32) {
    %c0_i32 = arith.constant 0 : i32
    %c0_i32_0 = arith.constant 0 : i32
    %c0_i32_1 = arith.constant 0 : i32
    return %c0_i32, %c0_i32_0 : i32, i32
  }
  func.func @transform_3(%arg0: i32) -> (i32, i32) {
    %c0_i32 = arith.constant 0 : i32
    %c0_i32_0 = arith.constant 0 : i32
    %c0_i32_1 = arith.constant 0 : i32
    return %c0_i32, %c0_i32_0 : i32, i32
  }
  func.func @transform_4(%arg0: i32) -> (i32, i32, i32) {
    %c0_i32 = arith.constant 0 : i32
    %c0_i32_0 = arith.constant 0 : i32
    %c0_i32_1 = arith.constant 0 : i32
    %c0_i32_2 = arith.constant 0 : i32
    return %c0_i32, %c0_i32_0, %c0_i32_1 : i32, i32, i32
  }
}

module attributes {stable_mosaic.version = 11 : i64} {
  func.func @_gemm_bn_act_kernel(%arg0: i32, %arg1: memref<4x8x256xf32, #tpu.memory_space<vmem>>, %arg2: memref<4x256x32xf32, #tpu.memory_space<vmem>>, %arg3: memref<1x32xf32, #tpu.memory_space<vmem>>, %arg4: memref<1x32xf32, #tpu.memory_space<vmem>>, %arg5: memref<4x8x32xf32, #tpu.memory_space<vmem>>) attributes {dimension_semantics = [#tpu.dimension_semantics<arbitrary>], iteration_bounds = array<i64: 1>, scalar_prefetch = 0 : i64, scratch_operands = 0 : i64, tpu.core_type = #tpu.core_type<tc>, window_params = [{pipeline_mode = #tpu.pipeline_mode<synchronous>, transform_indices = @transform_0, window_bounds = array<i64: 4, 8, 256>}, {pipeline_mode = #tpu.pipeline_mode<synchronous>, transform_indices = @transform_1, window_bounds = array<i64: 4, 256, 32>}, {pipeline_mode = #tpu.pipeline_mode<synchronous>, transform_indices = @transform_2, window_bounds = array<i64: 1, 32>}, {pipeline_mode = #tpu.pipeline_mode<synchronous>, transform_indices = @transform_3, window_bounds = array<i64: 1, 32>}, {pipeline_mode = #tpu.pipeline_mode<synchronous>, transform_indices = @transform_4, window_bounds = array<i64: 4, 8, 32>}]} {
    %c0 = arith.constant 0 : index
    %c0_0 = arith.constant 0 : index
    %c0_1 = arith.constant 0 : index
    %0 = vector.load %arg1[%c0, %c0_0, %c0_1] : memref<4x8x256xf32, #tpu.memory_space<vmem>>, vector<1x8x256xf32>
    %1 = vector.shape_cast %0 : vector<1x8x256xf32> to vector<8x256xf32>
    %c0_2 = arith.constant 0 : index
    %c0_3 = arith.constant 0 : index
    %c0_4 = arith.constant 0 : index
    %2 = vector.load %arg2[%c0_2, %c0_3, %c0_4] : memref<4x256x32xf32, #tpu.memory_space<vmem>>, vector<1x256x32xf32>
    %3 = vector.shape_cast %2 : vector<1x256x32xf32> to vector<256x32xf32>
    %cst = arith.constant dense<0.000000e+00> : vector<8x32xf32>
    %4 = tpu.matmul %1, %3, %cst {dimension_numbers = #tpu.dot_dimension_numbers<[1], [0], [0], [1], [0, 0, 1, 1], [], []>} : vector<8x256xf32>, vector<256x32xf32>, vector<8x32xf32> -> vector<8x32xf32>
    %c1 = arith.constant 1 : index
    %c0_5 = arith.constant 0 : index
    %c0_6 = arith.constant 0 : index
    %5 = vector.load %arg1[%c1, %c0_5, %c0_6] : memref<4x8x256xf32, #tpu.memory_space<vmem>>, vector<1x8x256xf32>
    %6 = vector.shape_cast %5 : vector<1x8x256xf32> to vector<8x256xf32>
    %c1_7 = arith.constant 1 : index
    %c0_8 = arith.constant 0 : index
    %c0_9 = arith.constant 0 : index
    %7 = vector.load %arg2[%c1_7, %c0_8, %c0_9] : memref<4x256x32xf32, #tpu.memory_space<vmem>>, vector<1x256x32xf32>
    %8 = vector.shape_cast %7 : vector<1x256x32xf32> to vector<256x32xf32>
    %cst_10 = arith.constant dense<0.000000e+00> : vector<8x32xf32>
    %9 = tpu.matmul %6, %8, %cst_10 {dimension_numbers = #tpu.dot_dimension_numbers<[1], [0], [0], [1], [0, 0, 1, 1], [], []>} : vector<8x256xf32>, vector<256x32xf32>, vector<8x32xf32> -> vector<8x32xf32>
    %c2 = arith.constant 2 : index
    %c0_11 = arith.constant 0 : index
    %c0_12 = arith.constant 0 : index
    %10 = vector.load %arg1[%c2, %c0_11, %c0_12] : memref<4x8x256xf32, #tpu.memory_space<vmem>>, vector<1x8x256xf32>
    %11 = vector.shape_cast %10 : vector<1x8x256xf32> to vector<8x256xf32>
    %c2_13 = arith.constant 2 : index
    %c0_14 = arith.constant 0 : index
    %c0_15 = arith.constant 0 : index
    %12 = vector.load %arg2[%c2_13, %c0_14, %c0_15] : memref<4x256x32xf32, #tpu.memory_space<vmem>>, vector<1x256x32xf32>
    %13 = vector.shape_cast %12 : vector<1x256x32xf32> to vector<256x32xf32>
    %cst_16 = arith.constant dense<0.000000e+00> : vector<8x32xf32>
    %14 = tpu.matmul %11, %13, %cst_16 {dimension_numbers = #tpu.dot_dimension_numbers<[1], [0], [0], [1], [0, 0, 1, 1], [], []>} : vector<8x256xf32>, vector<256x32xf32>, vector<8x32xf32> -> vector<8x32xf32>
    %c3 = arith.constant 3 : index
    %c0_17 = arith.constant 0 : index
    %c0_18 = arith.constant 0 : index
    %15 = vector.load %arg1[%c3, %c0_17, %c0_18] : memref<4x8x256xf32, #tpu.memory_space<vmem>>, vector<1x8x256xf32>
    %16 = vector.shape_cast %15 : vector<1x8x256xf32> to vector<8x256xf32>
    %c3_19 = arith.constant 3 : index
    %c0_20 = arith.constant 0 : index
    %c0_21 = arith.constant 0 : index
    %17 = vector.load %arg2[%c3_19, %c0_20, %c0_21] : memref<4x256x32xf32, #tpu.memory_space<vmem>>, vector<1x256x32xf32>
    %18 = vector.shape_cast %17 : vector<1x256x32xf32> to vector<256x32xf32>
    %cst_22 = arith.constant dense<0.000000e+00> : vector<8x32xf32>
    %19 = tpu.matmul %16, %18, %cst_22 {dimension_numbers = #tpu.dot_dimension_numbers<[1], [0], [0], [1], [0, 0, 1, 1], [], []>} : vector<8x256xf32>, vector<256x32xf32>, vector<8x32xf32> -> vector<8x32xf32>
    %cst_23 = arith.constant dense<0.000000e+00> : vector<32xf32>
    %20 = vector.multi_reduction <add>, %4, %cst_23 [0] : vector<8x32xf32> to vector<32xf32>
    %21 = vector.shape_cast %20 : vector<32xf32> to vector<1x32xf32>
    %cst_24 = arith.constant dense<0.000000e+00> : vector<32xf32>
    %22 = vector.multi_reduction <add>, %9, %cst_24 [0] : vector<8x32xf32> to vector<32xf32>
    %23 = vector.shape_cast %22 : vector<32xf32> to vector<1x32xf32>
    %24 = arith.addf %21, %23 : vector<1x32xf32>
    %cst_25 = arith.constant dense<0.000000e+00> : vector<32xf32>
    %25 = vector.multi_reduction <add>, %14, %cst_25 [0] : vector<8x32xf32> to vector<32xf32>
    %26 = vector.shape_cast %25 : vector<32xf32> to vector<1x32xf32>
    %27 = arith.addf %24, %26 : vector<1x32xf32>
    %cst_26 = arith.constant dense<0.000000e+00> : vector<32xf32>
    %28 = vector.multi_reduction <add>, %19, %cst_26 [0] : vector<8x32xf32> to vector<32xf32>
    %29 = vector.shape_cast %28 : vector<32xf32> to vector<1x32xf32>
    %30 = arith.addf %27, %29 : vector<1x32xf32>
    %cst_27 = arith.constant 3.125000e-02 : f32
    %31 = vector.broadcast %cst_27 : f32 to vector<1x32xf32>
    %32 = arith.mulf %30, %31 : vector<1x32xf32>
    %33 = vector.broadcast %32 : vector<1x32xf32> to vector<8x32xf32>
    %34 = arith.subf %4, %33 : vector<8x32xf32>
    %35 = arith.mulf %34, %34 : vector<8x32xf32>
    %cst_28 = arith.constant dense<0.000000e+00> : vector<32xf32>
    %36 = vector.multi_reduction <add>, %35, %cst_28 [0] : vector<8x32xf32> to vector<32xf32>
    %37 = vector.shape_cast %36 : vector<32xf32> to vector<1x32xf32>
    %38 = vector.broadcast %32 : vector<1x32xf32> to vector<8x32xf32>
    %39 = arith.subf %9, %38 : vector<8x32xf32>
    %40 = arith.mulf %39, %39 : vector<8x32xf32>
    %cst_29 = arith.constant dense<0.000000e+00> : vector<32xf32>
    %41 = vector.multi_reduction <add>, %40, %cst_29 [0] : vector<8x32xf32> to vector<32xf32>
    %42 = vector.shape_cast %41 : vector<32xf32> to vector<1x32xf32>
    %43 = arith.addf %37, %42 : vector<1x32xf32>
    %44 = vector.broadcast %32 : vector<1x32xf32> to vector<8x32xf32>
    %45 = arith.subf %14, %44 : vector<8x32xf32>
    %46 = arith.mulf %45, %45 : vector<8x32xf32>
    %cst_30 = arith.constant dense<0.000000e+00> : vector<32xf32>
    %47 = vector.multi_reduction <add>, %46, %cst_30 [0] : vector<8x32xf32> to vector<32xf32>
    %48 = vector.shape_cast %47 : vector<32xf32> to vector<1x32xf32>
    %49 = arith.addf %43, %48 : vector<1x32xf32>
    %50 = vector.broadcast %32 : vector<1x32xf32> to vector<8x32xf32>
    %51 = arith.subf %19, %50 : vector<8x32xf32>
    %52 = arith.mulf %51, %51 : vector<8x32xf32>
    %cst_31 = arith.constant dense<0.000000e+00> : vector<32xf32>
    %53 = vector.multi_reduction <add>, %52, %cst_31 [0] : vector<8x32xf32> to vector<32xf32>
    %54 = vector.shape_cast %53 : vector<32xf32> to vector<1x32xf32>
    %55 = arith.addf %49, %54 : vector<1x32xf32>
    %cst_32 = arith.constant 3.125000e-02 : f32
    %56 = vector.broadcast %cst_32 : f32 to vector<1x32xf32>
    %57 = arith.mulf %55, %56 : vector<1x32xf32>
    %c0_33 = arith.constant 0 : index
    %c0_34 = arith.constant 0 : index
    %58 = vector.load %arg3[%c0_33, %c0_34] : memref<1x32xf32, #tpu.memory_space<vmem>>, vector<1x32xf32>
    %cst_35 = arith.constant 9.99999974E-6 : f32
    %59 = vector.broadcast %cst_35 : f32 to vector<1x32xf32>
    %60 = arith.addf %57, %59 : vector<1x32xf32>
    %61 = math.rsqrt %60 : vector<1x32xf32>
    %62 = arith.mulf %58, %61 : vector<1x32xf32>
    %c0_36 = arith.constant 0 : index
    %c0_37 = arith.constant 0 : index
    %63 = vector.load %arg4[%c0_36, %c0_37] : memref<1x32xf32, #tpu.memory_space<vmem>>, vector<1x32xf32>
    %64 = arith.mulf %32, %62 : vector<1x32xf32>
    %65 = arith.subf %63, %64 : vector<1x32xf32>
    %66 = vector.broadcast %62 : vector<1x32xf32> to vector<8x32xf32>
    %67 = arith.mulf %4, %66 : vector<8x32xf32>
    %68 = vector.broadcast %65 : vector<1x32xf32> to vector<8x32xf32>
    %69 = arith.addf %67, %68 : vector<8x32xf32>
    %cst_38 = arith.constant 0.000000e+00 : f32
    %70 = vector.broadcast %cst_38 : f32 to vector<8x32xf32>
    %71 = arith.cmpf oge, %69, %70 : vector<8x32xf32>
    %cst_39 = arith.constant 0.000000e+00 : f32
    %72 = vector.broadcast %cst_39 : f32 to vector<8x32xf32>
    %73 = arith.mulf %72, %69 : vector<8x32xf32>
    %74 = arith.select %71, %69, %73 : vector<8x32xi1>, vector<8x32xf32>
    %c0_40 = arith.constant 0 : index
    %c0_41 = arith.constant 0 : index
    %c0_42 = arith.constant 0 : index
    %75 = vector.load %arg5[%c0_40, %c0_41, %c0_42] : memref<4x8x32xf32, #tpu.memory_space<vmem>>, vector<1x8x32xf32>
    %76 = vector.shape_cast %75 : vector<1x8x32xf32> to vector<8x32xf32>
    %77 = vector.shape_cast %74 : vector<8x32xf32> to vector<1x8x32xf32>
    tpu.vector_store %arg5[%c0_40, %c0_41, %c0_42], %77 {strides = array<i32>} : memref<4x8x32xf32, #tpu.memory_space<vmem>>, vector<1x8x32xf32>,
    %78 = vector.broadcast %62 : vector<1x32xf32> to vector<8x32xf32>
    %79 = arith.mulf %9, %78 : vector<8x32xf32>
    %80 = vector.broadcast %65 : vector<1x32xf32> to vector<8x32xf32>
    %81 = arith.addf %79, %80 : vector<8x32xf32>
    %cst_43 = arith.constant 0.000000e+00 : f32
    %82 = vector.broadcast %cst_43 : f32 to vector<8x32xf32>
    %83 = arith.cmpf oge, %81, %82 : vector<8x32xf32>
    %cst_44 = arith.constant 0.000000e+00 : f32
    %84 = vector.broadcast %cst_44 : f32 to vector<8x32xf32>
    %85 = arith.mulf %84, %81 : vector<8x32xf32>
    %86 = arith.select %83, %81, %85 : vector<8x32xi1>, vector<8x32xf32>
    %c1_45 = arith.constant 1 : index
    %c0_46 = arith.constant 0 : index
    %c0_47 = arith.constant 0 : index
    %87 = vector.load %arg5[%c1_45, %c0_46, %c0_47] : memref<4x8x32xf32, #tpu.memory_space<vmem>>, vector<1x8x32xf32>
    %88 = vector.shape_cast %87 : vector<1x8x32xf32> to vector<8x32xf32>
    %89 = vector.shape_cast %86 : vector<8x32xf32> to vector<1x8x32xf32>
    tpu.vector_store %arg5[%c1_45, %c0_46, %c0_47], %89 {strides = array<i32>} : memref<4x8x32xf32, #tpu.memory_space<vmem>>, vector<1x8x32xf32>,
    %90 = vector.broadcast %62 : vector<1x32xf32> to vector<8x32xf32>
    %91 = arith.mulf %14, %90 : vector<8x32xf32>
    %92 = vector.broadcast %65 : vector<1x32xf32> to vector<8x32xf32>
    %93 = arith.addf %91, %92 : vector<8x32xf32>
    %cst_48 = arith.constant 0.000000e+00 : f32
    %94 = vector.broadcast %cst_48 : f32 to vector<8x32xf32>
    %95 = arith.cmpf oge, %93, %94 : vector<8x32xf32>
    %cst_49 = arith.constant 0.000000e+00 : f32
    %96 = vector.broadcast %cst_49 : f32 to vector<8x32xf32>
    %97 = arith.mulf %96, %93 : vector<8x32xf32>
    %98 = arith.select %95, %93, %97 : vector<8x32xi1>, vector<8x32xf32>
    %c2_50 = arith.constant 2 : index
    %c0_51 = arith.constant 0 : index
    %c0_52 = arith.constant 0 : index
    %99 = vector.load %arg5[%c2_50, %c0_51, %c0_52] : memref<4x8x32xf32, #tpu.memory_space<vmem>>, vector<1x8x32xf32>
    %100 = vector.shape_cast %99 : vector<1x8x32xf32> to vector<8x32xf32>
    %101 = vector.shape_cast %98 : vector<8x32xf32> to vector<1x8x32xf32>
    tpu.vector_store %arg5[%c2_50, %c0_51, %c0_52], %101 {strides = array<i32>} : memref<4x8x32xf32, #tpu.memory_space<vmem>>, vector<1x8x32xf32>,
    %102 = vector.broadcast %62 : vector<1x32xf32> to vector<8x32xf32>
    %103 = arith.mulf %19, %102 : vector<8x32xf32>
    %104 = vector.broadcast %65 : vector<1x32xf32> to vector<8x32xf32>
    %105 = arith.addf %103, %104 : vector<8x32xf32>
    %cst_53 = arith.constant 0.000000e+00 : f32
    %106 = vector.broadcast %cst_53 : f32 to vector<8x32xf32>
    %107 = arith.cmpf oge, %105, %106 : vector<8x32xf32>
    %cst_54 = arith.constant 0.000000e+00 : f32
    %108 = vector.broadcast %cst_54 : f32 to vector<8x32xf32>
    %109 = arith.mulf %108, %105 : vector<8x32xf32>
    %110 = arith.select %107, %105, %109 : vector<8x32xi1>, vector<8x32xf32>
    %c3_55 = arith.constant 3 : index
    %c0_56 = arith.constant 0 : index
    %c0_57 = arith.constant 0 : index
    %111 = vector.load %arg5[%c3_55, %c0_56, %c0_57] : memref<4x8x32xf32, #tpu.memory_space<vmem>>, vector<1x8x32xf32>
    %112 = vector.shape_cast %111 : vector<1x8x32xf32> to vector<8x32xf32>
    %113 = vector.shape_cast %110 : vector<8x32xf32> to vector<1x8x32xf32>
    tpu.vector_store %arg5[%c3_55, %c0_56, %c0_57], %113 {strides = array<i32>} : memref<4x8x32xf32, #tpu.memory_space<vmem>>, vector<1x8x32xf32>,
    return
  }
  func.func @transform_0(%arg0: i32) -> (i32, i32, i32) {
    %c0_i32 = arith.constant 0 : i32
    %c0_i32_0 = arith.constant 0 : i32
    %c0_i32_1 = arith.constant 0 : i32
    %c0_i32_2 = arith.constant 0 : i32
    return %c0_i32, %c0_i32_0, %c0_i32_1 : i32, i32, i32
  }
  func.func @transform_1(%arg0: i32) -> (i32, i32, i32) {
    %c0_i32 = arith.constant 0 : i32
    %c0_i32_0 = arith.constant 0 : i32
    %c0_i32_1 = arith.constant 0 : i32
    %c0_i32_2 = arith.constant 0 : i32
    return %c0_i32, %c0_i32_0, %c0_i32_1 : i32, i32, i32
  }
  func.func @transform_2(%arg0: i32) -> (i32, i32) {
    %c0_i32 = arith.constant 0 : i32
    %c0_i32_0 = arith.constant 0 : i32
    %c0_i32_1 = arith.constant 0 : i32
    return %c0_i32, %c0_i32_0 : i32, i32
  }
  func.func @transform_3(%arg0: i32) -> (i32, i32) {
    %c0_i32 = arith.constant 0 : i32
    %c0_i32_0 = arith.constant 0 : i32
    %c0_i32_1 = arith.constant 0 : i32
    return %c0_i32, %c0_i32_0 : i32, i32
  }
  func.func @transform_4(%arg0: i32) -> (i32, i32, i32) {
    %c0_i32 = arith.constant 0 : i32
    %c0_i32_0 = arith.constant 0 : i32
    %c0_i32_1 = arith.constant 0 : i32
    %c0_i32_2 = arith.constant 0 : i32
    return %c0_i32, %c0_i32_0, %c0_i32_1 : i32, i32, i32
  }
}

module attributes {stable_mosaic.version = 11 : i64} {
  func.func @_gemm_bn_act_kernel(%arg0: i32, %arg1: memref<4x32x256xf32, #tpu.memory_space<vmem>>, %arg2: memref<4x256x16xf32, #tpu.memory_space<vmem>>, %arg3: memref<1x16xf32, #tpu.memory_space<vmem>>, %arg4: memref<1x16xf32, #tpu.memory_space<vmem>>, %arg5: memref<4x32x16xf32, #tpu.memory_space<vmem>>) attributes {dimension_semantics = [#tpu.dimension_semantics<arbitrary>], iteration_bounds = array<i64: 1>, scalar_prefetch = 0 : i64, scratch_operands = 0 : i64, tpu.core_type = #tpu.core_type<tc>, window_params = [{pipeline_mode = #tpu.pipeline_mode<synchronous>, transform_indices = @transform_0, window_bounds = array<i64: 4, 32, 256>}, {pipeline_mode = #tpu.pipeline_mode<synchronous>, transform_indices = @transform_1, window_bounds = array<i64: 4, 256, 16>}, {pipeline_mode = #tpu.pipeline_mode<synchronous>, transform_indices = @transform_2, window_bounds = array<i64: 1, 16>}, {pipeline_mode = #tpu.pipeline_mode<synchronous>, transform_indices = @transform_3, window_bounds = array<i64: 1, 16>}, {pipeline_mode = #tpu.pipeline_mode<synchronous>, transform_indices = @transform_4, window_bounds = array<i64: 4, 32, 16>}]} {
    %c0 = arith.constant 0 : index
    %c0_0 = arith.constant 0 : index
    %c0_1 = arith.constant 0 : index
    %0 = vector.load %arg1[%c0, %c0_0, %c0_1] : memref<4x32x256xf32, #tpu.memory_space<vmem>>, vector<1x32x256xf32>
    %1 = vector.shape_cast %0 : vector<1x32x256xf32> to vector<32x256xf32>
    %c0_2 = arith.constant 0 : index
    %c0_3 = arith.constant 0 : index
    %c0_4 = arith.constant 0 : index
    %2 = vector.load %arg2[%c0_2, %c0_3, %c0_4] : memref<4x256x16xf32, #tpu.memory_space<vmem>>, vector<1x256x16xf32>
    %3 = vector.shape_cast %2 : vector<1x256x16xf32> to vector<256x16xf32>
    %cst = arith.constant dense<0.000000e+00> : vector<32x16xf32>
    %4 = tpu.matmul %1, %3, %cst {dimension_numbers = #tpu.dot_dimension_numbers<[1], [0], [0], [1], [0, 0, 1, 1], [], []>} : vector<32x256xf32>, vector<256x16xf32>, vector<32x16xf32> -> vector<32x16xf32>
    %c1 = arith.constant 1 : index
    %c0_5 = arith.constant 0 : index
    %c0_6 = arith.constant 0 : index
    %5 = vector.load %arg1[%c1, %c0_5, %c0_6] : memref<4x32x256xf32, #tpu.memory_space<vmem>>, vector<1x32x256xf32>
    %6 = vector.shape_cast %5 : vector<1x32x256xf32> to vector<32x256xf32>
    %c1_7 = arith.constant 1 : index
    %c0_8 = arith.constant 0 : index
    %c0_9 = arith.constant 0 : index
    %7 = vector.load %arg2[%c1_7, %c0_8, %c0_9] : memref<4x256x16xf32, #tpu.memory_space<vmem>>, vector<1x256x16xf32>
    %8 = vector.shape_cast %7 : vector<1x256x16xf32> to vector<256x16xf32>
    %cst_10 = arith.constant dense<0.000000e+00> : vector<32x16xf32>
    %9 = tpu.matmul %6, %8, %cst_10 {dimension_numbers = #tpu.dot_dimension_numbers<[1], [0], [0], [1], [0, 0, 1, 1], [], []>} : vector<32x256xf32>, vector<256x16xf32>, vector<32x16xf32> -> vector<32x16xf32>
    %c2 = arith.constant 2 : index
    %c0_11 = arith.constant 0 : index
    %c0_12 = arith.constant 0 : index
    %10 = vector.load %arg1[%c2, %c0_11, %c0_12] : memref<4x32x256xf32, #tpu.memory_space<vmem>>, vector<1x32x256xf32>
    %11 = vector.shape_cast %10 : vector<1x32x256xf32> to vector<32x256xf32>
    %c2_13 = arith.constant 2 : index
    %c0_14 = arith.constant 0 : index
    %c0_15 = arith.constant 0 : index
    %12 = vector.load %arg2[%c2_13, %c0_14, %c0_15] : memref<4x256x16xf32, #tpu.memory_space<vmem>>, vector<1x256x16xf32>
    %13 = vector.shape_cast %12 : vector<1x256x16xf32> to vector<256x16xf32>
    %cst_16 = arith.constant dense<0.000000e+00> : vector<32x16xf32>
    %14 = tpu.matmul %11, %13, %cst_16 {dimension_numbers = #tpu.dot_dimension_numbers<[1], [0], [0], [1], [0, 0, 1, 1], [], []>} : vector<32x256xf32>, vector<256x16xf32>, vector<32x16xf32> -> vector<32x16xf32>
    %c3 = arith.constant 3 : index
    %c0_17 = arith.constant 0 : index
    %c0_18 = arith.constant 0 : index
    %15 = vector.load %arg1[%c3, %c0_17, %c0_18] : memref<4x32x256xf32, #tpu.memory_space<vmem>>, vector<1x32x256xf32>
    %16 = vector.shape_cast %15 : vector<1x32x256xf32> to vector<32x256xf32>
    %c3_19 = arith.constant 3 : index
    %c0_20 = arith.constant 0 : index
    %c0_21 = arith.constant 0 : index
    %17 = vector.load %arg2[%c3_19, %c0_20, %c0_21] : memref<4x256x16xf32, #tpu.memory_space<vmem>>, vector<1x256x16xf32>
    %18 = vector.shape_cast %17 : vector<1x256x16xf32> to vector<256x16xf32>
    %cst_22 = arith.constant dense<0.000000e+00> : vector<32x16xf32>
    %19 = tpu.matmul %16, %18, %cst_22 {dimension_numbers = #tpu.dot_dimension_numbers<[1], [0], [0], [1], [0, 0, 1, 1], [], []>} : vector<32x256xf32>, vector<256x16xf32>, vector<32x16xf32> -> vector<32x16xf32>
    %cst_23 = arith.constant dense<0.000000e+00> : vector<16xf32>
    %20 = vector.multi_reduction <add>, %4, %cst_23 [0] : vector<32x16xf32> to vector<16xf32>
    %21 = vector.shape_cast %20 : vector<16xf32> to vector<1x16xf32>
    %cst_24 = arith.constant dense<0.000000e+00> : vector<16xf32>
    %22 = vector.multi_reduction <add>, %9, %cst_24 [0] : vector<32x16xf32> to vector<16xf32>
    %23 = vector.shape_cast %22 : vector<16xf32> to vector<1x16xf32>
    %24 = arith.addf %21, %23 : vector<1x16xf32>
    %cst_25 = arith.constant dense<0.000000e+00> : vector<16xf32>
    %25 = vector.multi_reduction <add>, %14, %cst_25 [0] : vector<32x16xf32> to vector<16xf32>
    %26 = vector.shape_cast %25 : vector<16xf32> to vector<1x16xf32>
    %27 = arith.addf %24, %26 : vector<1x16xf32>
    %cst_26 = arith.constant dense<0.000000e+00> : vector<16xf32>
    %28 = vector.multi_reduction <add>, %19, %cst_26 [0] : vector<32x16xf32> to vector<16xf32>
    %29 = vector.shape_cast %28 : vector<16xf32> to vector<1x16xf32>
    %30 = arith.addf %27, %29 : vector<1x16xf32>
    %cst_27 = arith.constant 7.812500e-03 : f32
    %31 = vector.broadcast %cst_27 : f32 to vector<1x16xf32>
    %32 = arith.mulf %30, %31 : vector<1x16xf32>
    %33 = vector.broadcast %32 : vector<1x16xf32> to vector<32x16xf32>
    %34 = arith.subf %4, %33 : vector<32x16xf32>
    %35 = arith.mulf %34, %34 : vector<32x16xf32>
    %cst_28 = arith.constant dense<0.000000e+00> : vector<16xf32>
    %36 = vector.multi_reduction <add>, %35, %cst_28 [0] : vector<32x16xf32> to vector<16xf32>
    %37 = vector.shape_cast %36 : vector<16xf32> to vector<1x16xf32>
    %38 = vector.broadcast %32 : vector<1x16xf32> to vector<32x16xf32>
    %39 = arith.subf %9, %38 : vector<32x16xf32>
    %40 = arith.mulf %39, %39 : vector<32x16xf32>
    %cst_29 = arith.constant dense<0.000000e+00> : vector<16xf32>
    %41 = vector.multi_reduction <add>, %40, %cst_29 [0] : vector<32x16xf32> to vector<16xf32>
    %42 = vector.shape_cast %41 : vector<16xf32> to vector<1x16xf32>
    %43 = arith.addf %37, %42 : vector<1x16xf32>
    %44 = vector.broadcast %32 : vector<1x16xf32> to vector<32x16xf32>
    %45 = arith.subf %14, %44 : vector<32x16xf32>
    %46 = arith.mulf %45, %45 : vector<32x16xf32>
    %cst_30 = arith.constant dense<0.000000e+00> : vector<16xf32>
    %47 = vector.multi_reduction <add>, %46, %cst_30 [0] : vector<32x16xf32> to vector<16xf32>
    %48 = vector.shape_cast %47 : vector<16xf32> to vector<1x16xf32>
    %49 = arith.addf %43, %48 : vector<1x16xf32>
    %50 = vector.broadcast %32 : vector<1x16xf32> to vector<32x16xf32>
    %51 = arith.subf %19, %50 : vector<32x16xf32>
    %52 = arith.mulf %51, %51 : vector<32x16xf32>
    %cst_31 = arith.constant dense<0.000000e+00> : vector<16xf32>
    %53 = vector.multi_reduction <add>, %52, %cst_31 [0] : vector<32x16xf32> to vector<16xf32>
    %54 = vector.shape_cast %53 : vector<16xf32> to vector<1x16xf32>
    %55 = arith.addf %49, %54 : vector<1x16xf32>
    %cst_32 = arith.constant 7.812500e-03 : f32
    %56 = vector.broadcast %cst_32 : f32 to vector<1x16xf32>
    %57 = arith.mulf %55, %56 : vector<1x16xf32>
    %c0_33 = arith.constant 0 : index
    %c0_34 = arith.constant 0 : index
    %58 = vector.load %arg3[%c0_33, %c0_34] : memref<1x16xf32, #tpu.memory_space<vmem>>, vector<1x16xf32>
    %cst_35 = arith.constant 9.99999974E-6 : f32
    %59 = vector.broadcast %cst_35 : f32 to vector<1x16xf32>
    %60 = arith.addf %57, %59 : vector<1x16xf32>
    %61 = math.rsqrt %60 : vector<1x16xf32>
    %62 = arith.mulf %58, %61 : vector<1x16xf32>
    %c0_36 = arith.constant 0 : index
    %c0_37 = arith.constant 0 : index
    %63 = vector.load %arg4[%c0_36, %c0_37] : memref<1x16xf32, #tpu.memory_space<vmem>>, vector<1x16xf32>
    %64 = arith.mulf %32, %62 : vector<1x16xf32>
    %65 = arith.subf %63, %64 : vector<1x16xf32>
    %66 = vector.broadcast %62 : vector<1x16xf32> to vector<32x16xf32>
    %67 = arith.mulf %4, %66 : vector<32x16xf32>
    %68 = vector.broadcast %65 : vector<1x16xf32> to vector<32x16xf32>
    %69 = arith.addf %67, %68 : vector<32x16xf32>
    %cst_38 = arith.constant 0.000000e+00 : f32
    %70 = vector.broadcast %cst_38 : f32 to vector<32x16xf32>
    %71 = arith.cmpf oge, %69, %70 : vector<32x16xf32>
    %cst_39 = arith.constant 0.000000e+00 : f32
    %72 = vector.broadcast %cst_39 : f32 to vector<32x16xf32>
    %73 = arith.mulf %72, %69 : vector<32x16xf32>
    %74 = arith.select %71, %69, %73 : vector<32x16xi1>, vector<32x16xf32>
    %c0_40 = arith.constant 0 : index
    %c0_41 = arith.constant 0 : index
    %c0_42 = arith.constant 0 : index
    %75 = vector.load %arg5[%c0_40, %c0_41, %c0_42] : memref<4x32x16xf32, #tpu.memory_space<vmem>>, vector<1x32x16xf32>
    %76 = vector.shape_cast %75 : vector<1x32x16xf32> to vector<32x16xf32>
    %77 = vector.shape_cast %74 : vector<32x16xf32> to vector<1x32x16xf32>
    tpu.vector_store %arg5[%c0_40, %c0_41, %c0_42], %77 {strides = array<i32>} : memref<4x32x16xf32, #tpu.memory_space<vmem>>, vector<1x32x16xf32>,
    %78 = vector.broadcast %62 : vector<1x16xf32> to vector<32x16xf32>
    %79 = arith.mulf %9, %78 : vector<32x16xf32>
    %80 = vector.broadcast %65 : vector<1x16xf32> to vector<32x16xf32>
    %81 = arith.addf %79, %80 : vector<32x16xf32>
    %cst_43 = arith.constant 0.000000e+00 : f32
    %82 = vector.broadcast %cst_43 : f32 to vector<32x16xf32>
    %83 = arith.cmpf oge, %81, %82 : vector<32x16xf32>
    %cst_44 = arith.constant 0.000000e+00 : f32
    %84 = vector.broadcast %cst_44 : f32 to vector<32x16xf32>
    %85 = arith.mulf %84, %81 : vector<32x16xf32>
    %86 = arith.select %83, %81, %85 : vector<32x16xi1>, vector<32x16xf32>
    %c1_45 = arith.constant 1 : index
    %c0_46 = arith.constant 0 : index
    %c0_47 = arith.constant 0 : index
    %87 = vector.load %arg5[%c1_45, %c0_46, %c0_47] : memref<4x32x16xf32, #tpu.memory_space<vmem>>, vector<1x32x16xf32>
    %88 = vector.shape_cast %87 : vector<1x32x16xf32> to vector<32x16xf32>
    %89 = vector.shape_cast %86 : vector<32x16xf32> to vector<1x32x16xf32>
    tpu.vector_store %arg5[%c1_45, %c0_46, %c0_47], %89 {strides = array<i32>} : memref<4x32x16xf32, #tpu.memory_space<vmem>>, vector<1x32x16xf32>,
    %90 = vector.broadcast %62 : vector<1x16xf32> to vector<32x16xf32>
    %91 = arith.mulf %14, %90 : vector<32x16xf32>
    %92 = vector.broadcast %65 : vector<1x16xf32> to vector<32x16xf32>
    %93 = arith.addf %91, %92 : vector<32x16xf32>
    %cst_48 = arith.constant 0.000000e+00 : f32
    %94 = vector.broadcast %cst_48 : f32 to vector<32x16xf32>
    %95 = arith.cmpf oge, %93, %94 : vector<32x16xf32>
    %cst_49 = arith.constant 0.000000e+00 : f32
    %96 = vector.broadcast %cst_49 : f32 to vector<32x16xf32>
    %97 = arith.mulf %96, %93 : vector<32x16xf32>
    %98 = arith.select %95, %93, %97 : vector<32x16xi1>, vector<32x16xf32>
    %c2_50 = arith.constant 2 : index
    %c0_51 = arith.constant 0 : index
    %c0_52 = arith.constant 0 : index
    %99 = vector.load %arg5[%c2_50, %c0_51, %c0_52] : memref<4x32x16xf32, #tpu.memory_space<vmem>>, vector<1x32x16xf32>
    %100 = vector.shape_cast %99 : vector<1x32x16xf32> to vector<32x16xf32>
    %101 = vector.shape_cast %98 : vector<32x16xf32> to vector<1x32x16xf32>
    tpu.vector_store %arg5[%c2_50, %c0_51, %c0_52], %101 {strides = array<i32>} : memref<4x32x16xf32, #tpu.memory_space<vmem>>, vector<1x32x16xf32>,
    %102 = vector.broadcast %62 : vector<1x16xf32> to vector<32x16xf32>
    %103 = arith.mulf %19, %102 : vector<32x16xf32>
    %104 = vector.broadcast %65 : vector<1x16xf32> to vector<32x16xf32>
    %105 = arith.addf %103, %104 : vector<32x16xf32>
    %cst_53 = arith.constant 0.000000e+00 : f32
    %106 = vector.broadcast %cst_53 : f32 to vector<32x16xf32>
    %107 = arith.cmpf oge, %105, %106 : vector<32x16xf32>
    %cst_54 = arith.constant 0.000000e+00 : f32
    %108 = vector.broadcast %cst_54 : f32 to vector<32x16xf32>
    %109 = arith.mulf %108, %105 : vector<32x16xf32>
    %110 = arith.select %107, %105, %109 : vector<32x16xi1>, vector<32x16xf32>
    %c3_55 = arith.constant 3 : index
    %c0_56 = arith.constant 0 : index
    %c0_57 = arith.constant 0 : index
    %111 = vector.load %arg5[%c3_55, %c0_56, %c0_57] : memref<4x32x16xf32, #tpu.memory_space<vmem>>, vector<1x32x16xf32>
    %112 = vector.shape_cast %111 : vector<1x32x16xf32> to vector<32x16xf32>
    %113 = vector.shape_cast %110 : vector<32x16xf32> to vector<1x32x16xf32>
    tpu.vector_store %arg5[%c3_55, %c0_56, %c0_57], %113 {strides = array<i32>} : memref<4x32x16xf32, #tpu.memory_space<vmem>>, vector<1x32x16xf32>,
    return
  }
  func.func @transform_0(%arg0: i32) -> (i32, i32, i32) {
    %c0_i32 = arith.constant 0 : i32
    %c0_i32_0 = arith.constant 0 : i32
    %c0_i32_1 = arith.constant 0 : i32
    %c0_i32_2 = arith.constant 0 : i32
    return %c0_i32, %c0_i32_0, %c0_i32_1 : i32, i32, i32
  }
  func.func @transform_1(%arg0: i32) -> (i32, i32, i32) {
    %c0_i32 = arith.constant 0 : i32
    %c0_i32_0 = arith.constant 0 : i32
    %c0_i32_1 = arith.constant 0 : i32
    %c0_i32_2 = arith.constant 0 : i32
    return %c0_i32, %c0_i32_0, %c0_i32_1 : i32, i32, i32
  }
  func.func @transform_2(%arg0: i32) -> (i32, i32) {
    %c0_i32 = arith.constant 0 : i32
    %c0_i32_0 = arith.constant 0 : i32
    %c0_i32_1 = arith.constant 0 : i32
    return %c0_i32, %c0_i32_0 : i32, i32
  }
  func.func @transform_3(%arg0: i32) -> (i32, i32) {
    %c0_i32 = arith.constant 0 : i32
    %c0_i32_0 = arith.constant 0 : i32
    %c0_i32_1 = arith.constant 0 : i32
    return %c0_i32, %c0_i32_0 : i32, i32
  }
  func.func @transform_4(%arg0: i32) -> (i32, i32, i32) {
    %c0_i32 = arith.constant 0 : i32
    %c0_i32_0 = arith.constant 0 : i32
    %c0_i32_1 = arith.constant 0 : i32
    %c0_i32_2 = arith.constant 0 : i32
    return %c0_i32, %c0_i32_0, %c0_i32_1 : i32, i32, i32
  }
}

module attributes {stable_mosaic.version = 11 : i64} {
  func.func @_gemm_bn_act_kernel(%arg0: i32, %arg1: memref<4x128x128xf32, #tpu.memory_space<vmem>>, %arg2: memref<4x128x8xf32, #tpu.memory_space<vmem>>, %arg3: memref<1x8xf32, #tpu.memory_space<vmem>>, %arg4: memref<1x8xf32, #tpu.memory_space<vmem>>, %arg5: memref<4x128x8xf32, #tpu.memory_space<vmem>>) attributes {dimension_semantics = [#tpu.dimension_semantics<arbitrary>], iteration_bounds = array<i64: 1>, scalar_prefetch = 0 : i64, scratch_operands = 0 : i64, tpu.core_type = #tpu.core_type<tc>, window_params = [{pipeline_mode = #tpu.pipeline_mode<synchronous>, transform_indices = @transform_0, window_bounds = array<i64: 4, 128, 128>}, {pipeline_mode = #tpu.pipeline_mode<synchronous>, transform_indices = @transform_1, window_bounds = array<i64: 4, 128, 8>}, {pipeline_mode = #tpu.pipeline_mode<synchronous>, transform_indices = @transform_2, window_bounds = array<i64: 1, 8>}, {pipeline_mode = #tpu.pipeline_mode<synchronous>, transform_indices = @transform_3, window_bounds = array<i64: 1, 8>}, {pipeline_mode = #tpu.pipeline_mode<synchronous>, transform_indices = @transform_4, window_bounds = array<i64: 4, 128, 8>}]} {
    %c0 = arith.constant 0 : index
    %c0_0 = arith.constant 0 : index
    %c0_1 = arith.constant 0 : index
    %0 = vector.load %arg1[%c0, %c0_0, %c0_1] : memref<4x128x128xf32, #tpu.memory_space<vmem>>, vector<1x128x128xf32>
    %1 = vector.shape_cast %0 : vector<1x128x128xf32> to vector<128x128xf32>
    %c0_2 = arith.constant 0 : index
    %c0_3 = arith.constant 0 : index
    %c0_4 = arith.constant 0 : index
    %2 = vector.load %arg2[%c0_2, %c0_3, %c0_4] : memref<4x128x8xf32, #tpu.memory_space<vmem>>, vector<1x128x8xf32>
    %3 = vector.shape_cast %2 : vector<1x128x8xf32> to vector<128x8xf32>
    %cst = arith.constant dense<0.000000e+00> : vector<128x8xf32>
    %4 = tpu.matmul %1, %3, %cst {dimension_numbers = #tpu.dot_dimension_numbers<[1], [0], [0], [1], [0, 0, 1, 1], [], []>} : vector<128x128xf32>, vector<128x8xf32>, vector<128x8xf32> -> vector<128x8xf32>
    %c1 = arith.constant 1 : index
    %c0_5 = arith.constant 0 : index
    %c0_6 = arith.constant 0 : index
    %5 = vector.load %arg1[%c1, %c0_5, %c0_6] : memref<4x128x128xf32, #tpu.memory_space<vmem>>, vector<1x128x128xf32>
    %6 = vector.shape_cast %5 : vector<1x128x128xf32> to vector<128x128xf32>
    %c1_7 = arith.constant 1 : index
    %c0_8 = arith.constant 0 : index
    %c0_9 = arith.constant 0 : index
    %7 = vector.load %arg2[%c1_7, %c0_8, %c0_9] : memref<4x128x8xf32, #tpu.memory_space<vmem>>, vector<1x128x8xf32>
    %8 = vector.shape_cast %7 : vector<1x128x8xf32> to vector<128x8xf32>
    %cst_10 = arith.constant dense<0.000000e+00> : vector<128x8xf32>
    %9 = tpu.matmul %6, %8, %cst_10 {dimension_numbers = #tpu.dot_dimension_numbers<[1], [0], [0], [1], [0, 0, 1, 1], [], []>} : vector<128x128xf32>, vector<128x8xf32>, vector<128x8xf32> -> vector<128x8xf32>
    %c2 = arith.constant 2 : index
    %c0_11 = arith.constant 0 : index
    %c0_12 = arith.constant 0 : index
    %10 = vector.load %arg1[%c2, %c0_11, %c0_12] : memref<4x128x128xf32, #tpu.memory_space<vmem>>, vector<1x128x128xf32>
    %11 = vector.shape_cast %10 : vector<1x128x128xf32> to vector<128x128xf32>
    %c2_13 = arith.constant 2 : index
    %c0_14 = arith.constant 0 : index
    %c0_15 = arith.constant 0 : index
    %12 = vector.load %arg2[%c2_13, %c0_14, %c0_15] : memref<4x128x8xf32, #tpu.memory_space<vmem>>, vector<1x128x8xf32>
    %13 = vector.shape_cast %12 : vector<1x128x8xf32> to vector<128x8xf32>
    %cst_16 = arith.constant dense<0.000000e+00> : vector<128x8xf32>
    %14 = tpu.matmul %11, %13, %cst_16 {dimension_numbers = #tpu.dot_dimension_numbers<[1], [0], [0], [1], [0, 0, 1, 1], [], []>} : vector<128x128xf32>, vector<128x8xf32>, vector<128x8xf32> -> vector<128x8xf32>
    %c3 = arith.constant 3 : index
    %c0_17 = arith.constant 0 : index
    %c0_18 = arith.constant 0 : index
    %15 = vector.load %arg1[%c3, %c0_17, %c0_18] : memref<4x128x128xf32, #tpu.memory_space<vmem>>, vector<1x128x128xf32>
    %16 = vector.shape_cast %15 : vector<1x128x128xf32> to vector<128x128xf32>
    %c3_19 = arith.constant 3 : index
    %c0_20 = arith.constant 0 : index
    %c0_21 = arith.constant 0 : index
    %17 = vector.load %arg2[%c3_19, %c0_20, %c0_21] : memref<4x128x8xf32, #tpu.memory_space<vmem>>, vector<1x128x8xf32>
    %18 = vector.shape_cast %17 : vector<1x128x8xf32> to vector<128x8xf32>
    %cst_22 = arith.constant dense<0.000000e+00> : vector<128x8xf32>
    %19 = tpu.matmul %16, %18, %cst_22 {dimension_numbers = #tpu.dot_dimension_numbers<[1], [0], [0], [1], [0, 0, 1, 1], [], []>} : vector<128x128xf32>, vector<128x8xf32>, vector<128x8xf32> -> vector<128x8xf32>
    %cst_23 = arith.constant dense<0.000000e+00> : vector<8xf32>
    %20 = vector.multi_reduction <add>, %4, %cst_23 [0] : vector<128x8xf32> to vector<8xf32>
    %21 = vector.shape_cast %20 : vector<8xf32> to vector<1x8xf32>
    %cst_24 = arith.constant dense<0.000000e+00> : vector<8xf32>
    %22 = vector.multi_reduction <add>, %9, %cst_24 [0] : vector<128x8xf32> to vector<8xf32>
    %23 = vector.shape_cast %22 : vector<8xf32> to vector<1x8xf32>
    %24 = arith.addf %21, %23 : vector<1x8xf32>
    %cst_25 = arith.constant dense<0.000000e+00> : vector<8xf32>
    %25 = vector.multi_reduction <add>, %14, %cst_25 [0] : vector<128x8xf32> to vector<8xf32>
    %26 = vector.shape_cast %25 : vector<8xf32> to vector<1x8xf32>
    %27 = arith.addf %24, %26 : vector<1x8xf32>
    %cst_26 = arith.constant dense<0.000000e+00> : vector<8xf32>
    %28 = vector.multi_reduction <add>, %19, %cst_26 [0] : vector<128x8xf32> to vector<8xf32>
    %29 = vector.shape_cast %28 : vector<8xf32> to vector<1x8xf32>
    %30 = arith.addf %27, %29 : vector<1x8xf32>
    %cst_27 = arith.constant 0.001953125 : f32
    %31 = vector.broadcast %cst_27 : f32 to vector<1x8xf32>
    %32 = arith.mulf %30, %31 : vector<1x8xf32>
    %33 = vector.broadcast %32 : vector<1x8xf32> to vector<128x8xf32>
    %34 = arith.subf %4, %33 : vector<128x8xf32>
    %35 = arith.mulf %34, %34 : vector<128x8xf32>
    %cst_28 = arith.constant dense<0.000000e+00> : vector<8xf32>
    %36 = vector.multi_reduction <add>, %35, %cst_28 [0] : vector<128x8xf32> to vector<8xf32>
    %37 = vector.shape_cast %36 : vector<8xf32> to vector<1x8xf32>
    %38 = vector.broadcast %32 : vector<1x8xf32> to vector<128x8xf32>
    %39 = arith.subf %9, %38 : vector<128x8xf32>
    %40 = arith.mulf %39, %39 : vector<128x8xf32>
    %cst_29 = arith.constant dense<0.000000e+00> : vector<8xf32>
    %41 = vector.multi_reduction <add>, %40, %cst_29 [0] : vector<128x8xf32> to vector<8xf32>
    %42 = vector.shape_cast %41 : vector<8xf32> to vector<1x8xf32>
    %43 = arith.addf %37, %42 : vector<1x8xf32>
    %44 = vector.broadcast %32 : vector<1x8xf32> to vector<128x8xf32>
    %45 = arith.subf %14, %44 : vector<128x8xf32>
    %46 = arith.mulf %45, %45 : vector<128x8xf32>
    %cst_30 = arith.constant dense<0.000000e+00> : vector<8xf32>
    %47 = vector.multi_reduction <add>, %46, %cst_30 [0] : vector<128x8xf32> to vector<8xf32>
    %48 = vector.shape_cast %47 : vector<8xf32> to vector<1x8xf32>
    %49 = arith.addf %43, %48 : vector<1x8xf32>
    %50 = vector.broadcast %32 : vector<1x8xf32> to vector<128x8xf32>
    %51 = arith.subf %19, %50 : vector<128x8xf32>
    %52 = arith.mulf %51, %51 : vector<128x8xf32>
    %cst_31 = arith.constant dense<0.000000e+00> : vector<8xf32>
    %53 = vector.multi_reduction <add>, %52, %cst_31 [0] : vector<128x8xf32> to vector<8xf32>
    %54 = vector.shape_cast %53 : vector<8xf32> to vector<1x8xf32>
    %55 = arith.addf %49, %54 : vector<1x8xf32>
    %cst_32 = arith.constant 0.001953125 : f32
    %56 = vector.broadcast %cst_32 : f32 to vector<1x8xf32>
    %57 = arith.mulf %55, %56 : vector<1x8xf32>
    %c0_33 = arith.constant 0 : index
    %c0_34 = arith.constant 0 : index
    %58 = vector.load %arg3[%c0_33, %c0_34] : memref<1x8xf32, #tpu.memory_space<vmem>>, vector<1x8xf32>
    %cst_35 = arith.constant 9.99999974E-6 : f32
    %59 = vector.broadcast %cst_35 : f32 to vector<1x8xf32>
    %60 = arith.addf %57, %59 : vector<1x8xf32>
    %61 = math.rsqrt %60 : vector<1x8xf32>
    %62 = arith.mulf %58, %61 : vector<1x8xf32>
    %c0_36 = arith.constant 0 : index
    %c0_37 = arith.constant 0 : index
    %63 = vector.load %arg4[%c0_36, %c0_37] : memref<1x8xf32, #tpu.memory_space<vmem>>, vector<1x8xf32>
    %64 = arith.mulf %32, %62 : vector<1x8xf32>
    %65 = arith.subf %63, %64 : vector<1x8xf32>
    %66 = vector.broadcast %62 : vector<1x8xf32> to vector<128x8xf32>
    %67 = arith.mulf %4, %66 : vector<128x8xf32>
    %68 = vector.broadcast %65 : vector<1x8xf32> to vector<128x8xf32>
    %69 = arith.addf %67, %68 : vector<128x8xf32>
    %cst_38 = arith.constant 0.000000e+00 : f32
    %70 = vector.broadcast %cst_38 : f32 to vector<128x8xf32>
    %71 = arith.cmpf oge, %69, %70 : vector<128x8xf32>
    %cst_39 = arith.constant 0.000000e+00 : f32
    %72 = vector.broadcast %cst_39 : f32 to vector<128x8xf32>
    %73 = arith.mulf %72, %69 : vector<128x8xf32>
    %74 = arith.select %71, %69, %73 : vector<128x8xi1>, vector<128x8xf32>
    %c0_40 = arith.constant 0 : index
    %c0_41 = arith.constant 0 : index
    %c0_42 = arith.constant 0 : index
    %75 = vector.load %arg5[%c0_40, %c0_41, %c0_42] : memref<4x128x8xf32, #tpu.memory_space<vmem>>, vector<1x128x8xf32>
    %76 = vector.shape_cast %75 : vector<1x128x8xf32> to vector<128x8xf32>
    %77 = vector.shape_cast %74 : vector<128x8xf32> to vector<1x128x8xf32>
    tpu.vector_store %arg5[%c0_40, %c0_41, %c0_42], %77 {strides = array<i32>} : memref<4x128x8xf32, #tpu.memory_space<vmem>>, vector<1x128x8xf32>,
    %78 = vector.broadcast %62 : vector<1x8xf32> to vector<128x8xf32>
    %79 = arith.mulf %9, %78 : vector<128x8xf32>
    %80 = vector.broadcast %65 : vector<1x8xf32> to vector<128x8xf32>
    %81 = arith.addf %79, %80 : vector<128x8xf32>
    %cst_43 = arith.constant 0.000000e+00 : f32
    %82 = vector.broadcast %cst_43 : f32 to vector<128x8xf32>
    %83 = arith.cmpf oge, %81, %82 : vector<128x8xf32>
    %cst_44 = arith.constant 0.000000e+00 : f32
    %84 = vector.broadcast %cst_44 : f32 to vector<128x8xf32>
    %85 = arith.mulf %84, %81 : vector<128x8xf32>
    %86 = arith.select %83, %81, %85 : vector<128x8xi1>, vector<128x8xf32>
    %c1_45 = arith.constant 1 : index
    %c0_46 = arith.constant 0 : index
    %c0_47 = arith.constant 0 : index
    %87 = vector.load %arg5[%c1_45, %c0_46, %c0_47] : memref<4x128x8xf32, #tpu.memory_space<vmem>>, vector<1x128x8xf32>
    %88 = vector.shape_cast %87 : vector<1x128x8xf32> to vector<128x8xf32>
    %89 = vector.shape_cast %86 : vector<128x8xf32> to vector<1x128x8xf32>
    tpu.vector_store %arg5[%c1_45, %c0_46, %c0_47], %89 {strides = array<i32>} : memref<4x128x8xf32, #tpu.memory_space<vmem>>, vector<1x128x8xf32>,
    %90 = vector.broadcast %62 : vector<1x8xf32> to vector<128x8xf32>
    %91 = arith.mulf %14, %90 : vector<128x8xf32>
    %92 = vector.broadcast %65 : vector<1x8xf32> to vector<128x8xf32>
    %93 = arith.addf %91, %92 : vector<128x8xf32>
    %cst_48 = arith.constant 0.000000e+00 : f32
    %94 = vector.broadcast %cst_48 : f32 to vector<128x8xf32>
    %95 = arith.cmpf oge, %93, %94 : vector<128x8xf32>
    %cst_49 = arith.constant 0.000000e+00 : f32
    %96 = vector.broadcast %cst_49 : f32 to vector<128x8xf32>
    %97 = arith.mulf %96, %93 : vector<128x8xf32>
    %98 = arith.select %95, %93, %97 : vector<128x8xi1>, vector<128x8xf32>
    %c2_50 = arith.constant 2 : index
    %c0_51 = arith.constant 0 : index
    %c0_52 = arith.constant 0 : index
    %99 = vector.load %arg5[%c2_50, %c0_51, %c0_52] : memref<4x128x8xf32, #tpu.memory_space<vmem>>, vector<1x128x8xf32>
    %100 = vector.shape_cast %99 : vector<1x128x8xf32> to vector<128x8xf32>
    %101 = vector.shape_cast %98 : vector<128x8xf32> to vector<1x128x8xf32>
    tpu.vector_store %arg5[%c2_50, %c0_51, %c0_52], %101 {strides = array<i32>} : memref<4x128x8xf32, #tpu.memory_space<vmem>>, vector<1x128x8xf32>,
    %102 = vector.broadcast %62 : vector<1x8xf32> to vector<128x8xf32>
    %103 = arith.mulf %19, %102 : vector<128x8xf32>
    %104 = vector.broadcast %65 : vector<1x8xf32> to vector<128x8xf32>
    %105 = arith.addf %103, %104 : vector<128x8xf32>
    %cst_53 = arith.constant 0.000000e+00 : f32
    %106 = vector.broadcast %cst_53 : f32 to vector<128x8xf32>
    %107 = arith.cmpf oge, %105, %106 : vector<128x8xf32>
    %cst_54 = arith.constant 0.000000e+00 : f32
    %108 = vector.broadcast %cst_54 : f32 to vector<128x8xf32>
    %109 = arith.mulf %108, %105 : vector<128x8xf32>
    %110 = arith.select %107, %105, %109 : vector<128x8xi1>, vector<128x8xf32>
    %c3_55 = arith.constant 3 : index
    %c0_56 = arith.constant 0 : index
    %c0_57 = arith.constant 0 : index
    %111 = vector.load %arg5[%c3_55, %c0_56, %c0_57] : memref<4x128x8xf32, #tpu.memory_space<vmem>>, vector<1x128x8xf32>
    %112 = vector.shape_cast %111 : vector<1x128x8xf32> to vector<128x8xf32>
    %113 = vector.shape_cast %110 : vector<128x8xf32> to vector<1x128x8xf32>
    tpu.vector_store %arg5[%c3_55, %c0_56, %c0_57], %113 {strides = array<i32>} : memref<4x128x8xf32, #tpu.memory_space<vmem>>, vector<1x128x8xf32>,
    return
  }
  func.func @transform_0(%arg0: i32) -> (i32, i32, i32) {
    %c0_i32 = arith.constant 0 : i32
    %c0_i32_0 = arith.constant 0 : i32
    %c0_i32_1 = arith.constant 0 : i32
    %c0_i32_2 = arith.constant 0 : i32
    return %c0_i32, %c0_i32_0, %c0_i32_1 : i32, i32, i32
  }
  func.func @transform_1(%arg0: i32) -> (i32, i32, i32) {
    %c0_i32 = arith.constant 0 : i32
    %c0_i32_0 = arith.constant 0 : i32
    %c0_i32_1 = arith.constant 0 : i32
    %c0_i32_2 = arith.constant 0 : i32
    return %c0_i32, %c0_i32_0, %c0_i32_1 : i32, i32, i32
  }
  func.func @transform_2(%arg0: i32) -> (i32, i32) {
    %c0_i32 = arith.constant 0 : i32
    %c0_i32_0 = arith.constant 0 : i32
    %c0_i32_1 = arith.constant 0 : i32
    return %c0_i32, %c0_i32_0 : i32, i32
  }
  func.func @transform_3(%arg0: i32) -> (i32, i32) {
    %c0_i32 = arith.constant 0 : i32
    %c0_i32_0 = arith.constant 0 : i32
    %c0_i32_1 = arith.constant 0 : i32
    return %c0_i32, %c0_i32_0 : i32, i32
  }
  func.func @transform_4(%arg0: i32) -> (i32, i32, i32) {
    %c0_i32 = arith.constant 0 : i32
    %c0_i32_0 = arith.constant 0 : i32
    %c0_i32_1 = arith.constant 0 : i32
    %c0_i32_2 = arith.constant 0 : i32
    return %c0_i32, %c0_i32_0, %c0_i32_1 : i32, i32, i32
  }
}

module attributes {stable_mosaic.version = 11 : i64} {
  func.func @_matmul_kernel(%arg0: i32, %arg1: memref<512x16xf32, #tpu.memory_space<vmem>>, %arg2: memref<16x3xf32, #tpu.memory_space<vmem>>, %arg3: memref<512x3xf32, #tpu.memory_space<vmem>>) attributes {dimension_semantics = [#tpu.dimension_semantics<arbitrary>], iteration_bounds = array<i64: 1>, scalar_prefetch = 0 : i64, scratch_operands = 0 : i64, tpu.core_type = #tpu.core_type<tc>, window_params = [{pipeline_mode = #tpu.pipeline_mode<synchronous>, transform_indices = @transform_0, window_bounds = array<i64: 512, 16>}, {pipeline_mode = #tpu.pipeline_mode<synchronous>, transform_indices = @transform_1, window_bounds = array<i64: 16, 3>}, {pipeline_mode = #tpu.pipeline_mode<synchronous>, transform_indices = @transform_2, window_bounds = array<i64: 512, 3>}]} {
    %c0 = arith.constant 0 : index
    %c0_0 = arith.constant 0 : index
    %0 = vector.load %arg1[%c0, %c0_0] : memref<512x16xf32, #tpu.memory_space<vmem>>, vector<512x16xf32>
    %c0_1 = arith.constant 0 : index
    %c0_2 = arith.constant 0 : index
    %1 = vector.load %arg2[%c0_1, %c0_2] : memref<16x3xf32, #tpu.memory_space<vmem>>, vector<16x3xf32>
    %cst = arith.constant dense<0.000000e+00> : vector<512x3xf32>
    %2 = tpu.matmul %0, %1, %cst {dimension_numbers = #tpu.dot_dimension_numbers<[1], [0], [0], [1], [0, 0, 1, 1], [], []>} : vector<512x16xf32>, vector<16x3xf32>, vector<512x3xf32> -> vector<512x3xf32>
    %c0_3 = arith.constant 0 : index
    %c0_4 = arith.constant 0 : index
    %3 = vector.load %arg3[%c0_3, %c0_4] : memref<512x3xf32, #tpu.memory_space<vmem>>, vector<512x3xf32>
    tpu.vector_store %arg3[%c0_3, %c0_4], %2 {strides = array<i32>} : memref<512x3xf32, #tpu.memory_space<vmem>>, vector<512x3xf32>,
    return
  }
  func.func @transform_0(%arg0: i32) -> (i32, i32) {
    %c0_i32 = arith.constant 0 : i32
    %c0_i32_0 = arith.constant 0 : i32
    %c0_i32_1 = arith.constant 0 : i32
    return %c0_i32, %c0_i32_0 : i32, i32
  }
  func.func @transform_1(%arg0: i32) -> (i32, i32) {
    %c0_i32 = arith.constant 0 : i32
    %c0_i32_0 = arith.constant 0 : i32
    %c0_i32_1 = arith.constant 0 : i32
    return %c0_i32, %c0_i32_0 : i32, i32
  }
  func.func @transform_2(%arg0: i32) -> (i32, i32) {
    %c0_i32 = arith.constant 0 : i32
    %c0_i32_0 = arith.constant 0 : i32
    %c0_i32_1 = arith.constant 0 : i32
    return %c0_i32, %c0_i32_0 : i32, i32
  }
}

module attributes {stable_mosaic.version = 11 : i64} {
  func.func @_bilinear_tanh_kernel(%arg0: i32, %arg1: memref<1x3x16x16xf32, #tpu.memory_space<vmem>>, %arg2: memref<256x16xf32, #tpu.memory_space<vmem>>, %arg3: memref<16x256xf32, #tpu.memory_space<vmem>>, %arg4: memref<1x3x256x256xf32, #tpu.memory_space<vmem>>) attributes {dimension_semantics = [#tpu.dimension_semantics<parallel>], iteration_bounds = array<i64: 2>, scalar_prefetch = 0 : i64, scratch_operands = 0 : i64, tpu.core_type = #tpu.core_type<tc>, window_params = [{transform_indices = @transform_0, window_bounds = array<i64: 1, 3, 16, 16>}, {pipeline_mode = #tpu.pipeline_mode<synchronous>, transform_indices = @transform_1, window_bounds = array<i64: 256, 16>}, {pipeline_mode = #tpu.pipeline_mode<synchronous>, transform_indices = @transform_2, window_bounds = array<i64: 16, 256>}, {transform_indices = @transform_3, window_bounds = array<i64: 1, 3, 256, 256>}]} {
    %c0 = arith.constant 0 : index
    %c0_0 = arith.constant 0 : index
    %0 = vector.load %arg2[%c0, %c0_0] : memref<256x16xf32, #tpu.memory_space<vmem>>, vector<256x16xf32>
    %c0_1 = arith.constant 0 : index
    %c0_2 = arith.constant 0 : index
    %1 = vector.load %arg3[%c0_1, %c0_2] : memref<16x256xf32, #tpu.memory_space<vmem>>, vector<16x256xf32>
    %c0_3 = arith.constant 0 : index
    %c0_4 = arith.constant 0 : index
    %c0_5 = arith.constant 0 : index
    %c0_6 = arith.constant 0 : index
    %2 = vector.load %arg1[%c0_3, %c0_4, %c0_5, %c0_6] : memref<1x3x16x16xf32, #tpu.memory_space<vmem>>, vector<1x1x16x16xf32>
    %3 = vector.shape_cast %2 : vector<1x1x16x16xf32> to vector<16x16xf32>
    %cst = arith.constant dense<0.000000e+00> : vector<16x256xf32>
    %4 = tpu.matmul %3, %1, %cst {dimension_numbers = #tpu.dot_dimension_numbers<[1], [0], [0], [1], [0, 0, 1, 1], [], []>} : vector<16x16xf32>, vector<16x256xf32>, vector<16x256xf32> -> vector<16x256xf32>
    %cst_7 = arith.constant dense<0.000000e+00> : vector<256x256xf32>
    %5 = tpu.matmul %0, %4, %cst_7 {dimension_numbers = #tpu.dot_dimension_numbers<[1], [0], [0], [1], [0, 0, 1, 1], [], []>} : vector<256x16xf32>, vector<16x256xf32>, vector<256x256xf32> -> vector<256x256xf32>
    %6 = math.tanh %5 : vector<256x256xf32>
    %c0_8 = arith.constant 0 : index
    %c0_9 = arith.constant 0 : index
    %c0_10 = arith.constant 0 : index
    %c0_11 = arith.constant 0 : index
    %7 = vector.load %arg4[%c0_8, %c0_9, %c0_10, %c0_11] : memref<1x3x256x256xf32, #tpu.memory_space<vmem>>, vector<1x1x256x256xf32>
    %8 = vector.shape_cast %7 : vector<1x1x256x256xf32> to vector<256x256xf32>
    %9 = vector.shape_cast %6 : vector<256x256xf32> to vector<1x1x256x256xf32>
    tpu.vector_store %arg4[%c0_8, %c0_9, %c0_10, %c0_11], %9 {strides = array<i32>} : memref<1x3x256x256xf32, #tpu.memory_space<vmem>>, vector<1x1x256x256xf32>,
    %c0_12 = arith.constant 0 : index
    %c1 = arith.constant 1 : index
    %c0_13 = arith.constant 0 : index
    %c0_14 = arith.constant 0 : index
    %10 = vector.load %arg1[%c0_12, %c1, %c0_13, %c0_14] : memref<1x3x16x16xf32, #tpu.memory_space<vmem>>, vector<1x1x16x16xf32>
    %11 = vector.shape_cast %10 : vector<1x1x16x16xf32> to vector<16x16xf32>
    %cst_15 = arith.constant dense<0.000000e+00> : vector<16x256xf32>
    %12 = tpu.matmul %11, %1, %cst_15 {dimension_numbers = #tpu.dot_dimension_numbers<[1], [0], [0], [1], [0, 0, 1, 1], [], []>} : vector<16x16xf32>, vector<16x256xf32>, vector<16x256xf32> -> vector<16x256xf32>
    %cst_16 = arith.constant dense<0.000000e+00> : vector<256x256xf32>
    %13 = tpu.matmul %0, %12, %cst_16 {dimension_numbers = #tpu.dot_dimension_numbers<[1], [0], [0], [1], [0, 0, 1, 1], [], []>} : vector<256x16xf32>, vector<16x256xf32>, vector<256x256xf32> -> vector<256x256xf32>
    %14 = math.tanh %13 : vector<256x256xf32>
    %c0_17 = arith.constant 0 : index
    %c1_18 = arith.constant 1 : index
    %c0_19 = arith.constant 0 : index
    %c0_20 = arith.constant 0 : index
    %15 = vector.load %arg4[%c0_17, %c1_18, %c0_19, %c0_20] : memref<1x3x256x256xf32, #tpu.memory_space<vmem>>, vector<1x1x256x256xf32>
    %16 = vector.shape_cast %15 : vector<1x1x256x256xf32> to vector<256x256xf32>
    %17 = vector.shape_cast %14 : vector<256x256xf32> to vector<1x1x256x256xf32>
    tpu.vector_store %arg4[%c0_17, %c1_18, %c0_19, %c0_20], %17 {strides = array<i32>} : memref<1x3x256x256xf32, #tpu.memory_space<vmem>>, vector<1x1x256x256xf32>,
    %c0_21 = arith.constant 0 : index
    %c2 = arith.constant 2 : index
    %c0_22 = arith.constant 0 : index
    %c0_23 = arith.constant 0 : index
    %18 = vector.load %arg1[%c0_21, %c2, %c0_22, %c0_23] : memref<1x3x16x16xf32, #tpu.memory_space<vmem>>, vector<1x1x16x16xf32>
    %19 = vector.shape_cast %18 : vector<1x1x16x16xf32> to vector<16x16xf32>
    %cst_24 = arith.constant dense<0.000000e+00> : vector<16x256xf32>
    %20 = tpu.matmul %19, %1, %cst_24 {dimension_numbers = #tpu.dot_dimension_numbers<[1], [0], [0], [1], [0, 0, 1, 1], [], []>} : vector<16x16xf32>, vector<16x256xf32>, vector<16x256xf32> -> vector<16x256xf32>
    %cst_25 = arith.constant dense<0.000000e+00> : vector<256x256xf32>
    %21 = tpu.matmul %0, %20, %cst_25 {dimension_numbers = #tpu.dot_dimension_numbers<[1], [0], [0], [1], [0, 0, 1, 1], [], []>} : vector<256x16xf32>, vector<16x256xf32>, vector<256x256xf32> -> vector<256x256xf32>
    %22 = math.tanh %21 : vector<256x256xf32>
    %c0_26 = arith.constant 0 : index
    %c2_27 = arith.constant 2 : index
    %c0_28 = arith.constant 0 : index
    %c0_29 = arith.constant 0 : index
    %23 = vector.load %arg4[%c0_26, %c2_27, %c0_28, %c0_29] : memref<1x3x256x256xf32, #tpu.memory_space<vmem>>, vector<1x1x256x256xf32>
    %24 = vector.shape_cast %23 : vector<1x1x256x256xf32> to vector<256x256xf32>
    %25 = vector.shape_cast %22 : vector<256x256xf32> to vector<1x1x256x256xf32>
    tpu.vector_store %arg4[%c0_26, %c2_27, %c0_28, %c0_29], %25 {strides = array<i32>} : memref<1x3x256x256xf32, #tpu.memory_space<vmem>>, vector<1x1x256x256xf32>,
    return
  }
  func.func @transform_0(%arg0: i32) -> (i32, i32, i32, i32) {
    %c0_i32 = arith.constant 0 : i32
    %c0_i32_0 = arith.constant 0 : i32
    %c0_i32_1 = arith.constant 0 : i32
    %c0_i32_2 = arith.constant 0 : i32
    return %arg0, %c0_i32, %c0_i32_0, %c0_i32_1 : i32, i32, i32, i32
  }
  func.func @transform_1(%arg0: i32) -> (i32, i32) {
    %c0_i32 = arith.constant 0 : i32
    %c0_i32_0 = arith.constant 0 : i32
    %c0_i32_1 = arith.constant 0 : i32
    return %c0_i32, %c0_i32_0 : i32, i32
  }
  func.func @transform_2(%arg0: i32) -> (i32, i32) {
    %c0_i32 = arith.constant 0 : i32
    %c0_i32_0 = arith.constant 0 : i32
    %c0_i32_1 = arith.constant 0 : i32
    return %c0_i32, %c0_i32_0 : i32, i32
  }
  func.func @transform_3(%arg0: i32) -> (i32, i32, i32, i32) {
    %c0_i32 = arith.constant 0 : i32
    %c0_i32_0 = arith.constant 0 : i32
    %c0_i32_1 = arith.constant 0 : i32
    %c0_i32_2 = arith.constant 0 : i32
    return %arg0, %c0_i32, %c0_i32_0, %c0_i32_1 : i32, i32, i32, i32
  }
}

</mosaic_0001>

<llo_original>
// kernel: unet_forward.9
$region0: #{unet_forward.9}
  #allocation0 [shape = 'u32[]', space=smem, size = 0x4, offset = 0x4, fixed_abs, tag = 'smem constant byte address 0x4 - core index']
  #allocation1 [shape = 'u32[144,128]{1,0:T(1,128)}', space=vmem, size = 0x12000, scoped, tag = 'internal scratch']
  %s0 = inlined_call_operand.vmem [shape: f32[1,512,48], index: 0, kind: input, shape index: {}]
  %s1 = inlined_call_operand.vmem [shape: f32[1,48,8], index: 1, kind: input, shape index: {}]
  %s2 = inlined_call_operand.vmem [shape: f32[1,8], index: 2, kind: input, shape index: {}]
  %s3 = inlined_call_operand.vmem [shape: f32[1,8], index: 3, kind: input, shape index: {}]
  %s4 = inlined_call_operand.vmem [shape: f32[1,512,8], index: 4, kind: output, shape index: {}]
  %s5 = sld [smem:[#allocation0]]
  $region26: #{unet_forward.9} parent=0
    _
  %s7 = ssub.s32 1, %s5
  %s8 = scalar_select 0, %s7, %s5
  // Predicated region
  $region2: #{unet_forward.9} parent=0 // pred_check
    _
  $region3: #{unet_forward.9} parent=0 // pred_check_branch
    %10 = sbr.rel (0) target = $region5
  $region4: #{unet_forward.9} parent=0 // pred_region
    _
  $region5: #{unet_forward.9} parent=0 // pred_fallthru
    _
  // Predicated region
  $region6: #{unet_forward.9} parent=0 // pred_check
    _
  $region7: #{unet_forward.9} parent=0 // pred_check_branch
    %12 = sbr.rel (0) target = $region9
  $region8: #{unet_forward.9} parent=0 // pred_region
    _
  $region9: #{unet_forward.9} parent=0 // pred_fallthru
    _
  // Predicated region
  $region10: #{unet_forward.9} parent=0 // pred_check
    _
  $region11: #{unet_forward.9} parent=0 // pred_check_branch
    %14 = sbr.rel (0) target = $region13
  $region12: #{unet_forward.9} parent=0 // pred_region
    _
  $region13: #{unet_forward.9} parent=0 // pred_fallthru
    _
  // Predicated region
  $region14: #{unet_forward.9} parent=0 // pred_check
    _
  $region15: #{unet_forward.9} parent=0 // pred_check_branch
    %16 = sbr.rel (0) target = $region17
  $region16: #{unet_forward.9} parent=0 // pred_region
    _
  $region17: #{unet_forward.9} parent=0 // pred_fallthru
    _
  %v17 = vld [vmem:[%s0] sm:$0xff]
  %v18 = vld [vmem:[%s0 + $0x8] sm:$0xff]
  %v19 = vld [vmem:[%s0 + $0x10] sm:$0xff]
  %v20 = vld [vmem:[%s0 + $0x18] sm:$0xff]
  %v21 = vld [vmem:[%s0 + $0x20] sm:$0xff]
  %v22 = vld [vmem:[%s0 + $0x28] sm:$0xff]
  %v23 = vld [vmem:[%s0 + $0x30] sm:$0xff]
  %v24 = vld [vmem:[%s0 + $0x38] sm:$0xff]
  %v25 = vld [vmem:[%s0 + $0x40] sm:$0xff]
  %v26 = vld [vmem:[%s0 + $0x48] sm:$0xff]
  %v27 = vld [vmem:[%s0 + $0x50] sm:$0xff]
  %v28 = vld [vmem:[%s0 + $0x58] sm:$0xff]
  %v29 = vld [vmem:[%s0 + $0x60] sm:$0xff]
  %v30 = vld [vmem:[%s0 + $0x68] sm:$0xff]
  %v31 = vld [vmem:[%s0 + $0x70] sm:$0xff]
  %v32 = vld [vmem:[%s0 + $0x78] sm:$0xff]
  %v33 = vld [vmem:[%s0 + $0x80] sm:$0xff]
  %v34 = vld [vmem:[%s0 + $0x88] sm:$0xff]
  %v35 = vld [vmem:[%s0 + $0x90] sm:$0xff]
  %v36 = vld [vmem:[%s0 + $0x98] sm:$0xff]
  %v37 = vld [vmem:[%s0 + $0xa0] sm:$0xff]
  %v38 = vld [vmem:[%s0 + $0xa8] sm:$0xff]
  %v39 = vld [vmem:[%s0 + $0xb0] sm:$0xff]
  %v40 = vld [vmem:[%s0 + $0xb8] sm:$0xff]
  %v41 = vld [vmem:[%s0 + $0xc0] sm:$0xff]
  %v42 = vld [vmem:[%s0 + $0xc8] sm:$0xff]
  %v43 = vld [vmem:[%s0 + $0xd0] sm:$0xff]
  %v44 = vld [vmem:[%s0 + $0xd8] sm:$0xff]
  %v45 = vld [vmem:[%s0 + $0xe0] sm:$0xff]
  %v46 = vld [vmem:[%s0 + $0xe8] sm:$0xff]
  %v47 = vld [vmem:[%s0 + $0xf0] sm:$0xff]
  %v48 = vld [vmem:[%s0 + $0xf8] sm:$0xff]
  %v49 = vld [vmem:[%s0 + $0x100] sm:$0xff]
  %v50 = vld [vmem:[%s0 + $0x108] sm:$0xff]
  %v51 = vld [vmem:[%s0 + $0x110] sm:$0xff]
  %v52 = vld [vmem:[%s0 + $0x118] sm:$0xff]
  %v53 = vld [vmem:[%s0 + $0x120] sm:$0xff]
  %v54 = vld [vmem:[%s0 + $0x128] sm:$0xff]
  %v55 = vld [vmem:[%s0 + $0x130] sm:$0xff]
  %v56 = vld [vmem:[%s0 + $0x138] sm:$0xff]
  %v57 = vld [vmem:[%s0 + $0x140] sm:$0xff]
  %v58 = vld [vmem:[%s0 + $0x148] sm:$0xff]
  %v59 = vld [vmem:[%s0 + $0x150] sm:$0xff]
  %v60 = vld [vmem:[%s0 + $0x158] sm:$0xff]
  %v61 = vld [vmem:[%s0 + $0x160] sm:$0xff]
  %v62 = vld [vmem:[%s0 + $0x168] sm:$0xff]
  %v63 = vld [vmem:[%s0 + $0x170] sm:$0xff]
  %v64 = vld [vmem:[%s0 + $0x178] sm:$0xff]
  %v65 = vld [vmem:[%s0 + $0x180] sm:$0xff]
  %v66 = vld [vmem:[%s0 + $0x188] sm:$0xff]
  %v67 = vld [vmem:[%s0 + $0x190] sm:$0xff]
  %v68 = vld [vmem:[%s0 + $0x198] sm:$0xff]
  %v69 = vld [vmem:[%s0 + $0x1a0] sm:$0xff]
  %v70 = vld [vmem:[%s0 + $0x1a8] sm:$0xff]
  %v71 = vld [vmem:[%s0 + $0x1b0] sm:$0xff]
  %v72 = vld [vmem:[%s0 + $0x1b8] sm:$0xff]
  %v73 = vld [vmem:[%s0 + $0x1c0] sm:$0xff]
  %v74 = vld [vmem:[%s0 + $0x1c8] sm:$0xff]
  %v75 = vld [vmem:[%s0 + $0x1d0] sm:$0xff]
  %v76 = vld [vmem:[%s0 + $0x1d8] sm:$0xff]
  %v77 = vld [vmem:[%s0 + $0x1e0] sm:$0xff]
  %v78 = vld [vmem:[%s0 + $0x1e8] sm:$0xff]
  %v79 = vld [vmem:[%s0 + $0x1f0] sm:$0xff]
  %v80 = vld [vmem:[%s0 + $0x1f8] sm:$0xff]
  %v81 = vld [vmem:[%s1] sm:$0xff]
  %v82 = vld [vmem:[%s1 + $0x8] sm:$0xff]
  %v83 = vld [vmem:[%s1 + $0x10] sm:$0xff]
  %v84 = vld [vmem:[%s1 + $0x18] sm:$0xff]
  %v85 = vld [vmem:[%s1 + $0x20] sm:$0xff]
  %v86 = vld [vmem:[%s1 + $0x28] sm:$0xff]
  %vm87 = vcmask 392192
  %v89 = vsel %vm87, %v17, 0
  %v92 = vsel %vm87, %v18, 0
  %v95 = vsel %vm87, %v19, 0
  %v98 = vsel %vm87, %v20, 0
  %v101 = vsel %vm87, %v21, 0
  %v104 = vsel %vm87, %v22, 0
  %v107 = vsel %vm87, %v23, 0
  %v110 = vsel %vm87, %v24, 0
  %v113 = vsel %vm87, %v25, 0
  %v116 = vsel %vm87, %v26, 0
  %v119 = vsel %vm87, %v27, 0
  %v122 = vsel %vm87, %v28, 0
  %v125 = vsel %vm87, %v29, 0
  %v128 = vsel %vm87, %v30, 0
  %v131 = vsel %vm87, %v31, 0
  %v134 = vsel %vm87, %v32, 0
  %v137 = vsel %vm87, %v33, 0
  %v140 = vsel %vm87, %v34, 0
  %v143 = vsel %vm87, %v35, 0
  %v146 = vsel %vm87, %v36, 0
  %v149 = vsel %vm87, %v37, 0
  %v152 = vsel %vm87, %v38, 0
  %v155 = vsel %vm87, %v39, 0
  %v158 = vsel %vm87, %v40, 0
  %v161 = vsel %vm87, %v41, 0
  %v164 = vsel %vm87, %v42, 0
  %v167 = vsel %vm87, %v43, 0
  %v170 = vsel %vm87, %v44, 0
  %v173 = vsel %vm87, %v45, 0
  %v176 = vsel %vm87, %v46, 0
  %v179 = vsel %vm87, %v47, 0
  %v182 = vsel %vm87, %v48, 0
  %v185 = vsel %vm87, %v49, 0
  %v188 = vsel %vm87, %v50, 0
  %v191 = vsel %vm87, %v51, 0
  %v194 = vsel %vm87, %v52, 0
  %v197 = vsel %vm87, %v53, 0
  %v200 = vsel %vm87, %v54, 0
  %v203 = vsel %vm87, %v55, 0
  %v206 = vsel %vm87, %v56, 0
  %v209 = vsel %vm87, %v57, 0
  %v212 = vsel %vm87, %v58, 0
  %v215 = vsel %vm87, %v59, 0
  %v218 = vsel %vm87, %v60, 0
  %v221 = vsel %vm87, %v61, 0
  %v224 = vsel %vm87, %v62, 0
  %v227 = vsel %vm87, %v63, 0
  %v230 = vsel %vm87, %v64, 0
  %v233 = vsel %vm87, %v65, 0
  %v236 = vsel %vm87, %v66, 0
  %v239 = vsel %vm87, %v67, 0
  %v242 = vsel %vm87, %v68, 0
  %v245 = vsel %vm87, %v69, 0
  %v248 = vsel %vm87, %v70, 0
  %v251 = vsel %vm87, %v71, 0
  %v254 = vsel %vm87, %v72, 0
  %v257 = vsel %vm87, %v73, 0
  %v260 = vsel %vm87, %v74, 0
  %v263 = vsel %vm87, %v75, 0
  %v266 = vsel %vm87, %v76, 0
  %v269 = vsel %vm87, %v77, 0
  %v272 = vsel %vm87, %v78, 0
  %v275 = vsel %vm87, %v79, 0
  %v278 = vsel %vm87, %v80, 0
  %280 = vmatprep.subr.mxu0 0.0
  %281 = vmatpush1.msra.mxu0 %v81
  %282 = vmatprep.subr.mxu0 0.0
  %283 = vmatpush1.msra.mxu0 %v82
  %284 = vmatprep.subr.mxu0 0.0
  %285 = vmatpush1.msra.mxu0 %v83
  %286 = vmatprep.subr.mxu0 0.0
  %287 = vmatpush1.msra.mxu0 %v84
  %288 = vmatprep.subr.mxu0 0.0
  %289 = vmatpush1.msra.mxu0 %v85
  %290 = vmatprep.subr.mxu0 0.0
  %291 = vmatpush1.msra.mxu0 %v86
  %292 = vmatprep.subr.mxu0 0.0
  %293 = vmatpush1.msra.mxu0 0.0
  %294 = vmatprep.subr.mxu0 0.0
  %295 = vmatpush1.msra.mxu0 0.0
  %296 = vmatprep.subr.mxu0 0.0
  %297 = vmatpush1.msra.mxu0 0.0
  %298 = vmatprep.subr.mxu0 0.0
  %299 = vmatpush1.msra.mxu0 0.0
  %300 = vmatprep.subr.mxu0 0.0
  %301 = vmatpush1.msra.mxu0 0.0
  %302 = vmatprep.subr.mxu0 0.0
  %303 = vmatpush1.msra.mxu0 0.0
  %304 = vmatprep.subr.mxu0 0.0
  %305 = vmatpush1.msra.mxu0 0.0
  %306 = vmatprep.subr.mxu0 0.0
  %307 = vmatpush1.msra.mxu0 0.0
  %308 = vmatprep.subr.mxu0 0.0
  %309 = vmatpush1.msra.mxu0 0.0
  %310 = vmatprep.subr.mxu0 0.0
  %311 = vmatpush1.msra.mxu0 0.0
  %312 = vmatprep.subr.mxu0 0.0
  %313 = vmatpush1.msra.mxu0 0.0
  %314 = vmatprep.subr.mxu0 0.0
  %315 = vmatpush1.msra.mxu0 0.0
  %316 = vmatprep.subr.mxu0 0.0
  %317 = vmatpush1.msra.mxu0 0.0
  %318 = vmatprep.subr.mxu0 0.0
  %319 = vmatpush1.msra.mxu0 0.0
  %320 = vmatprep.subr.mxu0 0.0
  %321 = vmatpush1.msra.mxu0 0.0
  %322 = vmatprep.subr.mxu0 0.0
  %323 = vmatpush1.msra.mxu0 0.0
  %324 = vmatprep.subr.mxu0 0.0
  %325 = vmatpush1.msra.mxu0 0.0
  %326 = vmatprep.subr.mxu0 0.0
  %327 = vmatpush1.msra.mxu0 0.0
  %328 = vmatprep.subr.mxu0 0.0
  %329 = vmatpush1.msra.mxu0 0.0
  %330 = vmatprep.subr.mxu0 0.0
  %331 = vmatpush1.msra.mxu0 0.0
  %332 = vmatprep.subr.mxu0 0.0
  %333 = vmatpush1.msra.mxu0 0.0
  %334 = vmatprep.subr.mxu0 0.0
  %335 = vmatpush1.msra.mxu0 0.0
  %336 = vmatprep.subr.mxu0 0.0
  %337 = vmatpush1.msra.mxu0 0.0
  %338 = vmatprep.subr.mxu0 0.0
  %339 = vmatpush1.msra.mxu0 0.0
  %340 = vmatprep.subr.mxu0 0.0
  %341 = vmatpush1.msra.mxu0 0.0
  %342 = vmatprep.subr.mxu0 0.0
  %343 = vmatpush1.msra.mxu0 0.0
  %344 = vmatprep.mubr.f32.mxu0 0.0
  %345 = vmatmul.mubr.f32.gmra.mrb[0].mxu0 %v89
  %v346 = vpop.f32.mrb[0].mxu0
  %v347 = vadd.f32 0.0, %v346
  %v348 = vpop.f32.mrb[0].mxu0
  %349 = vmatprep.mubr.f32.mxu0 0.0
  %350 = vmatmul.mubr.f32.gmra.mrb[0].mxu0 %v92
  %v351 = vpop.f32.mrb[0].mxu0
  %v352 = vadd.f32 0.0, %v351
  %v353 = vpop.f32.mrb[0].mxu0
  %354 = vmatprep.mubr.f32.mxu0 0.0
  %355 = vmatmul.mubr.f32.gmra.mrb[0].mxu0 %v95
  %v356 = vpop.f32.mrb[0].mxu0
  %v357 = vadd.f32 0.0, %v356
  %v358 = vpop.f32.mrb[0].mxu0
  %359 = vmatprep.mubr.f32.mxu0 0.0
  %360 = vmatmul.mubr.f32.gmra.mrb[0].mxu0 %v98
  %v361 = vpop.f32.mrb[0].mxu0
  %v362 = vadd.f32 0.0, %v361
  %v363 = vpop.f32.mrb[0].mxu0
  %364 = vmatprep.mubr.f32.mxu0 0.0
  %365 = vmatmul.mubr.f32.gmra.mrb[0].mxu0 %v101
  %v366 = vpop.f32.mrb[0].mxu0
  %v367 = vadd.f32 0.0, %v366
  %v368 = vpop.f32.mrb[0].mxu0
  %369 = vmatprep.mubr.f32.mxu0 0.0
  %370 = vmatmul.mubr.f32.gmra.mrb[0].mxu0 %v104
  %v371 = vpop.f32.mrb[0].mxu0
  %v372 = vadd.f32 0.0, %v371
  %v373 = vpop.f32.mrb[0].mxu0
  %374 = vmatprep.mubr.f32.mxu0 0.0
  %375 = vmatmul.mubr.f32.gmra.mrb[0].mxu0 %v107
  %v376 = vpop.f32.mrb[0].mxu0
  %v377 = vadd.f32 0.0, %v376
  %v378 = vpop.f32.mrb[0].mxu0
  %379 = vmatprep.mubr.f32.mxu0 0.0
  %380 = vmatmul.mubr.f32.gmra.mrb[0].mxu0 %v110
  %v381 = vpop.f32.mrb[0].mxu0
  %v382 = vadd.f32 0.0, %v381
  %v383 = vpop.f32.mrb[0].mxu0
  %384 = vmatprep.mubr.f32.mxu0 0.0
  %385 = vmatmul.mubr.f32.gmra.mrb[0].mxu0 %v113
  %v386 = vpop.f32.mrb[0].mxu0
  %v387 = vadd.f32 0.0, %v386
  %v388 = vpop.f32.mrb[0].mxu0
  %389 = vmatprep.mubr.f32.mxu0 0.0
  %390 = vmatmul.mubr.f32.gmra.mrb[0].mxu0 %v116
  %v391 = vpop.f32.mrb[0].mxu0
  %v392 = vadd.f32 0.0, %v391
  %v393 = vpop.f32.mrb[0].mxu0
  %394 = vmatprep.mubr.f32.mxu0 0.0
  %395 = vmatmul.mubr.f32.gmra.mrb[0].mxu0 %v119
  %v396 = vpop.f32.mrb[0].mxu0
  %v397 = vadd.f32 0.0, %v396
  %v398 = vpop.f32.mrb[0].mxu0
  %399 = vmatprep.mubr.f32.mxu0 0.0
  %400 = vmatmul.mubr.f32.gmra.mrb[0].mxu0 %v122
  %v401 = vpop.f32.mrb[0].mxu0
  %v402 = vadd.f32 0.0, %v401
  %v403 = vpop.f32.mrb[0].mxu0
  %404 = vmatprep.mubr.f32.mxu0 0.0
  %405 = vmatmul.mubr.f32.gmra.mrb[0].mxu0 %v125
  %v406 = vpop.f32.mrb[0].mxu0
  %v407 = vadd.f32 0.0, %v406
  %v408 = vpop.f32.mrb[0].mxu0
  %409 = vmatprep.mubr.f32.mxu0 0.0
  %410 = vmatmul.mubr.f32.gmra.mrb[0].mxu0 %v128
  %v411 = vpop.f32.mrb[0].mxu0
  %v412 = vadd.f32 0.0, %v411
  %v413 = vpop.f32.mrb[0].mxu0
  %414 = vmatprep.mubr.f32.mxu0 0.0
  %415 = vmatmul.mubr.f32.gmra.mrb[0].mxu0 %v131
  %v416 = vpop.f32.mrb[0].mxu0
  %v417 = vadd.f32 0.0, %v416
  %v418 = vpop.f32.mrb[0].mxu0
  %419 = vmatprep.mubr.f32.mxu0 0.0
  %420 = vmatmul.mubr.f32.gmra.mrb[0].mxu0 %v134
  %v421 = vpop.f32.mrb[0].mxu0
  %v422 = vadd.f32 0.0, %v421
  %v423 = vpop.f32.mrb[0].mxu0
  %424 = vmatprep.mubr.f32.mxu0 0.0
  %425 = vmatmul.mubr.f32.gmra.mrb[0].mxu0 %v137
  %v426 = vpop.f32.mrb[0].mxu0
  %v427 = vadd.f32 0.0, %v426
  %v428 = vpop.f32.mrb[0].mxu0
  %429 = vmatprep.mubr.f32.mxu0 0.0
  %430 = vmatmul.mubr.f32.gmra.mrb[0].mxu0 %v140
  %v431 = vpop.f32.mrb[0].mxu0
  %v432 = vadd.f32 0.0, %v431
  %v433 = vpop.f32.mrb[0].mxu0
  %434 = vmatprep.mubr.f32.mxu0 0.0
  %435 = vmatmul.mubr.f32.gmra.mrb[0].mxu0 %v143
  %v436 = vpop.f32.mrb[0].mxu0
  %v437 = vadd.f32 0.0, %v436
  %v438 = vpop.f32.mrb[0].mxu0
  %439 = vmatprep.mubr.f32.mxu0 0.0
  %440 = vmatmul.mubr.f32.gmra.mrb[0].mxu0 %v146
  %v441 = vpop.f32.mrb[0].mxu0
  %v442 = vadd.f32 0.0, %v441
  %v443 = vpop.f32.mrb[0].mxu0
  %444 = vmatprep.mubr.f32.mxu0 0.0
  %445 = vmatmul.mubr.f32.gmra.mrb[0].mxu0 %v149
  %v446 = vpop.f32.mrb[0].mxu0
  %v447 = vadd.f32 0.0, %v446
  %v448 = vpop.f32.mrb[0].mxu0
  %449 = vmatprep.mubr.f32.mxu0 0.0
  %450 = vmatmul.mubr.f32.gmra.mrb[0].mxu0 %v152
  %v451 = vpop.f32.mrb[0].mxu0
  %v452 = vadd.f32 0.0, %v451
  %v453 = vpop.f32.mrb[0].mxu0
  %454 = vmatprep.mubr.f32.mxu0 0.0
  %455 = vmatmul.mubr.f32.gmra.mrb[0].mxu0 %v155
  %v456 = vpop.f32.mrb[0].mxu0
  %v457 = vadd.f32 0.0, %v456
  %v458 = vpop.f32.mrb[0].mxu0
  %459 = vmatprep.mubr.f32.mxu0 0.0
  %460 = vmatmul.mubr.f32.gmra.mrb[0].mxu0 %v158
  %v461 = vpop.f32.mrb[0].mxu0
  %v462 = vadd.f32 0.0, %v461
  %v463 = vpop.f32.mrb[0].mxu0
  %464 = vmatprep.mubr.f32.mxu0 0.0
  %465 = vmatmul.mubr.f32.gmra.mrb[0].mxu0 %v161
  %v466 = vpop.f32.mrb[0].mxu0
  %v467 = vadd.f32 0.0, %v466
  %v468 = vpop.f32.mrb[0].mxu0
  %469 = vmatprep.mubr.f32.mxu0 0.0
  %470 = vmatmul.mubr.f32.gmra.mrb[0].mxu0 %v164
  %v471 = vpop.f32.mrb[0].mxu0
  %v472 = vadd.f32 0.0, %v471
  %v473 = vpop.f32.mrb[0].mxu0
  %474 = vmatprep.mubr.f32.mxu0 0.0
  %475 = vmatmul.mubr.f32.gmra.mrb[0].mxu0 %v167
  %v476 = vpop.f32.mrb[0].mxu0
  %v477 = vadd.f32 0.0, %v476
  %v478 = vpop.f32.mrb[0].mxu0
  %479 = vmatprep.mubr.f32.mxu0 0.0
  %480 = vmatmul.mubr.f32.gmra.mrb[0].mxu0 %v170
  %v481 = vpop.f32.mrb[0].mxu0
  %v482 = vadd.f32 0.0, %v481
  %v483 = vpop.f32.mrb[0].mxu0
  %484 = vmatprep.mubr.f32.mxu0 0.0
  %485 = vmatmul.mubr.f32.gmra.mrb[0].mxu0 %v173
  %v486 = vpop.f32.mrb[0].mxu0
  %v487 = vadd.f32 0.0, %v486
  %v488 = vpop.f32.mrb[0].mxu0
  %489 = vmatprep.mubr.f32.mxu0 0.0
  %490 = vmatmul.mubr.f32.gmra.mrb[0].mxu0 %v176
  %v491 = vpop.f32.mrb[0].mxu0
  %v492 = vadd.f32 0.0, %v491
  %v493 = vpop.f32.mrb[0].mxu0
  %494 = vmatprep.mubr.f32.mxu0 0.0
  %495 = vmatmul.mubr.f32.gmra.mrb[0].mxu0 %v179
  %v496 = vpop.f32.mrb[0].mxu0
  %v497 = vadd.f32 0.0, %v496
  %v498 = vpop.f32.mrb[0].mxu0
  %499 = vmatprep.mubr.f32.mxu0 0.0
  %500 = vmatmul.mubr.f32.gmra.mrb[0].mxu0 %v182
  %v501 = vpop.f32.mrb[0].mxu0
  %v502 = vadd.f32 0.0, %v501
  %v503 = vpop.f32.mrb[0].mxu0
  %504 = vmatprep.mubr.f32.mxu0 0.0
  %505 = vmatmul.mubr.f32.gmra.mrb[0].mxu0 %v185
  %v506 = vpop.f32.mrb[0].mxu0
  %v507 = vadd.f32 0.0, %v506
  %v508 = vpop.f32.mrb[0].mxu0
  %509 = vmatprep.mubr.f32.mxu0 0.0
  %510 = vmatmul.mubr.f32.gmra.mrb[0].mxu0 %v188
  %v511 = vpop.f32.mrb[0].mxu0
  %v512 = vadd.f32 0.0, %v511
  %v513 = vpop.f32.mrb[0].mxu0
  %514 = vmatprep.mubr.f32.mxu0 0.0
  %515 = vmatmul.mubr.f32.gmra.mrb[0].mxu0 %v191
  %v516 = vpop.f32.mrb[0].mxu0
  %v517 = vadd.f32 0.0, %v516
  %v518 = vpop.f32.mrb[0].mxu0
  %519 = vmatprep.mubr.f32.mxu0 0.0
  %520 = vmatmul.mubr.f32.gmra.mrb[0].mxu0 %v194
  %v521 = vpop.f32.mrb[0].mxu0
  %v522 = vadd.f32 0.0, %v521
  %v523 = vpop.f32.mrb[0].mxu0
  %524 = vmatprep.mubr.f32.mxu0 0.0
  %525 = vmatmul.mubr.f32.gmra.mrb[0].mxu0 %v197
  %v526 = vpop.f32.mrb[0].mxu0
  %v527 = vadd.f32 0.0, %v526
  %v528 = vpop.f32.mrb[0].mxu0
  %529 = vmatprep.mubr.f32.mxu0 0.0
  %530 = vmatmul.mubr.f32.gmra.mrb[0].mxu0 %v200
  %v531 = vpop.f32.mrb[0].mxu0
  %v532 = vadd.f32 0.0, %v531
  %v533 = vpop.f32.mrb[0].mxu0
  %534 = vmatprep.mubr.f32.mxu0 0.0
  %535 = vmatmul.mubr.f32.gmra.mrb[0].mxu0 %v203
  %v536 = vpop.f32.mrb[0].mxu0
  %v537 = vadd.f32 0.0, %v536
  %v538 = vpop.f32.mrb[0].mxu0
  %539 = vmatprep.mubr.f32.mxu0 0.0
  %540 = vmatmul.mubr.f32.gmra.mrb[0].mxu0 %v206
  %v541 = vpop.f32.mrb[0].mxu0
  %v542 = vadd.f32 0.0, %v541
  %v543 = vpop.f32.mrb[0].mxu0
  %544 = vmatprep.mubr.f32.mxu0 0.0
  %545 = vmatmul.mubr.f32.gmra.mrb[0].mxu0 %v209
  %v546 = vpop.f32.mrb[0].mxu0
  %v547 = vadd.f32 0.0, %v546
  %v548 = vpop.f32.mrb[0].mxu0
  %549 = vmatprep.mubr.f32.mxu0 0.0
  %550 = vmatmul.mubr.f32.gmra.mrb[0].mxu0 %v212
  %v551 = vpop.f32.mrb[0].mxu0
  %v552 = vadd.f32 0.0, %v551
  %v553 = vpop.f32.mrb[0].mxu0
  %554 = vmatprep.mubr.f32.mxu0 0.0
  %555 = vmatmul.mubr.f32.gmra.mrb[0].mxu0 %v215
  %v556 = vpop.f32.mrb[0].mxu0
  %v557 = vadd.f32 0.0, %v556
  %v558 = vpop.f32.mrb[0].mxu0
  %559 = vmatprep.mubr.f32.mxu0 0.0
  %560 = vmatmul.mubr.f32.gmra.mrb[0].mxu0 %v218
  %v561 = vpop.f32.mrb[0].mxu0
  %v562 = vadd.f32 0.0, %v561
  %v563 = vpop.f32.mrb[0].mxu0
  %564 = vmatprep.mubr.f32.mxu0 0.0
  %565 = vmatmul.mubr.f32.gmra.mrb[0].mxu0 %v221
  %v566 = vpop.f32.mrb[0].mxu0
  %v567 = vadd.f32 0.0, %v566
  %v568 = vpop.f32.mrb[0].mxu0
  %569 = vmatprep.mubr.f32.mxu0 0.0
  %570 = vmatmul.mubr.f32.gmra.mrb[0].mxu0 %v224
  %v571 = vpop.f32.mrb[0].mxu0
  %v572 = vadd.f32 0.0, %v571
  %v573 = vpop.f32.mrb[0].mxu0
  %574 = vmatprep.mubr.f32.mxu0 0.0
  %575 = vmatmul.mubr.f32.gmra.mrb[0].mxu0 %v227
  %v576 = vpop.f32.mrb[0].mxu0
  %v577 = vadd.f32 0.0, %v576
  %v578 = vpop.f32.mrb[0].mxu0
  %579 = vmatprep.mubr.f32.mxu0 0.0
  %580 = vmatmul.mubr.f32.gmra.mrb[0].mxu0 %v230
  %v581 = vpop.f32.mrb[0].mxu0
  %v582 = vadd.f32 0.0, %v581
  %v583 = vpop.f32.mrb[0].mxu0
  %584 = vmatprep.mubr.f32.mxu0 0.0
  %585 = vmatmul.mubr.f32.gmra.mrb[0].mxu0 %v233
  %v586 = vpop.f32.mrb[0].mxu0
  %v587 = vadd.f32 0.0, %v586
  %v588 = vpop.f32.mrb[0].mxu0
  %589 = vmatprep.mubr.f32.mxu0 0.0
  %590 = vmatmul.mubr.f32.gmra.mrb[0].mxu0 %v236
  %v591 = vpop.f32.mrb[0].mxu0
  %v592 = vadd.f32 0.0, %v591
  %v593 = vpop.f32.mrb[0].mxu0
  %594 = vmatprep.mubr.f32.mxu0 0.0
  %595 = vmatmul.mubr.f32.gmra.mrb[0].mxu0 %v239
  %v596 = vpop.f32.mrb[0].mxu0
  %v597 = vadd.f32 0.0, %v596
  %v598 = vpop.f32.mrb[0].mxu0
  %599 = vmatprep.mubr.f32.mxu0 0.0
  %600 = vmatmul.mubr.f32.gmra.mrb[0].mxu0 %v242
  %v601 = vpop.f32.mrb[0].mxu0
  %v602 = vadd.f32 0.0, %v601
  %v603 = vpop.f32.mrb[0].mxu0
  %604 = vmatprep.mubr.f32.mxu0 0.0
  %605 = vmatmul.mubr.f32.gmra.mrb[0].mxu0 %v245
  %v606 = vpop.f32.mrb[0].mxu0
  %v607 = vadd.f32 0.0, %v606
  %v608 = vpop.f32.mrb[0].mxu0
  %609 = vmatprep.mubr.f32.mxu0 0.0
  %610 = vmatmul.mubr.f32.gmra.mrb[0].mxu0 %v248
  %v611 = vpop.f32.mrb[0].mxu0
  %v612 = vadd.f32 0.0, %v611
  %v613 = vpop.f32.mrb[0].mxu0
  %614 = vmatprep.mubr.f32.mxu0 0.0
  %615 = vmatmul.mubr.f32.gmra.mrb[0].mxu0 %v251
  %v616 = vpop.f32.mrb[0].mxu0
  %v617 = vadd.f32 0.0, %v616
  %v618 = vpop.f32.mrb[0].mxu0
  %619 = vmatprep.mubr.f32.mxu0 0.0
  %620 = vmatmul.mubr.f32.gmra.mrb[0].mxu0 %v254
  %v621 = vpop.f32.mrb[0].mxu0
  %v622 = vadd.f32 0.0, %v621
  %v623 = vpop.f32.mrb[0].mxu0
  %624 = vmatprep.mubr.f32.mxu0 0.0
  %625 = vmatmul.mubr.f32.gmra.mrb[0].mxu0 %v257
  %v626 = vpop.f32.mrb[0].mxu0
  %v627 = vadd.f32 0.0, %v626
  %v628 = vpop.f32.mrb[0].mxu0
  %629 = vmatprep.mubr.f32.mxu0 0.0
  %630 = vmatmul.mubr.f32.gmra.mrb[0].mxu0 %v260
  %v631 = vpop.f32.mrb[0].mxu0
  %v632 = vadd.f32 0.0, %v631
  %v633 = vpop.f32.mrb[0].mxu0
  %634 = vmatprep.mubr.f32.mxu0 0.0
  %635 = vmatmul.mubr.f32.gmra.mrb[0].mxu0 %v263
  %v636 = vpop.f32.mrb[0].mxu0
  %v637 = vadd.f32 0.0, %v636
  %v638 = vpop.f32.mrb[0].mxu0
  %639 = vmatprep.mubr.f32.mxu0 0.0
  %640 = vmatmul.mubr.f32.gmra.mrb[0].mxu0 %v266
  %v641 = vpop.f32.mrb[0].mxu0
  %v642 = vadd.f32 0.0, %v641
  %v643 = vpop.f32.mrb[0].mxu0
  %644 = vmatprep.mubr.f32.mxu0 0.0
  %645 = vmatmul.mubr.f32.gmra.mrb[0].mxu0 %v269
  %v646 = vpop.f32.mrb[0].mxu0
  %v647 = vadd.f32 0.0, %v646
  %v648 = vpop.f32.mrb[0].mxu0
  %649 = vmatprep.mubr.f32.mxu0 0.0
  %650 = vmatmul.mubr.f32.gmra.mrb[0].mxu0 %v272
  %v651 = vpop.f32.mrb[0].mxu0
  %v652 = vadd.f32 0.0, %v651
  %v653 = vpop.f32.mrb[0].mxu0
  %654 = vmatprep.mubr.f32.mxu0 0.0
  %655 = vmatmul.mubr.f32.gmra.mrb[0].mxu0 %v275
  %v656 = vpop.f32.mrb[0].mxu0
  %v657 = vadd.f32 0.0, %v656
  %v658 = vpop.f32.mrb[0].mxu0
  %659 = vmatprep.mubr.f32.mxu0 0.0
  %660 = vmatmul.mubr.f32.gmra.mrb[0].mxu0 %v278
  %v661 = vpop.f32.mrb[0].mxu0
  %v662 = vadd.f32 0.0, %v661
  %v663 = vpop.f32.mrb[0].mxu0
  %664 = vdwg.mxu0
  %vm665 = vcmask 64512
  %v666 = vsel %vm665, %v347, 0.0
  %v667 = vsel %vm665, %v352, 0.0
  %v668 = vadd.f32 %v666, %v667
  %v669 = vsel %vm665, %v357, 0.0
  %v670 = vadd.f32 %v668, %v669
  %v671 = vsel %vm665, %v362, 0.0
  %v672 = vadd.f32 %v670, %v671
  %v673 = vsel %vm665, %v367, 0.0
  %v674 = vadd.f32 %v672, %v673
  %v675 = vsel %vm665, %v372, 0.0
  %v676 = vadd.f32 %v674, %v675
  %v677 = vsel %vm665, %v377, 0.0
  %v678 = vadd.f32 %v676, %v677
  %v679 = vsel %vm665, %v382, 0.0
  %v680 = vadd.f32 %v678, %v679
  %v681 = vsel %vm665, %v387, 0.0
  %v682 = vadd.f32 %v680, %v681
  %v683 = vsel %vm665, %v392, 0.0
  %v684 = vadd.f32 %v682, %v683
  %v685 = vsel %vm665, %v397, 0.0
  %v686 = vadd.f32 %v684, %v685
  %v687 = vsel %vm665, %v402, 0.0
  %v688 = vadd.f32 %v686, %v687
  %v689 = vsel %vm665, %v407, 0.0
  %v690 = vadd.f32 %v688, %v689
  %v691 = vsel %vm665, %v412, 0.0
  %v692 = vadd.f32 %v690, %v691
  %v693 = vsel %vm665, %v417, 0.0
  %v694 = vadd.f32 %v692, %v693
  %v695 = vsel %vm665, %v422, 0.0
  %v696 = vadd.f32 %v694, %v695
  %v697 = vsel %vm665, %v427, 0.0
  %v698 = vadd.f32 %v696, %v697
  %v699 = vsel %vm665, %v432, 0.0
  %v700 = vadd.f32 %v698, %v699
  %v701 = vsel %vm665, %v437, 0.0
  %v702 = vadd.f32 %v700, %v701
  %v703 = vsel %vm665, %v442, 0.0
  %v704 = vadd.f32 %v702, %v703
  %v705 = vsel %vm665, %v447, 0.0
  %v706 = vadd.f32 %v704, %v705
  %v707 = vsel %vm665, %v452, 0.0
  %v708 = vadd.f32 %v706, %v707
  %v709 = vsel %vm665, %v457, 0.0
  %v710 = vadd.f32 %v708, %v709
  %v711 = vsel %vm665, %v462, 0.0
  %v712 = vadd.f32 %v710, %v711
  %v713 = vsel %vm665, %v467, 0.0
  %v714 = vadd.f32 %v712, %v713
  %v715 = vsel %vm665, %v472, 0.0
  %v716 = vadd.f32 %v714, %v715
  %v717 = vsel %vm665, %v477, 0.0
  %v718 = vadd.f32 %v716, %v717
  %v719 = vsel %vm665, %v482, 0.0
  %v720 = vadd.f32 %v718, %v719
  %v721 = vsel %vm665, %v487, 0.0
  %v722 = vadd.f32 %v720, %v721
  %v723 = vsel %vm665, %v492, 0.0
  %v724 = vadd.f32 %v722, %v723
  %v725 = vsel %vm665, %v497, 0.0
  %v726 = vadd.f32 %v724, %v725
  %v727 = vsel %vm665, %v502, 0.0
  %v728 = vadd.f32 %v726, %v727
  %v729 = vsel %vm665, %v507, 0.0
  %v730 = vadd.f32 %v728, %v729
  %v731 = vsel %vm665, %v512, 0.0
  %v732 = vadd.f32 %v730, %v731
  %v733 = vsel %vm665, %v517, 0.0
  %v734 = vadd.f32 %v732, %v733
  %v735 = vsel %vm665, %v522, 0.0
  %v736 = vadd.f32 %v734, %v735
  %v737 = vsel %vm665, %v527, 0.0
  %v738 = vadd.f32 %v736, %v737
  %v739 = vsel %vm665, %v532, 0.0
  %v740 = vadd.f32 %v738, %v739
  %v741 = vsel %vm665, %v537, 0.0
  %v742 = vadd.f32 %v740, %v741
  %v743 = vsel %vm665, %v542, 0.0
  %v744 = vadd.f32 %v742, %v743
  %v745 = vsel %vm665, %v547, 0.0
  %v746 = vadd.f32 %v744, %v745
  %v747 = vsel %vm665, %v552, 0.0
  %v748 = vadd.f32 %v746, %v747
  %v749 = vsel %vm665, %v557, 0.0
  %v750 = vadd.f32 %v748, %v749
  %v751 = vsel %vm665, %v562, 0.0
  %v752 = vadd.f32 %v750, %v751
  %v753 = vsel %vm665, %v567, 0.0
  %v754 = vadd.f32 %v752, %v753
  %v755 = vsel %vm665, %v572, 0.0
  %v756 = vadd.f32 %v754, %v755
  %v757 = vsel %vm665, %v577, 0.0
  %v758 = vadd.f32 %v756, %v757
  %v759 = vsel %vm665, %v582, 0.0
  %v760 = vadd.f32 %v758, %v759
  %v761 = vsel %vm665, %v587, 0.0
  %v762 = vadd.f32 %v760, %v761
  %v763 = vsel %vm665, %v592, 0.0
  %v764 = vadd.f32 %v762, %v763
  %v765 = vsel %vm665, %v597, 0.0
  %v766 = vadd.f32 %v764, %v765
  %v767 = vsel %vm665, %v602, 0.0
  %v768 = vadd.f32 %v766, %v767
  %v769 = vsel %vm665, %v607, 0.0
  %v770 = vadd.f32 %v768, %v769
  %v771 = vsel %vm665, %v612, 0.0
  %v772 = vadd.f32 %v770, %v771
  %v773 = vsel %vm665, %v617, 0.0
  %v774 = vadd.f32 %v772, %v773
  %v775 = vsel %vm665, %v622, 0.0
  %v776 = vadd.f32 %v774, %v775
  %v777 = vsel %vm665, %v627, 0.0
  %v778 = vadd.f32 %v776, %v777
  %v779 = vsel %vm665, %v632, 0.0
  %v780 = vadd.f32 %v778, %v779
  %v781 = vsel %vm665, %v637, 0.0
  %v782 = vadd.f32 %v780, %v781
  %v783 = vsel %vm665, %v642, 0.0
  %v784 = vadd.f32 %v782, %v783
  %v785 = vsel %vm665, %v647, 0.0
  %v786 = vadd.f32 %v784, %v785
  %v787 = vsel %vm665, %v652, 0.0
  %v788 = vadd.f32 %v786, %v787
  %v789 = vsel %vm665, %v657, 0.0
  %v790 = vadd.f32 %v788, %v789
  %v791 = vsel %vm665, %v662, 0.0
  %v792 = vadd.f32 %v790, %v791
  %v793 = vrot.slane %v792, 4
  %v794 = vadd.f32 %v792, %v793
  %v795 = vrot.slane %v794, 2
  %v796 = vadd.f32 %v794, %v795
  %v797 = vrot.slane %v796, 1
  %v798 = vadd.f32 %v796, %v797
  %v799 = vmul.f32 %v798, 0.001953125
  %v800 = vsub.f32 %v347, %v799
  %v801 = vsub.f32 %v352, %v799
  %v802 = vsub.f32 %v357, %v799
  %v803 = vsub.f32 %v362, %v799
  %v804 = vsub.f32 %v367, %v799
  %v805 = vsub.f32 %v372, %v799
  %v806 = vsub.f32 %v377, %v799
  %v807 = vsub.f32 %v382, %v799
  %v808 = vsub.f32 %v387, %v799
  %v809 = vsub.f32 %v392, %v799
  %v810 = vsub.f32 %v397, %v799
  %v811 = vsub.f32 %v402, %v799
  %v812 = vsub.f32 %v407, %v799
  %v813 = vsub.f32 %v412, %v799
  %v814 = vsub.f32 %v417, %v799
  %v815 = vsub.f32 %v422, %v799
  %v816 = vsub.f32 %v427, %v799
  %v817 = vsub.f32 %v432, %v799
  %v818 = vsub.f32 %v437, %v799
  %v819 = vsub.f32 %v442, %v799
  %v820 = vsub.f32 %v447, %v799
  %v821 = vsub.f32 %v452, %v799
  %v822 = vsub.f32 %v457, %v799
  %v823 = vsub.f32 %v462, %v799
  %v824 = vsub.f32 %v467, %v799
  %v825 = vsub.f32 %v472, %v799
  %v826 = vsub.f32 %v477, %v799
  %v827 = vsub.f32 %v482, %v799
  %v828 = vsub.f32 %v487, %v799
  %v829 = vsub.f32 %v492, %v799
  %v830 = vsub.f32 %v497, %v799
  %v831 = vsub.f32 %v502, %v799
  %v832 = vsub.f32 %v507, %v799
  %v833 = vsub.f32 %v512, %v799
  %v834 = vsub.f32 %v517, %v799
  %v835 = vsub.f32 %v522, %v799
  %v836 = vsub.f32 %v527, %v799
  %v837 = vsub.f32 %v532, %v799
  %v838 = vsub.f32 %v537, %v799
  %v839 = vsub.f32 %v542, %v799
  %v840 = vsub.f32 %v547, %v799
  %v841 = vsub.f32 %v552, %v799
  %v842 = vsub.f32 %v557, %v799
  %v843 = vsub.f32 %v562, %v799
  %v844 = vsub.f32 %v567, %v799
  %v845 = vsub.f32 %v572, %v799
  %v846 = vsub.f32 %v577, %v799
  %v847 = vsub.f32 %v582, %v799
  %v848 = vsub.f32 %v587, %v799
  %v849 = vsub.f32 %v592, %v799
  %v850 = vsub.f32 %v597, %v799
  %v851 = vsub.f32 %v602, %v799
  %v852 = vsub.f32 %v607, %v799
  %v853 = vsub.f32 %v612, %v799
  %v854 = vsub.f32 %v617, %v799
  %v855 = vsub.f32 %v622, %v799
  %v856 = vsub.f32 %v627, %v799
  %v857 = vsub.f32 %v632, %v799
  %v858 = vsub.f32 %v637, %v799
  %v859 = vsub.f32 %v642, %v799
  %v860 = vsub.f32 %v647, %v799
  %v861 = vsub.f32 %v652, %v799
  %v862 = vsub.f32 %v657, %v799
  %v863 = vsub.f32 %v662, %v799
  %v864 = vmul.f32 %v800, %v800
  %v865 = vmul.f32 %v801, %v801
  %v866 = vmul.f32 %v802, %v802
  %v867 = vmul.f32 %v803, %v803
  %v868 = vmul.f32 %v804, %v804
  %v869 = vmul.f32 %v805, %v805
  %v870 = vmul.f32 %v806, %v806
  %v871 = vmul.f32 %v807, %v807
  %v872 = vmul.f32 %v808, %v808
  %v873 = vmul.f32 %v809, %v809
  %v874 = vmul.f32 %v810, %v810
  %v875 = vmul.f32 %v811, %v811
  %v876 = vmul.f32 %v812, %v812
  %v877 = vmul.f32 %v813, %v813
  %v878 = vmul.f32 %v814, %v814
  %v879 = vmul.f32 %v815, %v815
  %v880 = vmul.f32 %v816, %v816
  %v881 = vmul.f32 %v817, %v817
  %v882 = vmul.f32 %v818, %v818
  %v883 = vmul.f32 %v819, %v819
  %v884 = vmul.f32 %v820, %v820
  %v885 = vmul.f32 %v821, %v821
  %v886 = vmul.f32 %v822, %v822
  %v887 = vmul.f32 %v823, %v823
  %v888 = vmul.f32 %v824, %v824
  %v889 = vmul.f32 %v825, %v825
  %v890 = vmul.f32 %v826, %v826
  %v891 = vmul.f32 %v827, %v827
  %v892 = vmul.f32 %v828, %v828
  %v893 = vmul.f32 %v829, %v829
  %v894 = vmul.f32 %v830, %v830
  %v895 = vmul.f32 %v831, %v831
  %v896 = vmul.f32 %v832, %v832
  %v897 = vmul.f32 %v833, %v833
  %v898 = vmul.f32 %v834, %v834
  %v899 = vmul.f32 %v835, %v835
  %v900 = vmul.f32 %v836, %v836
  %v901 = vmul.f32 %v837, %v837
  %v902 = vmul.f32 %v838, %v838
  %v903 = vmul.f32 %v839, %v839
  %v904 = vmul.f32 %v840, %v840
  %v905 = vmul.f32 %v841, %v841
  %v906 = vmul.f32 %v842, %v842
  %v907 = vmul.f32 %v843, %v843
  %v908 = vmul.f32 %v844, %v844
  %v909 = vmul.f32 %v845, %v845
  %v910 = vmul.f32 %v846, %v846
  %v911 = vmul.f32 %v847, %v847
  %v912 = vmul.f32 %v848, %v848
  %v913 = vmul.f32 %v849, %v849
  %v914 = vmul.f32 %v850, %v850
  %v915 = vmul.f32 %v851, %v851
  %v916 = vmul.f32 %v852, %v852
  %v917 = vmul.f32 %v853, %v853
  %v918 = vmul.f32 %v854, %v854
  %v919 = vmul.f32 %v855, %v855
  %v920 = vmul.f32 %v856, %v856
  %v921 = vmul.f32 %v857, %v857
  %v922 = vmul.f32 %v858, %v858
  %v923 = vmul.f32 %v859, %v859
  %v924 = vmul.f32 %v860, %v860
  %v925 = vmul.f32 %v861, %v861
  %v926 = vmul.f32 %v862, %v862
  %v927 = vmul.f32 %v863, %v863
  %v928 = vsel %vm665, %v864, 0.0
  %v929 = vsel %vm665, %v865, 0.0
  %v930 = vadd.f32 %v928, %v929
  %v931 = vsel %vm665, %v866, 0.0
  %v932 = vadd.f32 %v930, %v931
  %v933 = vsel %vm665, %v867, 0.0
  %v934 = vadd.f32 %v932, %v933
  %v935 = vsel %vm665, %v868, 0.0
  %v936 = vadd.f32 %v934, %v935
  %v937 = vsel %vm665, %v869, 0.0
  %v938 = vadd.f32 %v936, %v937
  %v939 = vsel %vm665, %v870, 0.0
  %v940 = vadd.f32 %v938, %v939
  %v941 = vsel %vm665, %v871, 0.0
  %v942 = vadd.f32 %v940, %v941
  %v943 = vsel %vm665, %v872, 0.0
  %v944 = vadd.f32 %v942, %v943
  %v945 = vsel %vm665, %v873, 0.0
  %v946 = vadd.f32 %v944, %v945
  %v947 = vsel %vm665, %v874, 0.0
  %v948 = vadd.f32 %v946, %v947
  %v949 = vsel %vm665, %v875, 0.0
  %v950 = vadd.f32 %v948, %v949
  %v951 = vsel %vm665, %v876, 0.0
  %v952 = vadd.f32 %v950, %v951
  %v953 = vsel %vm665, %v877, 0.0
  %v954 = vadd.f32 %v952, %v953
  %v955 = vsel %vm665, %v878, 0.0
  %v956 = vadd.f32 %v954, %v955
  %v957 = vsel %vm665, %v879, 0.0
  %v958 = vadd.f32 %v956, %v957
  %v959 = vsel %vm665, %v880, 0.0
  %v960 = vadd.f32 %v958, %v959
  %v961 = vsel %vm665, %v881, 0.0
  %v962 = vadd.f32 %v960, %v961
  %v963 = vsel %vm665, %v882, 0.0
  %v964 = vadd.f32 %v962, %v963
  %v965 = vsel %vm665, %v883, 0.0
  %v966 = vadd.f32 %v964, %v965
  %v967 = vsel %vm665, %v884, 0.0
  %v968 = vadd.f32 %v966, %v967
  %v969 = vsel %vm665, %v885, 0.0
  %v970 = vadd.f32 %v968, %v969
  %v971 = vsel %vm665, %v886, 0.0
  %v972 = vadd.f32 %v970, %v971
  %v973 = vsel %vm665, %v887, 0.0
  %v974 = vadd.f32 %v972, %v973
  %v975 = vsel %vm665, %v888, 0.0
  %v976 = vadd.f32 %v974, %v975
  %v977 = vsel %vm665, %v889, 0.0
  %v978 = vadd.f32 %v976, %v977
  %v979 = vsel %vm665, %v890, 0.0
  %v980 = vadd.f32 %v978, %v979
  %v981 = vsel %vm665, %v891, 0.0
  %v982 = vadd.f32 %v980, %v981
  %v983 = vsel %vm665, %v892, 0.0
  %v984 = vadd.f32 %v982, %v983
  %v985 = vsel %vm665, %v893, 0.0
  %v986 = vadd.f32 %v984, %v985
  %v987 = vsel %vm665, %v894, 0.0
  %v988 = vadd.f32 %v986, %v987
  %v989 = vsel %vm665, %v895, 0.0
  %v990 = vadd.f32 %v988, %v989
  %v991 = vsel %vm665, %v896, 0.0
  %v992 = vadd.f32 %v990, %v991
  %v993 = vsel %vm665, %v897, 0.0
  %v994 = vadd.f32 %v992, %v993
  %v995 = vsel %vm665, %v898, 0.0
  %v996 = vadd.f32 %v994, %v995
  %v997 = vsel %vm665, %v899, 0.0
  %v998 = vadd.f32 %v996, %v997
  %v999 = vsel %vm665, %v900, 0.0
  %v1000 = vadd.f32 %v998, %v999
  %v1001 = vsel %vm665, %v901, 0.0
  %v1002 = vadd.f32 %v1000, %v1001
  %v1003 = vsel %vm665, %v902, 0.0
  %v1004 = vadd.f32 %v1002, %v1003
  %v1005 = vsel %vm665, %v903, 0.0
  %v1006 = vadd.f32 %v1004, %v1005
  %v1007 = vsel %vm665, %v904, 0.0
  %v1008 = vadd.f32 %v1006, %v1007
  %v1009 = vsel %vm665, %v905, 0.0
  %v1010 = vadd.f32 %v1008, %v1009
  %v1011 = vsel %vm665, %v906, 0.0
  %v1012 = vadd.f32 %v1010, %v1011
  %v1013 = vsel %vm665, %v907, 0.0
  %v1014 = vadd.f32 %v1012, %v1013
  %v1015 = vsel %vm665, %v908, 0.0
  %v1016 = vadd.f32 %v1014, %v1015
  %v1017 = vsel %vm665, %v909, 0.0
  %v1018 = vadd.f32 %v1016, %v1017
  %v1019 = vsel %vm665, %v910, 0.0
  %v1020 = vadd.f32 %v1018, %v1019
  %v1021 = vsel %vm665, %v911, 0.0
  %v1022 = vadd.f32 %v1020, %v1021
  %v1023 = vsel %vm665, %v912, 0.0
  %v1024 = vadd.f32 %v1022, %v1023
  %v1025 = vsel %vm665, %v913, 0.0
  %v1026 = vadd.f32 %v1024, %v1025
  %v1027 = vsel %vm665, %v914, 0.0
  %v1028 = vadd.f32 %v1026, %v1027
  %v1029 = vsel %vm665, %v915, 0.0
  %v1030 = vadd.f32 %v1028, %v1029
  %v1031 = vsel %vm665, %v916, 0.0
  %v1032 = vadd.f32 %v1030, %v1031
  %v1033 = vsel %vm665, %v917, 0.0
  %v1034 = vadd.f32 %v1032, %v1033
  %v1035 = vsel %vm665, %v918, 0.0
  %v1036 = vadd.f32 %v1034, %v1035
  %v1037 = vsel %vm665, %v919, 0.0
  %v1038 = vadd.f32 %v1036, %v1037
  %v1039 = vsel %vm665, %v920, 0.0
  %v1040 = vadd.f32 %v1038, %v1039
  %v1041 = vsel %vm665, %v921, 0.0
  %v1042 = vadd.f32 %v1040, %v1041
  %v1043 = vsel %vm665, %v922, 0.0
  %v1044 = vadd.f32 %v1042, %v1043
  %v1045 = vsel %vm665, %v923, 0.0
  %v1046 = vadd.f32 %v1044, %v1045
  %v1047 = vsel %vm665, %v924, 0.0
  %v1048 = vadd.f32 %v1046, %v1047
  %v1049 = vsel %vm665, %v925, 0.0
  %v1050 = vadd.f32 %v1048, %v1049
  %v1051 = vsel %vm665, %v926, 0.0
  %v1052 = vadd.f32 %v1050, %v1051
  %v1053 = vsel %vm665, %v927, 0.0
  %v1054 = vadd.f32 %v1052, %v1053
  %v1055 = vrot.slane %v1054, 4
  %v1056 = vadd.f32 %v1054, %v1055
  %v1057 = vrot.slane %v1056, 2
  %v1058 = vadd.f32 %v1056, %v1057
  %v1059 = vrot.slane %v1058, 1
  %v1060 = vadd.f32 %v1058, %v1059
  %v1061 = vmul.f32 %v1060, 0.001953125
  %v1062 = vld [vmem:[%s2] sm:$0x1]
  %v1063 = vadd.f32 %v1061, 1e-05
  %v1064 = vrsqrt.pop %v1063
  %v1065 = vmul.f32 %v1062, %v1064
  %v1066 = vld [vmem:[%s3] sm:$0x1]
  %v1067 = vmul.f32 %v799, %v1065
  %v1068 = vsub.f32 %v1066, %v1067
  %v1070 = vlaneseq
  %v1071 = vshrl.u32 %v1070, 7
  %v1072 = vsub.s32 0, %v1071
  %v1073 = vrot.slane %v1065, %v1072
  %v1075 = vmul.f32 %v347, %v1073
  %v1076 = vmul.f32 %v352, %v1073
  %v1077 = vmul.f32 %v357, %v1073
  %v1078 = vmul.f32 %v362, %v1073
  %v1079 = vmul.f32 %v367, %v1073
  %v1080 = vmul.f32 %v372, %v1073
  %v1081 = vmul.f32 %v377, %v1073
  %v1082 = vmul.f32 %v382, %v1073
  %v1083 = vmul.f32 %v387, %v1073
  %v1084 = vmul.f32 %v392, %v1073
  %v1085 = vmul.f32 %v397, %v1073
  %v1086 = vmul.f32 %v402, %v1073
  %v1087 = vmul.f32 %v407, %v1073
  %v1088 = vmul.f32 %v412, %v1073
  %v1089 = vmul.f32 %v417, %v1073
  %v1090 = vmul.f32 %v422, %v1073
  %v1091 = vmul.f32 %v427, %v1073
  %v1092 = vmul.f32 %v432, %v1073
  %v1093 = vmul.f32 %v437, %v1073
  %v1094 = vmul.f32 %v442, %v1073
  %v1095 = vmul.f32 %v447, %v1073
  %v1096 = vmul.f32 %v452, %v1073
  %v1097 = vmul.f32 %v457, %v1073
  %v1098 = vmul.f32 %v462, %v1073
  %v1099 = vmul.f32 %v467, %v1073
  %v1100 = vmul.f32 %v472, %v1073
  %v1101 = vmul.f32 %v477, %v1073
  %v1102 = vmul.f32 %v482, %v1073
  %v1103 = vmul.f32 %v487, %v1073
  %v1104 = vmul.f32 %v492, %v1073
  %v1105 = vmul.f32 %v497, %v1073
  %v1106 = vmul.f32 %v502, %v1073
  %v1107 = vmul.f32 %v507, %v1073
  %v1108 = vmul.f32 %v512, %v1073
  %v1109 = vmul.f32 %v517, %v1073
  %v1110 = vmul.f32 %v522, %v1073
  %v1111 = vmul.f32 %v527, %v1073
  %v1112 = vmul.f32 %v532, %v1073
  %v1113 = vmul.f32 %v537, %v1073
  %v1114 = vmul.f32 %v542, %v1073
  %v1115 = vmul.f32 %v547, %v1073
  %v1116 = vmul.f32 %v552, %v1073
  %v1117 = vmul.f32 %v557, %v1073
  %v1118 = vmul.f32 %v562, %v1073
  %v1119 = vmul.f32 %v567, %v1073
  %v1120 = vmul.f32 %v572, %v1073
  %v1121 = vmul.f32 %v577, %v1073
  %v1122 = vmul.f32 %v582, %v1073
  %v1123 = vmul.f32 %v587, %v1073
  %v1124 = vmul.f32 %v592, %v1073
  %v1125 = vmul.f32 %v597, %v1073
  %v1126 = vmul.f32 %v602, %v1073
  %v1127 = vmul.f32 %v607, %v1073
  %v1128 = vmul.f32 %v612, %v1073
  %v1129 = vmul.f32 %v617, %v1073
  %v1130 = vmul.f32 %v622, %v1073
  %v1131 = vmul.f32 %v627, %v1073
  %v1132 = vmul.f32 %v632, %v1073
  %v1133 = vmul.f32 %v637, %v1073
  %v1134 = vmul.f32 %v642, %v1073
  %v1135 = vmul.f32 %v647, %v1073
  %v1136 = vmul.f32 %v652, %v1073
  %v1137 = vmul.f32 %v657, %v1073
  %v1138 = vmul.f32 %v662, %v1073
  %v1140 = vlaneseq
  %v1141 = vshrl.u32 %v1140, 7
  %v1142 = vsub.s32 0, %v1141
  %v1143 = vrot.slane %v1068, %v1142
  %v1145 = vadd.f32 %v1075, %v1143
  %v1146 = vadd.f32 %v1076, %v1143
  %v1147 = vadd.f32 %v1077, %v1143
  %v1148 = vadd.f32 %v1078, %v1143
  %v1149 = vadd.f32 %v1079, %v1143
  %v1150 = vadd.f32 %v1080, %v1143
  %v1151 = vadd.f32 %v1081, %v1143
  %v1152 = vadd.f32 %v1082, %v1143
  %v1153 = vadd.f32 %v1083, %v1143
  %v1154 = vadd.f32 %v1084, %v1143
  %v1155 = vadd.f32 %v1085, %v1143
  %v1156 = vadd.f32 %v1086, %v1143
  %v1157 = vadd.f32 %v1087, %v1143
  %v1158 = vadd.f32 %v1088, %v1143
  %v1159 = vadd.f32 %v1089, %v1143
  %v1160 = vadd.f32 %v1090, %v1143
  %v1161 = vadd.f32 %v1091, %v1143
  %v1162 = vadd.f32 %v1092, %v1143
  %v1163 = vadd.f32 %v1093, %v1143
  %v1164 = vadd.f32 %v1094, %v1143
  %v1165 = vadd.f32 %v1095, %v1143
  %v1166 = vadd.f32 %v1096, %v1143
  %v1167 = vadd.f32 %v1097, %v1143
  %v1168 = vadd.f32 %v1098, %v1143
  %v1169 = vadd.f32 %v1099, %v1143
  %v1170 = vadd.f32 %v1100, %v1143
  %v1171 = vadd.f32 %v1101, %v1143
  %v1172 = vadd.f32 %v1102, %v1143
  %v1173 = vadd.f32 %v1103, %v1143
  %v1174 = vadd.f32 %v1104, %v1143
  %v1175 = vadd.f32 %v1105, %v1143
  %v1176 = vadd.f32 %v1106, %v1143
  %v1177 = vadd.f32 %v1107, %v1143
  %v1178 = vadd.f32 %v1108, %v1143
  %v1179 = vadd.f32 %v1109, %v1143
  %v1180 = vadd.f32 %v1110, %v1143
  %v1181 = vadd.f32 %v1111, %v1143
  %v1182 = vadd.f32 %v1112, %v1143
  %v1183 = vadd.f32 %v1113, %v1143
  %v1184 = vadd.f32 %v1114, %v1143
  %v1185 = vadd.f32 %v1115, %v1143
  %v1186 = vadd.f32 %v1116, %v1143
  %v1187 = vadd.f32 %v1117, %v1143
  %v1188 = vadd.f32 %v1118, %v1143
  %v1189 = vadd.f32 %v1119, %v1143
  %v1190 = vadd.f32 %v1120, %v1143
  %v1191 = vadd.f32 %v1121, %v1143
  %v1192 = vadd.f32 %v1122, %v1143
  %v1193 = vadd.f32 %v1123, %v1143
  %v1194 = vadd.f32 %v1124, %v1143
  %v1195 = vadd.f32 %v1125, %v1143
  %v1196 = vadd.f32 %v1126, %v1143
  %v1197 = vadd.f32 %v1127, %v1143
  %v1198 = vadd.f32 %v1128, %v1143
  %v1199 = vadd.f32 %v1129, %v1143
  %v1200 = vadd.f32 %v1130, %v1143
  %v1201 = vadd.f32 %v1131, %v1143
  %v1202 = vadd.f32 %v1132, %v1143
  %v1203 = vadd.f32 %v1133, %v1143
  %v1204 = vadd.f32 %v1134, %v1143
  %v1205 = vadd.f32 %v1135, %v1143
  %v1206 = vadd.f32 %v1136, %v1143
  %v1207 = vadd.f32 %v1137, %v1143
  %v1208 = vadd.f32 %v1138, %v1143
  %vm1209 = vcmp.ge.f32.partialorder %v1145, 0.0
  %vm1210 = vcmp.ge.f32.partialorder %v1146, 0.0
  %vm1211 = vcmp.ge.f32.partialorder %v1147, 0.0
  %vm1212 = vcmp.ge.f32.partialorder %v1148, 0.0
  %vm1213 = vcmp.ge.f32.partialorder %v1149, 0.0
  %vm1214 = vcmp.ge.f32.partialorder %v1150, 0.0
  %vm1215 = vcmp.ge.f32.partialorder %v1151, 0.0
  %vm1216 = vcmp.ge.f32.partialorder %v1152, 0.0
  %vm1217 = vcmp.ge.f32.partialorder %v1153, 0.0
  %vm1218 = vcmp.ge.f32.partialorder %v1154, 0.0
  %vm1219 = vcmp.ge.f32.partialorder %v1155, 0.0
  %vm1220 = vcmp.ge.f32.partialorder %v1156, 0.0
  %vm1221 = vcmp.ge.f32.partialorder %v1157, 0.0
  %vm1222 = vcmp.ge.f32.partialorder %v1158, 0.0
  %vm1223 = vcmp.ge.f32.partialorder %v1159, 0.0
  %vm1224 = vcmp.ge.f32.partialorder %v1160, 0.0
  %vm1225 = vcmp.ge.f32.partialorder %v1161, 0.0
  %vm1226 = vcmp.ge.f32.partialorder %v1162, 0.0
  %vm1227 = vcmp.ge.f32.partialorder %v1163, 0.0
  %vm1228 = vcmp.ge.f32.partialorder %v1164, 0.0
  %vm1229 = vcmp.ge.f32.partialorder %v1165, 0.0
  %vm1230 = vcmp.ge.f32.partialorder %v1166, 0.0
  %vm1231 = vcmp.ge.f32.partialorder %v1167, 0.0
  %vm1232 = vcmp.ge.f32.partialorder %v1168, 0.0
  %vm1233 = vcmp.ge.f32.partialorder %v1169, 0.0
  %vm1234 = vcmp.ge.f32.partialorder %v1170, 0.0
  %vm1235 = vcmp.ge.f32.partialorder %v1171, 0.0
  %vm1236 = vcmp.ge.f32.partialorder %v1172, 0.0
  %vm1237 = vcmp.ge.f32.partialorder %v1173, 0.0
  %vm1238 = vcmp.ge.f32.partialorder %v1174, 0.0
  %vm1239 = vcmp.ge.f32.partialorder %v1175, 0.0
  %vm1240 = vcmp.ge.f32.partialorder %v1176, 0.0
  %vm1241 = vcmp.ge.f32.partialorder %v1177, 0.0
  %vm1242 = vcmp.ge.f32.partialorder %v1178, 0.0
  %vm1243 = vcmp.ge.f32.partialorder %v1179, 0.0
  %vm1244 = vcmp.ge.f32.partialorder %v1180, 0.0
  %vm1245 = vcmp.ge.f32.partialorder %v1181, 0.0
  %vm1246 = vcmp.ge.f32.partialorder %v1182, 0.0
  %vm1247 = vcmp.ge.f32.partialorder %v1183, 0.0
  %vm1248 = vcmp.ge.f32.partialorder %v1184, 0.0
  %vm1249 = vcmp.ge.f32.partialorder %v1185, 0.0
  %vm1250 = vcmp.ge.f32.partialorder %v1186, 0.0
  %vm1251 = vcmp.ge.f32.partialorder %v1187, 0.0
  %vm1252 = vcmp.ge.f32.partialorder %v1188, 0.0
  %vm1253 = vcmp.ge.f32.partialorder %v1189, 0.0
  %vm1254 = vcmp.ge.f32.partialorder %v1190, 0.0
  %vm1255 = vcmp.ge.f32.partialorder %v1191, 0.0
  %vm1256 = vcmp.ge.f32.partialorder %v1192, 0.0
  %vm1257 = vcmp.ge.f32.partialorder %v1193, 0.0
  %vm1258 = vcmp.ge.f32.partialorder %v1194, 0.0
  %vm1259 = vcmp.ge.f32.partialorder %v1195, 0.0
  %vm1260 = vcmp.ge.f32.partialorder %v1196, 0.0
  %vm1261 = vcmp.ge.f32.partialorder %v1197, 0.0
  %vm1262 = vcmp.ge.f32.partialorder %v1198, 0.0
  %vm1263 = vcmp.ge.f32.partialorder %v1199, 0.0
  %vm1264 = vcmp.ge.f32.partialorder %v1200, 0.0
  %vm1265 = vcmp.ge.f32.partialorder %v1201, 0.0
  %vm1266 = vcmp.ge.f32.partialorder %v1202, 0.0
  %vm1267 = vcmp.ge.f32.partialorder %v1203, 0.0
  %vm1268 = vcmp.ge.f32.partialorder %v1204, 0.0
  %vm1269 = vcmp.ge.f32.partialorder %v1205, 0.0
  %vm1270 = vcmp.ge.f32.partialorder %v1206, 0.0
  %vm1271 = vcmp.ge.f32.partialorder %v1207, 0.0
  %vm1272 = vcmp.ge.f32.partialorder %v1208, 0.0
  %v1273 = vmul.f32 %v1145, 0.2
  %v1274 = vmul.f32 %v1146, 0.2
  %v1275 = vmul.f32 %v1147, 0.2
  %v1276 = vmul.f32 %v1148, 0.2
  %v1277 = vmul.f32 %v1149, 0.2
  %v1278 = vmul.f32 %v1150, 0.2
  %v1279 = vmul.f32 %v1151, 0.2
  %v1280 = vmul.f32 %v1152, 0.2
  %v1281 = vmul.f32 %v1153, 0.2
  %v1282 = vmul.f32 %v1154, 0.2
  %v1283 = vmul.f32 %v1155, 0.2
  %v1284 = vmul.f32 %v1156, 0.2
  %v1285 = vmul.f32 %v1157, 0.2
  %v1286 = vmul.f32 %v1158, 0.2
  %v1287 = vmul.f32 %v1159, 0.2
  %v1288 = vmul.f32 %v1160, 0.2
  %v1289 = vmul.f32 %v1161, 0.2
  %v1290 = vmul.f32 %v1162, 0.2
  %v1291 = vmul.f32 %v1163, 0.2
  %v1292 = vmul.f32 %v1164, 0.2
  %v1293 = vmul.f32 %v1165, 0.2
  %v1294 = vmul.f32 %v1166, 0.2
  %v1295 = vmul.f32 %v1167, 0.2
  %v1296 = vmul.f32 %v1168, 0.2
  %v1297 = vmul.f32 %v1169, 0.2
  %v1298 = vmul.f32 %v1170, 0.2
  %v1299 = vmul.f32 %v1171, 0.2
  %v1300 = vmul.f32 %v1172, 0.2
  %v1301 = vmul.f32 %v1173, 0.2
  %v1302 = vmul.f32 %v1174, 0.2
  %v1303 = vmul.f32 %v1175, 0.2
  %v1304 = vmul.f32 %v1176, 0.2
  %v1305 = vmul.f32 %v1177, 0.2
  %v1306 = vmul.f32 %v1178, 0.2
  %v1307 = vmul.f32 %v1179, 0.2
  %v1308 = vmul.f32 %v1180, 0.2
  %v1309 = vmul.f32 %v1181, 0.2
  %v1310 = vmul.f32 %v1182, 0.2
  %v1311 = vmul.f32 %v1183, 0.2
  %v1312 = vmul.f32 %v1184, 0.2
  %v1313 = vmul.f32 %v1185, 0.2
  %v1314 = vmul.f32 %v1186, 0.2
  %v1315 = vmul.f32 %v1187, 0.2
  %v1316 = vmul.f32 %v1188, 0.2
  %v1317 = vmul.f32 %v1189, 0.2
  %v1318 = vmul.f32 %v1190, 0.2
  %v1319 = vmul.f32 %v1191, 0.2
  %v1320 = vmul.f32 %v1192, 0.2
  %v1321 = vmul.f32 %v1193, 0.2
  %v1322 = vmul.f32 %v1194, 0.2
  %v1323 = vmul.f32 %v1195, 0.2
  %v1324 = vmul.f32 %v1196, 0.2
  %v1325 = vmul.f32 %v1197, 0.2
  %v1326 = vmul.f32 %v1198, 0.2
  %v1327 = vmul.f32 %v1199, 0.2
  %v1328 = vmul.f32 %v1200, 0.2
  %v1329 = vmul.f32 %v1201, 0.2
  %v1330 = vmul.f32 %v1202, 0.2
  %v1331 = vmul.f32 %v1203, 0.2
  %v1332 = vmul.f32 %v1204, 0.2
  %v1333 = vmul.f32 %v1205, 0.2
  %v1334 = vmul.f32 %v1206, 0.2
  %v1335 = vmul.f32 %v1207, 0.2
  %v1336 = vmul.f32 %v1208, 0.2
  %v1337 = vsel %vm1209, %v1145, %v1273
  %v1338 = vsel %vm1210, %v1146, %v1274
  %v1339 = vsel %vm1211, %v1147, %v1275
  %v1340 = vsel %vm1212, %v1148, %v1276
  %v1341 = vsel %vm1213, %v1149, %v1277
  %v1342 = vsel %vm1214, %v1150, %v1278
  %v1343 = vsel %vm1215, %v1151, %v1279
  %v1344 = vsel %vm1216, %v1152, %v1280
  %v1345 = vsel %vm1217, %v1153, %v1281
  %v1346 = vsel %vm1218, %v1154, %v1282
  %v1347 = vsel %vm1219, %v1155, %v1283
  %v1348 = vsel %vm1220, %v1156, %v1284
  %v1349 = vsel %vm1221, %v1157, %v1285
  %v1350 = vsel %vm1222, %v1158, %v1286
  %v1351 = vsel %vm1223, %v1159, %v1287
  %v1352 = vsel %vm1224, %v1160, %v1288
  %v1353 = vsel %vm1225, %v1161, %v1289
  %v1354 = vsel %vm1226, %v1162, %v1290
  %v1355 = vsel %vm1227, %v1163, %v1291
  %v1356 = vsel %vm1228, %v1164, %v1292
  %v1357 = vsel %vm1229, %v1165, %v1293
  %v1358 = vsel %vm1230, %v1166, %v1294
  %v1359 = vsel %vm1231, %v1167, %v1295
  %v1360 = vsel %vm1232, %v1168, %v1296
  %v1361 = vsel %vm1233, %v1169, %v1297
  %v1362 = vsel %vm1234, %v1170, %v1298
  %v1363 = vsel %vm1235, %v1171, %v1299
  %v1364 = vsel %vm1236, %v1172, %v1300
  %v1365 = vsel %vm1237, %v1173, %v1301
  %v1366 = vsel %vm1238, %v1174, %v1302
  %v1367 = vsel %vm1239, %v1175, %v1303
  %v1368 = vsel %vm1240, %v1176, %v1304
  %v1369 = vsel %vm1241, %v1177, %v1305
  %v1370 = vsel %vm1242, %v1178, %v1306
  %v1371 = vsel %vm1243, %v1179, %v1307
  %v1372 = vsel %vm1244, %v1180, %v1308
  %v1373 = vsel %vm1245, %v1181, %v1309
  %v1374 = vsel %vm1246, %v1182, %v1310
  %v1375 = vsel %vm1247, %v1183, %v1311
  %v1376 = vsel %vm1248, %v1184, %v1312
  %v1377 = vsel %vm1249, %v1185, %v1313
  %v1378 = vsel %vm1250, %v1186, %v1314
  %v1379 = vsel %vm1251, %v1187, %v1315
  %v1380 = vsel %vm1252, %v1188, %v1316
  %v1381 = vsel %vm1253, %v1189, %v1317
  %v1382 = vsel %vm1254, %v1190, %v1318
  %v1383 = vsel %vm1255, %v1191, %v1319
  %v1384 = vsel %vm1256, %v1192, %v1320
  %v1385 = vsel %vm1257, %v1193, %v1321
  %v1386 = vsel %vm1258, %v1194, %v1322
  %v1387 = vsel %vm1259, %v1195, %v1323
  %v1388 = vsel %vm1260, %v1196, %v1324
  %v1389 = vsel %vm1261, %v1197, %v1325
  %v1390 = vsel %vm1262, %v1198, %v1326
  %v1391 = vsel %vm1263, %v1199, %v1327
  %v1392 = vsel %vm1264, %v1200, %v1328
  %v1393 = vsel %vm1265, %v1201, %v1329
  %v1394 = vsel %vm1266, %v1202, %v1330
  %v1395 = vsel %vm1267, %v1203, %v1331
  %v1396 = vsel %vm1268, %v1204, %v1332
  %v1397 = vsel %vm1269, %v1205, %v1333
  %v1398 = vsel %vm1270, %v1206, %v1334
  %v1399 = vsel %vm1271, %v1207, %v1335
  %v1400 = vsel %vm1272, %v1208, %v1336
  %1401 = vst.msk [vmem:[%s4] sm:$0xff] %vm665, %v1337
  %1402 = vst.msk [vmem:[%s4 + $0x8] sm:$0xff] %vm665, %v1338
  %1403 = vst.msk [vmem:[%s4 + $0x10] sm:$0xff] %vm665, %v1339
  %1404 = vst.msk [vmem:[%s4 + $0x18] sm:$0xff] %vm665, %v1340
  %1405 = vst.msk [vmem:[%s4 + $0x20] sm:$0xff] %vm665, %v1341
  %1406 = vst.msk [vmem:[%s4 + $0x28] sm:$0xff] %vm665, %v1342
  %1407 = vst.msk [vmem:[%s4 + $0x30] sm:$0xff] %vm665, %v1343
  %1408 = vst.msk [vmem:[%s4 + $0x38] sm:$0xff] %vm665, %v1344
  %1409 = vst.msk [vmem:[%s4 + $0x40] sm:$0xff] %vm665, %v1345
  %1410 = vst.msk [vmem:[%s4 + $0x48] sm:$0xff] %vm665, %v1346
  %1411 = vst.msk [vmem:[%s4 + $0x50] sm:$0xff] %vm665, %v1347
  %1412 = vst.msk [vmem:[%s4 + $0x58] sm:$0xff] %vm665, %v1348
  %1413 = vst.msk [vmem:[%s4 + $0x60] sm:$0xff] %vm665, %v1349
  %1414 = vst.msk [vmem:[%s4 + $0x68] sm:$0xff] %vm665, %v1350
  %1415 = vst.msk [vmem:[%s4 + $0x70] sm:$0xff] %vm665, %v1351
  %1416 = vst.msk [vmem:[%s4 + $0x78] sm:$0xff] %vm665, %v1352
  %1417 = vst.msk [vmem:[%s4 + $0x80] sm:$0xff] %vm665, %v1353
  %1418 = vst.msk [vmem:[%s4 + $0x88] sm:$0xff] %vm665, %v1354
  %1419 = vst.msk [vmem:[%s4 + $0x90] sm:$0xff] %vm665, %v1355
  %1420 = vst.msk [vmem:[%s4 + $0x98] sm:$0xff] %vm665, %v1356
  %1421 = vst.msk [vmem:[%s4 + $0xa0] sm:$0xff] %vm665, %v1357
  %1422 = vst.msk [vmem:[%s4 + $0xa8] sm:$0xff] %vm665, %v1358
  %1423 = vst.msk [vmem:[%s4 + $0xb0] sm:$0xff] %vm665, %v1359
  %1424 = vst.msk [vmem:[%s4 + $0xb8] sm:$0xff] %vm665, %v1360
  %1425 = vst.msk [vmem:[%s4 + $0xc0] sm:$0xff] %vm665, %v1361
  %1426 = vst.msk [vmem:[%s4 + $0xc8] sm:$0xff] %vm665, %v1362
  %1427 = vst.msk [vmem:[%s4 + $0xd0] sm:$0xff] %vm665, %v1363
  %1428 = vst.msk [vmem:[%s4 + $0xd8] sm:$0xff] %vm665, %v1364
  %1429 = vst.msk [vmem:[%s4 + $0xe0] sm:$0xff] %vm665, %v1365
  %1430 = vst.msk [vmem:[%s4 + $0xe8] sm:$0xff] %vm665, %v1366
  %1431 = vst.msk [vmem:[%s4 + $0xf0] sm:$0xff] %vm665, %v1367
  %1432 = vst.msk [vmem:[%s4 + $0xf8] sm:$0xff] %vm665, %v1368
  %1433 = vst.msk [vmem:[%s4 + $0x100] sm:$0xff] %vm665, %v1369
  %1434 = vst.msk [vmem:[%s4 + $0x108] sm:$0xff] %vm665, %v1370
  %1435 = vst.msk [vmem:[%s4 + $0x110] sm:$0xff] %vm665, %v1371
  %1436 = vst.msk [vmem:[%s4 + $0x118] sm:$0xff] %vm665, %v1372
  %1437 = vst.msk [vmem:[%s4 + $0x120] sm:$0xff] %vm665, %v1373
  %1438 = vst.msk [vmem:[%s4 + $0x128] sm:$0xff] %vm665, %v1374
  %1439 = vst.msk [vmem:[%s4 + $0x130] sm:$0xff] %vm665, %v1375
  %1440 = vst.msk [vmem:[%s4 + $0x138] sm:$0xff] %vm665, %v1376
  %1441 = vst.msk [vmem:[%s4 + $0x140] sm:$0xff] %vm665, %v1377
  %1442 = vst.msk [vmem:[%s4 + $0x148] sm:$0xff] %vm665, %v1378
  %1443 = vst.msk [vmem:[%s4 + $0x150] sm:$0xff] %vm665, %v1379
  %1444 = vst.msk [vmem:[%s4 + $0x158] sm:$0xff] %vm665, %v1380
  %1445 = vst.msk [vmem:[%s4 + $0x160] sm:$0xff] %vm665, %v1381
  %1446 = vst.msk [vmem:[%s4 + $0x168] sm:$0xff] %vm665, %v1382
  %1447 = vst.msk [vmem:[%s4 + $0x170] sm:$0xff] %vm665, %v1383
  %1448 = vst.msk [vmem:[%s4 + $0x178] sm:$0xff] %vm665, %v1384
  %1449 = vst.msk [vmem:[%s4 + $0x180] sm:$0xff] %vm665, %v1385
  %1450 = vst.msk [vmem:[%s4 + $0x188] sm:$0xff] %vm665, %v1386
  %1451 = vst.msk [vmem:[%s4 + $0x190] sm:$0xff] %vm665, %v1387
  %1452 = vst.msk [vmem:[%s4 + $0x198] sm:$0xff] %vm665, %v1388
  %1453 = vst.msk [vmem:[%s4 + $0x1a0] sm:$0xff] %vm665, %v1389
  %1454 = vst.msk [vmem:[%s4 + $0x1a8] sm:$0xff] %vm665, %v1390
  %1455 = vst.msk [vmem:[%s4 + $0x1b0] sm:$0xff] %vm665, %v1391
  %1456 = vst.msk [vmem:[%s4 + $0x1b8] sm:$0xff] %vm665, %v1392
  %1457 = vst.msk [vmem:[%s4 + $0x1c0] sm:$0xff] %vm665, %v1393
  %1458 = vst.msk [vmem:[%s4 + $0x1c8] sm:$0xff] %vm665, %v1394
  %1459 = vst.msk [vmem:[%s4 + $0x1d0] sm:$0xff] %vm665, %v1395
  %1460 = vst.msk [vmem:[%s4 + $0x1d8] sm:$0xff] %vm665, %v1396
  %1461 = vst.msk [vmem:[%s4 + $0x1e0] sm:$0xff] %vm665, %v1397
  %1462 = vst.msk [vmem:[%s4 + $0x1e8] sm:$0xff] %vm665, %v1398
  %1463 = vst.msk [vmem:[%s4 + $0x1f0] sm:$0xff] %vm665, %v1399
  %1464 = vst.msk [vmem:[%s4 + $0x1f8] sm:$0xff] %vm665, %v1400
  // Predicated region
  $region18: #{unet_forward.9} parent=0 // pred_check
    _
  $region19: #{unet_forward.9} parent=0 // pred_check_branch
    %1466 = sbr.rel (0) target = $region21
  $region20: #{unet_forward.9} parent=0 // pred_region
    _
  $region21: #{unet_forward.9} parent=0 // pred_fallthru
    _
  // Predicated region
  $region22: #{unet_forward.9} parent=0 // pred_check
    _
  $region23: #{unet_forward.9} parent=0 // pred_check_branch
    %1468 = sbr.rel (0) target = $region25
  $region24: #{unet_forward.9} parent=0 // pred_region
    _
  $region25: #{unet_forward.9} parent=0 // pred_fallthru
    _

// kernel: unet_forward.10
$region0: #{unet_forward.10}
  #allocation0 [shape = 'u32[]', space=smem, size = 0x4, offset = 0x4, fixed_abs, tag = 'smem constant byte address 0x4 - core index']
  #allocation1 [shape = 'u32[144,128]{1,0:T(1,128)}', space=vmem, size = 0x12000, scoped, tag = 'internal scratch']
  %s0 = inlined_call_operand.vmem [shape: f32[1,128,128], index: 0, kind: input, shape index: {}]
  %s1 = inlined_call_operand.vmem [shape: f32[1,128,16], index: 1, kind: input, shape index: {}]
  %s2 = inlined_call_operand.vmem [shape: f32[1,16], index: 2, kind: input, shape index: {}]
  %s3 = inlined_call_operand.vmem [shape: f32[1,16], index: 3, kind: input, shape index: {}]
  %s4 = inlined_call_operand.vmem [shape: f32[1,128,16], index: 4, kind: output, shape index: {}]
  %s5 = sld [smem:[#allocation0]]
  $region26: #{unet_forward.10} parent=0
    _
  %s7 = ssub.s32 1, %s5
  %s8 = scalar_select 0, %s7, %s5
  // Predicated region
  $region2: #{unet_forward.10} parent=0 // pred_check
    _
  $region3: #{unet_forward.10} parent=0 // pred_check_branch
    %10 = sbr.rel (0) target = $region5
  $region4: #{unet_forward.10} parent=0 // pred_region
    _
  $region5: #{unet_forward.10} parent=0 // pred_fallthru
    _
  // Predicated region
  $region6: #{unet_forward.10} parent=0 // pred_check
    _
  $region7: #{unet_forward.10} parent=0 // pred_check_branch
    %12 = sbr.rel (0) target = $region9
  $region8: #{unet_forward.10} parent=0 // pred_region
    _
  $region9: #{unet_forward.10} parent=0 // pred_fallthru
    _
  // Predicated region
  $region10: #{unet_forward.10} parent=0 // pred_check
    _
  $region11: #{unet_forward.10} parent=0 // pred_check_branch
    %14 = sbr.rel (0) target = $region13
  $region12: #{unet_forward.10} parent=0 // pred_region
    _
  $region13: #{unet_forward.10} parent=0 // pred_fallthru
    _
  // Predicated region
  $region14: #{unet_forward.10} parent=0 // pred_check
    _
  $region15: #{unet_forward.10} parent=0 // pred_check_branch
    %16 = sbr.rel (0) target = $region17
  $region16: #{unet_forward.10} parent=0 // pred_region
    _
  $region17: #{unet_forward.10} parent=0 // pred_fallthru
    _
  %v17 = vld [vmem:[%s0] sm:$0xff]
  %v18 = vld [vmem:[%s0 + $0x8] sm:$0xff]
  %v19 = vld [vmem:[%s0 + $0x10] sm:$0xff]
  %v20 = vld [vmem:[%s0 + $0x18] sm:$0xff]
  %v21 = vld [vmem:[%s0 + $0x20] sm:$0xff]
  %v22 = vld [vmem:[%s0 + $0x28] sm:$0xff]
  %v23 = vld [vmem:[%s0 + $0x30] sm:$0xff]
  %v24 = vld [vmem:[%s0 + $0x38] sm:$0xff]
  %v25 = vld [vmem:[%s0 + $0x40] sm:$0xff]
  %v26 = vld [vmem:[%s0 + $0x48] sm:$0xff]
  %v27 = vld [vmem:[%s0 + $0x50] sm:$0xff]
  %v28 = vld [vmem:[%s0 + $0x58] sm:$0xff]
  %v29 = vld [vmem:[%s0 + $0x60] sm:$0xff]
  %v30 = vld [vmem:[%s0 + $0x68] sm:$0xff]
  %v31 = vld [vmem:[%s0 + $0x70] sm:$0xff]
  %v32 = vld [vmem:[%s0 + $0x78] sm:$0xff]
  %v33 = vld [vmem:[%s1] sm:$0xff]
  %v34 = vld [vmem:[%s1 + $0x8] sm:$0xff]
  %v35 = vld [vmem:[%s1 + $0x10] sm:$0xff]
  %v36 = vld [vmem:[%s1 + $0x18] sm:$0xff]
  %v37 = vld [vmem:[%s1 + $0x20] sm:$0xff]
  %v38 = vld [vmem:[%s1 + $0x28] sm:$0xff]
  %v39 = vld [vmem:[%s1 + $0x30] sm:$0xff]
  %v40 = vld [vmem:[%s1 + $0x38] sm:$0xff]
  %v41 = vld [vmem:[%s1 + $0x40] sm:$0xff]
  %v42 = vld [vmem:[%s1 + $0x48] sm:$0xff]
  %v43 = vld [vmem:[%s1 + $0x50] sm:$0xff]
  %v44 = vld [vmem:[%s1 + $0x58] sm:$0xff]
  %v45 = vld [vmem:[%s1 + $0x60] sm:$0xff]
  %v46 = vld [vmem:[%s1 + $0x68] sm:$0xff]
  %v47 = vld [vmem:[%s1 + $0x70] sm:$0xff]
  %v48 = vld [vmem:[%s1 + $0x78] sm:$0xff]
  %49 = vmatprep.subr.mxu0 0.0
  %50 = vmatpush1.msra.mxu0 %v33
  %51 = vmatprep.subr.mxu0 0.0
  %52 = vmatpush1.msra.mxu0 %v34
  %53 = vmatprep.subr.mxu0 0.0
  %54 = vmatpush1.msra.mxu0 %v35
  %55 = vmatprep.subr.mxu0 0.0
  %56 = vmatpush1.msra.mxu0 %v36
  %57 = vmatprep.subr.mxu0 0.0
  %58 = vmatpush1.msra.mxu0 %v37
  %59 = vmatprep.subr.mxu0 0.0
  %60 = vmatpush1.msra.mxu0 %v38
  %61 = vmatprep.subr.mxu0 0.0
  %62 = vmatpush1.msra.mxu0 %v39
  %63 = vmatprep.subr.mxu0 0.0
  %64 = vmatpush1.msra.mxu0 %v40
  %65 = vmatprep.subr.mxu0 0.0
  %66 = vmatpush1.msra.mxu0 %v41
  %67 = vmatprep.subr.mxu0 0.0
  %68 = vmatpush1.msra.mxu0 %v42
  %69 = vmatprep.subr.mxu0 0.0
  %70 = vmatpush1.msra.mxu0 %v43
  %71 = vmatprep.subr.mxu0 0.0
  %72 = vmatpush1.msra.mxu0 %v44
  %73 = vmatprep.subr.mxu0 0.0
  %74 = vmatpush1.msra.mxu0 %v45
  %75 = vmatprep.subr.mxu0 0.0
  %76 = vmatpush1.msra.mxu0 %v46
  %77 = vmatprep.subr.mxu0 0.0
  %78 = vmatpush1.msra.mxu0 %v47
  %79 = vmatprep.subr.mxu0 0.0
  %80 = vmatpush1.msra.mxu0 %v48
  %81 = vmatprep.subr.mxu0 0.0
  %82 = vmatpush1.msra.mxu0 0.0
  %83 = vmatprep.subr.mxu0 0.0
  %84 = vmatpush1.msra.mxu0 0.0
  %85 = vmatprep.subr.mxu0 0.0
  %86 = vmatpush1.msra.mxu0 0.0
  %87 = vmatprep.subr.mxu0 0.0
  %88 = vmatpush1.msra.mxu0 0.0
  %89 = vmatprep.subr.mxu0 0.0
  %90 = vmatpush1.msra.mxu0 0.0
  %91 = vmatprep.subr.mxu0 0.0
  %92 = vmatpush1.msra.mxu0 0.0
  %93 = vmatprep.subr.mxu0 0.0
  %94 = vmatpush1.msra.mxu0 0.0
  %95 = vmatprep.subr.mxu0 0.0
  %96 = vmatpush1.msra.mxu0 0.0
  %97 = vmatprep.subr.mxu0 0.0
  %98 = vmatpush1.msra.mxu0 0.0
  %99 = vmatprep.subr.mxu0 0.0
  %100 = vmatpush1.msra.mxu0 0.0
  %101 = vmatprep.subr.mxu0 0.0
  %102 = vmatpush1.msra.mxu0 0.0
  %103 = vmatprep.subr.mxu0 0.0
  %104 = vmatpush1.msra.mxu0 0.0
  %105 = vmatprep.subr.mxu0 0.0
  %106 = vmatpush1.msra.mxu0 0.0
  %107 = vmatprep.subr.mxu0 0.0
  %108 = vmatpush1.msra.mxu0 0.0
  %109 = vmatprep.subr.mxu0 0.0
  %110 = vmatpush1.msra.mxu0 0.0
  %111 = vmatprep.subr.mxu0 0.0
  %112 = vmatpush1.msra.mxu0 0.0
  %113 = vmatprep.mubr.f32.mxu0 0.0
  %114 = vmatmul.mubr.f32.gmra.mrb[0].mxu0 %v17
  %v115 = vpop.f32.mrb[0].mxu0
  %v116 = vadd.f32 0.0, %v115
  %v117 = vpop.f32.mrb[0].mxu0
  %118 = vmatprep.mubr.f32.mxu0 0.0
  %119 = vmatmul.mubr.f32.gmra.mrb[0].mxu0 %v18
  %v120 = vpop.f32.mrb[0].mxu0
  %v121 = vadd.f32 0.0, %v120
  %v122 = vpop.f32.mrb[0].mxu0
  %123 = vmatprep.mubr.f32.mxu0 0.0
  %124 = vmatmul.mubr.f32.gmra.mrb[0].mxu0 %v19
  %v125 = vpop.f32.mrb[0].mxu0
  %v126 = vadd.f32 0.0, %v125
  %v127 = vpop.f32.mrb[0].mxu0
  %128 = vmatprep.mubr.f32.mxu0 0.0
  %129 = vmatmul.mubr.f32.gmra.mrb[0].mxu0 %v20
  %v130 = vpop.f32.mrb[0].mxu0
  %v131 = vadd.f32 0.0, %v130
  %v132 = vpop.f32.mrb[0].mxu0
  %133 = vmatprep.mubr.f32.mxu0 0.0
  %134 = vmatmul.mubr.f32.gmra.mrb[0].mxu0 %v21
  %v135 = vpop.f32.mrb[0].mxu0
  %v136 = vadd.f32 0.0, %v135
  %v137 = vpop.f32.mrb[0].mxu0
  %138 = vmatprep.mubr.f32.mxu0 0.0
  %139 = vmatmul.mubr.f32.gmra.mrb[0].mxu0 %v22
  %v140 = vpop.f32.mrb[0].mxu0
  %v141 = vadd.f32 0.0, %v140
  %v142 = vpop.f32.mrb[0].mxu0
  %143 = vmatprep.mubr.f32.mxu0 0.0
  %144 = vmatmul.mubr.f32.gmra.mrb[0].mxu0 %v23
  %v145 = vpop.f32.mrb[0].mxu0
  %v146 = vadd.f32 0.0, %v145
  %v147 = vpop.f32.mrb[0].mxu0
  %148 = vmatprep.mubr.f32.mxu0 0.0
  %149 = vmatmul.mubr.f32.gmra.mrb[0].mxu0 %v24
  %v150 = vpop.f32.mrb[0].mxu0
  %v151 = vadd.f32 0.0, %v150
  %v152 = vpop.f32.mrb[0].mxu0
  %153 = vmatprep.mubr.f32.mxu0 0.0
  %154 = vmatmul.mubr.f32.gmra.mrb[0].mxu0 %v25
  %v155 = vpop.f32.mrb[0].mxu0
  %v156 = vadd.f32 0.0, %v155
  %v157 = vpop.f32.mrb[0].mxu0
  %158 = vmatprep.mubr.f32.mxu0 0.0
  %159 = vmatmul.mubr.f32.gmra.mrb[0].mxu0 %v26
  %v160 = vpop.f32.mrb[0].mxu0
  %v161 = vadd.f32 0.0, %v160
  %v162 = vpop.f32.mrb[0].mxu0
  %163 = vmatprep.mubr.f32.mxu0 0.0
  %164 = vmatmul.mubr.f32.gmra.mrb[0].mxu0 %v27
  %v165 = vpop.f32.mrb[0].mxu0
  %v166 = vadd.f32 0.0, %v165
  %v167 = vpop.f32.mrb[0].mxu0
  %168 = vmatprep.mubr.f32.mxu0 0.0
  %169 = vmatmul.mubr.f32.gmra.mrb[0].mxu0 %v28
  %v170 = vpop.f32.mrb[0].mxu0
  %v171 = vadd.f32 0.0, %v170
  %v172 = vpop.f32.mrb[0].mxu0
  %173 = vmatprep.mubr.f32.mxu0 0.0
  %174 = vmatmul.mubr.f32.gmra.mrb[0].mxu0 %v29
  %v175 = vpop.f32.mrb[0].mxu0
  %v176 = vadd.f32 0.0, %v175
  %v177 = vpop.f32.mrb[0].mxu0
  %178 = vmatprep.mubr.f32.mxu0 0.0
  %179 = vmatmul.mubr.f32.gmra.mrb[0].mxu0 %v30
  %v180 = vpop.f32.mrb[0].mxu0
  %v181 = vadd.f32 0.0, %v180
  %v182 = vpop.f32.mrb[0].mxu0
  %183 = vmatprep.mubr.f32.mxu0 0.0
  %184 = vmatmul.mubr.f32.gmra.mrb[0].mxu0 %v31
  %v185 = vpop.f32.mrb[0].mxu0
  %v186 = vadd.f32 0.0, %v185
  %v187 = vpop.f32.mrb[0].mxu0
  %188 = vmatprep.mubr.f32.mxu0 0.0
  %189 = vmatmul.mubr.f32.gmra.mrb[0].mxu0 %v32
  %v190 = vpop.f32.mrb[0].mxu0
  %v191 = vadd.f32 0.0, %v190
  %v192 = vpop.f32.mrb[0].mxu0
  %193 = vdwg.mxu0
  %vm194 = vcmask 130048
  %v195 = vsel %vm194, %v116, 0.0
  %v196 = vsel %vm194, %v121, 0.0
  %v197 = vadd.f32 %v195, %v196
  %v198 = vsel %vm194, %v126, 0.0
  %v199 = vadd.f32 %v197, %v198
  %v200 = vsel %vm194, %v131, 0.0
  %v201 = vadd.f32 %v199, %v200
  %v202 = vsel %vm194, %v136, 0.0
  %v203 = vadd.f32 %v201, %v202
  %v204 = vsel %vm194, %v141, 0.0
  %v205 = vadd.f32 %v203, %v204
  %v206 = vsel %vm194, %v146, 0.0
  %v207 = vadd.f32 %v205, %v206
  %v208 = vsel %vm194, %v151, 0.0
  %v209 = vadd.f32 %v207, %v208
  %v210 = vsel %vm194, %v156, 0.0
  %v211 = vadd.f32 %v209, %v210
  %v212 = vsel %vm194, %v161, 0.0
  %v213 = vadd.f32 %v211, %v212
  %v214 = vsel %vm194, %v166, 0.0
  %v215 = vadd.f32 %v213, %v214
  %v216 = vsel %vm194, %v171, 0.0
  %v217 = vadd.f32 %v215, %v216
  %v218 = vsel %vm194, %v176, 0.0
  %v219 = vadd.f32 %v217, %v218
  %v220 = vsel %vm194, %v181, 0.0
  %v221 = vadd.f32 %v219, %v220
  %v222 = vsel %vm194, %v186, 0.0
  %v223 = vadd.f32 %v221, %v222
  %v224 = vsel %vm194, %v191, 0.0
  %v225 = vadd.f32 %v223, %v224
  %v226 = vrot.slane %v225, 4
  %v227 = vadd.f32 %v225, %v226
  %v228 = vrot.slane %v227, 2
  %v229 = vadd.f32 %v227, %v228
  %v230 = vrot.slane %v229, 1
  %v231 = vadd.f32 %v229, %v230
  %v232 = vmul.f32 %v231, 0.0078125
  %v233 = vsub.f32 %v116, %v232
  %v234 = vsub.f32 %v121, %v232
  %v235 = vsub.f32 %v126, %v232
  %v236 = vsub.f32 %v131, %v232
  %v237 = vsub.f32 %v136, %v232
  %v238 = vsub.f32 %v141, %v232
  %v239 = vsub.f32 %v146, %v232
  %v240 = vsub.f32 %v151, %v232
  %v241 = vsub.f32 %v156, %v232
  %v242 = vsub.f32 %v161, %v232
  %v243 = vsub.f32 %v166, %v232
  %v244 = vsub.f32 %v171, %v232
  %v245 = vsub.f32 %v176, %v232
  %v246 = vsub.f32 %v181, %v232
  %v247 = vsub.f32 %v186, %v232
  %v248 = vsub.f32 %v191, %v232
  %v249 = vmul.f32 %v233, %v233
  %v250 = vmul.f32 %v234, %v234
  %v251 = vmul.f32 %v235, %v235
  %v252 = vmul.f32 %v236, %v236
  %v253 = vmul.f32 %v237, %v237
  %v254 = vmul.f32 %v238, %v238
  %v255 = vmul.f32 %v239, %v239
  %v256 = vmul.f32 %v240, %v240
  %v257 = vmul.f32 %v241, %v241
  %v258 = vmul.f32 %v242, %v242
  %v259 = vmul.f32 %v243, %v243
  %v260 = vmul.f32 %v244, %v244
  %v261 = vmul.f32 %v245, %v245
  %v262 = vmul.f32 %v246, %v246
  %v263 = vmul.f32 %v247, %v247
  %v264 = vmul.f32 %v248, %v248
  %v265 = vsel %vm194, %v249, 0.0
  %v266 = vsel %vm194, %v250, 0.0
  %v267 = vadd.f32 %v265, %v266
  %v268 = vsel %vm194, %v251, 0.0
  %v269 = vadd.f32 %v267, %v268
  %v270 = vsel %vm194, %v252, 0.0
  %v271 = vadd.f32 %v269, %v270
  %v272 = vsel %vm194, %v253, 0.0
  %v273 = vadd.f32 %v271, %v272
  %v274 = vsel %vm194, %v254, 0.0
  %v275 = vadd.f32 %v273, %v274
  %v276 = vsel %vm194, %v255, 0.0
  %v277 = vadd.f32 %v275, %v276
  %v278 = vsel %vm194, %v256, 0.0
  %v279 = vadd.f32 %v277, %v278
  %v280 = vsel %vm194, %v257, 0.0
  %v281 = vadd.f32 %v279, %v280
  %v282 = vsel %vm194, %v258, 0.0
  %v283 = vadd.f32 %v281, %v282
  %v284 = vsel %vm194, %v259, 0.0
  %v285 = vadd.f32 %v283, %v284
  %v286 = vsel %vm194, %v260, 0.0
  %v287 = vadd.f32 %v285, %v286
  %v288 = vsel %vm194, %v261, 0.0
  %v289 = vadd.f32 %v287, %v288
  %v290 = vsel %vm194, %v262, 0.0
  %v291 = vadd.f32 %v289, %v290
  %v292 = vsel %vm194, %v263, 0.0
  %v293 = vadd.f32 %v291, %v292
  %v294 = vsel %vm194, %v264, 0.0
  %v295 = vadd.f32 %v293, %v294
  %v296 = vrot.slane %v295, 4
  %v297 = vadd.f32 %v295, %v296
  %v298 = vrot.slane %v297, 2
  %v299 = vadd.f32 %v297, %v298
  %v300 = vrot.slane %v299, 1
  %v301 = vadd.f32 %v299, %v300
  %v302 = vmul.f32 %v301, 0.0078125
  %v303 = vld [vmem:[%s2] sm:$0x1]
  %v304 = vadd.f32 %v302, 1e-05
  %v305 = vrsqrt.pop %v304
  %v306 = vmul.f32 %v303, %v305
  %v307 = vld [vmem:[%s3] sm:$0x1]
  %v308 = vmul.f32 %v232, %v306
  %v309 = vsub.f32 %v307, %v308
  %v311 = vlaneseq
  %v312 = vshrl.u32 %v311, 7
  %v313 = vsub.s32 0, %v312
  %v314 = vrot.slane %v306, %v313
  %v316 = vmul.f32 %v116, %v314
  %v317 = vmul.f32 %v121, %v314
  %v318 = vmul.f32 %v126, %v314
  %v319 = vmul.f32 %v131, %v314
  %v320 = vmul.f32 %v136, %v314
  %v321 = vmul.f32 %v141, %v314
  %v322 = vmul.f32 %v146, %v314
  %v323 = vmul.f32 %v151, %v314
  %v324 = vmul.f32 %v156, %v314
  %v325 = vmul.f32 %v161, %v314
  %v326 = vmul.f32 %v166, %v314
  %v327 = vmul.f32 %v171, %v314
  %v328 = vmul.f32 %v176, %v314
  %v329 = vmul.f32 %v181, %v314
  %v330 = vmul.f32 %v186, %v314
  %v331 = vmul.f32 %v191, %v314
  %v333 = vlaneseq
  %v334 = vshrl.u32 %v333, 7
  %v335 = vsub.s32 0, %v334
  %v336 = vrot.slane %v309, %v335
  %v338 = vadd.f32 %v316, %v336
  %v339 = vadd.f32 %v317, %v336
  %v340 = vadd.f32 %v318, %v336
  %v341 = vadd.f32 %v319, %v336
  %v342 = vadd.f32 %v320, %v336
  %v343 = vadd.f32 %v321, %v336
  %v344 = vadd.f32 %v322, %v336
  %v345 = vadd.f32 %v323, %v336
  %v346 = vadd.f32 %v324, %v336
  %v347 = vadd.f32 %v325, %v336
  %v348 = vadd.f32 %v326, %v336
  %v349 = vadd.f32 %v327, %v336
  %v350 = vadd.f32 %v328, %v336
  %v351 = vadd.f32 %v329, %v336
  %v352 = vadd.f32 %v330, %v336
  %v353 = vadd.f32 %v331, %v336
  %vm354 = vcmp.ge.f32.partialorder %v338, 0.0
  %vm355 = vcmp.ge.f32.partialorder %v339, 0.0
  %vm356 = vcmp.ge.f32.partialorder %v340, 0.0
  %vm357 = vcmp.ge.f32.partialorder %v341, 0.0
  %vm358 = vcmp.ge.f32.partialorder %v342, 0.0
  %vm359 = vcmp.ge.f32.partialorder %v343, 0.0
  %vm360 = vcmp.ge.f32.partialorder %v344, 0.0
  %vm361 = vcmp.ge.f32.partialorder %v345, 0.0
  %vm362 = vcmp.ge.f32.partialorder %v346, 0.0
  %vm363 = vcmp.ge.f32.partialorder %v347, 0.0
  %vm364 = vcmp.ge.f32.partialorder %v348, 0.0
  %vm365 = vcmp.ge.f32.partialorder %v349, 0.0
  %vm366 = vcmp.ge.f32.partialorder %v350, 0.0
  %vm367 = vcmp.ge.f32.partialorder %v351, 0.0
  %vm368 = vcmp.ge.f32.partialorder %v352, 0.0
  %vm369 = vcmp.ge.f32.partialorder %v353, 0.0
  %v370 = vmul.f32 %v338, 0.2
  %v371 = vmul.f32 %v339, 0.2
  %v372 = vmul.f32 %v340, 0.2
  %v373 = vmul.f32 %v341, 0.2
  %v374 = vmul.f32 %v342, 0.2
  %v375 = vmul.f32 %v343, 0.2
  %v376 = vmul.f32 %v344, 0.2
  %v377 = vmul.f32 %v345, 0.2
  %v378 = vmul.f32 %v346, 0.2
  %v379 = vmul.f32 %v347, 0.2
  %v380 = vmul.f32 %v348, 0.2
  %v381 = vmul.f32 %v349, 0.2
  %v382 = vmul.f32 %v350, 0.2
  %v383 = vmul.f32 %v351, 0.2
  %v384 = vmul.f32 %v352, 0.2
  %v385 = vmul.f32 %v353, 0.2
  %v386 = vsel %vm354, %v338, %v370
  %v387 = vsel %vm355, %v339, %v371
  %v388 = vsel %vm356, %v340, %v372
  %v389 = vsel %vm357, %v341, %v373
  %v390 = vsel %vm358, %v342, %v374
  %v391 = vsel %vm359, %v343, %v375
  %v392 = vsel %vm360, %v344, %v376
  %v393 = vsel %vm361, %v345, %v377
  %v394 = vsel %vm362, %v346, %v378
  %v395 = vsel %vm363, %v347, %v379
  %v396 = vsel %vm364, %v348, %v380
  %v397 = vsel %vm365, %v349, %v381
  %v398 = vsel %vm366, %v350, %v382
  %v399 = vsel %vm367, %v351, %v383
  %v400 = vsel %vm368, %v352, %v384
  %v401 = vsel %vm369, %v353, %v385
  %402 = vst.msk [vmem:[%s4] sm:$0xff] %vm194, %v386
  %403 = vst.msk [vmem:[%s4 + $0x8] sm:$0xff] %vm194, %v387
  %404 = vst.msk [vmem:[%s4 + $0x10] sm:$0xff] %vm194, %v388
  %405 = vst.msk [vmem:[%s4 + $0x18] sm:$0xff] %vm194, %v389
  %406 = vst.msk [vmem:[%s4 + $0x20] sm:$0xff] %vm194, %v390
  %407 = vst.msk [vmem:[%s4 + $0x28] sm:$0xff] %vm194, %v391
  %408 = vst.msk [vmem:[%s4 + $0x30] sm:$0xff] %vm194, %v392
  %409 = vst.msk [vmem:[%s4 + $0x38] sm:$0xff] %vm194, %v393
  %410 = vst.msk [vmem:[%s4 + $0x40] sm:$0xff] %vm194, %v394
  %411 = vst.msk [vmem:[%s4 + $0x48] sm:$0xff] %vm194, %v395
  %412 = vst.msk [vmem:[%s4 + $0x50] sm:$0xff] %vm194, %v396
  %413 = vst.msk [vmem:[%s4 + $0x58] sm:$0xff] %vm194, %v397
  %414 = vst.msk [vmem:[%s4 + $0x60] sm:$0xff] %vm194, %v398
  %415 = vst.msk [vmem:[%s4 + $0x68] sm:$0xff] %vm194, %v399
  %416 = vst.msk [vmem:[%s4 + $0x70] sm:$0xff] %vm194, %v400
  %417 = vst.msk [vmem:[%s4 + $0x78] sm:$0xff] %vm194, %v401
  // Predicated region
  $region18: #{unet_forward.10} parent=0 // pred_check
    _
  $region19: #{unet_forward.10} parent=0 // pred_check_branch
    %419 = sbr.rel (0) target = $region21
  $region20: #{unet_forward.10} parent=0 // pred_region
    _
  $region21: #{unet_forward.10} parent=0 // pred_fallthru
    _
  // Predicated region
  $region22: #{unet_forward.10} parent=0 // pred_check
    _
  $region23: #{unet_forward.10} parent=0 // pred_check_branch
    %421 = sbr.rel (0) target = $region25
  $region24: #{unet_forward.10} parent=0 // pred_region
    _
  $region25: #{unet_forward.10} parent=0 // pred_fallthru
    _

// kernel: unet_forward.11
$region0: #{unet_forward.11}
  #allocation0 [shape = 'u32[]', space=smem, size = 0x4, offset = 0x4, fixed_abs, tag = 'smem constant byte address 0x4 - core index']
  #allocation1 [shape = 'u32[144,128]{1,0:T(1,128)}', space=vmem, size = 0x12000, scoped, tag = 'internal scratch']
  %s0 = inlined_call_operand.vmem [shape: f32[1,32,256], index: 0, kind: input, shape index: {}]
  %s1 = inlined_call_operand.vmem [shape: f32[1,256,32], index: 1, kind: input, shape index: {}]
  %s2 = inlined_call_operand.vmem [shape: f32[1,32], index: 2, kind: input, shape index: {}]
  %s3 = inlined_call_operand.vmem [shape: f32[1,32], index: 3, kind: input, shape index: {}]
  %s4 = inlined_call_operand.vmem [shape: f32[1,32,32], index: 4, kind: output, shape index: {}]
  %s5 = sld [smem:[#allocation0]]
  $region26: #{unet_forward.11} parent=0
    _
  %s7 = ssub.s32 1, %s5
  %s8 = scalar_select 0, %s7, %s5
  // Predicated region
  $region2: #{unet_forward.11} parent=0 // pred_check
    _
  $region3: #{unet_forward.11} parent=0 // pred_check_branch
    %10 = sbr.rel (0) target = $region5
  $region4: #{unet_forward.11} parent=0 // pred_region
    _
  $region5: #{unet_forward.11} parent=0 // pred_fallthru
    _
  // Predicated region
  $region6: #{unet_forward.11} parent=0 // pred_check
    _
  $region7: #{unet_forward.11} parent=0 // pred_check_branch
    %12 = sbr.rel (0) target = $region9
  $region8: #{unet_forward.11} parent=0 // pred_region
    _
  $region9: #{unet_forward.11} parent=0 // pred_fallthru
    _
  // Predicated region
  $region10: #{unet_forward.11} parent=0 // pred_check
    _
  $region11: #{unet_forward.11} parent=0 // pred_check_branch
    %14 = sbr.rel (0) target = $region13
  $region12: #{unet_forward.11} parent=0 // pred_region
    _
  $region13: #{unet_forward.11} parent=0 // pred_fallthru
    _
  // Predicated region
  $region14: #{unet_forward.11} parent=0 // pred_check
    _
  $region15: #{unet_forward.11} parent=0 // pred_check_branch
    %16 = sbr.rel (0) target = $region17
  $region16: #{unet_forward.11} parent=0 // pred_region
    _
  $region17: #{unet_forward.11} parent=0 // pred_fallthru
    _
  %v17 = vld [vmem:[%s0] sm:$0xff]
  %v18 = vld [vmem:[%s0 + $0x8] sm:$0xff]
  %v19 = vld [vmem:[%s0 + $0x10] sm:$0xff]
  %v20 = vld [vmem:[%s0 + $0x18] sm:$0xff]
  %v21 = vld [vmem:[%s0 + $0x20] sm:$0xff]
  %v22 = vld [vmem:[%s0 + $0x28] sm:$0xff]
  %v23 = vld [vmem:[%s0 + $0x30] sm:$0xff]
  %v24 = vld [vmem:[%s0 + $0x38] sm:$0xff]
  %v25 = vld [vmem:[%s1] sm:$0xff]
  %v26 = vld [vmem:[%s1 + $0x8] sm:$0xff]
  %v27 = vld [vmem:[%s1 + $0x10] sm:$0xff]
  %v28 = vld [vmem:[%s1 + $0x18] sm:$0xff]
  %v29 = vld [vmem:[%s1 + $0x20] sm:$0xff]
  %v30 = vld [vmem:[%s1 + $0x28] sm:$0xff]
  %v31 = vld [vmem:[%s1 + $0x30] sm:$0xff]
  %v32 = vld [vmem:[%s1 + $0x38] sm:$0xff]
  %v33 = vld [vmem:[%s1 + $0x40] sm:$0xff]
  %v34 = vld [vmem:[%s1 + $0x48] sm:$0xff]
  %v35 = vld [vmem:[%s1 + $0x50] sm:$0xff]
  %v36 = vld [vmem:[%s1 + $0x58] sm:$0xff]
  %v37 = vld [vmem:[%s1 + $0x60] sm:$0xff]
  %v38 = vld [vmem:[%s1 + $0x68] sm:$0xff]
  %v39 = vld [vmem:[%s1 + $0x70] sm:$0xff]
  %v40 = vld [vmem:[%s1 + $0x78] sm:$0xff]
  %v41 = vld [vmem:[%s1 + $0x80] sm:$0xff]
  %v42 = vld [vmem:[%s1 + $0x88] sm:$0xff]
  %v43 = vld [vmem:[%s1 + $0x90] sm:$0xff]
  %v44 = vld [vmem:[%s1 + $0x98] sm:$0xff]
  %v45 = vld [vmem:[%s1 + $0xa0] sm:$0xff]
  %v46 = vld [vmem:[%s1 + $0xa8] sm:$0xff]
  %v47 = vld [vmem:[%s1 + $0xb0] sm:$0xff]
  %v48 = vld [vmem:[%s1 + $0xb8] sm:$0xff]
  %v49 = vld [vmem:[%s1 + $0xc0] sm:$0xff]
  %v50 = vld [vmem:[%s1 + $0xc8] sm:$0xff]
  %v51 = vld [vmem:[%s1 + $0xd0] sm:$0xff]
  %v52 = vld [vmem:[%s1 + $0xd8] sm:$0xff]
  %v53 = vld [vmem:[%s1 + $0xe0] sm:$0xff]
  %v54 = vld [vmem:[%s1 + $0xe8] sm:$0xff]
  %v55 = vld [vmem:[%s1 + $0xf0] sm:$0xff]
  %v56 = vld [vmem:[%s1 + $0xf8] sm:$0xff]
  %57 = vmatprep.subr.mxu0 0.0
  %58 = vmatpush1.msra.mxu0 %v25
  %59 = vmatprep.subr.mxu0 0.0
  %60 = vmatpush1.msra.mxu0 %v26
  %61 = vmatprep.subr.mxu0 0.0
  %62 = vmatpush1.msra.mxu0 %v27
  %63 = vmatprep.subr.mxu0 0.0
  %64 = vmatpush1.msra.mxu0 %v28
  %65 = vmatprep.subr.mxu0 0.0
  %66 = vmatpush1.msra.mxu0 %v29
  %67 = vmatprep.subr.mxu0 0.0
  %68 = vmatpush1.msra.mxu0 %v30
  %69 = vmatprep.subr.mxu0 0.0
  %70 = vmatpush1.msra.mxu0 %v31
  %71 = vmatprep.subr.mxu0 0.0
  %72 = vmatpush1.msra.mxu0 %v32
  %73 = vmatprep.subr.mxu0 0.0
  %74 = vmatpush1.msra.mxu0 %v33
  %75 = vmatprep.subr.mxu0 0.0
  %76 = vmatpush1.msra.mxu0 %v34
  %77 = vmatprep.subr.mxu0 0.0
  %78 = vmatpush1.msra.mxu0 %v35
  %79 = vmatprep.subr.mxu0 0.0
  %80 = vmatpush1.msra.mxu0 %v36
  %81 = vmatprep.subr.mxu0 0.0
  %82 = vmatpush1.msra.mxu0 %v37
  %83 = vmatprep.subr.mxu0 0.0
  %84 = vmatpush1.msra.mxu0 %v38
  %85 = vmatprep.subr.mxu0 0.0
  %86 = vmatpush1.msra.mxu0 %v39
  %87 = vmatprep.subr.mxu0 0.0
  %88 = vmatpush1.msra.mxu0 %v40
  %89 = vmatprep.subr.mxu0 0.0
  %90 = vmatpush1.msra.mxu0 %v41
  %91 = vmatprep.subr.mxu0 0.0
  %92 = vmatpush1.msra.mxu0 %v42
  %93 = vmatprep.subr.mxu0 0.0
  %94 = vmatpush1.msra.mxu0 %v43
  %95 = vmatprep.subr.mxu0 0.0
  %96 = vmatpush1.msra.mxu0 %v44
  %97 = vmatprep.subr.mxu0 0.0
  %98 = vmatpush1.msra.mxu0 %v45
  %99 = vmatprep.subr.mxu0 0.0
  %100 = vmatpush1.msra.mxu0 %v46
  %101 = vmatprep.subr.mxu0 0.0
  %102 = vmatpush1.msra.mxu0 %v47
  %103 = vmatprep.subr.mxu0 0.0
  %104 = vmatpush1.msra.mxu0 %v48
  %105 = vmatprep.subr.mxu0 0.0
  %106 = vmatpush1.msra.mxu0 %v49
  %107 = vmatprep.subr.mxu0 0.0
  %108 = vmatpush1.msra.mxu0 %v50
  %109 = vmatprep.subr.mxu0 0.0
  %110 = vmatpush1.msra.mxu0 %v51
  %111 = vmatprep.subr.mxu0 0.0
  %112 = vmatpush1.msra.mxu0 %v52
  %113 = vmatprep.subr.mxu0 0.0
  %114 = vmatpush1.msra.mxu0 %v53
  %115 = vmatprep.subr.mxu0 0.0
  %116 = vmatpush1.msra.mxu0 %v54
  %117 = vmatprep.subr.mxu0 0.0
  %118 = vmatpush1.msra.mxu0 %v55
  %119 = vmatprep.subr.mxu0 0.0
  %120 = vmatpush1.msra.mxu0 %v56
  %121 = vmatprep.mubr.f32.mxu0 %v18
  %122 = vmatmul.mubr.f32.gmra.mrb[0].mxu0 %v17
  %v123 = vpop.f32.mrb[0].mxu0
  %v124 = vadd.f32 0.0, %v123
  %v125 = vpop.f32.mrb[0].mxu0
  %126 = vmatprep.mubr.f32.mxu0 %v20
  %127 = vmatmul.mubr.f32.gmra.mrb[0].mxu0 %v19
  %v128 = vpop.f32.mrb[0].mxu0
  %v129 = vadd.f32 0.0, %v128
  %v130 = vpop.f32.mrb[0].mxu0
  %131 = vmatprep.mubr.f32.mxu0 %v22
  %132 = vmatmul.mubr.f32.gmra.mrb[0].mxu0 %v21
  %v133 = vpop.f32.mrb[0].mxu0
  %v134 = vadd.f32 0.0, %v133
  %v135 = vpop.f32.mrb[0].mxu0
  %136 = vmatprep.mubr.f32.mxu0 %v24
  %137 = vmatmul.mubr.f32.gmra.mrb[0].mxu0 %v23
  %v138 = vpop.f32.mrb[0].mxu0
  %v139 = vadd.f32 0.0, %v138
  %v140 = vpop.f32.mrb[0].mxu0
  %141 = vdwg.mxu0
  %vm142 = vcmask 261120
  %v143 = vsel %vm142, %v124, 0.0
  %v144 = vsel %vm142, %v129, 0.0
  %v145 = vadd.f32 %v143, %v144
  %v146 = vsel %vm142, %v134, 0.0
  %v147 = vadd.f32 %v145, %v146
  %v148 = vsel %vm142, %v139, 0.0
  %v149 = vadd.f32 %v147, %v148
  %v150 = vrot.slane %v149, 4
  %v151 = vadd.f32 %v149, %v150
  %v152 = vrot.slane %v151, 2
  %v153 = vadd.f32 %v151, %v152
  %v154 = vrot.slane %v153, 1
  %v155 = vadd.f32 %v153, %v154
  %v156 = vmul.f32 %v155, 0.03125
  %v157 = vsub.f32 %v124, %v156
  %v158 = vsub.f32 %v129, %v156
  %v159 = vsub.f32 %v134, %v156
  %v160 = vsub.f32 %v139, %v156
  %v161 = vmul.f32 %v157, %v157
  %v162 = vmul.f32 %v158, %v158
  %v163 = vmul.f32 %v159, %v159
  %v164 = vmul.f32 %v160, %v160
  %v165 = vsel %vm142, %v161, 0.0
  %v166 = vsel %vm142, %v162, 0.0
  %v167 = vadd.f32 %v165, %v166
  %v168 = vsel %vm142, %v163, 0.0
  %v169 = vadd.f32 %v167, %v168
  %v170 = vsel %vm142, %v164, 0.0
  %v171 = vadd.f32 %v169, %v170
  %v172 = vrot.slane %v171, 4
  %v173 = vadd.f32 %v171, %v172
  %v174 = vrot.slane %v173, 2
  %v175 = vadd.f32 %v173, %v174
  %v176 = vrot.slane %v175, 1
  %v177 = vadd.f32 %v175, %v176
  %v178 = vmul.f32 %v177, 0.03125
  %v179 = vld [vmem:[%s2] sm:$0x1]
  %v180 = vadd.f32 %v178, 1e-05
  %v181 = vrsqrt.pop %v180
  %v182 = vmul.f32 %v179, %v181
  %v183 = vld [vmem:[%s3] sm:$0x1]
  %v184 = vmul.f32 %v156, %v182
  %v185 = vsub.f32 %v183, %v184
  %v187 = vlaneseq
  %v188 = vshrl.u32 %v187, 7
  %v189 = vsub.s32 0, %v188
  %v190 = vrot.slane %v182, %v189
  %v192 = vmul.f32 %v124, %v190
  %v193 = vmul.f32 %v129, %v190
  %v194 = vmul.f32 %v134, %v190
  %v195 = vmul.f32 %v139, %v190
  %v197 = vlaneseq
  %v198 = vshrl.u32 %v197, 7
  %v199 = vsub.s32 0, %v198
  %v200 = vrot.slane %v185, %v199
  %v202 = vadd.f32 %v192, %v200
  %v203 = vadd.f32 %v193, %v200
  %v204 = vadd.f32 %v194, %v200
  %v205 = vadd.f32 %v195, %v200
  %vm206 = vcmp.ge.f32.partialorder %v202, 0.0
  %vm207 = vcmp.ge.f32.partialorder %v203, 0.0
  %vm208 = vcmp.ge.f32.partialorder %v204, 0.0
  %vm209 = vcmp.ge.f32.partialorder %v205, 0.0
  %v210 = vmul.f32 %v202, 0.2
  %v211 = vmul.f32 %v203, 0.2
  %v212 = vmul.f32 %v204, 0.2
  %v213 = vmul.f32 %v205, 0.2
  %v214 = vsel %vm206, %v202, %v210
  %v215 = vsel %vm207, %v203, %v211
  %v216 = vsel %vm208, %v204, %v212
  %v217 = vsel %vm209, %v205, %v213
  %218 = vst.msk [vmem:[%s4] sm:$0xff] %vm142, %v214
  %219 = vst.msk [vmem:[%s4 + $0x8] sm:$0xff] %vm142, %v215
  %220 = vst.msk [vmem:[%s4 + $0x10] sm:$0xff] %vm142, %v216
  %221 = vst.msk [vmem:[%s4 + $0x18] sm:$0xff] %vm142, %v217
  // Predicated region
  $region18: #{unet_forward.11} parent=0 // pred_check
    _
  $region19: #{unet_forward.11} parent=0 // pred_check_branch
    %223 = sbr.rel (0) target = $region21
  $region20: #{unet_forward.11} parent=0 // pred_region
    _
  $region21: #{unet_forward.11} parent=0 // pred_fallthru
    _
  // Predicated region
  $region22: #{unet_forward.11} parent=0 // pred_check
    _
  $region23: #{unet_forward.11} parent=0 // pred_check_branch
    %225 = sbr.rel (0) target = $region25
  $region24: #{unet_forward.11} parent=0 // pred_region
    _
  $region25: #{unet_forward.11} parent=0 // pred_fallthru
    _

// kernel: unet_forward.12
$region0: #{unet_forward.12}
  #allocation0 [shape = 'u32[]', space=smem, size = 0x4, offset = 0x4, fixed_abs, tag = 'smem constant byte address 0x4 - core index']
  #allocation1 [shape = 'u32[144,128]{1,0:T(1,128)}', space=vmem, size = 0x12000, scoped, tag = 'internal scratch']
  %s0 = inlined_call_operand.vmem [shape: f32[1,8,512], index: 0, kind: input, shape index: {}]
  %s1 = inlined_call_operand.vmem [shape: f32[1,512,64], index: 1, kind: input, shape index: {}]
  %s2 = inlined_call_operand.vmem [shape: f32[1,64], index: 2, kind: input, shape index: {}]
  %s3 = inlined_call_operand.vmem [shape: f32[1,64], index: 3, kind: input, shape index: {}]
  %s4 = inlined_call_operand.vmem [shape: f32[1,8,64], index: 4, kind: output, shape index: {}]
  %s5 = sld [smem:[#allocation0]]
  $region26: #{unet_forward.12} parent=0
    _
  %s7 = ssub.s32 1, %s5
  %s8 = scalar_select 0, %s7, %s5
  // Predicated region
  $region2: #{unet_forward.12} parent=0 // pred_check
    _
  $region3: #{unet_forward.12} parent=0 // pred_check_branch
    %10 = sbr.rel (0) target = $region5
  $region4: #{unet_forward.12} parent=0 // pred_region
    _
  $region5: #{unet_forward.12} parent=0 // pred_fallthru
    _
  // Predicated region
  $region6: #{unet_forward.12} parent=0 // pred_check
    _
  $region7: #{unet_forward.12} parent=0 // pred_check_branch
    %12 = sbr.rel (0) target = $region9
  $region8: #{unet_forward.12} parent=0 // pred_region
    _
  $region9: #{unet_forward.12} parent=0 // pred_fallthru
    _
  // Predicated region
  $region10: #{unet_forward.12} parent=0 // pred_check
    _
  $region11: #{unet_forward.12} parent=0 // pred_check_branch
    %14 = sbr.rel (0) target = $region13
  $region12: #{unet_forward.12} parent=0 // pred_region
    _
  $region13: #{unet_forward.12} parent=0 // pred_fallthru
    _
  // Predicated region
  $region14: #{unet_forward.12} parent=0 // pred_check
    _
  $region15: #{unet_forward.12} parent=0 // pred_check_branch
    %16 = sbr.rel (0) target = $region17
  $region16: #{unet_forward.12} parent=0 // pred_region
    _
  $region17: #{unet_forward.12} parent=0 // pred_fallthru
    _
  %v17 = vld [vmem:[%s0] sm:$0xff]
  %v18 = vld [vmem:[%s0 + $0x8] sm:$0xff]
  %v19 = vld [vmem:[%s0 + $0x10] sm:$0xff]
  %v20 = vld [vmem:[%s0 + $0x18] sm:$0xff]
  %v21 = vld [vmem:[%s1] sm:$0xff]
  %v22 = vld [vmem:[%s1 + $0x8] sm:$0xff]
  %v23 = vld [vmem:[%s1 + $0x10] sm:$0xff]
  %v24 = vld [vmem:[%s1 + $0x18] sm:$0xff]
  %v25 = vld [vmem:[%s1 + $0x20] sm:$0xff]
  %v26 = vld [vmem:[%s1 + $0x28] sm:$0xff]
  %v27 = vld [vmem:[%s1 + $0x30] sm:$0xff]
  %v28 = vld [vmem:[%s1 + $0x38] sm:$0xff]
  %v29 = vld [vmem:[%s1 + $0x40] sm:$0xff]
  %v30 = vld [vmem:[%s1 + $0x48] sm:$0xff]
  %v31 = vld [vmem:[%s1 + $0x50] sm:$0xff]
  %v32 = vld [vmem:[%s1 + $0x58] sm:$0xff]
  %v33 = vld [vmem:[%s1 + $0x60] sm:$0xff]
  %v34 = vld [vmem:[%s1 + $0x68] sm:$0xff]
  %v35 = vld [vmem:[%s1 + $0x70] sm:$0xff]
  %v36 = vld [vmem:[%s1 + $0x78] sm:$0xff]
  %v37 = vld [vmem:[%s1 + $0x80] sm:$0xff]
  %v38 = vld [vmem:[%s1 + $0x88] sm:$0xff]
  %v39 = vld [vmem:[%s1 + $0x90] sm:$0xff]
  %v40 = vld [vmem:[%s1 + $0x98] sm:$0xff]
  %v41 = vld [vmem:[%s1 + $0xa0] sm:$0xff]
  %v42 = vld [vmem:[%s1 + $0xa8] sm:$0xff]
  %v43 = vld [vmem:[%s1 + $0xb0] sm:$0xff]
  %v44 = vld [vmem:[%s1 + $0xb8] sm:$0xff]
  %v45 = vld [vmem:[%s1 + $0xc0] sm:$0xff]
  %v46 = vld [vmem:[%s1 + $0xc8] sm:$0xff]
  %v47 = vld [vmem:[%s1 + $0xd0] sm:$0xff]
  %v48 = vld [vmem:[%s1 + $0xd8] sm:$0xff]
  %v49 = vld [vmem:[%s1 + $0xe0] sm:$0xff]
  %v50 = vld [vmem:[%s1 + $0xe8] sm:$0xff]
  %v51 = vld [vmem:[%s1 + $0xf0] sm:$0xff]
  %v52 = vld [vmem:[%s1 + $0xf8] sm:$0xff]
  %v53 = vld [vmem:[%s1 + $0x100] sm:$0xff]
  %v54 = vld [vmem:[%s1 + $0x108] sm:$0xff]
  %v55 = vld [vmem:[%s1 + $0x110] sm:$0xff]
  %v56 = vld [vmem:[%s1 + $0x118] sm:$0xff]
  %v57 = vld [vmem:[%s1 + $0x120] sm:$0xff]
  %v58 = vld [vmem:[%s1 + $0x128] sm:$0xff]
  %v59 = vld [vmem:[%s1 + $0x130] sm:$0xff]
  %v60 = vld [vmem:[%s1 + $0x138] sm:$0xff]
  %v61 = vld [vmem:[%s1 + $0x140] sm:$0xff]
  %v62 = vld [vmem:[%s1 + $0x148] sm:$0xff]
  %v63 = vld [vmem:[%s1 + $0x150] sm:$0xff]
  %v64 = vld [vmem:[%s1 + $0x158] sm:$0xff]
  %v65 = vld [vmem:[%s1 + $0x160] sm:$0xff]
  %v66 = vld [vmem:[%s1 + $0x168] sm:$0xff]
  %v67 = vld [vmem:[%s1 + $0x170] sm:$0xff]
  %v68 = vld [vmem:[%s1 + $0x178] sm:$0xff]
  %v69 = vld [vmem:[%s1 + $0x180] sm:$0xff]
  %v70 = vld [vmem:[%s1 + $0x188] sm:$0xff]
  %v71 = vld [vmem:[%s1 + $0x190] sm:$0xff]
  %v72 = vld [vmem:[%s1 + $0x198] sm:$0xff]
  %v73 = vld [vmem:[%s1 + $0x1a0] sm:$0xff]
  %v74 = vld [vmem:[%s1 + $0x1a8] sm:$0xff]
  %v75 = vld [vmem:[%s1 + $0x1b0] sm:$0xff]
  %v76 = vld [vmem:[%s1 + $0x1b8] sm:$0xff]
  %v77 = vld [vmem:[%s1 + $0x1c0] sm:$0xff]
  %v78 = vld [vmem:[%s1 + $0x1c8] sm:$0xff]
  %v79 = vld [vmem:[%s1 + $0x1d0] sm:$0xff]
  %v80 = vld [vmem:[%s1 + $0x1d8] sm:$0xff]
  %v81 = vld [vmem:[%s1 + $0x1e0] sm:$0xff]
  %v82 = vld [vmem:[%s1 + $0x1e8] sm:$0xff]
  %v83 = vld [vmem:[%s1 + $0x1f0] sm:$0xff]
  %v84 = vld [vmem:[%s1 + $0x1f8] sm:$0xff]
  %85 = vmatprep.subr.mxu0 0.0
  %86 = vmatpush1.msra.mxu0 %v21
  %87 = vmatprep.subr.mxu0 0.0
  %88 = vmatpush1.msra.mxu0 %v22
  %89 = vmatprep.subr.mxu0 0.0
  %90 = vmatpush1.msra.mxu0 %v23
  %91 = vmatprep.subr.mxu0 0.0
  %92 = vmatpush1.msra.mxu0 %v24
  %93 = vmatprep.subr.mxu0 0.0
  %94 = vmatpush1.msra.mxu0 %v25
  %95 = vmatprep.subr.mxu0 0.0
  %96 = vmatpush1.msra.mxu0 %v26
  %97 = vmatprep.subr.mxu0 0.0
  %98 = vmatpush1.msra.mxu0 %v27
  %99 = vmatprep.subr.mxu0 0.0
  %100 = vmatpush1.msra.mxu0 %v28
  %101 = vmatprep.subr.mxu0 0.0
  %102 = vmatpush1.msra.mxu0 %v29
  %103 = vmatprep.subr.mxu0 0.0
  %104 = vmatpush1.msra.mxu0 %v30
  %105 = vmatprep.subr.mxu0 0.0
  %106 = vmatpush1.msra.mxu0 %v31
  %107 = vmatprep.subr.mxu0 0.0
  %108 = vmatpush1.msra.mxu0 %v32
  %109 = vmatprep.subr.mxu0 0.0
  %110 = vmatpush1.msra.mxu0 %v33
  %111 = vmatprep.subr.mxu0 0.0
  %112 = vmatpush1.msra.mxu0 %v34
  %113 = vmatprep.subr.mxu0 0.0
  %114 = vmatpush1.msra.mxu0 %v35
  %115 = vmatprep.subr.mxu0 0.0
  %116 = vmatpush1.msra.mxu0 %v36
  %117 = vmatprep.subr.mxu0 0.0
  %118 = vmatpush1.msra.mxu0 %v37
  %119 = vmatprep.subr.mxu0 0.0
  %120 = vmatpush1.msra.mxu0 %v38
  %121 = vmatprep.subr.mxu0 0.0
  %122 = vmatpush1.msra.mxu0 %v39
  %123 = vmatprep.subr.mxu0 0.0
  %124 = vmatpush1.msra.mxu0 %v40
  %125 = vmatprep.subr.mxu0 0.0
  %126 = vmatpush1.msra.mxu0 %v41
  %127 = vmatprep.subr.mxu0 0.0
  %128 = vmatpush1.msra.mxu0 %v42
  %129 = vmatprep.subr.mxu0 0.0
  %130 = vmatpush1.msra.mxu0 %v43
  %131 = vmatprep.subr.mxu0 0.0
  %132 = vmatpush1.msra.mxu0 %v44
  %133 = vmatprep.subr.mxu0 0.0
  %134 = vmatpush1.msra.mxu0 %v45
  %135 = vmatprep.subr.mxu0 0.0
  %136 = vmatpush1.msra.mxu0 %v46
  %137 = vmatprep.subr.mxu0 0.0
  %138 = vmatpush1.msra.mxu0 %v47
  %139 = vmatprep.subr.mxu0 0.0
  %140 = vmatpush1.msra.mxu0 %v48
  %141 = vmatprep.subr.mxu0 0.0
  %142 = vmatpush1.msra.mxu0 %v49
  %143 = vmatprep.subr.mxu0 0.0
  %144 = vmatpush1.msra.mxu0 %v50
  %145 = vmatprep.subr.mxu0 0.0
  %146 = vmatpush1.msra.mxu0 %v51
  %147 = vmatprep.subr.mxu0 0.0
  %148 = vmatpush1.msra.mxu0 %v52
  %149 = vmatprep.mubr.f32.mxu0 %v18
  %150 = vmatmul.mubr.f32.gmra.mrb[0].mxu0 %v17
  %v151 = vpop.f32.mrb[0].mxu0
  %v152 = vadd.f32 0.0, %v151
  %v153 = vpop.f32.mrb[0].mxu0
  %154 = vdwg.mxu0
  %155 = vmatprep.subr.mxu0 0.0
  %156 = vmatpush1.msra.mxu0 %v53
  %157 = vmatprep.subr.mxu0 0.0
  %158 = vmatpush1.msra.mxu0 %v54
  %159 = vmatprep.subr.mxu0 0.0
  %160 = vmatpush1.msra.mxu0 %v55
  %161 = vmatprep.subr.mxu0 0.0
  %162 = vmatpush1.msra.mxu0 %v56
  %163 = vmatprep.subr.mxu0 0.0
  %164 = vmatpush1.msra.mxu0 %v57
  %165 = vmatprep.subr.mxu0 0.0
  %166 = vmatpush1.msra.mxu0 %v58
  %167 = vmatprep.subr.mxu0 0.0
  %168 = vmatpush1.msra.mxu0 %v59
  %169 = vmatprep.subr.mxu0 0.0
  %170 = vmatpush1.msra.mxu0 %v60
  %171 = vmatprep.subr.mxu0 0.0
  %172 = vmatpush1.msra.mxu0 %v61
  %173 = vmatprep.subr.mxu0 0.0
  %174 = vmatpush1.msra.mxu0 %v62
  %175 = vmatprep.subr.mxu0 0.0
  %176 = vmatpush1.msra.mxu0 %v63
  %177 = vmatprep.subr.mxu0 0.0
  %178 = vmatpush1.msra.mxu0 %v64
  %179 = vmatprep.subr.mxu0 0.0
  %180 = vmatpush1.msra.mxu0 %v65
  %181 = vmatprep.subr.mxu0 0.0
  %182 = vmatpush1.msra.mxu0 %v66
  %183 = vmatprep.subr.mxu0 0.0
  %184 = vmatpush1.msra.mxu0 %v67
  %185 = vmatprep.subr.mxu0 0.0
  %186 = vmatpush1.msra.mxu0 %v68
  %187 = vmatprep.subr.mxu0 0.0
  %188 = vmatpush1.msra.mxu0 %v69
  %189 = vmatprep.subr.mxu0 0.0
  %190 = vmatpush1.msra.mxu0 %v70
  %191 = vmatprep.subr.mxu0 0.0
  %192 = vmatpush1.msra.mxu0 %v71
  %193 = vmatprep.subr.mxu0 0.0
  %194 = vmatpush1.msra.mxu0 %v72
  %195 = vmatprep.subr.mxu0 0.0
  %196 = vmatpush1.msra.mxu0 %v73
  %197 = vmatprep.subr.mxu0 0.0
  %198 = vmatpush1.msra.mxu0 %v74
  %199 = vmatprep.subr.mxu0 0.0
  %200 = vmatpush1.msra.mxu0 %v75
  %201 = vmatprep.subr.mxu0 0.0
  %202 = vmatpush1.msra.mxu0 %v76
  %203 = vmatprep.subr.mxu0 0.0
  %204 = vmatpush1.msra.mxu0 %v77
  %205 = vmatprep.subr.mxu0 0.0
  %206 = vmatpush1.msra.mxu0 %v78
  %207 = vmatprep.subr.mxu0 0.0
  %208 = vmatpush1.msra.mxu0 %v79
  %209 = vmatprep.subr.mxu0 0.0
  %210 = vmatpush1.msra.mxu0 %v80
  %211 = vmatprep.subr.mxu0 0.0
  %212 = vmatpush1.msra.mxu0 %v81
  %213 = vmatprep.subr.mxu0 0.0
  %214 = vmatpush1.msra.mxu0 %v82
  %215 = vmatprep.subr.mxu0 0.0
  %216 = vmatpush1.msra.mxu0 %v83
  %217 = vmatprep.subr.mxu0 0.0
  %218 = vmatpush1.msra.mxu0 %v84
  %219 = vmatprep.mubr.f32.mxu0 %v20
  %220 = vmatmul.mubr.f32.gmra.mrb[0].mxu0 %v19
  %v221 = vpop.f32.mrb[0].mxu0
  %v222 = vadd.f32 %v152, %v221
  %v223 = vpop.f32.mrb[0].mxu0
  %224 = vdwg.mxu0
  %vm225 = vcmask 523264
  %v226 = vsel %vm225, %v222, 0.0
  %v227 = vrot.slane %v226, 4
  %v228 = vadd.f32 %v226, %v227
  %v229 = vrot.slane %v228, 2
  %v230 = vadd.f32 %v228, %v229
  %v231 = vrot.slane %v230, 1
  %v232 = vadd.f32 %v230, %v231
  %v233 = vmul.f32 %v232, 0.125
  %v234 = vsub.f32 %v222, %v233
  %v235 = vmul.f32 %v234, %v234
  %v236 = vsel %vm225, %v235, 0.0
  %v237 = vrot.slane %v236, 4
  %v238 = vadd.f32 %v236, %v237
  %v239 = vrot.slane %v238, 2
  %v240 = vadd.f32 %v238, %v239
  %v241 = vrot.slane %v240, 1
  %v242 = vadd.f32 %v240, %v241
  %v243 = vmul.f32 %v242, 0.125
  %v244 = vld [vmem:[%s2] sm:$0x1]
  %v245 = vadd.f32 %v243, 1e-05
  %v246 = vrsqrt.pop %v245
  %v247 = vmul.f32 %v244, %v246
  %v248 = vld [vmem:[%s3] sm:$0x1]
  %v249 = vmul.f32 %v233, %v247
  %v250 = vsub.f32 %v248, %v249
  %v252 = vlaneseq
  %v253 = vshrl.u32 %v252, 7
  %v254 = vsub.s32 0, %v253
  %v255 = vrot.slane %v247, %v254
  %v257 = vmul.f32 %v222, %v255
  %v259 = vlaneseq
  %v260 = vshrl.u32 %v259, 7
  %v261 = vsub.s32 0, %v260
  %v262 = vrot.slane %v250, %v261
  %v264 = vadd.f32 %v257, %v262
  %vm265 = vcmp.ge.f32.partialorder %v264, 0.0
  %v266 = vmul.f32 %v264, 0.2
  %v267 = vsel %vm265, %v264, %v266
  %268 = vst.msk [vmem:[%s4] sm:$0xff] %vm225, %v267
  // Predicated region
  $region18: #{unet_forward.12} parent=0 // pred_check
    _
  $region19: #{unet_forward.12} parent=0 // pred_check_branch
    %270 = sbr.rel (0) target = $region21
  $region20: #{unet_forward.12} parent=0 // pred_region
    _
  $region21: #{unet_forward.12} parent=0 // pred_fallthru
    _
  // Predicated region
  $region22: #{unet_forward.12} parent=0 // pred_check
    _
  $region23: #{unet_forward.12} parent=0 // pred_check_branch
    %272 = sbr.rel (0) target = $region25
  $region24: #{unet_forward.12} parent=0 // pred_region
    _
  $region25: #{unet_forward.12} parent=0 // pred_fallthru
    _

// kernel: unet_forward.13
$region0: #{unet_forward.13}
  #allocation0 [shape = 'u32[]', space=smem, size = 0x4, offset = 0x4, fixed_abs, tag = 'smem constant byte address 0x4 - core index']
  #allocation1 [shape = 'u32[144,128]{1,0:T(1,128)}', space=vmem, size = 0x12000, scoped, tag = 'internal scratch']
  %s0 = inlined_call_operand.vmem [shape: f32[4,8,256], index: 0, kind: input, shape index: {}]
  %s1 = inlined_call_operand.vmem [shape: f32[4,256,32], index: 1, kind: input, shape index: {}]
  %s2 = inlined_call_operand.vmem [shape: f32[1,32], index: 2, kind: input, shape index: {}]
  %s3 = inlined_call_operand.vmem [shape: f32[1,32], index: 3, kind: input, shape index: {}]
  %s4 = inlined_call_operand.vmem [shape: f32[4,8,32], index: 4, kind: output, shape index: {}]
  %s5 = sld [smem:[#allocation0]]
  $region26: #{unet_forward.13} parent=0
    _
  %s7 = ssub.s32 1, %s5
  %s8 = scalar_select 0, %s7, %s5
  // Predicated region
  $region2: #{unet_forward.13} parent=0 // pred_check
    _
  $region3: #{unet_forward.13} parent=0 // pred_check_branch
    %10 = sbr.rel (0) target = $region5
  $region4: #{unet_forward.13} parent=0 // pred_region
    _
  $region5: #{unet_forward.13} parent=0 // pred_fallthru
    _
  // Predicated region
  $region6: #{unet_forward.13} parent=0 // pred_check
    _
  $region7: #{unet_forward.13} parent=0 // pred_check_branch
    %12 = sbr.rel (0) target = $region9
  $region8: #{unet_forward.13} parent=0 // pred_region
    _
  $region9: #{unet_forward.13} parent=0 // pred_fallthru
    _
  // Predicated region
  $region10: #{unet_forward.13} parent=0 // pred_check
    _
  $region11: #{unet_forward.13} parent=0 // pred_check_branch
    %14 = sbr.rel (0) target = $region13
  $region12: #{unet_forward.13} parent=0 // pred_region
    _
  $region13: #{unet_forward.13} parent=0 // pred_fallthru
    _
  // Predicated region
  $region14: #{unet_forward.13} parent=0 // pred_check
    _
  $region15: #{unet_forward.13} parent=0 // pred_check_branch
    %16 = sbr.rel (0) target = $region17
  $region16: #{unet_forward.13} parent=0 // pred_region
    _
  $region17: #{unet_forward.13} parent=0 // pred_fallthru
    _
  %v17 = vld [vmem:[%s0] sm:$0xff]
  %v18 = vld [vmem:[%s0 + $0x8] sm:$0xff]
  %v19 = vld [vmem:[%s1] sm:$0xff]
  %v20 = vld [vmem:[%s1 + $0x8] sm:$0xff]
  %v21 = vld [vmem:[%s1 + $0x10] sm:$0xff]
  %v22 = vld [vmem:[%s1 + $0x18] sm:$0xff]
  %v23 = vld [vmem:[%s1 + $0x20] sm:$0xff]
  %v24 = vld [vmem:[%s1 + $0x28] sm:$0xff]
  %v25 = vld [vmem:[%s1 + $0x30] sm:$0xff]
  %v26 = vld [vmem:[%s1 + $0x38] sm:$0xff]
  %v27 = vld [vmem:[%s1 + $0x40] sm:$0xff]
  %v28 = vld [vmem:[%s1 + $0x48] sm:$0xff]
  %v29 = vld [vmem:[%s1 + $0x50] sm:$0xff]
  %v30 = vld [vmem:[%s1 + $0x58] sm:$0xff]
  %v31 = vld [vmem:[%s1 + $0x60] sm:$0xff]
  %v32 = vld [vmem:[%s1 + $0x68] sm:$0xff]
  %v33 = vld [vmem:[%s1 + $0x70] sm:$0xff]
  %v34 = vld [vmem:[%s1 + $0x78] sm:$0xff]
  %v35 = vld [vmem:[%s1 + $0x80] sm:$0xff]
  %v36 = vld [vmem:[%s1 + $0x88] sm:$0xff]
  %v37 = vld [vmem:[%s1 + $0x90] sm:$0xff]
  %v38 = vld [vmem:[%s1 + $0x98] sm:$0xff]
  %v39 = vld [vmem:[%s1 + $0xa0] sm:$0xff]
  %v40 = vld [vmem:[%s1 + $0xa8] sm:$0xff]
  %v41 = vld [vmem:[%s1 + $0xb0] sm:$0xff]
  %v42 = vld [vmem:[%s1 + $0xb8] sm:$0xff]
  %v43 = vld [vmem:[%s1 + $0xc0] sm:$0xff]
  %v44 = vld [vmem:[%s1 + $0xc8] sm:$0xff]
  %v45 = vld [vmem:[%s1 + $0xd0] sm:$0xff]
  %v46 = vld [vmem:[%s1 + $0xd8] sm:$0xff]
  %v47 = vld [vmem:[%s1 + $0xe0] sm:$0xff]
  %v48 = vld [vmem:[%s1 + $0xe8] sm:$0xff]
  %v49 = vld [vmem:[%s1 + $0xf0] sm:$0xff]
  %v50 = vld [vmem:[%s1 + $0xf8] sm:$0xff]
  %51 = vmatprep.subr.mxu0 0.0
  %52 = vmatpush1.msra.mxu0 %v19
  %53 = vmatprep.subr.mxu0 0.0
  %54 = vmatpush1.msra.mxu0 %v20
  %55 = vmatprep.subr.mxu0 0.0
  %56 = vmatpush1.msra.mxu0 %v21
  %57 = vmatprep.subr.mxu0 0.0
  %58 = vmatpush1.msra.mxu0 %v22
  %59 = vmatprep.subr.mxu0 0.0
  %60 = vmatpush1.msra.mxu0 %v23
  %61 = vmatprep.subr.mxu0 0.0
  %62 = vmatpush1.msra.mxu0 %v24
  %63 = vmatprep.subr.mxu0 0.0
  %64 = vmatpush1.msra.mxu0 %v25
  %65 = vmatprep.subr.mxu0 0.0
  %66 = vmatpush1.msra.mxu0 %v26
  %67 = vmatprep.subr.mxu0 0.0
  %68 = vmatpush1.msra.mxu0 %v27
  %69 = vmatprep.subr.mxu0 0.0
  %70 = vmatpush1.msra.mxu0 %v28
  %71 = vmatprep.subr.mxu0 0.0
  %72 = vmatpush1.msra.mxu0 %v29
  %73 = vmatprep.subr.mxu0 0.0
  %74 = vmatpush1.msra.mxu0 %v30
  %75 = vmatprep.subr.mxu0 0.0
  %76 = vmatpush1.msra.mxu0 %v31
  %77 = vmatprep.subr.mxu0 0.0
  %78 = vmatpush1.msra.mxu0 %v32
  %79 = vmatprep.subr.mxu0 0.0
  %80 = vmatpush1.msra.mxu0 %v33
  %81 = vmatprep.subr.mxu0 0.0
  %82 = vmatpush1.msra.mxu0 %v34
  %83 = vmatprep.subr.mxu0 0.0
  %84 = vmatpush1.msra.mxu0 %v35
  %85 = vmatprep.subr.mxu0 0.0
  %86 = vmatpush1.msra.mxu0 %v36
  %87 = vmatprep.subr.mxu0 0.0
  %88 = vmatpush1.msra.mxu0 %v37
  %89 = vmatprep.subr.mxu0 0.0
  %90 = vmatpush1.msra.mxu0 %v38
  %91 = vmatprep.subr.mxu0 0.0
  %92 = vmatpush1.msra.mxu0 %v39
  %93 = vmatprep.subr.mxu0 0.0
  %94 = vmatpush1.msra.mxu0 %v40
  %95 = vmatprep.subr.mxu0 0.0
  %96 = vmatpush1.msra.mxu0 %v41
  %97 = vmatprep.subr.mxu0 0.0
  %98 = vmatpush1.msra.mxu0 %v42
  %99 = vmatprep.subr.mxu0 0.0
  %100 = vmatpush1.msra.mxu0 %v43
  %101 = vmatprep.subr.mxu0 0.0
  %102 = vmatpush1.msra.mxu0 %v44
  %103 = vmatprep.subr.mxu0 0.0
  %104 = vmatpush1.msra.mxu0 %v45
  %105 = vmatprep.subr.mxu0 0.0
  %106 = vmatpush1.msra.mxu0 %v46
  %107 = vmatprep.subr.mxu0 0.0
  %108 = vmatpush1.msra.mxu0 %v47
  %109 = vmatprep.subr.mxu0 0.0
  %110 = vmatpush1.msra.mxu0 %v48
  %111 = vmatprep.subr.mxu0 0.0
  %112 = vmatpush1.msra.mxu0 %v49
  %113 = vmatprep.subr.mxu0 0.0
  %114 = vmatpush1.msra.mxu0 %v50
  %115 = vmatprep.mubr.f32.mxu0 %v18
  %116 = vmatmul.mubr.f32.gmra.mrb[0].mxu0 %v17
  %v117 = vpop.f32.mrb[0].mxu0
  %v118 = vadd.f32 0.0, %v117
  %v119 = vpop.f32.mrb[0].mxu0
  %120 = vdwg.mxu0
  %s121 = scalar_lea.vmem %s0, 16
  %v122 = vld [vmem:[%s121] sm:$0xff]
  %v123 = vld [vmem:[%s121 + $0x8] sm:$0xff]
  %s124 = scalar_lea.vmem %s1, 256
  %v125 = vld [vmem:[%s124] sm:$0xff]
  %v126 = vld [vmem:[%s124 + $0x8] sm:$0xff]
  %v127 = vld [vmem:[%s124 + $0x10] sm:$0xff]
  %v128 = vld [vmem:[%s124 + $0x18] sm:$0xff]
  %v129 = vld [vmem:[%s124 + $0x20] sm:$0xff]
  %v130 = vld [vmem:[%s124 + $0x28] sm:$0xff]
  %v131 = vld [vmem:[%s124 + $0x30] sm:$0xff]
  %v132 = vld [vmem:[%s124 + $0x38] sm:$0xff]
  %v133 = vld [vmem:[%s124 + $0x40] sm:$0xff]
  %v134 = vld [vmem:[%s124 + $0x48] sm:$0xff]
  %v135 = vld [vmem:[%s124 + $0x50] sm:$0xff]
  %v136 = vld [vmem:[%s124 + $0x58] sm:$0xff]
  %v137 = vld [vmem:[%s124 + $0x60] sm:$0xff]
  %v138 = vld [vmem:[%s124 + $0x68] sm:$0xff]
  %v139 = vld [vmem:[%s124 + $0x70] sm:$0xff]
  %v140 = vld [vmem:[%s124 + $0x78] sm:$0xff]
  %v141 = vld [vmem:[%s124 + $0x80] sm:$0xff]
  %v142 = vld [vmem:[%s124 + $0x88] sm:$0xff]
  %v143 = vld [vmem:[%s124 + $0x90] sm:$0xff]
  %v144 = vld [vmem:[%s124 + $0x98] sm:$0xff]
  %v145 = vld [vmem:[%s124 + $0xa0] sm:$0xff]
  %v146 = vld [vmem:[%s124 + $0xa8] sm:$0xff]
  %v147 = vld [vmem:[%s124 + $0xb0] sm:$0xff]
  %v148 = vld [vmem:[%s124 + $0xb8] sm:$0xff]
  %v149 = vld [vmem:[%s124 + $0xc0] sm:$0xff]
  %v150 = vld [vmem:[%s124 + $0xc8] sm:$0xff]
  %v151 = vld [vmem:[%s124 + $0xd0] sm:$0xff]
  %v152 = vld [vmem:[%s124 + $0xd8] sm:$0xff]
  %v153 = vld [vmem:[%s124 + $0xe0] sm:$0xff]
  %v154 = vld [vmem:[%s124 + $0xe8] sm:$0xff]
  %v155 = vld [vmem:[%s124 + $0xf0] sm:$0xff]
  %v156 = vld [vmem:[%s124 + $0xf8] sm:$0xff]
  %157 = vmatprep.subr.mxu0 0.0
  %158 = vmatpush1.msra.mxu0 %v125
  %159 = vmatprep.subr.mxu0 0.0
  %160 = vmatpush1.msra.mxu0 %v126
  %161 = vmatprep.subr.mxu0 0.0
  %162 = vmatpush1.msra.mxu0 %v127
  %163 = vmatprep.subr.mxu0 0.0
  %164 = vmatpush1.msra.mxu0 %v128
  %165 = vmatprep.subr.mxu0 0.0
  %166 = vmatpush1.msra.mxu0 %v129
  %167 = vmatprep.subr.mxu0 0.0
  %168 = vmatpush1.msra.mxu0 %v130
  %169 = vmatprep.subr.mxu0 0.0
  %170 = vmatpush1.msra.mxu0 %v131
  %171 = vmatprep.subr.mxu0 0.0
  %172 = vmatpush1.msra.mxu0 %v132
  %173 = vmatprep.subr.mxu0 0.0
  %174 = vmatpush1.msra.mxu0 %v133
  %175 = vmatprep.subr.mxu0 0.0
  %176 = vmatpush1.msra.mxu0 %v134
  %177 = vmatprep.subr.mxu0 0.0
  %178 = vmatpush1.msra.mxu0 %v135
  %179 = vmatprep.subr.mxu0 0.0
  %180 = vmatpush1.msra.mxu0 %v136
  %181 = vmatprep.subr.mxu0 0.0
  %182 = vmatpush1.msra.mxu0 %v137
  %183 = vmatprep.subr.mxu0 0.0
  %184 = vmatpush1.msra.mxu0 %v138
  %185 = vmatprep.subr.mxu0 0.0
  %186 = vmatpush1.msra.mxu0 %v139
  %187 = vmatprep.subr.mxu0 0.0
  %188 = vmatpush1.msra.mxu0 %v140
  %189 = vmatprep.subr.mxu0 0.0
  %190 = vmatpush1.msra.mxu0 %v141
  %191 = vmatprep.subr.mxu0 0.0
  %192 = vmatpush1.msra.mxu0 %v142
  %193 = vmatprep.subr.mxu0 0.0
  %194 = vmatpush1.msra.mxu0 %v143
  %195 = vmatprep.subr.mxu0 0.0
  %196 = vmatpush1.msra.mxu0 %v144
  %197 = vmatprep.subr.mxu0 0.0
  %198 = vmatpush1.msra.mxu0 %v145
  %199 = vmatprep.subr.mxu0 0.0
  %200 = vmatpush1.msra.mxu0 %v146
  %201 = vmatprep.subr.mxu0 0.0
  %202 = vmatpush1.msra.mxu0 %v147
  %203 = vmatprep.subr.mxu0 0.0
  %204 = vmatpush1.msra.mxu0 %v148
  %205 = vmatprep.subr.mxu0 0.0
  %206 = vmatpush1.msra.mxu0 %v149
  %207 = vmatprep.subr.mxu0 0.0
  %208 = vmatpush1.msra.mxu0 %v150
  %209 = vmatprep.subr.mxu0 0.0
  %210 = vmatpush1.msra.mxu0 %v151
  %211 = vmatprep.subr.mxu0 0.0
  %212 = vmatpush1.msra.mxu0 %v152
  %213 = vmatprep.subr.mxu0 0.0
  %214 = vmatpush1.msra.mxu0 %v153
  %215 = vmatprep.subr.mxu0 0.0
  %216 = vmatpush1.msra.mxu0 %v154
  %217 = vmatprep.subr.mxu0 0.0
  %218 = vmatpush1.msra.mxu0 %v155
  %219 = vmatprep.subr.mxu0 0.0
  %220 = vmatpush1.msra.mxu0 %v156
  %221 = vmatprep.mubr.f32.mxu0 %v123
  %222 = vmatmul.mubr.f32.gmra.mrb[0].mxu0 %v122
  %v223 = vpop.f32.mrb[0].mxu0
  %v224 = vadd.f32 0.0, %v223
  %v225 = vpop.f32.mrb[0].mxu0
  %226 = vdwg.mxu0
  %s227 = scalar_lea.vmem %s0, 32
  %v228 = vld [vmem:[%s227] sm:$0xff]
  %v229 = vld [vmem:[%s227 + $0x8] sm:$0xff]
  %s230 = scalar_lea.vmem %s1, 512
  %v231 = vld [vmem:[%s230] sm:$0xff]
  %v232 = vld [vmem:[%s230 + $0x8] sm:$0xff]
  %v233 = vld [vmem:[%s230 + $0x10] sm:$0xff]
  %v234 = vld [vmem:[%s230 + $0x18] sm:$0xff]
  %v235 = vld [vmem:[%s230 + $0x20] sm:$0xff]
  %v236 = vld [vmem:[%s230 + $0x28] sm:$0xff]
  %v237 = vld [vmem:[%s230 + $0x30] sm:$0xff]
  %v238 = vld [vmem:[%s230 + $0x38] sm:$0xff]
  %v239 = vld [vmem:[%s230 + $0x40] sm:$0xff]
  %v240 = vld [vmem:[%s230 + $0x48] sm:$0xff]
  %v241 = vld [vmem:[%s230 + $0x50] sm:$0xff]
  %v242 = vld [vmem:[%s230 + $0x58] sm:$0xff]
  %v243 = vld [vmem:[%s230 + $0x60] sm:$0xff]
  %v244 = vld [vmem:[%s230 + $0x68] sm:$0xff]
  %v245 = vld [vmem:[%s230 + $0x70] sm:$0xff]
  %v246 = vld [vmem:[%s230 + $0x78] sm:$0xff]
  %v247 = vld [vmem:[%s230 + $0x80] sm:$0xff]
  %v248 = vld [vmem:[%s230 + $0x88] sm:$0xff]
  %v249 = vld [vmem:[%s230 + $0x90] sm:$0xff]
  %v250 = vld [vmem:[%s230 + $0x98] sm:$0xff]
  %v251 = vld [vmem:[%s230 + $0xa0] sm:$0xff]
  %v252 = vld [vmem:[%s230 + $0xa8] sm:$0xff]
  %v253 = vld [vmem:[%s230 + $0xb0] sm:$0xff]
  %v254 = vld [vmem:[%s230 + $0xb8] sm:$0xff]
  %v255 = vld [vmem:[%s230 + $0xc0] sm:$0xff]
  %v256 = vld [vmem:[%s230 + $0xc8] sm:$0xff]
  %v257 = vld [vmem:[%s230 + $0xd0] sm:$0xff]
  %v258 = vld [vmem:[%s230 + $0xd8] sm:$0xff]
  %v259 = vld [vmem:[%s230 + $0xe0] sm:$0xff]
  %v260 = vld [vmem:[%s230 + $0xe8] sm:$0xff]
  %v261 = vld [vmem:[%s230 + $0xf0] sm:$0xff]
  %v262 = vld [vmem:[%s230 + $0xf8] sm:$0xff]
  %263 = vmatprep.subr.mxu0 0.0
  %264 = vmatpush1.msra.mxu0 %v231
  %265 = vmatprep.subr.mxu0 0.0
  %266 = vmatpush1.msra.mxu0 %v232
  %267 = vmatprep.subr.mxu0 0.0
  %268 = vmatpush1.msra.mxu0 %v233
  %269 = vmatprep.subr.mxu0 0.0
  %270 = vmatpush1.msra.mxu0 %v234
  %271 = vmatprep.subr.mxu0 0.0
  %272 = vmatpush1.msra.mxu0 %v235
  %273 = vmatprep.subr.mxu0 0.0
  %274 = vmatpush1.msra.mxu0 %v236
  %275 = vmatprep.subr.mxu0 0.0
  %276 = vmatpush1.msra.mxu0 %v237
  %277 = vmatprep.subr.mxu0 0.0
  %278 = vmatpush1.msra.mxu0 %v238
  %279 = vmatprep.subr.mxu0 0.0
  %280 = vmatpush1.msra.mxu0 %v239
  %281 = vmatprep.subr.mxu0 0.0
  %282 = vmatpush1.msra.mxu0 %v240
  %283 = vmatprep.subr.mxu0 0.0
  %284 = vmatpush1.msra.mxu0 %v241
  %285 = vmatprep.subr.mxu0 0.0
  %286 = vmatpush1.msra.mxu0 %v242
  %287 = vmatprep.subr.mxu0 0.0
  %288 = vmatpush1.msra.mxu0 %v243
  %289 = vmatprep.subr.mxu0 0.0
  %290 = vmatpush1.msra.mxu0 %v244
  %291 = vmatprep.subr.mxu0 0.0
  %292 = vmatpush1.msra.mxu0 %v245
  %293 = vmatprep.subr.mxu0 0.0
  %294 = vmatpush1.msra.mxu0 %v246
  %295 = vmatprep.subr.mxu0 0.0
  %296 = vmatpush1.msra.mxu0 %v247
  %297 = vmatprep.subr.mxu0 0.0
  %298 = vmatpush1.msra.mxu0 %v248
  %299 = vmatprep.subr.mxu0 0.0
  %300 = vmatpush1.msra.mxu0 %v249
  %301 = vmatprep.subr.mxu0 0.0
  %302 = vmatpush1.msra.mxu0 %v250
  %303 = vmatprep.subr.mxu0 0.0
  %304 = vmatpush1.msra.mxu0 %v251
  %305 = vmatprep.subr.mxu0 0.0
  %306 = vmatpush1.msra.mxu0 %v252
  %307 = vmatprep.subr.mxu0 0.0
  %308 = vmatpush1.msra.mxu0 %v253
  %309 = vmatprep.subr.mxu0 0.0
  %310 = vmatpush1.msra.mxu0 %v254
  %311 = vmatprep.subr.mxu0 0.0
  %312 = vmatpush1.msra.mxu0 %v255
  %313 = vmatprep.subr.mxu0 0.0
  %314 = vmatpush1.msra.mxu0 %v256
  %315 = vmatprep.subr.mxu0 0.0
  %316 = vmatpush1.msra.mxu0 %v257
  %317 = vmatprep.subr.mxu0 0.0
  %318 = vmatpush1.msra.mxu0 %v258
  %319 = vmatprep.subr.mxu0 0.0
  %320 = vmatpush1.msra.mxu0 %v259
  %321 = vmatprep.subr.mxu0 0.0
  %322 = vmatpush1.msra.mxu0 %v260
  %323 = vmatprep.subr.mxu0 0.0
  %324 = vmatpush1.msra.mxu0 %v261
  %325 = vmatprep.subr.mxu0 0.0
  %326 = vmatpush1.msra.mxu0 %v262
  %327 = vmatprep.mubr.f32.mxu0 %v229
  %328 = vmatmul.mubr.f32.gmra.mrb[0].mxu0 %v228
  %v329 = vpop.f32.mrb[0].mxu0
  %v330 = vadd.f32 0.0, %v329
  %v331 = vpop.f32.mrb[0].mxu0
  %332 = vdwg.mxu0
  %s333 = scalar_lea.vmem %s0, 48
  %v334 = vld [vmem:[%s333] sm:$0xff]
  %v335 = vld [vmem:[%s333 + $0x8] sm:$0xff]
  %s336 = scalar_lea.vmem %s1, 768
  %v337 = vld [vmem:[%s336] sm:$0xff]
  %v338 = vld [vmem:[%s336 + $0x8] sm:$0xff]
  %v339 = vld [vmem:[%s336 + $0x10] sm:$0xff]
  %v340 = vld [vmem:[%s336 + $0x18] sm:$0xff]
  %v341 = vld [vmem:[%s336 + $0x20] sm:$0xff]
  %v342 = vld [vmem:[%s336 + $0x28] sm:$0xff]
  %v343 = vld [vmem:[%s336 + $0x30] sm:$0xff]
  %v344 = vld [vmem:[%s336 + $0x38] sm:$0xff]
  %v345 = vld [vmem:[%s336 + $0x40] sm:$0xff]
  %v346 = vld [vmem:[%s336 + $0x48] sm:$0xff]
  %v347 = vld [vmem:[%s336 + $0x50] sm:$0xff]
  %v348 = vld [vmem:[%s336 + $0x58] sm:$0xff]
  %v349 = vld [vmem:[%s336 + $0x60] sm:$0xff]
  %v350 = vld [vmem:[%s336 + $0x68] sm:$0xff]
  %v351 = vld [vmem:[%s336 + $0x70] sm:$0xff]
  %v352 = vld [vmem:[%s336 + $0x78] sm:$0xff]
  %v353 = vld [vmem:[%s336 + $0x80] sm:$0xff]
  %v354 = vld [vmem:[%s336 + $0x88] sm:$0xff]
  %v355 = vld [vmem:[%s336 + $0x90] sm:$0xff]
  %v356 = vld [vmem:[%s336 + $0x98] sm:$0xff]
  %v357 = vld [vmem:[%s336 + $0xa0] sm:$0xff]
  %v358 = vld [vmem:[%s336 + $0xa8] sm:$0xff]
  %v359 = vld [vmem:[%s336 + $0xb0] sm:$0xff]
  %v360 = vld [vmem:[%s336 + $0xb8] sm:$0xff]
  %v361 = vld [vmem:[%s336 + $0xc0] sm:$0xff]
  %v362 = vld [vmem:[%s336 + $0xc8] sm:$0xff]
  %v363 = vld [vmem:[%s336 + $0xd0] sm:$0xff]
  %v364 = vld [vmem:[%s336 + $0xd8] sm:$0xff]
  %v365 = vld [vmem:[%s336 + $0xe0] sm:$0xff]
  %v366 = vld [vmem:[%s336 + $0xe8] sm:$0xff]
  %v367 = vld [vmem:[%s336 + $0xf0] sm:$0xff]
  %v368 = vld [vmem:[%s336 + $0xf8] sm:$0xff]
  %369 = vmatprep.subr.mxu0 0.0
  %370 = vmatpush1.msra.mxu0 %v337
  %371 = vmatprep.subr.mxu0 0.0
  %372 = vmatpush1.msra.mxu0 %v338
  %373 = vmatprep.subr.mxu0 0.0
  %374 = vmatpush1.msra.mxu0 %v339
  %375 = vmatprep.subr.mxu0 0.0
  %376 = vmatpush1.msra.mxu0 %v340
  %377 = vmatprep.subr.mxu0 0.0
  %378 = vmatpush1.msra.mxu0 %v341
  %379 = vmatprep.subr.mxu0 0.0
  %380 = vmatpush1.msra.mxu0 %v342
  %381 = vmatprep.subr.mxu0 0.0
  %382 = vmatpush1.msra.mxu0 %v343
  %383 = vmatprep.subr.mxu0 0.0
  %384 = vmatpush1.msra.mxu0 %v344
  %385 = vmatprep.subr.mxu0 0.0
  %386 = vmatpush1.msra.mxu0 %v345
  %387 = vmatprep.subr.mxu0 0.0
  %388 = vmatpush1.msra.mxu0 %v346
  %389 = vmatprep.subr.mxu0 0.0
  %390 = vmatpush1.msra.mxu0 %v347
  %391 = vmatprep.subr.mxu0 0.0
  %392 = vmatpush1.msra.mxu0 %v348
  %393 = vmatprep.subr.mxu0 0.0
  %394 = vmatpush1.msra.mxu0 %v349
  %395 = vmatprep.subr.mxu0 0.0
  %396 = vmatpush1.msra.mxu0 %v350
  %397 = vmatprep.subr.mxu0 0.0
  %398 = vmatpush1.msra.mxu0 %v351
  %399 = vmatprep.subr.mxu0 0.0
  %400 = vmatpush1.msra.mxu0 %v352
  %401 = vmatprep.subr.mxu0 0.0
  %402 = vmatpush1.msra.mxu0 %v353
  %403 = vmatprep.subr.mxu0 0.0
  %404 = vmatpush1.msra.mxu0 %v354
  %405 = vmatprep.subr.mxu0 0.0
  %406 = vmatpush1.msra.mxu0 %v355
  %407 = vmatprep.subr.mxu0 0.0
  %408 = vmatpush1.msra.mxu0 %v356
  %409 = vmatprep.subr.mxu0 0.0
  %410 = vmatpush1.msra.mxu0 %v357
  %411 = vmatprep.subr.mxu0 0.0
  %412 = vmatpush1.msra.mxu0 %v358
  %413 = vmatprep.subr.mxu0 0.0
  %414 = vmatpush1.msra.mxu0 %v359
  %415 = vmatprep.subr.mxu0 0.0
  %416 = vmatpush1.msra.mxu0 %v360
  %417 = vmatprep.subr.mxu0 0.0
  %418 = vmatpush1.msra.mxu0 %v361
  %419 = vmatprep.subr.mxu0 0.0
  %420 = vmatpush1.msra.mxu0 %v362
  %421 = vmatprep.subr.mxu0 0.0
  %422 = vmatpush1.msra.mxu0 %v363
  %423 = vmatprep.subr.mxu0 0.0
  %424 = vmatpush1.msra.mxu0 %v364
  %425 = vmatprep.subr.mxu0 0.0
  %426 = vmatpush1.msra.mxu0 %v365
  %427 = vmatprep.subr.mxu0 0.0
  %428 = vmatpush1.msra.mxu0 %v366
  %429 = vmatprep.subr.mxu0 0.0
  %430 = vmatpush1.msra.mxu0 %v367
  %431 = vmatprep.subr.mxu0 0.0
  %432 = vmatpush1.msra.mxu0 %v368
  %433 = vmatprep.mubr.f32.mxu0 %v335
  %434 = vmatmul.mubr.f32.gmra.mrb[0].mxu0 %v334
  %v435 = vpop.f32.mrb[0].mxu0
  %v436 = vadd.f32 0.0, %v435
  %v437 = vpop.f32.mrb[0].mxu0
  %438 = vdwg.mxu0
  %vm439 = vcmask 261120
  %v440 = vsel %vm439, %v118, 0.0
  %v441 = vrot.slane %v440, 4
  %v442 = vadd.f32 %v440, %v441
  %v443 = vrot.slane %v442, 2
  %v444 = vadd.f32 %v442, %v443
  %v445 = vrot.slane %v444, 1
  %v446 = vadd.f32 %v444, %v445
  %v447 = vsel %vm439, %v224, 0.0
  %v448 = vrot.slane %v447, 4
  %v449 = vadd.f32 %v447, %v448
  %v450 = vrot.slane %v449, 2
  %v451 = vadd.f32 %v449, %v450
  %v452 = vrot.slane %v451, 1
  %v453 = vadd.f32 %v451, %v452
  %v454 = vadd.f32 %v446, %v453
  %v455 = vsel %vm439, %v330, 0.0
  %v456 = vrot.slane %v455, 4
  %v457 = vadd.f32 %v455, %v456
  %v458 = vrot.slane %v457, 2
  %v459 = vadd.f32 %v457, %v458
  %v460 = vrot.slane %v459, 1
  %v461 = vadd.f32 %v459, %v460
  %v462 = vadd.f32 %v454, %v461
  %v463 = vsel %vm439, %v436, 0.0
  %v464 = vrot.slane %v463, 4
  %v465 = vadd.f32 %v463, %v464
  %v466 = vrot.slane %v465, 2
  %v467 = vadd.f32 %v465, %v466
  %v468 = vrot.slane %v467, 1
  %v469 = vadd.f32 %v467, %v468
  %v470 = vadd.f32 %v462, %v469
  %v471 = vmul.f32 %v470, 0.03125
  %v472 = vsub.f32 %v118, %v471
  %v473 = vmul.f32 %v472, %v472
  %v474 = vsel %vm439, %v473, 0.0
  %v475 = vrot.slane %v474, 4
  %v476 = vadd.f32 %v474, %v475
  %v477 = vrot.slane %v476, 2
  %v478 = vadd.f32 %v476, %v477
  %v479 = vrot.slane %v478, 1
  %v480 = vadd.f32 %v478, %v479
  %v481 = vsub.f32 %v224, %v471
  %v482 = vmul.f32 %v481, %v481
  %v483 = vsel %vm439, %v482, 0.0
  %v484 = vrot.slane %v483, 4
  %v485 = vadd.f32 %v483, %v484
  %v486 = vrot.slane %v485, 2
  %v487 = vadd.f32 %v485, %v486
  %v488 = vrot.slane %v487, 1
  %v489 = vadd.f32 %v487, %v488
  %v490 = vadd.f32 %v480, %v489
  %v491 = vsub.f32 %v330, %v471
  %v492 = vmul.f32 %v491, %v491
  %v493 = vsel %vm439, %v492, 0.0
  %v494 = vrot.slane %v493, 4
  %v495 = vadd.f32 %v493, %v494
  %v496 = vrot.slane %v495, 2
  %v497 = vadd.f32 %v495, %v496
  %v498 = vrot.slane %v497, 1
  %v499 = vadd.f32 %v497, %v498
  %v500 = vadd.f32 %v490, %v499
  %v501 = vsub.f32 %v436, %v471
  %v502 = vmul.f32 %v501, %v501
  %v503 = vsel %vm439, %v502, 0.0
  %v504 = vrot.slane %v503, 4
  %v505 = vadd.f32 %v503, %v504
  %v506 = vrot.slane %v505, 2
  %v507 = vadd.f32 %v505, %v506
  %v508 = vrot.slane %v507, 1
  %v509 = vadd.f32 %v507, %v508
  %v510 = vadd.f32 %v500, %v509
  %v511 = vmul.f32 %v510, 0.03125
  %v512 = vld [vmem:[%s2] sm:$0x1]
  %v513 = vadd.f32 %v511, 1e-05
  %v514 = vrsqrt.pop %v513
  %v515 = vmul.f32 %v512, %v514
  %v516 = vld [vmem:[%s3] sm:$0x1]
  %v517 = vmul.f32 %v471, %v515
  %v518 = vsub.f32 %v516, %v517
  %v520 = vlaneseq
  %v521 = vshrl.u32 %v520, 7
  %v522 = vsub.s32 0, %v521
  %v523 = vrot.slane %v515, %v522
  %v525 = vmul.f32 %v118, %v523
  %v527 = vlaneseq
  %v528 = vshrl.u32 %v527, 7
  %v529 = vsub.s32 0, %v528
  %v530 = vrot.slane %v518, %v529
  %v532 = vadd.f32 %v525, %v530
  %vm533 = vcmp.ge.f32.partialorder %v532, 0.0
  %v534 = vmul.f32 %v532, 0.0
  %v535 = vsel %vm533, %v532, %v534
  %536 = vst.msk [vmem:[%s4] sm:$0xff] %vm439, %v535
  %v537 = vmul.f32 %v224, %v523
  %v538 = vadd.f32 %v537, %v530
  %vm539 = vcmp.ge.f32.partialorder %v538, 0.0
  %v540 = vmul.f32 %v538, 0.0
  %v541 = vsel %vm539, %v538, %v540
  %s542 = scalar_lea.vmem %s4, 8
  %543 = vst.msk [vmem:[%s542] sm:$0xff] %vm439, %v541
  %v544 = vmul.f32 %v330, %v523
  %v545 = vadd.f32 %v544, %v530
  %vm546 = vcmp.ge.f32.partialorder %v545, 0.0
  %v547 = vmul.f32 %v545, 0.0
  %v548 = vsel %vm546, %v545, %v547
  %s549 = scalar_lea.vmem %s4, 16
  %550 = vst.msk [vmem:[%s549] sm:$0xff] %vm439, %v548
  %v551 = vmul.f32 %v436, %v523
  %v552 = vadd.f32 %v551, %v530
  %vm553 = vcmp.ge.f32.partialorder %v552, 0.0
  %v554 = vmul.f32 %v552, 0.0
  %v555 = vsel %vm553, %v552, %v554
  %s556 = scalar_lea.vmem %s4, 24
  %557 = vst.msk [vmem:[%s556] sm:$0xff] %vm439, %v555
  // Predicated region
  $region18: #{unet_forward.13} parent=0 // pred_check
    _
  $region19: #{unet_forward.13} parent=0 // pred_check_branch
    %559 = sbr.rel (0) target = $region21
  $region20: #{unet_forward.13} parent=0 // pred_region
    _
  $region21: #{unet_forward.13} parent=0 // pred_fallthru
    _
  // Predicated region
  $region22: #{unet_forward.13} parent=0 // pred_check
    _
  $region23: #{unet_forward.13} parent=0 // pred_check_branch
    %561 = sbr.rel (0) target = $region25
  $region24: #{unet_forward.13} parent=0 // pred_region
    _
  $region25: #{unet_forward.13} parent=0 // pred_fallthru
    _

// kernel: unet_forward.14
$region0: #{unet_forward.14}
  #allocation0 [shape = 'u32[]', space=smem, size = 0x4, offset = 0x4, fixed_abs, tag = 'smem constant byte address 0x4 - core index']
  #allocation1 [shape = 'u32[144,128]{1,0:T(1,128)}', space=vmem, size = 0x12000, scoped, tag = 'internal scratch']
  %s0 = inlined_call_operand.vmem [shape: f32[4,32,256], index: 0, kind: input, shape index: {}]
  %s1 = inlined_call_operand.vmem [shape: f32[4,256,16], index: 1, kind: input, shape index: {}]
  %s2 = inlined_call_operand.vmem [shape: f32[1,16], index: 2, kind: input, shape index: {}]
  %s3 = inlined_call_operand.vmem [shape: f32[1,16], index: 3, kind: input, shape index: {}]
  %s4 = inlined_call_operand.vmem [shape: f32[4,32,16], index: 4, kind: output, shape index: {}]
  %s5 = sld [smem:[#allocation0]]
  $region26: #{unet_forward.14} parent=0
    _
  %s7 = ssub.s32 1, %s5
  %s8 = scalar_select 0, %s7, %s5
  // Predicated region
  $region2: #{unet_forward.14} parent=0 // pred_check
    _
  $region3: #{unet_forward.14} parent=0 // pred_check_branch
    %10 = sbr.rel (0) target = $region5
  $region4: #{unet_forward.14} parent=0 // pred_region
    _
  $region5: #{unet_forward.14} parent=0 // pred_fallthru
    _
  // Predicated region
  $region6: #{unet_forward.14} parent=0 // pred_check
    _
  $region7: #{unet_forward.14} parent=0 // pred_check_branch
    %12 = sbr.rel (0) target = $region9
  $region8: #{unet_forward.14} parent=0 // pred_region
    _
  $region9: #{unet_forward.14} parent=0 // pred_fallthru
    _
  // Predicated region
  $region10: #{unet_forward.14} parent=0 // pred_check
    _
  $region11: #{unet_forward.14} parent=0 // pred_check_branch
    %14 = sbr.rel (0) target = $region13
  $region12: #{unet_forward.14} parent=0 // pred_region
    _
  $region13: #{unet_forward.14} parent=0 // pred_fallthru
    _
  // Predicated region
  $region14: #{unet_forward.14} parent=0 // pred_check
    _
  $region15: #{unet_forward.14} parent=0 // pred_check_branch
    %16 = sbr.rel (0) target = $region17
  $region16: #{unet_forward.14} parent=0 // pred_region
    _
  $region17: #{unet_forward.14} parent=0 // pred_fallthru
    _
  %v17 = vld [vmem:[%s0] sm:$0xff]
  %v18 = vld [vmem:[%s0 + $0x8] sm:$0xff]
  %v19 = vld [vmem:[%s0 + $0x10] sm:$0xff]
  %v20 = vld [vmem:[%s0 + $0x18] sm:$0xff]
  %v21 = vld [vmem:[%s0 + $0x20] sm:$0xff]
  %v22 = vld [vmem:[%s0 + $0x28] sm:$0xff]
  %v23 = vld [vmem:[%s0 + $0x30] sm:$0xff]
  %v24 = vld [vmem:[%s0 + $0x38] sm:$0xff]
  %v25 = vld [vmem:[%s1] sm:$0xff]
  %v26 = vld [vmem:[%s1 + $0x8] sm:$0xff]
  %v27 = vld [vmem:[%s1 + $0x10] sm:$0xff]
  %v28 = vld [vmem:[%s1 + $0x18] sm:$0xff]
  %v29 = vld [vmem:[%s1 + $0x20] sm:$0xff]
  %v30 = vld [vmem:[%s1 + $0x28] sm:$0xff]
  %v31 = vld [vmem:[%s1 + $0x30] sm:$0xff]
  %v32 = vld [vmem:[%s1 + $0x38] sm:$0xff]
  %v33 = vld [vmem:[%s1 + $0x40] sm:$0xff]
  %v34 = vld [vmem:[%s1 + $0x48] sm:$0xff]
  %v35 = vld [vmem:[%s1 + $0x50] sm:$0xff]
  %v36 = vld [vmem:[%s1 + $0x58] sm:$0xff]
  %v37 = vld [vmem:[%s1 + $0x60] sm:$0xff]
  %v38 = vld [vmem:[%s1 + $0x68] sm:$0xff]
  %v39 = vld [vmem:[%s1 + $0x70] sm:$0xff]
  %v40 = vld [vmem:[%s1 + $0x78] sm:$0xff]
  %v41 = vld [vmem:[%s1 + $0x80] sm:$0xff]
  %v42 = vld [vmem:[%s1 + $0x88] sm:$0xff]
  %v43 = vld [vmem:[%s1 + $0x90] sm:$0xff]
  %v44 = vld [vmem:[%s1 + $0x98] sm:$0xff]
  %v45 = vld [vmem:[%s1 + $0xa0] sm:$0xff]
  %v46 = vld [vmem:[%s1 + $0xa8] sm:$0xff]
  %v47 = vld [vmem:[%s1 + $0xb0] sm:$0xff]
  %v48 = vld [vmem:[%s1 + $0xb8] sm:$0xff]
  %v49 = vld [vmem:[%s1 + $0xc0] sm:$0xff]
  %v50 = vld [vmem:[%s1 + $0xc8] sm:$0xff]
  %v51 = vld [vmem:[%s1 + $0xd0] sm:$0xff]
  %v52 = vld [vmem:[%s1 + $0xd8] sm:$0xff]
  %v53 = vld [vmem:[%s1 + $0xe0] sm:$0xff]
  %v54 = vld [vmem:[%s1 + $0xe8] sm:$0xff]
  %v55 = vld [vmem:[%s1 + $0xf0] sm:$0xff]
  %v56 = vld [vmem:[%s1 + $0xf8] sm:$0xff]
  %57 = vmatprep.subr.mxu0 0.0
  %58 = vmatpush1.msra.mxu0 %v25
  %59 = vmatprep.subr.mxu0 0.0
  %60 = vmatpush1.msra.mxu0 %v26
  %61 = vmatprep.subr.mxu0 0.0
  %62 = vmatpush1.msra.mxu0 %v27
  %63 = vmatprep.subr.mxu0 0.0
  %64 = vmatpush1.msra.mxu0 %v28
  %65 = vmatprep.subr.mxu0 0.0
  %66 = vmatpush1.msra.mxu0 %v29
  %67 = vmatprep.subr.mxu0 0.0
  %68 = vmatpush1.msra.mxu0 %v30
  %69 = vmatprep.subr.mxu0 0.0
  %70 = vmatpush1.msra.mxu0 %v31
  %71 = vmatprep.subr.mxu0 0.0
  %72 = vmatpush1.msra.mxu0 %v32
  %73 = vmatprep.subr.mxu0 0.0
  %74 = vmatpush1.msra.mxu0 %v33
  %75 = vmatprep.subr.mxu0 0.0
  %76 = vmatpush1.msra.mxu0 %v34
  %77 = vmatprep.subr.mxu0 0.0
  %78 = vmatpush1.msra.mxu0 %v35
  %79 = vmatprep.subr.mxu0 0.0
  %80 = vmatpush1.msra.mxu0 %v36
  %81 = vmatprep.subr.mxu0 0.0
  %82 = vmatpush1.msra.mxu0 %v37
  %83 = vmatprep.subr.mxu0 0.0
  %84 = vmatpush1.msra.mxu0 %v38
  %85 = vmatprep.subr.mxu0 0.0
  %86 = vmatpush1.msra.mxu0 %v39
  %87 = vmatprep.subr.mxu0 0.0
  %88 = vmatpush1.msra.mxu0 %v40
  %89 = vmatprep.subr.mxu0 0.0
  %90 = vmatpush1.msra.mxu0 %v41
  %91 = vmatprep.subr.mxu0 0.0
  %92 = vmatpush1.msra.mxu0 %v42
  %93 = vmatprep.subr.mxu0 0.0
  %94 = vmatpush1.msra.mxu0 %v43
  %95 = vmatprep.subr.mxu0 0.0
  %96 = vmatpush1.msra.mxu0 %v44
  %97 = vmatprep.subr.mxu0 0.0
  %98 = vmatpush1.msra.mxu0 %v45
  %99 = vmatprep.subr.mxu0 0.0
  %100 = vmatpush1.msra.mxu0 %v46
  %101 = vmatprep.subr.mxu0 0.0
  %102 = vmatpush1.msra.mxu0 %v47
  %103 = vmatprep.subr.mxu0 0.0
  %104 = vmatpush1.msra.mxu0 %v48
  %105 = vmatprep.subr.mxu0 0.0
  %106 = vmatpush1.msra.mxu0 %v49
  %107 = vmatprep.subr.mxu0 0.0
  %108 = vmatpush1.msra.mxu0 %v50
  %109 = vmatprep.subr.mxu0 0.0
  %110 = vmatpush1.msra.mxu0 %v51
  %111 = vmatprep.subr.mxu0 0.0
  %112 = vmatpush1.msra.mxu0 %v52
  %113 = vmatprep.subr.mxu0 0.0
  %114 = vmatpush1.msra.mxu0 %v53
  %115 = vmatprep.subr.mxu0 0.0
  %116 = vmatpush1.msra.mxu0 %v54
  %117 = vmatprep.subr.mxu0 0.0
  %118 = vmatpush1.msra.mxu0 %v55
  %119 = vmatprep.subr.mxu0 0.0
  %120 = vmatpush1.msra.mxu0 %v56
  %121 = vmatprep.mubr.f32.mxu0 %v18
  %122 = vmatmul.mubr.f32.gmra.mrb[0].mxu0 %v17
  %v123 = vpop.f32.mrb[0].mxu0
  %v124 = vadd.f32 0.0, %v123
  %v125 = vpop.f32.mrb[0].mxu0
  %126 = vmatprep.mubr.f32.mxu0 %v20
  %127 = vmatmul.mubr.f32.gmra.mrb[0].mxu0 %v19
  %v128 = vpop.f32.mrb[0].mxu0
  %v129 = vadd.f32 0.0, %v128
  %v130 = vpop.f32.mrb[0].mxu0
  %131 = vmatprep.mubr.f32.mxu0 %v22
  %132 = vmatmul.mubr.f32.gmra.mrb[0].mxu0 %v21
  %v133 = vpop.f32.mrb[0].mxu0
  %v134 = vadd.f32 0.0, %v133
  %v135 = vpop.f32.mrb[0].mxu0
  %136 = vmatprep.mubr.f32.mxu0 %v24
  %137 = vmatmul.mubr.f32.gmra.mrb[0].mxu0 %v23
  %v138 = vpop.f32.mrb[0].mxu0
  %v139 = vadd.f32 0.0, %v138
  %v140 = vpop.f32.mrb[0].mxu0
  %141 = vdwg.mxu0
  %s142 = scalar_lea.vmem %s0, 64
  %v143 = vld [vmem:[%s142] sm:$0xff]
  %v144 = vld [vmem:[%s142 + $0x8] sm:$0xff]
  %v145 = vld [vmem:[%s142 + $0x10] sm:$0xff]
  %v146 = vld [vmem:[%s142 + $0x18] sm:$0xff]
  %v147 = vld [vmem:[%s142 + $0x20] sm:$0xff]
  %v148 = vld [vmem:[%s142 + $0x28] sm:$0xff]
  %v149 = vld [vmem:[%s142 + $0x30] sm:$0xff]
  %v150 = vld [vmem:[%s142 + $0x38] sm:$0xff]
  %s151 = scalar_lea.vmem %s1, 256
  %v152 = vld [vmem:[%s151] sm:$0xff]
  %v153 = vld [vmem:[%s151 + $0x8] sm:$0xff]
  %v154 = vld [vmem:[%s151 + $0x10] sm:$0xff]
  %v155 = vld [vmem:[%s151 + $0x18] sm:$0xff]
  %v156 = vld [vmem:[%s151 + $0x20] sm:$0xff]
  %v157 = vld [vmem:[%s151 + $0x28] sm:$0xff]
  %v158 = vld [vmem:[%s151 + $0x30] sm:$0xff]
  %v159 = vld [vmem:[%s151 + $0x38] sm:$0xff]
  %v160 = vld [vmem:[%s151 + $0x40] sm:$0xff]
  %v161 = vld [vmem:[%s151 + $0x48] sm:$0xff]
  %v162 = vld [vmem:[%s151 + $0x50] sm:$0xff]
  %v163 = vld [vmem:[%s151 + $0x58] sm:$0xff]
  %v164 = vld [vmem:[%s151 + $0x60] sm:$0xff]
  %v165 = vld [vmem:[%s151 + $0x68] sm:$0xff]
  %v166 = vld [vmem:[%s151 + $0x70] sm:$0xff]
  %v167 = vld [vmem:[%s151 + $0x78] sm:$0xff]
  %v168 = vld [vmem:[%s151 + $0x80] sm:$0xff]
  %v169 = vld [vmem:[%s151 + $0x88] sm:$0xff]
  %v170 = vld [vmem:[%s151 + $0x90] sm:$0xff]
  %v171 = vld [vmem:[%s151 + $0x98] sm:$0xff]
  %v172 = vld [vmem:[%s151 + $0xa0] sm:$0xff]
  %v173 = vld [vmem:[%s151 + $0xa8] sm:$0xff]
  %v174 = vld [vmem:[%s151 + $0xb0] sm:$0xff]
  %v175 = vld [vmem:[%s151 + $0xb8] sm:$0xff]
  %v176 = vld [vmem:[%s151 + $0xc0] sm:$0xff]
  %v177 = vld [vmem:[%s151 + $0xc8] sm:$0xff]
  %v178 = vld [vmem:[%s151 + $0xd0] sm:$0xff]
  %v179 = vld [vmem:[%s151 + $0xd8] sm:$0xff]
  %v180 = vld [vmem:[%s151 + $0xe0] sm:$0xff]
  %v181 = vld [vmem:[%s151 + $0xe8] sm:$0xff]
  %v182 = vld [vmem:[%s151 + $0xf0] sm:$0xff]
  %v183 = vld [vmem:[%s151 + $0xf8] sm:$0xff]
  %184 = vmatprep.subr.mxu0 0.0
  %185 = vmatpush1.msra.mxu0 %v152
  %186 = vmatprep.subr.mxu0 0.0
  %187 = vmatpush1.msra.mxu0 %v153
  %188 = vmatprep.subr.mxu0 0.0
  %189 = vmatpush1.msra.mxu0 %v154
  %190 = vmatprep.subr.mxu0 0.0
  %191 = vmatpush1.msra.mxu0 %v155
  %192 = vmatprep.subr.mxu0 0.0
  %193 = vmatpush1.msra.mxu0 %v156
  %194 = vmatprep.subr.mxu0 0.0
  %195 = vmatpush1.msra.mxu0 %v157
  %196 = vmatprep.subr.mxu0 0.0
  %197 = vmatpush1.msra.mxu0 %v158
  %198 = vmatprep.subr.mxu0 0.0
  %199 = vmatpush1.msra.mxu0 %v159
  %200 = vmatprep.subr.mxu0 0.0
  %201 = vmatpush1.msra.mxu0 %v160
  %202 = vmatprep.subr.mxu0 0.0
  %203 = vmatpush1.msra.mxu0 %v161
  %204 = vmatprep.subr.mxu0 0.0
  %205 = vmatpush1.msra.mxu0 %v162
  %206 = vmatprep.subr.mxu0 0.0
  %207 = vmatpush1.msra.mxu0 %v163
  %208 = vmatprep.subr.mxu0 0.0
  %209 = vmatpush1.msra.mxu0 %v164
  %210 = vmatprep.subr.mxu0 0.0
  %211 = vmatpush1.msra.mxu0 %v165
  %212 = vmatprep.subr.mxu0 0.0
  %213 = vmatpush1.msra.mxu0 %v166
  %214 = vmatprep.subr.mxu0 0.0
  %215 = vmatpush1.msra.mxu0 %v167
  %216 = vmatprep.subr.mxu0 0.0
  %217 = vmatpush1.msra.mxu0 %v168
  %218 = vmatprep.subr.mxu0 0.0
  %219 = vmatpush1.msra.mxu0 %v169
  %220 = vmatprep.subr.mxu0 0.0
  %221 = vmatpush1.msra.mxu0 %v170
  %222 = vmatprep.subr.mxu0 0.0
  %223 = vmatpush1.msra.mxu0 %v171
  %224 = vmatprep.subr.mxu0 0.0
  %225 = vmatpush1.msra.mxu0 %v172
  %226 = vmatprep.subr.mxu0 0.0
  %227 = vmatpush1.msra.mxu0 %v173
  %228 = vmatprep.subr.mxu0 0.0
  %229 = vmatpush1.msra.mxu0 %v174
  %230 = vmatprep.subr.mxu0 0.0
  %231 = vmatpush1.msra.mxu0 %v175
  %232 = vmatprep.subr.mxu0 0.0
  %233 = vmatpush1.msra.mxu0 %v176
  %234 = vmatprep.subr.mxu0 0.0
  %235 = vmatpush1.msra.mxu0 %v177
  %236 = vmatprep.subr.mxu0 0.0
  %237 = vmatpush1.msra.mxu0 %v178
  %238 = vmatprep.subr.mxu0 0.0
  %239 = vmatpush1.msra.mxu0 %v179
  %240 = vmatprep.subr.mxu0 0.0
  %241 = vmatpush1.msra.mxu0 %v180
  %242 = vmatprep.subr.mxu0 0.0
  %243 = vmatpush1.msra.mxu0 %v181
  %244 = vmatprep.subr.mxu0 0.0
  %245 = vmatpush1.msra.mxu0 %v182
  %246 = vmatprep.subr.mxu0 0.0
  %247 = vmatpush1.msra.mxu0 %v183
  %248 = vmatprep.mubr.f32.mxu0 %v144
  %249 = vmatmul.mubr.f32.gmra.mrb[0].mxu0 %v143
  %v250 = vpop.f32.mrb[0].mxu0
  %v251 = vadd.f32 0.0, %v250
  %v252 = vpop.f32.mrb[0].mxu0
  %253 = vmatprep.mubr.f32.mxu0 %v146
  %254 = vmatmul.mubr.f32.gmra.mrb[0].mxu0 %v145
  %v255 = vpop.f32.mrb[0].mxu0
  %v256 = vadd.f32 0.0, %v255
  %v257 = vpop.f32.mrb[0].mxu0
  %258 = vmatprep.mubr.f32.mxu0 %v148
  %259 = vmatmul.mubr.f32.gmra.mrb[0].mxu0 %v147
  %v260 = vpop.f32.mrb[0].mxu0
  %v261 = vadd.f32 0.0, %v260
  %v262 = vpop.f32.mrb[0].mxu0
  %263 = vmatprep.mubr.f32.mxu0 %v150
  %264 = vmatmul.mubr.f32.gmra.mrb[0].mxu0 %v149
  %v265 = vpop.f32.mrb[0].mxu0
  %v266 = vadd.f32 0.0, %v265
  %v267 = vpop.f32.mrb[0].mxu0
  %268 = vdwg.mxu0
  %s269 = scalar_lea.vmem %s0, 128
  %v270 = vld [vmem:[%s269] sm:$0xff]
  %v271 = vld [vmem:[%s269 + $0x8] sm:$0xff]
  %v272 = vld [vmem:[%s269 + $0x10] sm:$0xff]
  %v273 = vld [vmem:[%s269 + $0x18] sm:$0xff]
  %v274 = vld [vmem:[%s269 + $0x20] sm:$0xff]
  %v275 = vld [vmem:[%s269 + $0x28] sm:$0xff]
  %v276 = vld [vmem:[%s269 + $0x30] sm:$0xff]
  %v277 = vld [vmem:[%s269 + $0x38] sm:$0xff]
  %s278 = scalar_lea.vmem %s1, 512
  %v279 = vld [vmem:[%s278] sm:$0xff]
  %v280 = vld [vmem:[%s278 + $0x8] sm:$0xff]
  %v281 = vld [vmem:[%s278 + $0x10] sm:$0xff]
  %v282 = vld [vmem:[%s278 + $0x18] sm:$0xff]
  %v283 = vld [vmem:[%s278 + $0x20] sm:$0xff]
  %v284 = vld [vmem:[%s278 + $0x28] sm:$0xff]
  %v285 = vld [vmem:[%s278 + $0x30] sm:$0xff]
  %v286 = vld [vmem:[%s278 + $0x38] sm:$0xff]
  %v287 = vld [vmem:[%s278 + $0x40] sm:$0xff]
  %v288 = vld [vmem:[%s278 + $0x48] sm:$0xff]
  %v289 = vld [vmem:[%s278 + $0x50] sm:$0xff]
  %v290 = vld [vmem:[%s278 + $0x58] sm:$0xff]
  %v291 = vld [vmem:[%s278 + $0x60] sm:$0xff]
  %v292 = vld [vmem:[%s278 + $0x68] sm:$0xff]
  %v293 = vld [vmem:[%s278 + $0x70] sm:$0xff]
  %v294 = vld [vmem:[%s278 + $0x78] sm:$0xff]
  %v295 = vld [vmem:[%s278 + $0x80] sm:$0xff]
  %v296 = vld [vmem:[%s278 + $0x88] sm:$0xff]
  %v297 = vld [vmem:[%s278 + $0x90] sm:$0xff]
  %v298 = vld [vmem:[%s278 + $0x98] sm:$0xff]
  %v299 = vld [vmem:[%s278 + $0xa0] sm:$0xff]
  %v300 = vld [vmem:[%s278 + $0xa8] sm:$0xff]
  %v301 = vld [vmem:[%s278 + $0xb0] sm:$0xff]
  %v302 = vld [vmem:[%s278 + $0xb8] sm:$0xff]
  %v303 = vld [vmem:[%s278 + $0xc0] sm:$0xff]
  %v304 = vld [vmem:[%s278 + $0xc8] sm:$0xff]
  %v305 = vld [vmem:[%s278 + $0xd0] sm:$0xff]
  %v306 = vld [vmem:[%s278 + $0xd8] sm:$0xff]
  %v307 = vld [vmem:[%s278 + $0xe0] sm:$0xff]
  %v308 = vld [vmem:[%s278 + $0xe8] sm:$0xff]
  %v309 = vld [vmem:[%s278 + $0xf0] sm:$0xff]
  %v310 = vld [vmem:[%s278 + $0xf8] sm:$0xff]
  %311 = vmatprep.subr.mxu0 0.0
  %312 = vmatpush1.msra.mxu0 %v279
  %313 = vmatprep.subr.mxu0 0.0
  %314 = vmatpush1.msra.mxu0 %v280
  %315 = vmatprep.subr.mxu0 0.0
  %316 = vmatpush1.msra.mxu0 %v281
  %317 = vmatprep.subr.mxu0 0.0
  %318 = vmatpush1.msra.mxu0 %v282
  %319 = vmatprep.subr.mxu0 0.0
  %320 = vmatpush1.msra.mxu0 %v283
  %321 = vmatprep.subr.mxu0 0.0
  %322 = vmatpush1.msra.mxu0 %v284
  %323 = vmatprep.subr.mxu0 0.0
  %324 = vmatpush1.msra.mxu0 %v285
  %325 = vmatprep.subr.mxu0 0.0
  %326 = vmatpush1.msra.mxu0 %v286
  %327 = vmatprep.subr.mxu0 0.0
  %328 = vmatpush1.msra.mxu0 %v287
  %329 = vmatprep.subr.mxu0 0.0
  %330 = vmatpush1.msra.mxu0 %v288
  %331 = vmatprep.subr.mxu0 0.0
  %332 = vmatpush1.msra.mxu0 %v289
  %333 = vmatprep.subr.mxu0 0.0
  %334 = vmatpush1.msra.mxu0 %v290
  %335 = vmatprep.subr.mxu0 0.0
  %336 = vmatpush1.msra.mxu0 %v291
  %337 = vmatprep.subr.mxu0 0.0
  %338 = vmatpush1.msra.mxu0 %v292
  %339 = vmatprep.subr.mxu0 0.0
  %340 = vmatpush1.msra.mxu0 %v293
  %341 = vmatprep.subr.mxu0 0.0
  %342 = vmatpush1.msra.mxu0 %v294
  %343 = vmatprep.subr.mxu0 0.0
  %344 = vmatpush1.msra.mxu0 %v295
  %345 = vmatprep.subr.mxu0 0.0
  %346 = vmatpush1.msra.mxu0 %v296
  %347 = vmatprep.subr.mxu0 0.0
  %348 = vmatpush1.msra.mxu0 %v297
  %349 = vmatprep.subr.mxu0 0.0
  %350 = vmatpush1.msra.mxu0 %v298
  %351 = vmatprep.subr.mxu0 0.0
  %352 = vmatpush1.msra.mxu0 %v299
  %353 = vmatprep.subr.mxu0 0.0
  %354 = vmatpush1.msra.mxu0 %v300
  %355 = vmatprep.subr.mxu0 0.0
  %356 = vmatpush1.msra.mxu0 %v301
  %357 = vmatprep.subr.mxu0 0.0
  %358 = vmatpush1.msra.mxu0 %v302
  %359 = vmatprep.subr.mxu0 0.0
  %360 = vmatpush1.msra.mxu0 %v303
  %361 = vmatprep.subr.mxu0 0.0
  %362 = vmatpush1.msra.mxu0 %v304
  %363 = vmatprep.subr.mxu0 0.0
  %364 = vmatpush1.msra.mxu0 %v305
  %365 = vmatprep.subr.mxu0 0.0
  %366 = vmatpush1.msra.mxu0 %v306
  %367 = vmatprep.subr.mxu0 0.0
  %368 = vmatpush1.msra.mxu0 %v307
  %369 = vmatprep.subr.mxu0 0.0
  %370 = vmatpush1.msra.mxu0 %v308
  %371 = vmatprep.subr.mxu0 0.0
  %372 = vmatpush1.msra.mxu0 %v309
  %373 = vmatprep.subr.mxu0 0.0
  %374 = vmatpush1.msra.mxu0 %v310
  %375 = vmatprep.mubr.f32.mxu0 %v271
  %376 = vmatmul.mubr.f32.gmra.mrb[0].mxu0 %v270
  %v377 = vpop.f32.mrb[0].mxu0
  %v378 = vadd.f32 0.0, %v377
  %v379 = vpop.f32.mrb[0].mxu0
  %380 = vmatprep.mubr.f32.mxu0 %v273
  %381 = vmatmul.mubr.f32.gmra.mrb[0].mxu0 %v272
  %v382 = vpop.f32.mrb[0].mxu0
  %v383 = vadd.f32 0.0, %v382
  %v384 = vpop.f32.mrb[0].mxu0
  %385 = vmatprep.mubr.f32.mxu0 %v275
  %386 = vmatmul.mubr.f32.gmra.mrb[0].mxu0 %v274
  %v387 = vpop.f32.mrb[0].mxu0
  %v388 = vadd.f32 0.0, %v387
  %v389 = vpop.f32.mrb[0].mxu0
  %390 = vmatprep.mubr.f32.mxu0 %v277
  %391 = vmatmul.mubr.f32.gmra.mrb[0].mxu0 %v276
  %v392 = vpop.f32.mrb[0].mxu0
  %v393 = vadd.f32 0.0, %v392
  %v394 = vpop.f32.mrb[0].mxu0
  %395 = vdwg.mxu0
  %s396 = scalar_lea.vmem %s0, 192
  %v397 = vld [vmem:[%s396] sm:$0xff]
  %v398 = vld [vmem:[%s396 + $0x8] sm:$0xff]
  %v399 = vld [vmem:[%s396 + $0x10] sm:$0xff]
  %v400 = vld [vmem:[%s396 + $0x18] sm:$0xff]
  %v401 = vld [vmem:[%s396 + $0x20] sm:$0xff]
  %v402 = vld [vmem:[%s396 + $0x28] sm:$0xff]
  %v403 = vld [vmem:[%s396 + $0x30] sm:$0xff]
  %v404 = vld [vmem:[%s396 + $0x38] sm:$0xff]
  %s405 = scalar_lea.vmem %s1, 768
  %v406 = vld [vmem:[%s405] sm:$0xff]
  %v407 = vld [vmem:[%s405 + $0x8] sm:$0xff]
  %v408 = vld [vmem:[%s405 + $0x10] sm:$0xff]
  %v409 = vld [vmem:[%s405 + $0x18] sm:$0xff]
  %v410 = vld [vmem:[%s405 + $0x20] sm:$0xff]
  %v411 = vld [vmem:[%s405 + $0x28] sm:$0xff]
  %v412 = vld [vmem:[%s405 + $0x30] sm:$0xff]
  %v413 = vld [vmem:[%s405 + $0x38] sm:$0xff]
  %v414 = vld [vmem:[%s405 + $0x40] sm:$0xff]
  %v415 = vld [vmem:[%s405 + $0x48] sm:$0xff]
  %v416 = vld [vmem:[%s405 + $0x50] sm:$0xff]
  %v417 = vld [vmem:[%s405 + $0x58] sm:$0xff]
  %v418 = vld [vmem:[%s405 + $0x60] sm:$0xff]
  %v419 = vld [vmem:[%s405 + $0x68] sm:$0xff]
  %v420 = vld [vmem:[%s405 + $0x70] sm:$0xff]
  %v421 = vld [vmem:[%s405 + $0x78] sm:$0xff]
  %v422 = vld [vmem:[%s405 + $0x80] sm:$0xff]
  %v423 = vld [vmem:[%s405 + $0x88] sm:$0xff]
  %v424 = vld [vmem:[%s405 + $0x90] sm:$0xff]
  %v425 = vld [vmem:[%s405 + $0x98] sm:$0xff]
  %v426 = vld [vmem:[%s405 + $0xa0] sm:$0xff]
  %v427 = vld [vmem:[%s405 + $0xa8] sm:$0xff]
  %v428 = vld [vmem:[%s405 + $0xb0] sm:$0xff]
  %v429 = vld [vmem:[%s405 + $0xb8] sm:$0xff]
  %v430 = vld [vmem:[%s405 + $0xc0] sm:$0xff]
  %v431 = vld [vmem:[%s405 + $0xc8] sm:$0xff]
  %v432 = vld [vmem:[%s405 + $0xd0] sm:$0xff]
  %v433 = vld [vmem:[%s405 + $0xd8] sm:$0xff]
  %v434 = vld [vmem:[%s405 + $0xe0] sm:$0xff]
  %v435 = vld [vmem:[%s405 + $0xe8] sm:$0xff]
  %v436 = vld [vmem:[%s405 + $0xf0] sm:$0xff]
  %v437 = vld [vmem:[%s405 + $0xf8] sm:$0xff]
  %438 = vmatprep.subr.mxu0 0.0
  %439 = vmatpush1.msra.mxu0 %v406
  %440 = vmatprep.subr.mxu0 0.0
  %441 = vmatpush1.msra.mxu0 %v407
  %442 = vmatprep.subr.mxu0 0.0
  %443 = vmatpush1.msra.mxu0 %v408
  %444 = vmatprep.subr.mxu0 0.0
  %445 = vmatpush1.msra.mxu0 %v409
  %446 = vmatprep.subr.mxu0 0.0
  %447 = vmatpush1.msra.mxu0 %v410
  %448 = vmatprep.subr.mxu0 0.0
  %449 = vmatpush1.msra.mxu0 %v411
  %450 = vmatprep.subr.mxu0 0.0
  %451 = vmatpush1.msra.mxu0 %v412
  %452 = vmatprep.subr.mxu0 0.0
  %453 = vmatpush1.msra.mxu0 %v413
  %454 = vmatprep.subr.mxu0 0.0
  %455 = vmatpush1.msra.mxu0 %v414
  %456 = vmatprep.subr.mxu0 0.0
  %457 = vmatpush1.msra.mxu0 %v415
  %458 = vmatprep.subr.mxu0 0.0
  %459 = vmatpush1.msra.mxu0 %v416
  %460 = vmatprep.subr.mxu0 0.0
  %461 = vmatpush1.msra.mxu0 %v417
  %462 = vmatprep.subr.mxu0 0.0
  %463 = vmatpush1.msra.mxu0 %v418
  %464 = vmatprep.subr.mxu0 0.0
  %465 = vmatpush1.msra.mxu0 %v419
  %466 = vmatprep.subr.mxu0 0.0
  %467 = vmatpush1.msra.mxu0 %v420
  %468 = vmatprep.subr.mxu0 0.0
  %469 = vmatpush1.msra.mxu0 %v421
  %470 = vmatprep.subr.mxu0 0.0
  %471 = vmatpush1.msra.mxu0 %v422
  %472 = vmatprep.subr.mxu0 0.0
  %473 = vmatpush1.msra.mxu0 %v423
  %474 = vmatprep.subr.mxu0 0.0
  %475 = vmatpush1.msra.mxu0 %v424
  %476 = vmatprep.subr.mxu0 0.0
  %477 = vmatpush1.msra.mxu0 %v425
  %478 = vmatprep.subr.mxu0 0.0
  %479 = vmatpush1.msra.mxu0 %v426
  %480 = vmatprep.subr.mxu0 0.0
  %481 = vmatpush1.msra.mxu0 %v427
  %482 = vmatprep.subr.mxu0 0.0
  %483 = vmatpush1.msra.mxu0 %v428
  %484 = vmatprep.subr.mxu0 0.0
  %485 = vmatpush1.msra.mxu0 %v429
  %486 = vmatprep.subr.mxu0 0.0
  %487 = vmatpush1.msra.mxu0 %v430
  %488 = vmatprep.subr.mxu0 0.0
  %489 = vmatpush1.msra.mxu0 %v431
  %490 = vmatprep.subr.mxu0 0.0
  %491 = vmatpush1.msra.mxu0 %v432
  %492 = vmatprep.subr.mxu0 0.0
  %493 = vmatpush1.msra.mxu0 %v433
  %494 = vmatprep.subr.mxu0 0.0
  %495 = vmatpush1.msra.mxu0 %v434
  %496 = vmatprep.subr.mxu0 0.0
  %497 = vmatpush1.msra.mxu0 %v435
  %498 = vmatprep.subr.mxu0 0.0
  %499 = vmatpush1.msra.mxu0 %v436
  %500 = vmatprep.subr.mxu0 0.0
  %501 = vmatpush1.msra.mxu0 %v437
  %502 = vmatprep.mubr.f32.mxu0 %v398
  %503 = vmatmul.mubr.f32.gmra.mrb[0].mxu0 %v397
  %v504 = vpop.f32.mrb[0].mxu0
  %v505 = vadd.f32 0.0, %v504
  %v506 = vpop.f32.mrb[0].mxu0
  %507 = vmatprep.mubr.f32.mxu0 %v400
  %508 = vmatmul.mubr.f32.gmra.mrb[0].mxu0 %v399
  %v509 = vpop.f32.mrb[0].mxu0
  %v510 = vadd.f32 0.0, %v509
  %v511 = vpop.f32.mrb[0].mxu0
  %512 = vmatprep.mubr.f32.mxu0 %v402
  %513 = vmatmul.mubr.f32.gmra.mrb[0].mxu0 %v401
  %v514 = vpop.f32.mrb[0].mxu0
  %v515 = vadd.f32 0.0, %v514
  %v516 = vpop.f32.mrb[0].mxu0
  %517 = vmatprep.mubr.f32.mxu0 %v404
  %518 = vmatmul.mubr.f32.gmra.mrb[0].mxu0 %v403
  %v519 = vpop.f32.mrb[0].mxu0
  %v520 = vadd.f32 0.0, %v519
  %v521 = vpop.f32.mrb[0].mxu0
  %522 = vdwg.mxu0
  %vm523 = vcmask 130048
  %v524 = vsel %vm523, %v124, 0.0
  %v525 = vsel %vm523, %v129, 0.0
  %v526 = vadd.f32 %v524, %v525
  %v527 = vsel %vm523, %v134, 0.0
  %v528 = vadd.f32 %v526, %v527
  %v529 = vsel %vm523, %v139, 0.0
  %v530 = vadd.f32 %v528, %v529
  %v531 = vrot.slane %v530, 4
  %v532 = vadd.f32 %v530, %v531
  %v533 = vrot.slane %v532, 2
  %v534 = vadd.f32 %v532, %v533
  %v535 = vrot.slane %v534, 1
  %v536 = vadd.f32 %v534, %v535
  %v537 = vsel %vm523, %v251, 0.0
  %v538 = vsel %vm523, %v256, 0.0
  %v539 = vadd.f32 %v537, %v538
  %v540 = vsel %vm523, %v261, 0.0
  %v541 = vadd.f32 %v539, %v540
  %v542 = vsel %vm523, %v266, 0.0
  %v543 = vadd.f32 %v541, %v542
  %v544 = vrot.slane %v543, 4
  %v545 = vadd.f32 %v543, %v544
  %v546 = vrot.slane %v545, 2
  %v547 = vadd.f32 %v545, %v546
  %v548 = vrot.slane %v547, 1
  %v549 = vadd.f32 %v547, %v548
  %v550 = vadd.f32 %v536, %v549
  %v551 = vsel %vm523, %v378, 0.0
  %v552 = vsel %vm523, %v383, 0.0
  %v553 = vadd.f32 %v551, %v552
  %v554 = vsel %vm523, %v388, 0.0
  %v555 = vadd.f32 %v553, %v554
  %v556 = vsel %vm523, %v393, 0.0
  %v557 = vadd.f32 %v555, %v556
  %v558 = vrot.slane %v557, 4
  %v559 = vadd.f32 %v557, %v558
  %v560 = vrot.slane %v559, 2
  %v561 = vadd.f32 %v559, %v560
  %v562 = vrot.slane %v561, 1
  %v563 = vadd.f32 %v561, %v562
  %v564 = vadd.f32 %v550, %v563
  %v565 = vsel %vm523, %v505, 0.0
  %v566 = vsel %vm523, %v510, 0.0
  %v567 = vadd.f32 %v565, %v566
  %v568 = vsel %vm523, %v515, 0.0
  %v569 = vadd.f32 %v567, %v568
  %v570 = vsel %vm523, %v520, 0.0
  %v571 = vadd.f32 %v569, %v570
  %v572 = vrot.slane %v571, 4
  %v573 = vadd.f32 %v571, %v572
  %v574 = vrot.slane %v573, 2
  %v575 = vadd.f32 %v573, %v574
  %v576 = vrot.slane %v575, 1
  %v577 = vadd.f32 %v575, %v576
  %v578 = vadd.f32 %v564, %v577
  %v579 = vmul.f32 %v578, 0.0078125
  %v580 = vsub.f32 %v124, %v579
  %v581 = vsub.f32 %v129, %v579
  %v582 = vsub.f32 %v134, %v579
  %v583 = vsub.f32 %v139, %v579
  %v584 = vmul.f32 %v580, %v580
  %v585 = vmul.f32 %v581, %v581
  %v586 = vmul.f32 %v582, %v582
  %v587 = vmul.f32 %v583, %v583
  %v588 = vsel %vm523, %v584, 0.0
  %v589 = vsel %vm523, %v585, 0.0
  %v590 = vadd.f32 %v588, %v589
  %v591 = vsel %vm523, %v586, 0.0
  %v592 = vadd.f32 %v590, %v591
  %v593 = vsel %vm523, %v587, 0.0
  %v594 = vadd.f32 %v592, %v593
  %v595 = vrot.slane %v594, 4
  %v596 = vadd.f32 %v594, %v595
  %v597 = vrot.slane %v596, 2
  %v598 = vadd.f32 %v596, %v597
  %v599 = vrot.slane %v598, 1
  %v600 = vadd.f32 %v598, %v599
  %v601 = vsub.f32 %v251, %v579
  %v602 = vsub.f32 %v256, %v579
  %v603 = vsub.f32 %v261, %v579
  %v604 = vsub.f32 %v266, %v579
  %v605 = vmul.f32 %v601, %v601
  %v606 = vmul.f32 %v602, %v602
  %v607 = vmul.f32 %v603, %v603
  %v608 = vmul.f32 %v604, %v604
  %v609 = vsel %vm523, %v605, 0.0
  %v610 = vsel %vm523, %v606, 0.0
  %v611 = vadd.f32 %v609, %v610
  %v612 = vsel %vm523, %v607, 0.0
  %v613 = vadd.f32 %v611, %v612
  %v614 = vsel %vm523, %v608, 0.0
  %v615 = vadd.f32 %v613, %v614
  %v616 = vrot.slane %v615, 4
  %v617 = vadd.f32 %v615, %v616
  %v618 = vrot.slane %v617, 2
  %v619 = vadd.f32 %v617, %v618
  %v620 = vrot.slane %v619, 1
  %v621 = vadd.f32 %v619, %v620
  %v622 = vadd.f32 %v600, %v621
  %v623 = vsub.f32 %v378, %v579
  %v624 = vsub.f32 %v383, %v579
  %v625 = vsub.f32 %v388, %v579
  %v626 = vsub.f32 %v393, %v579
  %v627 = vmul.f32 %v623, %v623
  %v628 = vmul.f32 %v624, %v624
  %v629 = vmul.f32 %v625, %v625
  %v630 = vmul.f32 %v626, %v626
  %v631 = vsel %vm523, %v627, 0.0
  %v632 = vsel %vm523, %v628, 0.0
  %v633 = vadd.f32 %v631, %v632
  %v634 = vsel %vm523, %v629, 0.0
  %v635 = vadd.f32 %v633, %v634
  %v636 = vsel %vm523, %v630, 0.0
  %v637 = vadd.f32 %v635, %v636
  %v638 = vrot.slane %v637, 4
  %v639 = vadd.f32 %v637, %v638
  %v640 = vrot.slane %v639, 2
  %v641 = vadd.f32 %v639, %v640
  %v642 = vrot.slane %v641, 1
  %v643 = vadd.f32 %v641, %v642
  %v644 = vadd.f32 %v622, %v643
  %v645 = vsub.f32 %v505, %v579
  %v646 = vsub.f32 %v510, %v579
  %v647 = vsub.f32 %v515, %v579
  %v648 = vsub.f32 %v520, %v579
  %v649 = vmul.f32 %v645, %v645
  %v650 = vmul.f32 %v646, %v646
  %v651 = vmul.f32 %v647, %v647
  %v652 = vmul.f32 %v648, %v648
  %v653 = vsel %vm523, %v649, 0.0
  %v654 = vsel %vm523, %v650, 0.0
  %v655 = vadd.f32 %v653, %v654
  %v656 = vsel %vm523, %v651, 0.0
  %v657 = vadd.f32 %v655, %v656
  %v658 = vsel %vm523, %v652, 0.0
  %v659 = vadd.f32 %v657, %v658
  %v660 = vrot.slane %v659, 4
  %v661 = vadd.f32 %v659, %v660
  %v662 = vrot.slane %v661, 2
  %v663 = vadd.f32 %v661, %v662
  %v664 = vrot.slane %v663, 1
  %v665 = vadd.f32 %v663, %v664
  %v666 = vadd.f32 %v644, %v665
  %v667 = vmul.f32 %v666, 0.0078125
  %v668 = vld [vmem:[%s2] sm:$0x1]
  %v669 = vadd.f32 %v667, 1e-05
  %v670 = vrsqrt.pop %v669
  %v671 = vmul.f32 %v668, %v670
  %v672 = vld [vmem:[%s3] sm:$0x1]
  %v673 = vmul.f32 %v579, %v671
  %v674 = vsub.f32 %v672, %v673
  %v676 = vlaneseq
  %v677 = vshrl.u32 %v676, 7
  %v678 = vsub.s32 0, %v677
  %v679 = vrot.slane %v671, %v678
  %v681 = vmul.f32 %v124, %v679
  %v682 = vmul.f32 %v129, %v679
  %v683 = vmul.f32 %v134, %v679
  %v684 = vmul.f32 %v139, %v679
  %v686 = vlaneseq
  %v687 = vshrl.u32 %v686, 7
  %v688 = vsub.s32 0, %v687
  %v689 = vrot.slane %v674, %v688
  %v691 = vadd.f32 %v681, %v689
  %v692 = vadd.f32 %v682, %v689
  %v693 = vadd.f32 %v683, %v689
  %v694 = vadd.f32 %v684, %v689
  %vm695 = vcmp.ge.f32.partialorder %v691, 0.0
  %vm696 = vcmp.ge.f32.partialorder %v692, 0.0
  %vm697 = vcmp.ge.f32.partialorder %v693, 0.0
  %vm698 = vcmp.ge.f32.partialorder %v694, 0.0
  %v699 = vmul.f32 %v691, 0.0
  %v700 = vmul.f32 %v692, 0.0
  %v701 = vmul.f32 %v693, 0.0
  %v702 = vmul.f32 %v694, 0.0
  %v703 = vsel %vm695, %v691, %v699
  %v704 = vsel %vm696, %v692, %v700
  %v705 = vsel %vm697, %v693, %v701
  %v706 = vsel %vm698, %v694, %v702
  %707 = vst.msk [vmem:[%s4] sm:$0xff] %vm523, %v703
  %708 = vst.msk [vmem:[%s4 + $0x8] sm:$0xff] %vm523, %v704
  %709 = vst.msk [vmem:[%s4 + $0x10] sm:$0xff] %vm523, %v705
  %710 = vst.msk [vmem:[%s4 + $0x18] sm:$0xff] %vm523, %v706
  %v711 = vmul.f32 %v251, %v679
  %v712 = vmul.f32 %v256, %v679
  %v713 = vmul.f32 %v261, %v679
  %v714 = vmul.f32 %v266, %v679
  %v715 = vadd.f32 %v711, %v689
  %v716 = vadd.f32 %v712, %v689
  %v717 = vadd.f32 %v713, %v689
  %v718 = vadd.f32 %v714, %v689
  %vm719 = vcmp.ge.f32.partialorder %v715, 0.0
  %vm720 = vcmp.ge.f32.partialorder %v716, 0.0
  %vm721 = vcmp.ge.f32.partialorder %v717, 0.0
  %vm722 = vcmp.ge.f32.partialorder %v718, 0.0
  %v723 = vmul.f32 %v715, 0.0
  %v724 = vmul.f32 %v716, 0.0
  %v725 = vmul.f32 %v717, 0.0
  %v726 = vmul.f32 %v718, 0.0
  %v727 = vsel %vm719, %v715, %v723
  %v728 = vsel %vm720, %v716, %v724
  %v729 = vsel %vm721, %v717, %v725
  %v730 = vsel %vm722, %v718, %v726
  %s731 = scalar_lea.vmem %s4, 32
  %732 = vst.msk [vmem:[%s731] sm:$0xff] %vm523, %v727
  %733 = vst.msk [vmem:[%s731 + $0x8] sm:$0xff] %vm523, %v728
  %734 = vst.msk [vmem:[%s731 + $0x10] sm:$0xff] %vm523, %v729
  %735 = vst.msk [vmem:[%s731 + $0x18] sm:$0xff] %vm523, %v730
  %v736 = vmul.f32 %v378, %v679
  %v737 = vmul.f32 %v383, %v679
  %v738 = vmul.f32 %v388, %v679
  %v739 = vmul.f32 %v393, %v679
  %v740 = vadd.f32 %v736, %v689
  %v741 = vadd.f32 %v737, %v689
  %v742 = vadd.f32 %v738, %v689
  %v743 = vadd.f32 %v739, %v689
  %vm744 = vcmp.ge.f32.partialorder %v740, 0.0
  %vm745 = vcmp.ge.f32.partialorder %v741, 0.0
  %vm746 = vcmp.ge.f32.partialorder %v742, 0.0
  %vm747 = vcmp.ge.f32.partialorder %v743, 0.0
  %v748 = vmul.f32 %v740, 0.0
  %v749 = vmul.f32 %v741, 0.0
  %v750 = vmul.f32 %v742, 0.0
  %v751 = vmul.f32 %v743, 0.0
  %v752 = vsel %vm744, %v740, %v748
  %v753 = vsel %vm745, %v741, %v749
  %v754 = vsel %vm746, %v742, %v750
  %v755 = vsel %vm747, %v743, %v751
  %s756 = scalar_lea.vmem %s4, 64
  %757 = vst.msk [vmem:[%s756] sm:$0xff] %vm523, %v752
  %758 = vst.msk [vmem:[%s756 + $0x8] sm:$0xff] %vm523, %v753
  %759 = vst.msk [vmem:[%s756 + $0x10] sm:$0xff] %vm523, %v754
  %760 = vst.msk [vmem:[%s756 + $0x18] sm:$0xff] %vm523, %v755
  %v761 = vmul.f32 %v505, %v679
  %v762 = vmul.f32 %v510, %v679
  %v763 = vmul.f32 %v515, %v679
  %v764 = vmul.f32 %v520, %v679
  %v765 = vadd.f32 %v761, %v689
  %v766 = vadd.f32 %v762, %v689
  %v767 = vadd.f32 %v763, %v689
  %v768 = vadd.f32 %v764, %v689
  %vm769 = vcmp.ge.f32.partialorder %v765, 0.0
  %vm770 = vcmp.ge.f32.partialorder %v766, 0.0
  %vm771 = vcmp.ge.f32.partialorder %v767, 0.0
  %vm772 = vcmp.ge.f32.partialorder %v768, 0.0
  %v773 = vmul.f32 %v765, 0.0
  %v774 = vmul.f32 %v766, 0.0
  %v775 = vmul.f32 %v767, 0.0
  %v776 = vmul.f32 %v768, 0.0
  %v777 = vsel %vm769, %v765, %v773
  %v778 = vsel %vm770, %v766, %v774
  %v779 = vsel %vm771, %v767, %v775
  %v780 = vsel %vm772, %v768, %v776
  %s781 = scalar_lea.vmem %s4, 96
  %782 = vst.msk [vmem:[%s781] sm:$0xff] %vm523, %v777
  %783 = vst.msk [vmem:[%s781 + $0x8] sm:$0xff] %vm523, %v778
  %784 = vst.msk [vmem:[%s781 + $0x10] sm:$0xff] %vm523, %v779
  %785 = vst.msk [vmem:[%s781 + $0x18] sm:$0xff] %vm523, %v780
  // Predicated region
  $region18: #{unet_forward.14} parent=0 // pred_check
    _
  $region19: #{unet_forward.14} parent=0 // pred_check_branch
    %787 = sbr.rel (0) target = $region21
  $region20: #{unet_forward.14} parent=0 // pred_region
    _
  $region21: #{unet_forward.14} parent=0 // pred_fallthru
    _
  // Predicated region
  $region22: #{unet_forward.14} parent=0 // pred_check
    _
  $region23: #{unet_forward.14} parent=0 // pred_check_branch
    %789 = sbr.rel (0) target = $region25
  $region24: #{unet_forward.14} parent=0 // pred_region
    _
  $region25: #{unet_forward.14} parent=0 // pred_fallthru
    _

// kernel: unet_forward.16
$region0: #{unet_forward.16}
  #allocation0 [shape = 'u32[]', space=smem, size = 0x4, offset = 0x4, fixed_abs, tag = 'smem constant byte address 0x4 - core index']
  #allocation1 [shape = 'u32[144,128]{1,0:T(1,128)}', space=vmem, size = 0x12000, scoped, tag = 'internal scratch']
  %s0 = inlined_call_operand.vmem [shape: f32[512,16], index: 0, kind: input, shape index: {}]
  %s1 = inlined_call_operand.vmem [shape: f32[16,3], index: 1, kind: input, shape index: {}]
  %s2 = inlined_call_operand.vmem [shape: f32[512,3], index: 2, kind: output, shape index: {}]
  %s3 = sld [smem:[#allocation0]]
  $region18: #{unet_forward.16} parent=0
    _
  %s5 = ssub.s32 1, %s3
  %s6 = scalar_select 0, %s5, %s3
  // Predicated region
  $region2: #{unet_forward.16} parent=0 // pred_check
    _
  $region3: #{unet_forward.16} parent=0 // pred_check_branch
    %8 = sbr.rel (0) target = $region5
  $region4: #{unet_forward.16} parent=0 // pred_region
    _
  $region5: #{unet_forward.16} parent=0 // pred_fallthru
    _
  // Predicated region
  $region6: #{unet_forward.16} parent=0 // pred_check
    _
  $region7: #{unet_forward.16} parent=0 // pred_check_branch
    %10 = sbr.rel (0) target = $region9
  $region8: #{unet_forward.16} parent=0 // pred_region
    _
  $region9: #{unet_forward.16} parent=0 // pred_fallthru
    _
  %v11 = vld [vmem:[%s0] sm:$0xff]
  %v12 = vld [vmem:[%s0 + $0x8] sm:$0xff]
  %v13 = vld [vmem:[%s0 + $0x10] sm:$0xff]
  %v14 = vld [vmem:[%s0 + $0x18] sm:$0xff]
  %v15 = vld [vmem:[%s0 + $0x20] sm:$0xff]
  %v16 = vld [vmem:[%s0 + $0x28] sm:$0xff]
  %v17 = vld [vmem:[%s0 + $0x30] sm:$0xff]
  %v18 = vld [vmem:[%s0 + $0x38] sm:$0xff]
  %v19 = vld [vmem:[%s0 + $0x40] sm:$0xff]
  %v20 = vld [vmem:[%s0 + $0x48] sm:$0xff]
  %v21 = vld [vmem:[%s0 + $0x50] sm:$0xff]
  %v22 = vld [vmem:[%s0 + $0x58] sm:$0xff]
  %v23 = vld [vmem:[%s0 + $0x60] sm:$0xff]
  %v24 = vld [vmem:[%s0 + $0x68] sm:$0xff]
  %v25 = vld [vmem:[%s0 + $0x70] sm:$0xff]
  %v26 = vld [vmem:[%s0 + $0x78] sm:$0xff]
  %v27 = vld [vmem:[%s0 + $0x80] sm:$0xff]
  %v28 = vld [vmem:[%s0 + $0x88] sm:$0xff]
  %v29 = vld [vmem:[%s0 + $0x90] sm:$0xff]
  %v30 = vld [vmem:[%s0 + $0x98] sm:$0xff]
  %v31 = vld [vmem:[%s0 + $0xa0] sm:$0xff]
  %v32 = vld [vmem:[%s0 + $0xa8] sm:$0xff]
  %v33 = vld [vmem:[%s0 + $0xb0] sm:$0xff]
  %v34 = vld [vmem:[%s0 + $0xb8] sm:$0xff]
  %v35 = vld [vmem:[%s0 + $0xc0] sm:$0xff]
  %v36 = vld [vmem:[%s0 + $0xc8] sm:$0xff]
  %v37 = vld [vmem:[%s0 + $0xd0] sm:$0xff]
  %v38 = vld [vmem:[%s0 + $0xd8] sm:$0xff]
  %v39 = vld [vmem:[%s0 + $0xe0] sm:$0xff]
  %v40 = vld [vmem:[%s0 + $0xe8] sm:$0xff]
  %v41 = vld [vmem:[%s0 + $0xf0] sm:$0xff]
  %v42 = vld [vmem:[%s0 + $0xf8] sm:$0xff]
  %v43 = vld [vmem:[%s0 + $0x100] sm:$0xff]
  %v44 = vld [vmem:[%s0 + $0x108] sm:$0xff]
  %v45 = vld [vmem:[%s0 + $0x110] sm:$0xff]
  %v46 = vld [vmem:[%s0 + $0x118] sm:$0xff]
  %v47 = vld [vmem:[%s0 + $0x120] sm:$0xff]
  %v48 = vld [vmem:[%s0 + $0x128] sm:$0xff]
  %v49 = vld [vmem:[%s0 + $0x130] sm:$0xff]
  %v50 = vld [vmem:[%s0 + $0x138] sm:$0xff]
  %v51 = vld [vmem:[%s0 + $0x140] sm:$0xff]
  %v52 = vld [vmem:[%s0 + $0x148] sm:$0xff]
  %v53 = vld [vmem:[%s0 + $0x150] sm:$0xff]
  %v54 = vld [vmem:[%s0 + $0x158] sm:$0xff]
  %v55 = vld [vmem:[%s0 + $0x160] sm:$0xff]
  %v56 = vld [vmem:[%s0 + $0x168] sm:$0xff]
  %v57 = vld [vmem:[%s0 + $0x170] sm:$0xff]
  %v58 = vld [vmem:[%s0 + $0x178] sm:$0xff]
  %v59 = vld [vmem:[%s0 + $0x180] sm:$0xff]
  %v60 = vld [vmem:[%s0 + $0x188] sm:$0xff]
  %v61 = vld [vmem:[%s0 + $0x190] sm:$0xff]
  %v62 = vld [vmem:[%s0 + $0x198] sm:$0xff]
  %v63 = vld [vmem:[%s0 + $0x1a0] sm:$0xff]
  %v64 = vld [vmem:[%s0 + $0x1a8] sm:$0xff]
  %v65 = vld [vmem:[%s0 + $0x1b0] sm:$0xff]
  %v66 = vld [vmem:[%s0 + $0x1b8] sm:$0xff]
  %v67 = vld [vmem:[%s0 + $0x1c0] sm:$0xff]
  %v68 = vld [vmem:[%s0 + $0x1c8] sm:$0xff]
  %v69 = vld [vmem:[%s0 + $0x1d0] sm:$0xff]
  %v70 = vld [vmem:[%s0 + $0x1d8] sm:$0xff]
  %v71 = vld [vmem:[%s0 + $0x1e0] sm:$0xff]
  %v72 = vld [vmem:[%s0 + $0x1e8] sm:$0xff]
  %v73 = vld [vmem:[%s0 + $0x1f0] sm:$0xff]
  %v74 = vld [vmem:[%s0 + $0x1f8] sm:$0xff]
  %v75 = vld [vmem:[%s1] sm:$0xff]
  %v76 = vld [vmem:[%s1 + $0x8] sm:$0xff]
  %vm77 = vcmask 130048
  %v79 = vsel %vm77, %v11, 0
  %v82 = vsel %vm77, %v12, 0
  %v85 = vsel %vm77, %v13, 0
  %v88 = vsel %vm77, %v14, 0
  %v91 = vsel %vm77, %v15, 0
  %v94 = vsel %vm77, %v16, 0
  %v97 = vsel %vm77, %v17, 0
  %v100 = vsel %vm77, %v18, 0
  %v103 = vsel %vm77, %v19, 0
  %v106 = vsel %vm77, %v20, 0
  %v109 = vsel %vm77, %v21, 0
  %v112 = vsel %vm77, %v22, 0
  %v115 = vsel %vm77, %v23, 0
  %v118 = vsel %vm77, %v24, 0
  %v121 = vsel %vm77, %v25, 0
  %v124 = vsel %vm77, %v26, 0
  %v127 = vsel %vm77, %v27, 0
  %v130 = vsel %vm77, %v28, 0
  %v133 = vsel %vm77, %v29, 0
  %v136 = vsel %vm77, %v30, 0
  %v139 = vsel %vm77, %v31, 0
  %v142 = vsel %vm77, %v32, 0
  %v145 = vsel %vm77, %v33, 0
  %v148 = vsel %vm77, %v34, 0
  %v151 = vsel %vm77, %v35, 0
  %v154 = vsel %vm77, %v36, 0
  %v157 = vsel %vm77, %v37, 0
  %v160 = vsel %vm77, %v38, 0
  %v163 = vsel %vm77, %v39, 0
  %v166 = vsel %vm77, %v40, 0
  %v169 = vsel %vm77, %v41, 0
  %v172 = vsel %vm77, %v42, 0
  %v175 = vsel %vm77, %v43, 0
  %v178 = vsel %vm77, %v44, 0
  %v181 = vsel %vm77, %v45, 0
  %v184 = vsel %vm77, %v46, 0
  %v187 = vsel %vm77, %v47, 0
  %v190 = vsel %vm77, %v48, 0
  %v193 = vsel %vm77, %v49, 0
  %v196 = vsel %vm77, %v50, 0
  %v199 = vsel %vm77, %v51, 0
  %v202 = vsel %vm77, %v52, 0
  %v205 = vsel %vm77, %v53, 0
  %v208 = vsel %vm77, %v54, 0
  %v211 = vsel %vm77, %v55, 0
  %v214 = vsel %vm77, %v56, 0
  %v217 = vsel %vm77, %v57, 0
  %v220 = vsel %vm77, %v58, 0
  %v223 = vsel %vm77, %v59, 0
  %v226 = vsel %vm77, %v60, 0
  %v229 = vsel %vm77, %v61, 0
  %v232 = vsel %vm77, %v62, 0
  %v235 = vsel %vm77, %v63, 0
  %v238 = vsel %vm77, %v64, 0
  %v241 = vsel %vm77, %v65, 0
  %v244 = vsel %vm77, %v66, 0
  %v247 = vsel %vm77, %v67, 0
  %v250 = vsel %vm77, %v68, 0
  %v253 = vsel %vm77, %v69, 0
  %v256 = vsel %vm77, %v70, 0
  %v259 = vsel %vm77, %v71, 0
  %v262 = vsel %vm77, %v72, 0
  %v265 = vsel %vm77, %v73, 0
  %v268 = vsel %vm77, %v74, 0
  %270 = vmatprep.subr.mxu0 0.0
  %271 = vmatpush1.msra.mxu0 %v75
  %272 = vmatprep.subr.mxu0 0.0
  %273 = vmatpush1.msra.mxu0 %v76
  %274 = vmatprep.subr.mxu0 0.0
  %275 = vmatpush1.msra.mxu0 0.0
  %276 = vmatprep.subr.mxu0 0.0
  %277 = vmatpush1.msra.mxu0 0.0
  %278 = vmatprep.subr.mxu0 0.0
  %279 = vmatpush1.msra.mxu0 0.0
  %280 = vmatprep.subr.mxu0 0.0
  %281 = vmatpush1.msra.mxu0 0.0
  %282 = vmatprep.subr.mxu0 0.0
  %283 = vmatpush1.msra.mxu0 0.0
  %284 = vmatprep.subr.mxu0 0.0
  %285 = vmatpush1.msra.mxu0 0.0
  %286 = vmatprep.subr.mxu0 0.0
  %287 = vmatpush1.msra.mxu0 0.0
  %288 = vmatprep.subr.mxu0 0.0
  %289 = vmatpush1.msra.mxu0 0.0
  %290 = vmatprep.subr.mxu0 0.0
  %291 = vmatpush1.msra.mxu0 0.0
  %292 = vmatprep.subr.mxu0 0.0
  %293 = vmatpush1.msra.mxu0 0.0
  %294 = vmatprep.subr.mxu0 0.0
  %295 = vmatpush1.msra.mxu0 0.0
  %296 = vmatprep.subr.mxu0 0.0
  %297 = vmatpush1.msra.mxu0 0.0
  %298 = vmatprep.subr.mxu0 0.0
  %299 = vmatpush1.msra.mxu0 0.0
  %300 = vmatprep.subr.mxu0 0.0
  %301 = vmatpush1.msra.mxu0 0.0
  %302 = vmatprep.subr.mxu0 0.0
  %303 = vmatpush1.msra.mxu0 0.0
  %304 = vmatprep.subr.mxu0 0.0
  %305 = vmatpush1.msra.mxu0 0.0
  %306 = vmatprep.subr.mxu0 0.0
  %307 = vmatpush1.msra.mxu0 0.0
  %308 = vmatprep.subr.mxu0 0.0
  %309 = vmatpush1.msra.mxu0 0.0
  %310 = vmatprep.subr.mxu0 0.0
  %311 = vmatpush1.msra.mxu0 0.0
  %312 = vmatprep.subr.mxu0 0.0
  %313 = vmatpush1.msra.mxu0 0.0
  %314 = vmatprep.subr.mxu0 0.0
  %315 = vmatpush1.msra.mxu0 0.0
  %316 = vmatprep.subr.mxu0 0.0
  %317 = vmatpush1.msra.mxu0 0.0
  %318 = vmatprep.subr.mxu0 0.0
  %319 = vmatpush1.msra.mxu0 0.0
  %320 = vmatprep.subr.mxu0 0.0
  %321 = vmatpush1.msra.mxu0 0.0
  %322 = vmatprep.subr.mxu0 0.0
  %323 = vmatpush1.msra.mxu0 0.0
  %324 = vmatprep.subr.mxu0 0.0
  %325 = vmatpush1.msra.mxu0 0.0
  %326 = vmatprep.subr.mxu0 0.0
  %327 = vmatpush1.msra.mxu0 0.0
  %328 = vmatprep.subr.mxu0 0.0
  %329 = vmatpush1.msra.mxu0 0.0
  %330 = vmatprep.subr.mxu0 0.0
  %331 = vmatpush1.msra.mxu0 0.0
  %332 = vmatprep.subr.mxu0 0.0
  %333 = vmatpush1.msra.mxu0 0.0
  %334 = vmatprep.mubr.f32.mxu0 0.0
  %335 = vmatmul.mubr.f32.gmra.mrb[0].mxu0 %v79
  %v336 = vpop.f32.mrb[0].mxu0
  %v337 = vadd.f32 0.0, %v336
  %v338 = vpop.f32.mrb[0].mxu0
  %339 = vmatprep.mubr.f32.mxu0 0.0
  %340 = vmatmul.mubr.f32.gmra.mrb[0].mxu0 %v82
  %v341 = vpop.f32.mrb[0].mxu0
  %v342 = vadd.f32 0.0, %v341
  %v343 = vpop.f32.mrb[0].mxu0
  %344 = vmatprep.mubr.f32.mxu0 0.0
  %345 = vmatmul.mubr.f32.gmra.mrb[0].mxu0 %v85
  %v346 = vpop.f32.mrb[0].mxu0
  %v347 = vadd.f32 0.0, %v346
  %v348 = vpop.f32.mrb[0].mxu0
  %349 = vmatprep.mubr.f32.mxu0 0.0
  %350 = vmatmul.mubr.f32.gmra.mrb[0].mxu0 %v88
  %v351 = vpop.f32.mrb[0].mxu0
  %v352 = vadd.f32 0.0, %v351
  %v353 = vpop.f32.mrb[0].mxu0
  %354 = vmatprep.mubr.f32.mxu0 0.0
  %355 = vmatmul.mubr.f32.gmra.mrb[0].mxu0 %v91
  %v356 = vpop.f32.mrb[0].mxu0
  %v357 = vadd.f32 0.0, %v356
  %v358 = vpop.f32.mrb[0].mxu0
  %359 = vmatprep.mubr.f32.mxu0 0.0
  %360 = vmatmul.mubr.f32.gmra.mrb[0].mxu0 %v94
  %v361 = vpop.f32.mrb[0].mxu0
  %v362 = vadd.f32 0.0, %v361
  %v363 = vpop.f32.mrb[0].mxu0
  %364 = vmatprep.mubr.f32.mxu0 0.0
  %365 = vmatmul.mubr.f32.gmra.mrb[0].mxu0 %v97
  %v366 = vpop.f32.mrb[0].mxu0
  %v367 = vadd.f32 0.0, %v366
  %v368 = vpop.f32.mrb[0].mxu0
  %369 = vmatprep.mubr.f32.mxu0 0.0
  %370 = vmatmul.mubr.f32.gmra.mrb[0].mxu0 %v100
  %v371 = vpop.f32.mrb[0].mxu0
  %v372 = vadd.f32 0.0, %v371
  %v373 = vpop.f32.mrb[0].mxu0
  %374 = vmatprep.mubr.f32.mxu0 0.0
  %375 = vmatmul.mubr.f32.gmra.mrb[0].mxu0 %v103
  %v376 = vpop.f32.mrb[0].mxu0
  %v377 = vadd.f32 0.0, %v376
  %v378 = vpop.f32.mrb[0].mxu0
  %379 = vmatprep.mubr.f32.mxu0 0.0
  %380 = vmatmul.mubr.f32.gmra.mrb[0].mxu0 %v106
  %v381 = vpop.f32.mrb[0].mxu0
  %v382 = vadd.f32 0.0, %v381
  %v383 = vpop.f32.mrb[0].mxu0
  %384 = vmatprep.mubr.f32.mxu0 0.0
  %385 = vmatmul.mubr.f32.gmra.mrb[0].mxu0 %v109
  %v386 = vpop.f32.mrb[0].mxu0
  %v387 = vadd.f32 0.0, %v386
  %v388 = vpop.f32.mrb[0].mxu0
  %389 = vmatprep.mubr.f32.mxu0 0.0
  %390 = vmatmul.mubr.f32.gmra.mrb[0].mxu0 %v112
  %v391 = vpop.f32.mrb[0].mxu0
  %v392 = vadd.f32 0.0, %v391
  %v393 = vpop.f32.mrb[0].mxu0
  %394 = vmatprep.mubr.f32.mxu0 0.0
  %395 = vmatmul.mubr.f32.gmra.mrb[0].mxu0 %v115
  %v396 = vpop.f32.mrb[0].mxu0
  %v397 = vadd.f32 0.0, %v396
  %v398 = vpop.f32.mrb[0].mxu0
  %399 = vmatprep.mubr.f32.mxu0 0.0
  %400 = vmatmul.mubr.f32.gmra.mrb[0].mxu0 %v118
  %v401 = vpop.f32.mrb[0].mxu0
  %v402 = vadd.f32 0.0, %v401
  %v403 = vpop.f32.mrb[0].mxu0
  %404 = vmatprep.mubr.f32.mxu0 0.0
  %405 = vmatmul.mubr.f32.gmra.mrb[0].mxu0 %v121
  %v406 = vpop.f32.mrb[0].mxu0
  %v407 = vadd.f32 0.0, %v406
  %v408 = vpop.f32.mrb[0].mxu0
  %409 = vmatprep.mubr.f32.mxu0 0.0
  %410 = vmatmul.mubr.f32.gmra.mrb[0].mxu0 %v124
  %v411 = vpop.f32.mrb[0].mxu0
  %v412 = vadd.f32 0.0, %v411
  %v413 = vpop.f32.mrb[0].mxu0
  %414 = vmatprep.mubr.f32.mxu0 0.0
  %415 = vmatmul.mubr.f32.gmra.mrb[0].mxu0 %v127
  %v416 = vpop.f32.mrb[0].mxu0
  %v417 = vadd.f32 0.0, %v416
  %v418 = vpop.f32.mrb[0].mxu0
  %419 = vmatprep.mubr.f32.mxu0 0.0
  %420 = vmatmul.mubr.f32.gmra.mrb[0].mxu0 %v130
  %v421 = vpop.f32.mrb[0].mxu0
  %v422 = vadd.f32 0.0, %v421
  %v423 = vpop.f32.mrb[0].mxu0
  %424 = vmatprep.mubr.f32.mxu0 0.0
  %425 = vmatmul.mubr.f32.gmra.mrb[0].mxu0 %v133
  %v426 = vpop.f32.mrb[0].mxu0
  %v427 = vadd.f32 0.0, %v426
  %v428 = vpop.f32.mrb[0].mxu0
  %429 = vmatprep.mubr.f32.mxu0 0.0
  %430 = vmatmul.mubr.f32.gmra.mrb[0].mxu0 %v136
  %v431 = vpop.f32.mrb[0].mxu0
  %v432 = vadd.f32 0.0, %v431
  %v433 = vpop.f32.mrb[0].mxu0
  %434 = vmatprep.mubr.f32.mxu0 0.0
  %435 = vmatmul.mubr.f32.gmra.mrb[0].mxu0 %v139
  %v436 = vpop.f32.mrb[0].mxu0
  %v437 = vadd.f32 0.0, %v436
  %v438 = vpop.f32.mrb[0].mxu0
  %439 = vmatprep.mubr.f32.mxu0 0.0
  %440 = vmatmul.mubr.f32.gmra.mrb[0].mxu0 %v142
  %v441 = vpop.f32.mrb[0].mxu0
  %v442 = vadd.f32 0.0, %v441
  %v443 = vpop.f32.mrb[0].mxu0
  %444 = vmatprep.mubr.f32.mxu0 0.0
  %445 = vmatmul.mubr.f32.gmra.mrb[0].mxu0 %v145
  %v446 = vpop.f32.mrb[0].mxu0
  %v447 = vadd.f32 0.0, %v446
  %v448 = vpop.f32.mrb[0].mxu0
  %449 = vmatprep.mubr.f32.mxu0 0.0
  %450 = vmatmul.mubr.f32.gmra.mrb[0].mxu0 %v148
  %v451 = vpop.f32.mrb[0].mxu0
  %v452 = vadd.f32 0.0, %v451
  %v453 = vpop.f32.mrb[0].mxu0
  %454 = vmatprep.mubr.f32.mxu0 0.0
  %455 = vmatmul.mubr.f32.gmra.mrb[0].mxu0 %v151
  %v456 = vpop.f32.mrb[0].mxu0
  %v457 = vadd.f32 0.0, %v456
  %v458 = vpop.f32.mrb[0].mxu0
  %459 = vmatprep.mubr.f32.mxu0 0.0
  %460 = vmatmul.mubr.f32.gmra.mrb[0].mxu0 %v154
  %v461 = vpop.f32.mrb[0].mxu0
  %v462 = vadd.f32 0.0, %v461
  %v463 = vpop.f32.mrb[0].mxu0
  %464 = vmatprep.mubr.f32.mxu0 0.0
  %465 = vmatmul.mubr.f32.gmra.mrb[0].mxu0 %v157
  %v466 = vpop.f32.mrb[0].mxu0
  %v467 = vadd.f32 0.0, %v466
  %v468 = vpop.f32.mrb[0].mxu0
  %469 = vmatprep.mubr.f32.mxu0 0.0
  %470 = vmatmul.mubr.f32.gmra.mrb[0].mxu0 %v160
  %v471 = vpop.f32.mrb[0].mxu0
  %v472 = vadd.f32 0.0, %v471
  %v473 = vpop.f32.mrb[0].mxu0
  %474 = vmatprep.mubr.f32.mxu0 0.0
  %475 = vmatmul.mubr.f32.gmra.mrb[0].mxu0 %v163
  %v476 = vpop.f32.mrb[0].mxu0
  %v477 = vadd.f32 0.0, %v476
  %v478 = vpop.f32.mrb[0].mxu0
  %479 = vmatprep.mubr.f32.mxu0 0.0
  %480 = vmatmul.mubr.f32.gmra.mrb[0].mxu0 %v166
  %v481 = vpop.f32.mrb[0].mxu0
  %v482 = vadd.f32 0.0, %v481
  %v483 = vpop.f32.mrb[0].mxu0
  %484 = vmatprep.mubr.f32.mxu0 0.0
  %485 = vmatmul.mubr.f32.gmra.mrb[0].mxu0 %v169
  %v486 = vpop.f32.mrb[0].mxu0
  %v487 = vadd.f32 0.0, %v486
  %v488 = vpop.f32.mrb[0].mxu0
  %489 = vmatprep.mubr.f32.mxu0 0.0
  %490 = vmatmul.mubr.f32.gmra.mrb[0].mxu0 %v172
  %v491 = vpop.f32.mrb[0].mxu0
  %v492 = vadd.f32 0.0, %v491
  %v493 = vpop.f32.mrb[0].mxu0
  %494 = vmatprep.mubr.f32.mxu0 0.0
  %495 = vmatmul.mubr.f32.gmra.mrb[0].mxu0 %v175
  %v496 = vpop.f32.mrb[0].mxu0
  %v497 = vadd.f32 0.0, %v496
  %v498 = vpop.f32.mrb[0].mxu0
  %499 = vmatprep.mubr.f32.mxu0 0.0
  %500 = vmatmul.mubr.f32.gmra.mrb[0].mxu0 %v178
  %v501 = vpop.f32.mrb[0].mxu0
  %v502 = vadd.f32 0.0, %v501
  %v503 = vpop.f32.mrb[0].mxu0
  %504 = vmatprep.mubr.f32.mxu0 0.0
  %505 = vmatmul.mubr.f32.gmra.mrb[0].mxu0 %v181
  %v506 = vpop.f32.mrb[0].mxu0
  %v507 = vadd.f32 0.0, %v506
  %v508 = vpop.f32.mrb[0].mxu0
  %509 = vmatprep.mubr.f32.mxu0 0.0
  %510 = vmatmul.mubr.f32.gmra.mrb[0].mxu0 %v184
  %v511 = vpop.f32.mrb[0].mxu0
  %v512 = vadd.f32 0.0, %v511
  %v513 = vpop.f32.mrb[0].mxu0
  %514 = vmatprep.mubr.f32.mxu0 0.0
  %515 = vmatmul.mubr.f32.gmra.mrb[0].mxu0 %v187
  %v516 = vpop.f32.mrb[0].mxu0
  %v517 = vadd.f32 0.0, %v516
  %v518 = vpop.f32.mrb[0].mxu0
  %519 = vmatprep.mubr.f32.mxu0 0.0
  %520 = vmatmul.mubr.f32.gmra.mrb[0].mxu0 %v190
  %v521 = vpop.f32.mrb[0].mxu0
  %v522 = vadd.f32 0.0, %v521
  %v523 = vpop.f32.mrb[0].mxu0
  %524 = vmatprep.mubr.f32.mxu0 0.0
  %525 = vmatmul.mubr.f32.gmra.mrb[0].mxu0 %v193
  %v526 = vpop.f32.mrb[0].mxu0
  %v527 = vadd.f32 0.0, %v526
  %v528 = vpop.f32.mrb[0].mxu0
  %529 = vmatprep.mubr.f32.mxu0 0.0
  %530 = vmatmul.mubr.f32.gmra.mrb[0].mxu0 %v196
  %v531 = vpop.f32.mrb[0].mxu0
  %v532 = vadd.f32 0.0, %v531
  %v533 = vpop.f32.mrb[0].mxu0
  %534 = vmatprep.mubr.f32.mxu0 0.0
  %535 = vmatmul.mubr.f32.gmra.mrb[0].mxu0 %v199
  %v536 = vpop.f32.mrb[0].mxu0
  %v537 = vadd.f32 0.0, %v536
  %v538 = vpop.f32.mrb[0].mxu0
  %539 = vmatprep.mubr.f32.mxu0 0.0
  %540 = vmatmul.mubr.f32.gmra.mrb[0].mxu0 %v202
  %v541 = vpop.f32.mrb[0].mxu0
  %v542 = vadd.f32 0.0, %v541
  %v543 = vpop.f32.mrb[0].mxu0
  %544 = vmatprep.mubr.f32.mxu0 0.0
  %545 = vmatmul.mubr.f32.gmra.mrb[0].mxu0 %v205
  %v546 = vpop.f32.mrb[0].mxu0
  %v547 = vadd.f32 0.0, %v546
  %v548 = vpop.f32.mrb[0].mxu0
  %549 = vmatprep.mubr.f32.mxu0 0.0
  %550 = vmatmul.mubr.f32.gmra.mrb[0].mxu0 %v208
  %v551 = vpop.f32.mrb[0].mxu0
  %v552 = vadd.f32 0.0, %v551
  %v553 = vpop.f32.mrb[0].mxu0
  %554 = vmatprep.mubr.f32.mxu0 0.0
  %555 = vmatmul.mubr.f32.gmra.mrb[0].mxu0 %v211
  %v556 = vpop.f32.mrb[0].mxu0
  %v557 = vadd.f32 0.0, %v556
  %v558 = vpop.f32.mrb[0].mxu0
  %559 = vmatprep.mubr.f32.mxu0 0.0
  %560 = vmatmul.mubr.f32.gmra.mrb[0].mxu0 %v214
  %v561 = vpop.f32.mrb[0].mxu0
  %v562 = vadd.f32 0.0, %v561
  %v563 = vpop.f32.mrb[0].mxu0
  %564 = vmatprep.mubr.f32.mxu0 0.0
  %565 = vmatmul.mubr.f32.gmra.mrb[0].mxu0 %v217
  %v566 = vpop.f32.mrb[0].mxu0
  %v567 = vadd.f32 0.0, %v566
  %v568 = vpop.f32.mrb[0].mxu0
  %569 = vmatprep.mubr.f32.mxu0 0.0
  %570 = vmatmul.mubr.f32.gmra.mrb[0].mxu0 %v220
  %v571 = vpop.f32.mrb[0].mxu0
  %v572 = vadd.f32 0.0, %v571
  %v573 = vpop.f32.mrb[0].mxu0
  %574 = vmatprep.mubr.f32.mxu0 0.0
  %575 = vmatmul.mubr.f32.gmra.mrb[0].mxu0 %v223
  %v576 = vpop.f32.mrb[0].mxu0
  %v577 = vadd.f32 0.0, %v576
  %v578 = vpop.f32.mrb[0].mxu0
  %579 = vmatprep.mubr.f32.mxu0 0.0
  %580 = vmatmul.mubr.f32.gmra.mrb[0].mxu0 %v226
  %v581 = vpop.f32.mrb[0].mxu0
  %v582 = vadd.f32 0.0, %v581
  %v583 = vpop.f32.mrb[0].mxu0
  %584 = vmatprep.mubr.f32.mxu0 0.0
  %585 = vmatmul.mubr.f32.gmra.mrb[0].mxu0 %v229
  %v586 = vpop.f32.mrb[0].mxu0
  %v587 = vadd.f32 0.0, %v586
  %v588 = vpop.f32.mrb[0].mxu0
  %589 = vmatprep.mubr.f32.mxu0 0.0
  %590 = vmatmul.mubr.f32.gmra.mrb[0].mxu0 %v232
  %v591 = vpop.f32.mrb[0].mxu0
  %v592 = vadd.f32 0.0, %v591
  %v593 = vpop.f32.mrb[0].mxu0
  %594 = vmatprep.mubr.f32.mxu0 0.0
  %595 = vmatmul.mubr.f32.gmra.mrb[0].mxu0 %v235
  %v596 = vpop.f32.mrb[0].mxu0
  %v597 = vadd.f32 0.0, %v596
  %v598 = vpop.f32.mrb[0].mxu0
  %599 = vmatprep.mubr.f32.mxu0 0.0
  %600 = vmatmul.mubr.f32.gmra.mrb[0].mxu0 %v238
  %v601 = vpop.f32.mrb[0].mxu0
  %v602 = vadd.f32 0.0, %v601
  %v603 = vpop.f32.mrb[0].mxu0
  %604 = vmatprep.mubr.f32.mxu0 0.0
  %605 = vmatmul.mubr.f32.gmra.mrb[0].mxu0 %v241
  %v606 = vpop.f32.mrb[0].mxu0
  %v607 = vadd.f32 0.0, %v606
  %v608 = vpop.f32.mrb[0].mxu0
  %609 = vmatprep.mubr.f32.mxu0 0.0
  %610 = vmatmul.mubr.f32.gmra.mrb[0].mxu0 %v244
  %v611 = vpop.f32.mrb[0].mxu0
  %v612 = vadd.f32 0.0, %v611
  %v613 = vpop.f32.mrb[0].mxu0
  %614 = vmatprep.mubr.f32.mxu0 0.0
  %615 = vmatmul.mubr.f32.gmra.mrb[0].mxu0 %v247
  %v616 = vpop.f32.mrb[0].mxu0
  %v617 = vadd.f32 0.0, %v616
  %v618 = vpop.f32.mrb[0].mxu0
  %619 = vmatprep.mubr.f32.mxu0 0.0
  %620 = vmatmul.mubr.f32.gmra.mrb[0].mxu0 %v250
  %v621 = vpop.f32.mrb[0].mxu0
  %v622 = vadd.f32 0.0, %v621
  %v623 = vpop.f32.mrb[0].mxu0
  %624 = vmatprep.mubr.f32.mxu0 0.0
  %625 = vmatmul.mubr.f32.gmra.mrb[0].mxu0 %v253
  %v626 = vpop.f32.mrb[0].mxu0
  %v627 = vadd.f32 0.0, %v626
  %v628 = vpop.f32.mrb[0].mxu0
  %629 = vmatprep.mubr.f32.mxu0 0.0
  %630 = vmatmul.mubr.f32.gmra.mrb[0].mxu0 %v256
  %v631 = vpop.f32.mrb[0].mxu0
  %v632 = vadd.f32 0.0, %v631
  %v633 = vpop.f32.mrb[0].mxu0
  %634 = vmatprep.mubr.f32.mxu0 0.0
  %635 = vmatmul.mubr.f32.gmra.mrb[0].mxu0 %v259
  %v636 = vpop.f32.mrb[0].mxu0
  %v637 = vadd.f32 0.0, %v636
  %v638 = vpop.f32.mrb[0].mxu0
  %639 = vmatprep.mubr.f32.mxu0 0.0
  %640 = vmatmul.mubr.f32.gmra.mrb[0].mxu0 %v262
  %v641 = vpop.f32.mrb[0].mxu0
  %v642 = vadd.f32 0.0, %v641
  %v643 = vpop.f32.mrb[0].mxu0
  %644 = vmatprep.mubr.f32.mxu0 0.0
  %645 = vmatmul.mubr.f32.gmra.mrb[0].mxu0 %v265
  %v646 = vpop.f32.mrb[0].mxu0
  %v647 = vadd.f32 0.0, %v646
  %v648 = vpop.f32.mrb[0].mxu0
  %649 = vmatprep.mubr.f32.mxu0 0.0
  %650 = vmatmul.mubr.f32.gmra.mrb[0].mxu0 %v268
  %v651 = vpop.f32.mrb[0].mxu0
  %v652 = vadd.f32 0.0, %v651
  %v653 = vpop.f32.mrb[0].mxu0
  %654 = vdwg.mxu0
  %vm655 = vcmask 23552
  %656 = vst.msk [vmem:[%s2] sm:$0xff] %vm655, %v337
  %657 = vst.msk [vmem:[%s2 + $0x8] sm:$0xff] %vm655, %v342
  %658 = vst.msk [vmem:[%s2 + $0x10] sm:$0xff] %vm655, %v347
  %659 = vst.msk [vmem:[%s2 + $0x18] sm:$0xff] %vm655, %v352
  %660 = vst.msk [vmem:[%s2 + $0x20] sm:$0xff] %vm655, %v357
  %661 = vst.msk [vmem:[%s2 + $0x28] sm:$0xff] %vm655, %v362
  %662 = vst.msk [vmem:[%s2 + $0x30] sm:$0xff] %vm655, %v367
  %663 = vst.msk [vmem:[%s2 + $0x38] sm:$0xff] %vm655, %v372
  %664 = vst.msk [vmem:[%s2 + $0x40] sm:$0xff] %vm655, %v377
  %665 = vst.msk [vmem:[%s2 + $0x48] sm:$0xff] %vm655, %v382
  %666 = vst.msk [vmem:[%s2 + $0x50] sm:$0xff] %vm655, %v387
  %667 = vst.msk [vmem:[%s2 + $0x58] sm:$0xff] %vm655, %v392
  %668 = vst.msk [vmem:[%s2 + $0x60] sm:$0xff] %vm655, %v397
  %669 = vst.msk [vmem:[%s2 + $0x68] sm:$0xff] %vm655, %v402
  %670 = vst.msk [vmem:[%s2 + $0x70] sm:$0xff] %vm655, %v407
  %671 = vst.msk [vmem:[%s2 + $0x78] sm:$0xff] %vm655, %v412
  %672 = vst.msk [vmem:[%s2 + $0x80] sm:$0xff] %vm655, %v417
  %673 = vst.msk [vmem:[%s2 + $0x88] sm:$0xff] %vm655, %v422
  %674 = vst.msk [vmem:[%s2 + $0x90] sm:$0xff] %vm655, %v427
  %675 = vst.msk [vmem:[%s2 + $0x98] sm:$0xff] %vm655, %v432
  %676 = vst.msk [vmem:[%s2 + $0xa0] sm:$0xff] %vm655, %v437
  %677 = vst.msk [vmem:[%s2 + $0xa8] sm:$0xff] %vm655, %v442
  %678 = vst.msk [vmem:[%s2 + $0xb0] sm:$0xff] %vm655, %v447
  %679 = vst.msk [vmem:[%s2 + $0xb8] sm:$0xff] %vm655, %v452
  %680 = vst.msk [vmem:[%s2 + $0xc0] sm:$0xff] %vm655, %v457
  %681 = vst.msk [vmem:[%s2 + $0xc8] sm:$0xff] %vm655, %v462
  %682 = vst.msk [vmem:[%s2 + $0xd0] sm:$0xff] %vm655, %v467
  %683 = vst.msk [vmem:[%s2 + $0xd8] sm:$0xff] %vm655, %v472
  %684 = vst.msk [vmem:[%s2 + $0xe0] sm:$0xff] %vm655, %v477
  %685 = vst.msk [vmem:[%s2 + $0xe8] sm:$0xff] %vm655, %v482
  %686 = vst.msk [vmem:[%s2 + $0xf0] sm:$0xff] %vm655, %v487
  %687 = vst.msk [vmem:[%s2 + $0xf8] sm:$0xff] %vm655, %v492
  %688 = vst.msk [vmem:[%s2 + $0x100] sm:$0xff] %vm655, %v497
  %689 = vst.msk [vmem:[%s2 + $0x108] sm:$0xff] %vm655, %v502
  %690 = vst.msk [vmem:[%s2 + $0x110] sm:$0xff] %vm655, %v507
  %691 = vst.msk [vmem:[%s2 + $0x118] sm:$0xff] %vm655, %v512
  %692 = vst.msk [vmem:[%s2 + $0x120] sm:$0xff] %vm655, %v517
  %693 = vst.msk [vmem:[%s2 + $0x128] sm:$0xff] %vm655, %v522
  %694 = vst.msk [vmem:[%s2 + $0x130] sm:$0xff] %vm655, %v527
  %695 = vst.msk [vmem:[%s2 + $0x138] sm:$0xff] %vm655, %v532
  %696 = vst.msk [vmem:[%s2 + $0x140] sm:$0xff] %vm655, %v537
  %697 = vst.msk [vmem:[%s2 + $0x148] sm:$0xff] %vm655, %v542
  %698 = vst.msk [vmem:[%s2 + $0x150] sm:$0xff] %vm655, %v547
  %699 = vst.msk [vmem:[%s2 + $0x158] sm:$0xff] %vm655, %v552
  %700 = vst.msk [vmem:[%s2 + $0x160] sm:$0xff] %vm655, %v557
  %701 = vst.msk [vmem:[%s2 + $0x168] sm:$0xff] %vm655, %v562
  %702 = vst.msk [vmem:[%s2 + $0x170] sm:$0xff] %vm655, %v567
  %703 = vst.msk [vmem:[%s2 + $0x178] sm:$0xff] %vm655, %v572
  %704 = vst.msk [vmem:[%s2 + $0x180] sm:$0xff] %vm655, %v577
  %705 = vst.msk [vmem:[%s2 + $0x188] sm:$0xff] %vm655, %v582
  %706 = vst.msk [vmem:[%s2 + $0x190] sm:$0xff] %vm655, %v587
  %707 = vst.msk [vmem:[%s2 + $0x198] sm:$0xff] %vm655, %v592
  %708 = vst.msk [vmem:[%s2 + $0x1a0] sm:$0xff] %vm655, %v597
  %709 = vst.msk [vmem:[%s2 + $0x1a8] sm:$0xff] %vm655, %v602
  %710 = vst.msk [vmem:[%s2 + $0x1b0] sm:$0xff] %vm655, %v607
  %711 = vst.msk [vmem:[%s2 + $0x1b8] sm:$0xff] %vm655, %v612
  %712 = vst.msk [vmem:[%s2 + $0x1c0] sm:$0xff] %vm655, %v617
  %713 = vst.msk [vmem:[%s2 + $0x1c8] sm:$0xff] %vm655, %v622
  %714 = vst.msk [vmem:[%s2 + $0x1d0] sm:$0xff] %vm655, %v627
  %715 = vst.msk [vmem:[%s2 + $0x1d8] sm:$0xff] %vm655, %v632
  %716 = vst.msk [vmem:[%s2 + $0x1e0] sm:$0xff] %vm655, %v637
  %717 = vst.msk [vmem:[%s2 + $0x1e8] sm:$0xff] %vm655, %v642
  %718 = vst.msk [vmem:[%s2 + $0x1f0] sm:$0xff] %vm655, %v647
  %719 = vst.msk [vmem:[%s2 + $0x1f8] sm:$0xff] %vm655, %v652
  // Predicated region
  $region10: #{unet_forward.16} parent=0 // pred_check
    _
  $region11: #{unet_forward.16} parent=0 // pred_check_branch
    %721 = sbr.rel (0) target = $region13
  $region12: #{unet_forward.16} parent=0 // pred_region
    _
  $region13: #{unet_forward.16} parent=0 // pred_fallthru
    _
  // Predicated region
  $region14: #{unet_forward.16} parent=0 // pred_check
    _
  $region15: #{unet_forward.16} parent=0 // pred_check_branch
    %723 = sbr.rel (0) target = $region17
  $region16: #{unet_forward.16} parent=0 // pred_region
    _
  $region17: #{unet_forward.16} parent=0 // pred_fallthru
    _

// kernel: unet_forward.15
$region0: #{unet_forward.15}
  #allocation0 [shape = 'u32[]', space=smem, size = 0x4, offset = 0x4, fixed_abs, tag = 'smem constant byte address 0x4 - core index']
  #allocation1 [shape = 'u32[144,128]{1,0:T(1,128)}', space=vmem, size = 0x12000, scoped, tag = 'internal scratch']
  %s0 = inlined_call_operand.vmem [shape: f32[4,128,128], index: 0, kind: input, shape index: {}]
  %s1 = inlined_call_operand.vmem [shape: f32[4,128,8], index: 1, kind: input, shape index: {}]
  %s2 = inlined_call_operand.vmem [shape: f32[1,8], index: 2, kind: input, shape index: {}]
  %s3 = inlined_call_operand.vmem [shape: f32[1,8], index: 3, kind: input, shape index: {}]
  %s4 = inlined_call_operand.vmem [shape: f32[4,128,8], index: 4, kind: output, shape index: {}]
  %s5 = sld [smem:[#allocation0]]
  $region26: #{unet_forward.15} parent=0
    _
  %s7 = ssub.s32 1, %s5
  %s8 = scalar_select 0, %s7, %s5
  // Predicated region
  $region2: #{unet_forward.15} parent=0 // pred_check
    _
  $region3: #{unet_forward.15} parent=0 // pred_check_branch
    %10 = sbr.rel (0) target = $region5
  $region4: #{unet_forward.15} parent=0 // pred_region
    _
  $region5: #{unet_forward.15} parent=0 // pred_fallthru
    _
  // Predicated region
  $region6: #{unet_forward.15} parent=0 // pred_check
    _
  $region7: #{unet_forward.15} parent=0 // pred_check_branch
    %12 = sbr.rel (0) target = $region9
  $region8: #{unet_forward.15} parent=0 // pred_region
    _
  $region9: #{unet_forward.15} parent=0 // pred_fallthru
    _
  // Predicated region
  $region10: #{unet_forward.15} parent=0 // pred_check
    _
  $region11: #{unet_forward.15} parent=0 // pred_check_branch
    %14 = sbr.rel (0) target = $region13
  $region12: #{unet_forward.15} parent=0 // pred_region
    _
  $region13: #{unet_forward.15} parent=0 // pred_fallthru
    _
  // Predicated region
  $region14: #{unet_forward.15} parent=0 // pred_check
    _
  $region15: #{unet_forward.15} parent=0 // pred_check_branch
    %16 = sbr.rel (0) target = $region17
  $region16: #{unet_forward.15} parent=0 // pred_region
    _
  $region17: #{unet_forward.15} parent=0 // pred_fallthru
    _
  %v17 = vld [vmem:[%s0] sm:$0xff]
  %v18 = vld [vmem:[%s0 + $0x8] sm:$0xff]
  %v19 = vld [vmem:[%s0 + $0x10] sm:$0xff]
  %v20 = vld [vmem:[%s0 + $0x18] sm:$0xff]
  %v21 = vld [vmem:[%s0 + $0x20] sm:$0xff]
  %v22 = vld [vmem:[%s0 + $0x28] sm:$0xff]
  %v23 = vld [vmem:[%s0 + $0x30] sm:$0xff]
  %v24 = vld [vmem:[%s0 + $0x38] sm:$0xff]
  %v25 = vld [vmem:[%s0 + $0x40] sm:$0xff]
  %v26 = vld [vmem:[%s0 + $0x48] sm:$0xff]
  %v27 = vld [vmem:[%s0 + $0x50] sm:$0xff]
  %v28 = vld [vmem:[%s0 + $0x58] sm:$0xff]
  %v29 = vld [vmem:[%s0 + $0x60] sm:$0xff]
  %v30 = vld [vmem:[%s0 + $0x68] sm:$0xff]
  %v31 = vld [vmem:[%s0 + $0x70] sm:$0xff]
  %v32 = vld [vmem:[%s0 + $0x78] sm:$0xff]
  %v33 = vld [vmem:[%s1] sm:$0xff]
  %v34 = vld [vmem:[%s1 + $0x8] sm:$0xff]
  %v35 = vld [vmem:[%s1 + $0x10] sm:$0xff]
  %v36 = vld [vmem:[%s1 + $0x18] sm:$0xff]
  %v37 = vld [vmem:[%s1 + $0x20] sm:$0xff]
  %v38 = vld [vmem:[%s1 + $0x28] sm:$0xff]
  %v39 = vld [vmem:[%s1 + $0x30] sm:$0xff]
  %v40 = vld [vmem:[%s1 + $0x38] sm:$0xff]
  %v41 = vld [vmem:[%s1 + $0x40] sm:$0xff]
  %v42 = vld [vmem:[%s1 + $0x48] sm:$0xff]
  %v43 = vld [vmem:[%s1 + $0x50] sm:$0xff]
  %v44 = vld [vmem:[%s1 + $0x58] sm:$0xff]
  %v45 = vld [vmem:[%s1 + $0x60] sm:$0xff]
  %v46 = vld [vmem:[%s1 + $0x68] sm:$0xff]
  %v47 = vld [vmem:[%s1 + $0x70] sm:$0xff]
  %v48 = vld [vmem:[%s1 + $0x78] sm:$0xff]
  %49 = vmatprep.subr.mxu0 0.0
  %50 = vmatpush1.msra.mxu0 %v33
  %51 = vmatprep.subr.mxu0 0.0
  %52 = vmatpush1.msra.mxu0 %v34
  %53 = vmatprep.subr.mxu0 0.0
  %54 = vmatpush1.msra.mxu0 %v35
  %55 = vmatprep.subr.mxu0 0.0
  %56 = vmatpush1.msra.mxu0 %v36
  %57 = vmatprep.subr.mxu0 0.0
  %58 = vmatpush1.msra.mxu0 %v37
  %59 = vmatprep.subr.mxu0 0.0
  %60 = vmatpush1.msra.mxu0 %v38
  %61 = vmatprep.subr.mxu0 0.0
  %62 = vmatpush1.msra.mxu0 %v39
  %63 = vmatprep.subr.mxu0 0.0
  %64 = vmatpush1.msra.mxu0 %v40
  %65 = vmatprep.subr.mxu0 0.0
  %66 = vmatpush1.msra.mxu0 %v41
  %67 = vmatprep.subr.mxu0 0.0
  %68 = vmatpush1.msra.mxu0 %v42
  %69 = vmatprep.subr.mxu0 0.0
  %70 = vmatpush1.msra.mxu0 %v43
  %71 = vmatprep.subr.mxu0 0.0
  %72 = vmatpush1.msra.mxu0 %v44
  %73 = vmatprep.subr.mxu0 0.0
  %74 = vmatpush1.msra.mxu0 %v45
  %75 = vmatprep.subr.mxu0 0.0
  %76 = vmatpush1.msra.mxu0 %v46
  %77 = vmatprep.subr.mxu0 0.0
  %78 = vmatpush1.msra.mxu0 %v47
  %79 = vmatprep.subr.mxu0 0.0
  %80 = vmatpush1.msra.mxu0 %v48
  %81 = vmatprep.subr.mxu0 0.0
  %82 = vmatpush1.msra.mxu0 0.0
  %83 = vmatprep.subr.mxu0 0.0
  %84 = vmatpush1.msra.mxu0 0.0
  %85 = vmatprep.subr.mxu0 0.0
  %86 = vmatpush1.msra.mxu0 0.0
  %87 = vmatprep.subr.mxu0 0.0
  %88 = vmatpush1.msra.mxu0 0.0
  %89 = vmatprep.subr.mxu0 0.0
  %90 = vmatpush1.msra.mxu0 0.0
  %91 = vmatprep.subr.mxu0 0.0
  %92 = vmatpush1.msra.mxu0 0.0
  %93 = vmatprep.subr.mxu0 0.0
  %94 = vmatpush1.msra.mxu0 0.0
  %95 = vmatprep.subr.mxu0 0.0
  %96 = vmatpush1.msra.mxu0 0.0
  %97 = vmatprep.subr.mxu0 0.0
  %98 = vmatpush1.msra.mxu0 0.0
  %99 = vmatprep.subr.mxu0 0.0
  %100 = vmatpush1.msra.mxu0 0.0
  %101 = vmatprep.subr.mxu0 0.0
  %102 = vmatpush1.msra.mxu0 0.0
  %103 = vmatprep.subr.mxu0 0.0
  %104 = vmatpush1.msra.mxu0 0.0
  %105 = vmatprep.subr.mxu0 0.0
  %106 = vmatpush1.msra.mxu0 0.0
  %107 = vmatprep.subr.mxu0 0.0
  %108 = vmatpush1.msra.mxu0 0.0
  %109 = vmatprep.subr.mxu0 0.0
  %110 = vmatpush1.msra.mxu0 0.0
  %111 = vmatprep.subr.mxu0 0.0
  %112 = vmatpush1.msra.mxu0 0.0
  %113 = vmatprep.mubr.f32.mxu0 0.0
  %114 = vmatmul.mubr.f32.gmra.mrb[0].mxu0 %v17
  %v115 = vpop.f32.mrb[0].mxu0
  %v116 = vadd.f32 0.0, %v115
  %v117 = vpop.f32.mrb[0].mxu0
  %118 = vmatprep.mubr.f32.mxu0 0.0
  %119 = vmatmul.mubr.f32.gmra.mrb[0].mxu0 %v18
  %v120 = vpop.f32.mrb[0].mxu0
  %v121 = vadd.f32 0.0, %v120
  %v122 = vpop.f32.mrb[0].mxu0
  %123 = vmatprep.mubr.f32.mxu0 0.0
  %124 = vmatmul.mubr.f32.gmra.mrb[0].mxu0 %v19
  %v125 = vpop.f32.mrb[0].mxu0
  %v126 = vadd.f32 0.0, %v125
  %v127 = vpop.f32.mrb[0].mxu0
  %128 = vmatprep.mubr.f32.mxu0 0.0
  %129 = vmatmul.mubr.f32.gmra.mrb[0].mxu0 %v20
  %v130 = vpop.f32.mrb[0].mxu0
  %v131 = vadd.f32 0.0, %v130
  %v132 = vpop.f32.mrb[0].mxu0
  %133 = vmatprep.mubr.f32.mxu0 0.0
  %134 = vmatmul.mubr.f32.gmra.mrb[0].mxu0 %v21
  %v135 = vpop.f32.mrb[0].mxu0
  %v136 = vadd.f32 0.0, %v135
  %v137 = vpop.f32.mrb[0].mxu0
  %138 = vmatprep.mubr.f32.mxu0 0.0
  %139 = vmatmul.mubr.f32.gmra.mrb[0].mxu0 %v22
  %v140 = vpop.f32.mrb[0].mxu0
  %v141 = vadd.f32 0.0, %v140
  %v142 = vpop.f32.mrb[0].mxu0
  %143 = vmatprep.mubr.f32.mxu0 0.0
  %144 = vmatmul.mubr.f32.gmra.mrb[0].mxu0 %v23
  %v145 = vpop.f32.mrb[0].mxu0
  %v146 = vadd.f32 0.0, %v145
  %v147 = vpop.f32.mrb[0].mxu0
  %148 = vmatprep.mubr.f32.mxu0 0.0
  %149 = vmatmul.mubr.f32.gmra.mrb[0].mxu0 %v24
  %v150 = vpop.f32.mrb[0].mxu0
  %v151 = vadd.f32 0.0, %v150
  %v152 = vpop.f32.mrb[0].mxu0
  %153 = vmatprep.mubr.f32.mxu0 0.0
  %154 = vmatmul.mubr.f32.gmra.mrb[0].mxu0 %v25
  %v155 = vpop.f32.mrb[0].mxu0
  %v156 = vadd.f32 0.0, %v155
  %v157 = vpop.f32.mrb[0].mxu0
  %158 = vmatprep.mubr.f32.mxu0 0.0
  %159 = vmatmul.mubr.f32.gmra.mrb[0].mxu0 %v26
  %v160 = vpop.f32.mrb[0].mxu0
  %v161 = vadd.f32 0.0, %v160
  %v162 = vpop.f32.mrb[0].mxu0
  %163 = vmatprep.mubr.f32.mxu0 0.0
  %164 = vmatmul.mubr.f32.gmra.mrb[0].mxu0 %v27
  %v165 = vpop.f32.mrb[0].mxu0
  %v166 = vadd.f32 0.0, %v165
  %v167 = vpop.f32.mrb[0].mxu0
  %168 = vmatprep.mubr.f32.mxu0 0.0
  %169 = vmatmul.mubr.f32.gmra.mrb[0].mxu0 %v28
  %v170 = vpop.f32.mrb[0].mxu0
  %v171 = vadd.f32 0.0, %v170
  %v172 = vpop.f32.mrb[0].mxu0
  %173 = vmatprep.mubr.f32.mxu0 0.0
  %174 = vmatmul.mubr.f32.gmra.mrb[0].mxu0 %v29
  %v175 = vpop.f32.mrb[0].mxu0
  %v176 = vadd.f32 0.0, %v175
  %v177 = vpop.f32.mrb[0].mxu0
  %178 = vmatprep.mubr.f32.mxu0 0.0
  %179 = vmatmul.mubr.f32.gmra.mrb[0].mxu0 %v30
  %v180 = vpop.f32.mrb[0].mxu0
  %v181 = vadd.f32 0.0, %v180
  %v182 = vpop.f32.mrb[0].mxu0
  %183 = vmatprep.mubr.f32.mxu0 0.0
  %184 = vmatmul.mubr.f32.gmra.mrb[0].mxu0 %v31
  %v185 = vpop.f32.mrb[0].mxu0
  %v186 = vadd.f32 0.0, %v185
  %v187 = vpop.f32.mrb[0].mxu0
  %188 = vmatprep.mubr.f32.mxu0 0.0
  %189 = vmatmul.mubr.f32.gmra.mrb[0].mxu0 %v32
  %v190 = vpop.f32.mrb[0].mxu0
  %v191 = vadd.f32 0.0, %v190
  %v192 = vpop.f32.mrb[0].mxu0
  %193 = vdwg.mxu0
  %s194 = scalar_lea.vmem %s0, 128
  %v195 = vld [vmem:[%s194] sm:$0xff]
  %v196 = vld [vmem:[%s194 + $0x8] sm:$0xff]
  %v197 = vld [vmem:[%s194 + $0x10] sm:$0xff]
  %v198 = vld [vmem:[%s194 + $0x18] sm:$0xff]
  %v199 = vld [vmem:[%s194 + $0x20] sm:$0xff]
  %v200 = vld [vmem:[%s194 + $0x28] sm:$0xff]
  %v201 = vld [vmem:[%s194 + $0x30] sm:$0xff]
  %v202 = vld [vmem:[%s194 + $0x38] sm:$0xff]
  %v203 = vld [vmem:[%s194 + $0x40] sm:$0xff]
  %v204 = vld [vmem:[%s194 + $0x48] sm:$0xff]
  %v205 = vld [vmem:[%s194 + $0x50] sm:$0xff]
  %v206 = vld [vmem:[%s194 + $0x58] sm:$0xff]
  %v207 = vld [vmem:[%s194 + $0x60] sm:$0xff]
  %v208 = vld [vmem:[%s194 + $0x68] sm:$0xff]
  %v209 = vld [vmem:[%s194 + $0x70] sm:$0xff]
  %v210 = vld [vmem:[%s194 + $0x78] sm:$0xff]
  %s211 = scalar_lea.vmem %s1, 128
  %v212 = vld [vmem:[%s211] sm:$0xff]
  %v213 = vld [vmem:[%s211 + $0x8] sm:$0xff]
  %v214 = vld [vmem:[%s211 + $0x10] sm:$0xff]
  %v215 = vld [vmem:[%s211 + $0x18] sm:$0xff]
  %v216 = vld [vmem:[%s211 + $0x20] sm:$0xff]
  %v217 = vld [vmem:[%s211 + $0x28] sm:$0xff]
  %v218 = vld [vmem:[%s211 + $0x30] sm:$0xff]
  %v219 = vld [vmem:[%s211 + $0x38] sm:$0xff]
  %v220 = vld [vmem:[%s211 + $0x40] sm:$0xff]
  %v221 = vld [vmem:[%s211 + $0x48] sm:$0xff]
  %v222 = vld [vmem:[%s211 + $0x50] sm:$0xff]
  %v223 = vld [vmem:[%s211 + $0x58] sm:$0xff]
  %v224 = vld [vmem:[%s211 + $0x60] sm:$0xff]
  %v225 = vld [vmem:[%s211 + $0x68] sm:$0xff]
  %v226 = vld [vmem:[%s211 + $0x70] sm:$0xff]
  %v227 = vld [vmem:[%s211 + $0x78] sm:$0xff]
  %228 = vmatprep.subr.mxu0 0.0
  %229 = vmatpush1.msra.mxu0 %v212
  %230 = vmatprep.subr.mxu0 0.0
  %231 = vmatpush1.msra.mxu0 %v213
  %232 = vmatprep.subr.mxu0 0.0
  %233 = vmatpush1.msra.mxu0 %v214
  %234 = vmatprep.subr.mxu0 0.0
  %235 = vmatpush1.msra.mxu0 %v215
  %236 = vmatprep.subr.mxu0 0.0
  %237 = vmatpush1.msra.mxu0 %v216
  %238 = vmatprep.subr.mxu0 0.0
  %239 = vmatpush1.msra.mxu0 %v217
  %240 = vmatprep.subr.mxu0 0.0
  %241 = vmatpush1.msra.mxu0 %v218
  %242 = vmatprep.subr.mxu0 0.0
  %243 = vmatpush1.msra.mxu0 %v219
  %244 = vmatprep.subr.mxu0 0.0
  %245 = vmatpush1.msra.mxu0 %v220
  %246 = vmatprep.subr.mxu0 0.0
  %247 = vmatpush1.msra.mxu0 %v221
  %248 = vmatprep.subr.mxu0 0.0
  %249 = vmatpush1.msra.mxu0 %v222
  %250 = vmatprep.subr.mxu0 0.0
  %251 = vmatpush1.msra.mxu0 %v223
  %252 = vmatprep.subr.mxu0 0.0
  %253 = vmatpush1.msra.mxu0 %v224
  %254 = vmatprep.subr.mxu0 0.0
  %255 = vmatpush1.msra.mxu0 %v225
  %256 = vmatprep.subr.mxu0 0.0
  %257 = vmatpush1.msra.mxu0 %v226
  %258 = vmatprep.subr.mxu0 0.0
  %259 = vmatpush1.msra.mxu0 %v227
  %260 = vmatprep.subr.mxu0 0.0
  %261 = vmatpush1.msra.mxu0 0.0
  %262 = vmatprep.subr.mxu0 0.0
  %263 = vmatpush1.msra.mxu0 0.0
  %264 = vmatprep.subr.mxu0 0.0
  %265 = vmatpush1.msra.mxu0 0.0
  %266 = vmatprep.subr.mxu0 0.0
  %267 = vmatpush1.msra.mxu0 0.0
  %268 = vmatprep.subr.mxu0 0.0
  %269 = vmatpush1.msra.mxu0 0.0
  %270 = vmatprep.subr.mxu0 0.0
  %271 = vmatpush1.msra.mxu0 0.0
  %272 = vmatprep.subr.mxu0 0.0
  %273 = vmatpush1.msra.mxu0 0.0
  %274 = vmatprep.subr.mxu0 0.0
  %275 = vmatpush1.msra.mxu0 0.0
  %276 = vmatprep.subr.mxu0 0.0
  %277 = vmatpush1.msra.mxu0 0.0
  %278 = vmatprep.subr.mxu0 0.0
  %279 = vmatpush1.msra.mxu0 0.0
  %280 = vmatprep.subr.mxu0 0.0
  %281 = vmatpush1.msra.mxu0 0.0
  %282 = vmatprep.subr.mxu0 0.0
  %283 = vmatpush1.msra.mxu0 0.0
  %284 = vmatprep.subr.mxu0 0.0
  %285 = vmatpush1.msra.mxu0 0.0
  %286 = vmatprep.subr.mxu0 0.0
  %287 = vmatpush1.msra.mxu0 0.0
  %288 = vmatprep.subr.mxu0 0.0
  %289 = vmatpush1.msra.mxu0 0.0
  %290 = vmatprep.subr.mxu0 0.0
  %291 = vmatpush1.msra.mxu0 0.0
  %292 = vmatprep.mubr.f32.mxu0 0.0
  %293 = vmatmul.mubr.f32.gmra.mrb[0].mxu0 %v195
  %v294 = vpop.f32.mrb[0].mxu0
  %v295 = vadd.f32 0.0, %v294
  %v296 = vpop.f32.mrb[0].mxu0
  %297 = vmatprep.mubr.f32.mxu0 0.0
  %298 = vmatmul.mubr.f32.gmra.mrb[0].mxu0 %v196
  %v299 = vpop.f32.mrb[0].mxu0
  %v300 = vadd.f32 0.0, %v299
  %v301 = vpop.f32.mrb[0].mxu0
  %302 = vmatprep.mubr.f32.mxu0 0.0
  %303 = vmatmul.mubr.f32.gmra.mrb[0].mxu0 %v197
  %v304 = vpop.f32.mrb[0].mxu0
  %v305 = vadd.f32 0.0, %v304
  %v306 = vpop.f32.mrb[0].mxu0
  %307 = vmatprep.mubr.f32.mxu0 0.0
  %308 = vmatmul.mubr.f32.gmra.mrb[0].mxu0 %v198
  %v309 = vpop.f32.mrb[0].mxu0
  %v310 = vadd.f32 0.0, %v309
  %v311 = vpop.f32.mrb[0].mxu0
  %312 = vmatprep.mubr.f32.mxu0 0.0
  %313 = vmatmul.mubr.f32.gmra.mrb[0].mxu0 %v199
  %v314 = vpop.f32.mrb[0].mxu0
  %v315 = vadd.f32 0.0, %v314
  %v316 = vpop.f32.mrb[0].mxu0
  %317 = vmatprep.mubr.f32.mxu0 0.0
  %318 = vmatmul.mubr.f32.gmra.mrb[0].mxu0 %v200
  %v319 = vpop.f32.mrb[0].mxu0
  %v320 = vadd.f32 0.0, %v319
  %v321 = vpop.f32.mrb[0].mxu0
  %322 = vmatprep.mubr.f32.mxu0 0.0
  %323 = vmatmul.mubr.f32.gmra.mrb[0].mxu0 %v201
  %v324 = vpop.f32.mrb[0].mxu0
  %v325 = vadd.f32 0.0, %v324
  %v326 = vpop.f32.mrb[0].mxu0
  %327 = vmatprep.mubr.f32.mxu0 0.0
  %328 = vmatmul.mubr.f32.gmra.mrb[0].mxu0 %v202
  %v329 = vpop.f32.mrb[0].mxu0
  %v330 = vadd.f32 0.0, %v329
  %v331 = vpop.f32.mrb[0].mxu0
  %332 = vmatprep.mubr.f32.mxu0 0.0
  %333 = vmatmul.mubr.f32.gmra.mrb[0].mxu0 %v203
  %v334 = vpop.f32.mrb[0].mxu0
  %v335 = vadd.f32 0.0, %v334
  %v336 = vpop.f32.mrb[0].mxu0
  %337 = vmatprep.mubr.f32.mxu0 0.0
  %338 = vmatmul.mubr.f32.gmra.mrb[0].mxu0 %v204
  %v339 = vpop.f32.mrb[0].mxu0
  %v340 = vadd.f32 0.0, %v339
  %v341 = vpop.f32.mrb[0].mxu0
  %342 = vmatprep.mubr.f32.mxu0 0.0
  %343 = vmatmul.mubr.f32.gmra.mrb[0].mxu0 %v205
  %v344 = vpop.f32.mrb[0].mxu0
  %v345 = vadd.f32 0.0, %v344
  %v346 = vpop.f32.mrb[0].mxu0
  %347 = vmatprep.mubr.f32.mxu0 0.0
  %348 = vmatmul.mubr.f32.gmra.mrb[0].mxu0 %v206
  %v349 = vpop.f32.mrb[0].mxu0
  %v350 = vadd.f32 0.0, %v349
  %v351 = vpop.f32.mrb[0].mxu0
  %352 = vmatprep.mubr.f32.mxu0 0.0
  %353 = vmatmul.mubr.f32.gmra.mrb[0].mxu0 %v207
  %v354 = vpop.f32.mrb[0].mxu0
  %v355 = vadd.f32 0.0, %v354
  %v356 = vpop.f32.mrb[0].mxu0
  %357 = vmatprep.mubr.f32.mxu0 0.0
  %358 = vmatmul.mubr.f32.gmra.mrb[0].mxu0 %v208
  %v359 = vpop.f32.mrb[0].mxu0
  %v360 = vadd.f32 0.0, %v359
  %v361 = vpop.f32.mrb[0].mxu0
  %362 = vmatprep.mubr.f32.mxu0 0.0
  %363 = vmatmul.mubr.f32.gmra.mrb[0].mxu0 %v209
  %v364 = vpop.f32.mrb[0].mxu0
  %v365 = vadd.f32 0.0, %v364
  %v366 = vpop.f32.mrb[0].mxu0
  %367 = vmatprep.mubr.f32.mxu0 0.0
  %368 = vmatmul.mubr.f32.gmra.mrb[0].mxu0 %v210
  %v369 = vpop.f32.mrb[0].mxu0
  %v370 = vadd.f32 0.0, %v369
  %v371 = vpop.f32.mrb[0].mxu0
  %372 = vdwg.mxu0
  %s373 = scalar_lea.vmem %s0, 256
  %v374 = vld [vmem:[%s373] sm:$0xff]
  %v375 = vld [vmem:[%s373 + $0x8] sm:$0xff]
  %v376 = vld [vmem:[%s373 + $0x10] sm:$0xff]
  %v377 = vld [vmem:[%s373 + $0x18] sm:$0xff]
  %v378 = vld [vmem:[%s373 + $0x20] sm:$0xff]
  %v379 = vld [vmem:[%s373 + $0x28] sm:$0xff]
  %v380 = vld [vmem:[%s373 + $0x30] sm:$0xff]
  %v381 = vld [vmem:[%s373 + $0x38] sm:$0xff]
  %v382 = vld [vmem:[%s373 + $0x40] sm:$0xff]
  %v383 = vld [vmem:[%s373 + $0x48] sm:$0xff]
  %v384 = vld [vmem:[%s373 + $0x50] sm:$0xff]
  %v385 = vld [vmem:[%s373 + $0x58] sm:$0xff]
  %v386 = vld [vmem:[%s373 + $0x60] sm:$0xff]
  %v387 = vld [vmem:[%s373 + $0x68] sm:$0xff]
  %v388 = vld [vmem:[%s373 + $0x70] sm:$0xff]
  %v389 = vld [vmem:[%s373 + $0x78] sm:$0xff]
  %s390 = scalar_lea.vmem %s1, 256
  %v391 = vld [vmem:[%s390] sm:$0xff]
  %v392 = vld [vmem:[%s390 + $0x8] sm:$0xff]
  %v393 = vld [vmem:[%s390 + $0x10] sm:$0xff]
  %v394 = vld [vmem:[%s390 + $0x18] sm:$0xff]
  %v395 = vld [vmem:[%s390 + $0x20] sm:$0xff]
  %v396 = vld [vmem:[%s390 + $0x28] sm:$0xff]
  %v397 = vld [vmem:[%s390 + $0x30] sm:$0xff]
  %v398 = vld [vmem:[%s390 + $0x38] sm:$0xff]
  %v399 = vld [vmem:[%s390 + $0x40] sm:$0xff]
  %v400 = vld [vmem:[%s390 + $0x48] sm:$0xff]
  %v401 = vld [vmem:[%s390 + $0x50] sm:$0xff]
  %v402 = vld [vmem:[%s390 + $0x58] sm:$0xff]
  %v403 = vld [vmem:[%s390 + $0x60] sm:$0xff]
  %v404 = vld [vmem:[%s390 + $0x68] sm:$0xff]
  %v405 = vld [vmem:[%s390 + $0x70] sm:$0xff]
  %v406 = vld [vmem:[%s390 + $0x78] sm:$0xff]
  %407 = vmatprep.subr.mxu0 0.0
  %408 = vmatpush1.msra.mxu0 %v391
  %409 = vmatprep.subr.mxu0 0.0
  %410 = vmatpush1.msra.mxu0 %v392
  %411 = vmatprep.subr.mxu0 0.0
  %412 = vmatpush1.msra.mxu0 %v393
  %413 = vmatprep.subr.mxu0 0.0
  %414 = vmatpush1.msra.mxu0 %v394
  %415 = vmatprep.subr.mxu0 0.0
  %416 = vmatpush1.msra.mxu0 %v395
  %417 = vmatprep.subr.mxu0 0.0
  %418 = vmatpush1.msra.mxu0 %v396
  %419 = vmatprep.subr.mxu0 0.0
  %420 = vmatpush1.msra.mxu0 %v397
  %421 = vmatprep.subr.mxu0 0.0
  %422 = vmatpush1.msra.mxu0 %v398
  %423 = vmatprep.subr.mxu0 0.0
  %424 = vmatpush1.msra.mxu0 %v399
  %425 = vmatprep.subr.mxu0 0.0
  %426 = vmatpush1.msra.mxu0 %v400
  %427 = vmatprep.subr.mxu0 0.0
  %428 = vmatpush1.msra.mxu0 %v401
  %429 = vmatprep.subr.mxu0 0.0
  %430 = vmatpush1.msra.mxu0 %v402
  %431 = vmatprep.subr.mxu0 0.0
  %432 = vmatpush1.msra.mxu0 %v403
  %433 = vmatprep.subr.mxu0 0.0
  %434 = vmatpush1.msra.mxu0 %v404
  %435 = vmatprep.subr.mxu0 0.0
  %436 = vmatpush1.msra.mxu0 %v405
  %437 = vmatprep.subr.mxu0 0.0
  %438 = vmatpush1.msra.mxu0 %v406
  %439 = vmatprep.subr.mxu0 0.0
  %440 = vmatpush1.msra.mxu0 0.0
  %441 = vmatprep.subr.mxu0 0.0
  %442 = vmatpush1.msra.mxu0 0.0
  %443 = vmatprep.subr.mxu0 0.0
  %444 = vmatpush1.msra.mxu0 0.0
  %445 = vmatprep.subr.mxu0 0.0
  %446 = vmatpush1.msra.mxu0 0.0
  %447 = vmatprep.subr.mxu0 0.0
  %448 = vmatpush1.msra.mxu0 0.0
  %449 = vmatprep.subr.mxu0 0.0
  %450 = vmatpush1.msra.mxu0 0.0
  %451 = vmatprep.subr.mxu0 0.0
  %452 = vmatpush1.msra.mxu0 0.0
  %453 = vmatprep.subr.mxu0 0.0
  %454 = vmatpush1.msra.mxu0 0.0
  %455 = vmatprep.subr.mxu0 0.0
  %456 = vmatpush1.msra.mxu0 0.0
  %457 = vmatprep.subr.mxu0 0.0
  %458 = vmatpush1.msra.mxu0 0.0
  %459 = vmatprep.subr.mxu0 0.0
  %460 = vmatpush1.msra.mxu0 0.0
  %461 = vmatprep.subr.mxu0 0.0
  %462 = vmatpush1.msra.mxu0 0.0
  %463 = vmatprep.subr.mxu0 0.0
  %464 = vmatpush1.msra.mxu0 0.0
  %465 = vmatprep.subr.mxu0 0.0
  %466 = vmatpush1.msra.mxu0 0.0
  %467 = vmatprep.subr.mxu0 0.0
  %468 = vmatpush1.msra.mxu0 0.0
  %469 = vmatprep.subr.mxu0 0.0
  %470 = vmatpush1.msra.mxu0 0.0
  %471 = vmatprep.mubr.f32.mxu0 0.0
  %472 = vmatmul.mubr.f32.gmra.mrb[0].mxu0 %v374
  %v473 = vpop.f32.mrb[0].mxu0
  %v474 = vadd.f32 0.0, %v473
  %v475 = vpop.f32.mrb[0].mxu0
  %476 = vmatprep.mubr.f32.mxu0 0.0
  %477 = vmatmul.mubr.f32.gmra.mrb[0].mxu0 %v375
  %v478 = vpop.f32.mrb[0].mxu0
  %v479 = vadd.f32 0.0, %v478
  %v480 = vpop.f32.mrb[0].mxu0
  %481 = vmatprep.mubr.f32.mxu0 0.0
  %482 = vmatmul.mubr.f32.gmra.mrb[0].mxu0 %v376
  %v483 = vpop.f32.mrb[0].mxu0
  %v484 = vadd.f32 0.0, %v483
  %v485 = vpop.f32.mrb[0].mxu0
  %486 = vmatprep.mubr.f32.mxu0 0.0
  %487 = vmatmul.mubr.f32.gmra.mrb[0].mxu0 %v377
  %v488 = vpop.f32.mrb[0].mxu0
  %v489 = vadd.f32 0.0, %v488
  %v490 = vpop.f32.mrb[0].mxu0
  %491 = vmatprep.mubr.f32.mxu0 0.0
  %492 = vmatmul.mubr.f32.gmra.mrb[0].mxu0 %v378
  %v493 = vpop.f32.mrb[0].mxu0
  %v494 = vadd.f32 0.0, %v493
  %v495 = vpop.f32.mrb[0].mxu0
  %496 = vmatprep.mubr.f32.mxu0 0.0
  %497 = vmatmul.mubr.f32.gmra.mrb[0].mxu0 %v379
  %v498 = vpop.f32.mrb[0].mxu0
  %v499 = vadd.f32 0.0, %v498
  %v500 = vpop.f32.mrb[0].mxu0
  %501 = vmatprep.mubr.f32.mxu0 0.0
  %502 = vmatmul.mubr.f32.gmra.mrb[0].mxu0 %v380
  %v503 = vpop.f32.mrb[0].mxu0
  %v504 = vadd.f32 0.0, %v503
  %v505 = vpop.f32.mrb[0].mxu0
  %506 = vmatprep.mubr.f32.mxu0 0.0
  %507 = vmatmul.mubr.f32.gmra.mrb[0].mxu0 %v381
  %v508 = vpop.f32.mrb[0].mxu0
  %v509 = vadd.f32 0.0, %v508
  %v510 = vpop.f32.mrb[0].mxu0
  %511 = vmatprep.mubr.f32.mxu0 0.0
  %512 = vmatmul.mubr.f32.gmra.mrb[0].mxu0 %v382
  %v513 = vpop.f32.mrb[0].mxu0
  %v514 = vadd.f32 0.0, %v513
  %v515 = vpop.f32.mrb[0].mxu0
  %516 = vmatprep.mubr.f32.mxu0 0.0
  %517 = vmatmul.mubr.f32.gmra.mrb[0].mxu0 %v383
  %v518 = vpop.f32.mrb[0].mxu0
  %v519 = vadd.f32 0.0, %v518
  %v520 = vpop.f32.mrb[0].mxu0
  %521 = vmatprep.mubr.f32.mxu0 0.0
  %522 = vmatmul.mubr.f32.gmra.mrb[0].mxu0 %v384
  %v523 = vpop.f32.mrb[0].mxu0
  %v524 = vadd.f32 0.0, %v523
  %v525 = vpop.f32.mrb[0].mxu0
  %526 = vmatprep.mubr.f32.mxu0 0.0
  %527 = vmatmul.mubr.f32.gmra.mrb[0].mxu0 %v385
  %v528 = vpop.f32.mrb[0].mxu0
  %v529 = vadd.f32 0.0, %v528
  %v530 = vpop.f32.mrb[0].mxu0
  %531 = vmatprep.mubr.f32.mxu0 0.0
  %532 = vmatmul.mubr.f32.gmra.mrb[0].mxu0 %v386
  %v533 = vpop.f32.mrb[0].mxu0
  %v534 = vadd.f32 0.0, %v533
  %v535 = vpop.f32.mrb[0].mxu0
  %536 = vmatprep.mubr.f32.mxu0 0.0
  %537 = vmatmul.mubr.f32.gmra.mrb[0].mxu0 %v387
  %v538 = vpop.f32.mrb[0].mxu0
  %v539 = vadd.f32 0.0, %v538
  %v540 = vpop.f32.mrb[0].mxu0
  %541 = vmatprep.mubr.f32.mxu0 0.0
  %542 = vmatmul.mubr.f32.gmra.mrb[0].mxu0 %v388
  %v543 = vpop.f32.mrb[0].mxu0
  %v544 = vadd.f32 0.0, %v543
  %v545 = vpop.f32.mrb[0].mxu0
  %546 = vmatprep.mubr.f32.mxu0 0.0
  %547 = vmatmul.mubr.f32.gmra.mrb[0].mxu0 %v389
  %v548 = vpop.f32.mrb[0].mxu0
  %v549 = vadd.f32 0.0, %v548
  %v550 = vpop.f32.mrb[0].mxu0
  %551 = vdwg.mxu0
  %s552 = scalar_lea.vmem %s0, 384
  %v553 = vld [vmem:[%s552] sm:$0xff]
  %v554 = vld [vmem:[%s552 + $0x8] sm:$0xff]
  %v555 = vld [vmem:[%s552 + $0x10] sm:$0xff]
  %v556 = vld [vmem:[%s552 + $0x18] sm:$0xff]
  %v557 = vld [vmem:[%s552 + $0x20] sm:$0xff]
  %v558 = vld [vmem:[%s552 + $0x28] sm:$0xff]
  %v559 = vld [vmem:[%s552 + $0x30] sm:$0xff]
  %v560 = vld [vmem:[%s552 + $0x38] sm:$0xff]
  %v561 = vld [vmem:[%s552 + $0x40] sm:$0xff]
  %v562 = vld [vmem:[%s552 + $0x48] sm:$0xff]
  %v563 = vld [vmem:[%s552 + $0x50] sm:$0xff]
  %v564 = vld [vmem:[%s552 + $0x58] sm:$0xff]
  %v565 = vld [vmem:[%s552 + $0x60] sm:$0xff]
  %v566 = vld [vmem:[%s552 + $0x68] sm:$0xff]
  %v567 = vld [vmem:[%s552 + $0x70] sm:$0xff]
  %v568 = vld [vmem:[%s552 + $0x78] sm:$0xff]
  %s569 = scalar_lea.vmem %s1, 384
  %v570 = vld [vmem:[%s569] sm:$0xff]
  %v571 = vld [vmem:[%s569 + $0x8] sm:$0xff]
  %v572 = vld [vmem:[%s569 + $0x10] sm:$0xff]
  %v573 = vld [vmem:[%s569 + $0x18] sm:$0xff]
  %v574 = vld [vmem:[%s569 + $0x20] sm:$0xff]
  %v575 = vld [vmem:[%s569 + $0x28] sm:$0xff]
  %v576 = vld [vmem:[%s569 + $0x30] sm:$0xff]
  %v577 = vld [vmem:[%s569 + $0x38] sm:$0xff]
  %v578 = vld [vmem:[%s569 + $0x40] sm:$0xff]
  %v579 = vld [vmem:[%s569 + $0x48] sm:$0xff]
  %v580 = vld [vmem:[%s569 + $0x50] sm:$0xff]
  %v581 = vld [vmem:[%s569 + $0x58] sm:$0xff]
  %v582 = vld [vmem:[%s569 + $0x60] sm:$0xff]
  %v583 = vld [vmem:[%s569 + $0x68] sm:$0xff]
  %v584 = vld [vmem:[%s569 + $0x70] sm:$0xff]
  %v585 = vld [vmem:[%s569 + $0x78] sm:$0xff]
  %586 = vmatprep.subr.mxu0 0.0
  %587 = vmatpush1.msra.mxu0 %v570
  %588 = vmatprep.subr.mxu0 0.0
  %589 = vmatpush1.msra.mxu0 %v571
  %590 = vmatprep.subr.mxu0 0.0
  %591 = vmatpush1.msra.mxu0 %v572
  %592 = vmatprep.subr.mxu0 0.0
  %593 = vmatpush1.msra.mxu0 %v573
  %594 = vmatprep.subr.mxu0 0.0
  %595 = vmatpush1.msra.mxu0 %v574
  %596 = vmatprep.subr.mxu0 0.0
  %597 = vmatpush1.msra.mxu0 %v575
  %598 = vmatprep.subr.mxu0 0.0
  %599 = vmatpush1.msra.mxu0 %v576
  %600 = vmatprep.subr.mxu0 0.0
  %601 = vmatpush1.msra.mxu0 %v577
  %602 = vmatprep.subr.mxu0 0.0
  %603 = vmatpush1.msra.mxu0 %v578
  %604 = vmatprep.subr.mxu0 0.0
  %605 = vmatpush1.msra.mxu0 %v579
  %606 = vmatprep.subr.mxu0 0.0
  %607 = vmatpush1.msra.mxu0 %v580
  %608 = vmatprep.subr.mxu0 0.0
  %609 = vmatpush1.msra.mxu0 %v581
  %610 = vmatprep.subr.mxu0 0.0
  %611 = vmatpush1.msra.mxu0 %v582
  %612 = vmatprep.subr.mxu0 0.0
  %613 = vmatpush1.msra.mxu0 %v583
  %614 = vmatprep.subr.mxu0 0.0
  %615 = vmatpush1.msra.mxu0 %v584
  %616 = vmatprep.subr.mxu0 0.0
  %617 = vmatpush1.msra.mxu0 %v585
  %618 = vmatprep.subr.mxu0 0.0
  %619 = vmatpush1.msra.mxu0 0.0
  %620 = vmatprep.subr.mxu0 0.0
  %621 = vmatpush1.msra.mxu0 0.0
  %622 = vmatprep.subr.mxu0 0.0
  %623 = vmatpush1.msra.mxu0 0.0
  %624 = vmatprep.subr.mxu0 0.0
  %625 = vmatpush1.msra.mxu0 0.0
  %626 = vmatprep.subr.mxu0 0.0
  %627 = vmatpush1.msra.mxu0 0.0
  %628 = vmatprep.subr.mxu0 0.0
  %629 = vmatpush1.msra.mxu0 0.0
  %630 = vmatprep.subr.mxu0 0.0
  %631 = vmatpush1.msra.mxu0 0.0
  %632 = vmatprep.subr.mxu0 0.0
  %633 = vmatpush1.msra.mxu0 0.0
  %634 = vmatprep.subr.mxu0 0.0
  %635 = vmatpush1.msra.mxu0 0.0
  %636 = vmatprep.subr.mxu0 0.0
  %637 = vmatpush1.msra.mxu0 0.0
  %638 = vmatprep.subr.mxu0 0.0
  %639 = vmatpush1.msra.mxu0 0.0
  %640 = vmatprep.subr.mxu0 0.0
  %641 = vmatpush1.msra.mxu0 0.0
  %642 = vmatprep.subr.mxu0 0.0
  %643 = vmatpush1.msra.mxu0 0.0
  %644 = vmatprep.subr.mxu0 0.0
  %645 = vmatpush1.msra.mxu0 0.0
  %646 = vmatprep.subr.mxu0 0.0
  %647 = vmatpush1.msra.mxu0 0.0
  %648 = vmatprep.subr.mxu0 0.0
  %649 = vmatpush1.msra.mxu0 0.0
  %650 = vmatprep.mubr.f32.mxu0 0.0
  %651 = vmatmul.mubr.f32.gmra.mrb[0].mxu0 %v553
  %v652 = vpop.f32.mrb[0].mxu0
  %v653 = vadd.f32 0.0, %v652
  %v654 = vpop.f32.mrb[0].mxu0
  %655 = vmatprep.mubr.f32.mxu0 0.0
  %656 = vmatmul.mubr.f32.gmra.mrb[0].mxu0 %v554
  %v657 = vpop.f32.mrb[0].mxu0
  %v658 = vadd.f32 0.0, %v657
  %v659 = vpop.f32.mrb[0].mxu0
  %660 = vmatprep.mubr.f32.mxu0 0.0
  %661 = vmatmul.mubr.f32.gmra.mrb[0].mxu0 %v555
  %v662 = vpop.f32.mrb[0].mxu0
  %v663 = vadd.f32 0.0, %v662
  %v664 = vpop.f32.mrb[0].mxu0
  %665 = vmatprep.mubr.f32.mxu0 0.0
  %666 = vmatmul.mubr.f32.gmra.mrb[0].mxu0 %v556
  %v667 = vpop.f32.mrb[0].mxu0
  %v668 = vadd.f32 0.0, %v667
  %v669 = vpop.f32.mrb[0].mxu0
  %670 = vmatprep.mubr.f32.mxu0 0.0
  %671 = vmatmul.mubr.f32.gmra.mrb[0].mxu0 %v557
  %v672 = vpop.f32.mrb[0].mxu0
  %v673 = vadd.f32 0.0, %v672
  %v674 = vpop.f32.mrb[0].mxu0
  %675 = vmatprep.mubr.f32.mxu0 0.0
  %676 = vmatmul.mubr.f32.gmra.mrb[0].mxu0 %v558
  %v677 = vpop.f32.mrb[0].mxu0
  %v678 = vadd.f32 0.0, %v677
  %v679 = vpop.f32.mrb[0].mxu0
  %680 = vmatprep.mubr.f32.mxu0 0.0
  %681 = vmatmul.mubr.f32.gmra.mrb[0].mxu0 %v559
  %v682 = vpop.f32.mrb[0].mxu0
  %v683 = vadd.f32 0.0, %v682
  %v684 = vpop.f32.mrb[0].mxu0
  %685 = vmatprep.mubr.f32.mxu0 0.0
  %686 = vmatmul.mubr.f32.gmra.mrb[0].mxu0 %v560
  %v687 = vpop.f32.mrb[0].mxu0
  %v688 = vadd.f32 0.0, %v687
  %v689 = vpop.f32.mrb[0].mxu0
  %690 = vmatprep.mubr.f32.mxu0 0.0
  %691 = vmatmul.mubr.f32.gmra.mrb[0].mxu0 %v561
  %v692 = vpop.f32.mrb[0].mxu0
  %v693 = vadd.f32 0.0, %v692
  %v694 = vpop.f32.mrb[0].mxu0
  %695 = vmatprep.mubr.f32.mxu0 0.0
  %696 = vmatmul.mubr.f32.gmra.mrb[0].mxu0 %v562
  %v697 = vpop.f32.mrb[0].mxu0
  %v698 = vadd.f32 0.0, %v697
  %v699 = vpop.f32.mrb[0].mxu0
  %700 = vmatprep.mubr.f32.mxu0 0.0
  %701 = vmatmul.mubr.f32.gmra.mrb[0].mxu0 %v563
  %v702 = vpop.f32.mrb[0].mxu0
  %v703 = vadd.f32 0.0, %v702
  %v704 = vpop.f32.mrb[0].mxu0
  %705 = vmatprep.mubr.f32.mxu0 0.0
  %706 = vmatmul.mubr.f32.gmra.mrb[0].mxu0 %v564
  %v707 = vpop.f32.mrb[0].mxu0
  %v708 = vadd.f32 0.0, %v707
  %v709 = vpop.f32.mrb[0].mxu0
  %710 = vmatprep.mubr.f32.mxu0 0.0
  %711 = vmatmul.mubr.f32.gmra.mrb[0].mxu0 %v565
  %v712 = vpop.f32.mrb[0].mxu0
  %v713 = vadd.f32 0.0, %v712
  %v714 = vpop.f32.mrb[0].mxu0
  %715 = vmatprep.mubr.f32.mxu0 0.0
  %716 = vmatmul.mubr.f32.gmra.mrb[0].mxu0 %v566
  %v717 = vpop.f32.mrb[0].mxu0
  %v718 = vadd.f32 0.0, %v717
  %v719 = vpop.f32.mrb[0].mxu0
  %720 = vmatprep.mubr.f32.mxu0 0.0
  %721 = vmatmul.mubr.f32.gmra.mrb[0].mxu0 %v567
  %v722 = vpop.f32.mrb[0].mxu0
  %v723 = vadd.f32 0.0, %v722
  %v724 = vpop.f32.mrb[0].mxu0
  %725 = vmatprep.mubr.f32.mxu0 0.0
  %726 = vmatmul.mubr.f32.gmra.mrb[0].mxu0 %v568
  %v727 = vpop.f32.mrb[0].mxu0
  %v728 = vadd.f32 0.0, %v727
  %v729 = vpop.f32.mrb[0].mxu0
  %730 = vdwg.mxu0
  %vm731 = vcmask 64512
  %v732 = vsel %vm731, %v116, 0.0
  %v733 = vsel %vm731, %v121, 0.0
  %v734 = vadd.f32 %v732, %v733
  %v735 = vsel %vm731, %v126, 0.0
  %v736 = vadd.f32 %v734, %v735
  %v737 = vsel %vm731, %v131, 0.0
  %v738 = vadd.f32 %v736, %v737
  %v739 = vsel %vm731, %v136, 0.0
  %v740 = vadd.f32 %v738, %v739
  %v741 = vsel %vm731, %v141, 0.0
  %v742 = vadd.f32 %v740, %v741
  %v743 = vsel %vm731, %v146, 0.0
  %v744 = vadd.f32 %v742, %v743
  %v745 = vsel %vm731, %v151, 0.0
  %v746 = vadd.f32 %v744, %v745
  %v747 = vsel %vm731, %v156, 0.0
  %v748 = vadd.f32 %v746, %v747
  %v749 = vsel %vm731, %v161, 0.0
  %v750 = vadd.f32 %v748, %v749
  %v751 = vsel %vm731, %v166, 0.0
  %v752 = vadd.f32 %v750, %v751
  %v753 = vsel %vm731, %v171, 0.0
  %v754 = vadd.f32 %v752, %v753
  %v755 = vsel %vm731, %v176, 0.0
  %v756 = vadd.f32 %v754, %v755
  %v757 = vsel %vm731, %v181, 0.0
  %v758 = vadd.f32 %v756, %v757
  %v759 = vsel %vm731, %v186, 0.0
  %v760 = vadd.f32 %v758, %v759
  %v761 = vsel %vm731, %v191, 0.0
  %v762 = vadd.f32 %v760, %v761
  %v763 = vrot.slane %v762, 4
  %v764 = vadd.f32 %v762, %v763
  %v765 = vrot.slane %v764, 2
  %v766 = vadd.f32 %v764, %v765
  %v767 = vrot.slane %v766, 1
  %v768 = vadd.f32 %v766, %v767
  %v769 = vsel %vm731, %v295, 0.0
  %v770 = vsel %vm731, %v300, 0.0
  %v771 = vadd.f32 %v769, %v770
  %v772 = vsel %vm731, %v305, 0.0
  %v773 = vadd.f32 %v771, %v772
  %v774 = vsel %vm731, %v310, 0.0
  %v775 = vadd.f32 %v773, %v774
  %v776 = vsel %vm731, %v315, 0.0
  %v777 = vadd.f32 %v775, %v776
  %v778 = vsel %vm731, %v320, 0.0
  %v779 = vadd.f32 %v777, %v778
  %v780 = vsel %vm731, %v325, 0.0
  %v781 = vadd.f32 %v779, %v780
  %v782 = vsel %vm731, %v330, 0.0
  %v783 = vadd.f32 %v781, %v782
  %v784 = vsel %vm731, %v335, 0.0
  %v785 = vadd.f32 %v783, %v784
  %v786 = vsel %vm731, %v340, 0.0
  %v787 = vadd.f32 %v785, %v786
  %v788 = vsel %vm731, %v345, 0.0
  %v789 = vadd.f32 %v787, %v788
  %v790 = vsel %vm731, %v350, 0.0
  %v791 = vadd.f32 %v789, %v790
  %v792 = vsel %vm731, %v355, 0.0
  %v793 = vadd.f32 %v791, %v792
  %v794 = vsel %vm731, %v360, 0.0
  %v795 = vadd.f32 %v793, %v794
  %v796 = vsel %vm731, %v365, 0.0
  %v797 = vadd.f32 %v795, %v796
  %v798 = vsel %vm731, %v370, 0.0
  %v799 = vadd.f32 %v797, %v798
  %v800 = vrot.slane %v799, 4
  %v801 = vadd.f32 %v799, %v800
  %v802 = vrot.slane %v801, 2
  %v803 = vadd.f32 %v801, %v802
  %v804 = vrot.slane %v803, 1
  %v805 = vadd.f32 %v803, %v804
  %v806 = vadd.f32 %v768, %v805
  %v807 = vsel %vm731, %v474, 0.0
  %v808 = vsel %vm731, %v479, 0.0
  %v809 = vadd.f32 %v807, %v808
  %v810 = vsel %vm731, %v484, 0.0
  %v811 = vadd.f32 %v809, %v810
  %v812 = vsel %vm731, %v489, 0.0
  %v813 = vadd.f32 %v811, %v812
  %v814 = vsel %vm731, %v494, 0.0
  %v815 = vadd.f32 %v813, %v814
  %v816 = vsel %vm731, %v499, 0.0
  %v817 = vadd.f32 %v815, %v816
  %v818 = vsel %vm731, %v504, 0.0
  %v819 = vadd.f32 %v817, %v818
  %v820 = vsel %vm731, %v509, 0.0
  %v821 = vadd.f32 %v819, %v820
  %v822 = vsel %vm731, %v514, 0.0
  %v823 = vadd.f32 %v821, %v822
  %v824 = vsel %vm731, %v519, 0.0
  %v825 = vadd.f32 %v823, %v824
  %v826 = vsel %vm731, %v524, 0.0
  %v827 = vadd.f32 %v825, %v826
  %v828 = vsel %vm731, %v529, 0.0
  %v829 = vadd.f32 %v827, %v828
  %v830 = vsel %vm731, %v534, 0.0
  %v831 = vadd.f32 %v829, %v830
  %v832 = vsel %vm731, %v539, 0.0
  %v833 = vadd.f32 %v831, %v832
  %v834 = vsel %vm731, %v544, 0.0
  %v835 = vadd.f32 %v833, %v834
  %v836 = vsel %vm731, %v549, 0.0
  %v837 = vadd.f32 %v835, %v836
  %v838 = vrot.slane %v837, 4
  %v839 = vadd.f32 %v837, %v838
  %v840 = vrot.slane %v839, 2
  %v841 = vadd.f32 %v839, %v840
  %v842 = vrot.slane %v841, 1
  %v843 = vadd.f32 %v841, %v842
  %v844 = vadd.f32 %v806, %v843
  %v845 = vsel %vm731, %v653, 0.0
  %v846 = vsel %vm731, %v658, 0.0
  %v847 = vadd.f32 %v845, %v846
  %v848 = vsel %vm731, %v663, 0.0
  %v849 = vadd.f32 %v847, %v848
  %v850 = vsel %vm731, %v668, 0.0
  %v851 = vadd.f32 %v849, %v850
  %v852 = vsel %vm731, %v673, 0.0
  %v853 = vadd.f32 %v851, %v852
  %v854 = vsel %vm731, %v678, 0.0
  %v855 = vadd.f32 %v853, %v854
  %v856 = vsel %vm731, %v683, 0.0
  %v857 = vadd.f32 %v855, %v856
  %v858 = vsel %vm731, %v688, 0.0
  %v859 = vadd.f32 %v857, %v858
  %v860 = vsel %vm731, %v693, 0.0
  %v861 = vadd.f32 %v859, %v860
  %v862 = vsel %vm731, %v698, 0.0
  %v863 = vadd.f32 %v861, %v862
  %v864 = vsel %vm731, %v703, 0.0
  %v865 = vadd.f32 %v863, %v864
  %v866 = vsel %vm731, %v708, 0.0
  %v867 = vadd.f32 %v865, %v866
  %v868 = vsel %vm731, %v713, 0.0
  %v869 = vadd.f32 %v867, %v868
  %v870 = vsel %vm731, %v718, 0.0
  %v871 = vadd.f32 %v869, %v870
  %v872 = vsel %vm731, %v723, 0.0
  %v873 = vadd.f32 %v871, %v872
  %v874 = vsel %vm731, %v728, 0.0
  %v875 = vadd.f32 %v873, %v874
  %v876 = vrot.slane %v875, 4
  %v877 = vadd.f32 %v875, %v876
  %v878 = vrot.slane %v877, 2
  %v879 = vadd.f32 %v877, %v878
  %v880 = vrot.slane %v879, 1
  %v881 = vadd.f32 %v879, %v880
  %v882 = vadd.f32 %v844, %v881
  %v883 = vmul.f32 %v882, 0.001953125
  %v884 = vsub.f32 %v116, %v883
  %v885 = vsub.f32 %v121, %v883
  %v886 = vsub.f32 %v126, %v883
  %v887 = vsub.f32 %v131, %v883
  %v888 = vsub.f32 %v136, %v883
  %v889 = vsub.f32 %v141, %v883
  %v890 = vsub.f32 %v146, %v883
  %v891 = vsub.f32 %v151, %v883
  %v892 = vsub.f32 %v156, %v883
  %v893 = vsub.f32 %v161, %v883
  %v894 = vsub.f32 %v166, %v883
  %v895 = vsub.f32 %v171, %v883
  %v896 = vsub.f32 %v176, %v883
  %v897 = vsub.f32 %v181, %v883
  %v898 = vsub.f32 %v186, %v883
  %v899 = vsub.f32 %v191, %v883
  %v900 = vmul.f32 %v884, %v884
  %v901 = vmul.f32 %v885, %v885
  %v902 = vmul.f32 %v886, %v886
  %v903 = vmul.f32 %v887, %v887
  %v904 = vmul.f32 %v888, %v888
  %v905 = vmul.f32 %v889, %v889
  %v906 = vmul.f32 %v890, %v890
  %v907 = vmul.f32 %v891, %v891
  %v908 = vmul.f32 %v892, %v892
  %v909 = vmul.f32 %v893, %v893
  %v910 = vmul.f32 %v894, %v894
  %v911 = vmul.f32 %v895, %v895
  %v912 = vmul.f32 %v896, %v896
  %v913 = vmul.f32 %v897, %v897
  %v914 = vmul.f32 %v898, %v898
  %v915 = vmul.f32 %v899, %v899
  %v916 = vsel %vm731, %v900, 0.0
  %v917 = vsel %vm731, %v901, 0.0
  %v918 = vadd.f32 %v916, %v917
  %v919 = vsel %vm731, %v902, 0.0
  %v920 = vadd.f32 %v918, %v919
  %v921 = vsel %vm731, %v903, 0.0
  %v922 = vadd.f32 %v920, %v921
  %v923 = vsel %vm731, %v904, 0.0
  %v924 = vadd.f32 %v922, %v923
  %v925 = vsel %vm731, %v905, 0.0
  %v926 = vadd.f32 %v924, %v925
  %v927 = vsel %vm731, %v906, 0.0
  %v928 = vadd.f32 %v926, %v927
  %v929 = vsel %vm731, %v907, 0.0
  %v930 = vadd.f32 %v928, %v929
  %v931 = vsel %vm731, %v908, 0.0
  %v932 = vadd.f32 %v930, %v931
  %v933 = vsel %vm731, %v909, 0.0
  %v934 = vadd.f32 %v932, %v933
  %v935 = vsel %vm731, %v910, 0.0
  %v936 = vadd.f32 %v934, %v935
  %v937 = vsel %vm731, %v911, 0.0
  %v938 = vadd.f32 %v936, %v937
  %v939 = vsel %vm731, %v912, 0.0
  %v940 = vadd.f32 %v938, %v939
  %v941 = vsel %vm731, %v913, 0.0
  %v942 = vadd.f32 %v940, %v941
  %v943 = vsel %vm731, %v914, 0.0
  %v944 = vadd.f32 %v942, %v943
  %v945 = vsel %vm731, %v915, 0.0
  %v946 = vadd.f32 %v944, %v945
  %v947 = vrot.slane %v946, 4
  %v948 = vadd.f32 %v946, %v947
  %v949 = vrot.slane %v948, 2
  %v950 = vadd.f32 %v948, %v949
  %v951 = vrot.slane %v950, 1
  %v952 = vadd.f32 %v950, %v951
  %v953 = vsub.f32 %v295, %v883
  %v954 = vsub.f32 %v300, %v883
  %v955 = vsub.f32 %v305, %v883
  %v956 = vsub.f32 %v310, %v883
  %v957 = vsub.f32 %v315, %v883
  %v958 = vsub.f32 %v320, %v883
  %v959 = vsub.f32 %v325, %v883
  %v960 = vsub.f32 %v330, %v883
  %v961 = vsub.f32 %v335, %v883
  %v962 = vsub.f32 %v340, %v883
  %v963 = vsub.f32 %v345, %v883
  %v964 = vsub.f32 %v350, %v883
  %v965 = vsub.f32 %v355, %v883
  %v966 = vsub.f32 %v360, %v883
  %v967 = vsub.f32 %v365, %v883
  %v968 = vsub.f32 %v370, %v883
  %v969 = vmul.f32 %v953, %v953
  %v970 = vmul.f32 %v954, %v954
  %v971 = vmul.f32 %v955, %v955
  %v972 = vmul.f32 %v956, %v956
  %v973 = vmul.f32 %v957, %v957
  %v974 = vmul.f32 %v958, %v958
  %v975 = vmul.f32 %v959, %v959
  %v976 = vmul.f32 %v960, %v960
  %v977 = vmul.f32 %v961, %v961
  %v978 = vmul.f32 %v962, %v962
  %v979 = vmul.f32 %v963, %v963
  %v980 = vmul.f32 %v964, %v964
  %v981 = vmul.f32 %v965, %v965
  %v982 = vmul.f32 %v966, %v966
  %v983 = vmul.f32 %v967, %v967
  %v984 = vmul.f32 %v968, %v968
  %v985 = vsel %vm731, %v969, 0.0
  %v986 = vsel %vm731, %v970, 0.0
  %v987 = vadd.f32 %v985, %v986
  %v988 = vsel %vm731, %v971, 0.0
  %v989 = vadd.f32 %v987, %v988
  %v990 = vsel %vm731, %v972, 0.0
  %v991 = vadd.f32 %v989, %v990
  %v992 = vsel %vm731, %v973, 0.0
  %v993 = vadd.f32 %v991, %v992
  %v994 = vsel %vm731, %v974, 0.0
  %v995 = vadd.f32 %v993, %v994
  %v996 = vsel %vm731, %v975, 0.0
  %v997 = vadd.f32 %v995, %v996
  %v998 = vsel %vm731, %v976, 0.0
  %v999 = vadd.f32 %v997, %v998
  %v1000 = vsel %vm731, %v977, 0.0
  %v1001 = vadd.f32 %v999, %v1000
  %v1002 = vsel %vm731, %v978, 0.0
  %v1003 = vadd.f32 %v1001, %v1002
  %v1004 = vsel %vm731, %v979, 0.0
  %v1005 = vadd.f32 %v1003, %v1004
  %v1006 = vsel %vm731, %v980, 0.0
  %v1007 = vadd.f32 %v1005, %v1006
  %v1008 = vsel %vm731, %v981, 0.0
  %v1009 = vadd.f32 %v1007, %v1008
  %v1010 = vsel %vm731, %v982, 0.0
  %v1011 = vadd.f32 %v1009, %v1010
  %v1012 = vsel %vm731, %v983, 0.0
  %v1013 = vadd.f32 %v1011, %v1012
  %v1014 = vsel %vm731, %v984, 0.0
  %v1015 = vadd.f32 %v1013, %v1014
  %v1016 = vrot.slane %v1015, 4
  %v1017 = vadd.f32 %v1015, %v1016
  %v1018 = vrot.slane %v1017, 2
  %v1019 = vadd.f32 %v1017, %v1018
  %v1020 = vrot.slane %v1019, 1
  %v1021 = vadd.f32 %v1019, %v1020
  %v1022 = vadd.f32 %v952, %v1021
  %v1023 = vsub.f32 %v474, %v883
  %v1024 = vsub.f32 %v479, %v883
  %v1025 = vsub.f32 %v484, %v883
  %v1026 = vsub.f32 %v489, %v883
  %v1027 = vsub.f32 %v494, %v883
  %v1028 = vsub.f32 %v499, %v883
  %v1029 = vsub.f32 %v504, %v883
  %v1030 = vsub.f32 %v509, %v883
  %v1031 = vsub.f32 %v514, %v883
  %v1032 = vsub.f32 %v519, %v883
  %v1033 = vsub.f32 %v524, %v883
  %v1034 = vsub.f32 %v529, %v883
  %v1035 = vsub.f32 %v534, %v883
  %v1036 = vsub.f32 %v539, %v883
  %v1037 = vsub.f32 %v544, %v883
  %v1038 = vsub.f32 %v549, %v883
  %v1039 = vmul.f32 %v1023, %v1023
  %v1040 = vmul.f32 %v1024, %v1024
  %v1041 = vmul.f32 %v1025, %v1025
  %v1042 = vmul.f32 %v1026, %v1026
  %v1043 = vmul.f32 %v1027, %v1027
  %v1044 = vmul.f32 %v1028, %v1028
  %v1045 = vmul.f32 %v1029, %v1029
  %v1046 = vmul.f32 %v1030, %v1030
  %v1047 = vmul.f32 %v1031, %v1031
  %v1048 = vmul.f32 %v1032, %v1032
  %v1049 = vmul.f32 %v1033, %v1033
  %v1050 = vmul.f32 %v1034, %v1034
  %v1051 = vmul.f32 %v1035, %v1035
  %v1052 = vmul.f32 %v1036, %v1036
  %v1053 = vmul.f32 %v1037, %v1037
  %v1054 = vmul.f32 %v1038, %v1038
  %v1055 = vsel %vm731, %v1039, 0.0
  %v1056 = vsel %vm731, %v1040, 0.0
  %v1057 = vadd.f32 %v1055, %v1056
  %v1058 = vsel %vm731, %v1041, 0.0
  %v1059 = vadd.f32 %v1057, %v1058
  %v1060 = vsel %vm731, %v1042, 0.0
  %v1061 = vadd.f32 %v1059, %v1060
  %v1062 = vsel %vm731, %v1043, 0.0
  %v1063 = vadd.f32 %v1061, %v1062
  %v1064 = vsel %vm731, %v1044, 0.0
  %v1065 = vadd.f32 %v1063, %v1064
  %v1066 = vsel %vm731, %v1045, 0.0
  %v1067 = vadd.f32 %v1065, %v1066
  %v1068 = vsel %vm731, %v1046, 0.0
  %v1069 = vadd.f32 %v1067, %v1068
  %v1070 = vsel %vm731, %v1047, 0.0
  %v1071 = vadd.f32 %v1069, %v1070
  %v1072 = vsel %vm731, %v1048, 0.0
  %v1073 = vadd.f32 %v1071, %v1072
  %v1074 = vsel %vm731, %v1049, 0.0
  %v1075 = vadd.f32 %v1073, %v1074
  %v1076 = vsel %vm731, %v1050, 0.0
  %v1077 = vadd.f32 %v1075, %v1076
  %v1078 = vsel %vm731, %v1051, 0.0
  %v1079 = vadd.f32 %v1077, %v1078
  %v1080 = vsel %vm731, %v1052, 0.0
  %v1081 = vadd.f32 %v1079, %v1080
  %v1082 = vsel %vm731, %v1053, 0.0
  %v1083 = vadd.f32 %v1081, %v1082
  %v1084 = vsel %vm731, %v1054, 0.0
  %v1085 = vadd.f32 %v1083, %v1084
  %v1086 = vrot.slane %v1085, 4
  %v1087 = vadd.f32 %v1085, %v1086
  %v1088 = vrot.slane %v1087, 2
  %v1089 = vadd.f32 %v1087, %v1088
  %v1090 = vrot.slane %v1089, 1
  %v1091 = vadd.f32 %v1089, %v1090
  %v1092 = vadd.f32 %v1022, %v1091
  %v1093 = vsub.f32 %v653, %v883
  %v1094 = vsub.f32 %v658, %v883
  %v1095 = vsub.f32 %v663, %v883
  %v1096 = vsub.f32 %v668, %v883
  %v1097 = vsub.f32 %v673, %v883
  %v1098 = vsub.f32 %v678, %v883
  %v1099 = vsub.f32 %v683, %v883
  %v1100 = vsub.f32 %v688, %v883
  %v1101 = vsub.f32 %v693, %v883
  %v1102 = vsub.f32 %v698, %v883
  %v1103 = vsub.f32 %v703, %v883
  %v1104 = vsub.f32 %v708, %v883
  %v1105 = vsub.f32 %v713, %v883
  %v1106 = vsub.f32 %v718, %v883
  %v1107 = vsub.f32 %v723, %v883
  %v1108 = vsub.f32 %v728, %v883
  %v1109 = vmul.f32 %v1093, %v1093
  %v1110 = vmul.f32 %v1094, %v1094
  %v1111 = vmul.f32 %v1095, %v1095
  %v1112 = vmul.f32 %v1096, %v1096
  %v1113 = vmul.f32 %v1097, %v1097
  %v1114 = vmul.f32 %v1098, %v1098
  %v1115 = vmul.f32 %v1099, %v1099
  %v1116 = vmul.f32 %v1100, %v1100
  %v1117 = vmul.f32 %v1101, %v1101
  %v1118 = vmul.f32 %v1102, %v1102
  %v1119 = vmul.f32 %v1103, %v1103
  %v1120 = vmul.f32 %v1104, %v1104
  %v1121 = vmul.f32 %v1105, %v1105
  %v1122 = vmul.f32 %v1106, %v1106
  %v1123 = vmul.f32 %v1107, %v1107
  %v1124 = vmul.f32 %v1108, %v1108
  %v1125 = vsel %vm731, %v1109, 0.0
  %v1126 = vsel %vm731, %v1110, 0.0
  %v1127 = vadd.f32 %v1125, %v1126
  %v1128 = vsel %vm731, %v1111, 0.0
  %v1129 = vadd.f32 %v1127, %v1128
  %v1130 = vsel %vm731, %v1112, 0.0
  %v1131 = vadd.f32 %v1129, %v1130
  %v1132 = vsel %vm731, %v1113, 0.0
  %v1133 = vadd.f32 %v1131, %v1132
  %v1134 = vsel %vm731, %v1114, 0.0
  %v1135 = vadd.f32 %v1133, %v1134
  %v1136 = vsel %vm731, %v1115, 0.0
  %v1137 = vadd.f32 %v1135, %v1136
  %v1138 = vsel %vm731, %v1116, 0.0
  %v1139 = vadd.f32 %v1137, %v1138
  %v1140 = vsel %vm731, %v1117, 0.0
  %v1141 = vadd.f32 %v1139, %v1140
  %v1142 = vsel %vm731, %v1118, 0.0
  %v1143 = vadd.f32 %v1141, %v1142
  %v1144 = vsel %vm731, %v1119, 0.0
  %v1145 = vadd.f32 %v1143, %v1144
  %v1146 = vsel %vm731, %v1120, 0.0
  %v1147 = vadd.f32 %v1145, %v1146
  %v1148 = vsel %vm731, %v1121, 0.0
  %v1149 = vadd.f32 %v1147, %v1148
  %v1150 = vsel %vm731, %v1122, 0.0
  %v1151 = vadd.f32 %v1149, %v1150
  %v1152 = vsel %vm731, %v1123, 0.0
  %v1153 = vadd.f32 %v1151, %v1152
  %v1154 = vsel %vm731, %v1124, 0.0
  %v1155 = vadd.f32 %v1153, %v1154
  %v1156 = vrot.slane %v1155, 4
  %v1157 = vadd.f32 %v1155, %v1156
  %v1158 = vrot.slane %v1157, 2
  %v1159 = vadd.f32 %v1157, %v1158
  %v1160 = vrot.slane %v1159, 1
  %v1161 = vadd.f32 %v1159, %v1160
  %v1162 = vadd.f32 %v1092, %v1161
  %v1163 = vmul.f32 %v1162, 0.001953125
  %v1164 = vld [vmem:[%s2] sm:$0x1]
  %v1165 = vadd.f32 %v1163, 1e-05
  %v1166 = vrsqrt.pop %v1165
  %v1167 = vmul.f32 %v1164, %v1166
  %v1168 = vld [vmem:[%s3] sm:$0x1]
  %v1169 = vmul.f32 %v883, %v1167
  %v1170 = vsub.f32 %v1168, %v1169
  %v1172 = vlaneseq
  %v1173 = vshrl.u32 %v1172, 7
  %v1174 = vsub.s32 0, %v1173
  %v1175 = vrot.slane %v1167, %v1174
  %v1177 = vmul.f32 %v116, %v1175
  %v1178 = vmul.f32 %v121, %v1175
  %v1179 = vmul.f32 %v126, %v1175
  %v1180 = vmul.f32 %v131, %v1175
  %v1181 = vmul.f32 %v136, %v1175
  %v1182 = vmul.f32 %v141, %v1175
  %v1183 = vmul.f32 %v146, %v1175
  %v1184 = vmul.f32 %v151, %v1175
  %v1185 = vmul.f32 %v156, %v1175
  %v1186 = vmul.f32 %v161, %v1175
  %v1187 = vmul.f32 %v166, %v1175
  %v1188 = vmul.f32 %v171, %v1175
  %v1189 = vmul.f32 %v176, %v1175
  %v1190 = vmul.f32 %v181, %v1175
  %v1191 = vmul.f32 %v186, %v1175
  %v1192 = vmul.f32 %v191, %v1175
  %v1194 = vlaneseq
  %v1195 = vshrl.u32 %v1194, 7
  %v1196 = vsub.s32 0, %v1195
  %v1197 = vrot.slane %v1170, %v1196
  %v1199 = vadd.f32 %v1177, %v1197
  %v1200 = vadd.f32 %v1178, %v1197
  %v1201 = vadd.f32 %v1179, %v1197
  %v1202 = vadd.f32 %v1180, %v1197
  %v1203 = vadd.f32 %v1181, %v1197
  %v1204 = vadd.f32 %v1182, %v1197
  %v1205 = vadd.f32 %v1183, %v1197
  %v1206 = vadd.f32 %v1184, %v1197
  %v1207 = vadd.f32 %v1185, %v1197
  %v1208 = vadd.f32 %v1186, %v1197
  %v1209 = vadd.f32 %v1187, %v1197
  %v1210 = vadd.f32 %v1188, %v1197
  %v1211 = vadd.f32 %v1189, %v1197
  %v1212 = vadd.f32 %v1190, %v1197
  %v1213 = vadd.f32 %v1191, %v1197
  %v1214 = vadd.f32 %v1192, %v1197
  %vm1215 = vcmp.ge.f32.partialorder %v1199, 0.0
  %vm1216 = vcmp.ge.f32.partialorder %v1200, 0.0
  %vm1217 = vcmp.ge.f32.partialorder %v1201, 0.0
  %vm1218 = vcmp.ge.f32.partialorder %v1202, 0.0
  %vm1219 = vcmp.ge.f32.partialorder %v1203, 0.0
  %vm1220 = vcmp.ge.f32.partialorder %v1204, 0.0
  %vm1221 = vcmp.ge.f32.partialorder %v1205, 0.0
  %vm1222 = vcmp.ge.f32.partialorder %v1206, 0.0
  %vm1223 = vcmp.ge.f32.partialorder %v1207, 0.0
  %vm1224 = vcmp.ge.f32.partialorder %v1208, 0.0
  %vm1225 = vcmp.ge.f32.partialorder %v1209, 0.0
  %vm1226 = vcmp.ge.f32.partialorder %v1210, 0.0
  %vm1227 = vcmp.ge.f32.partialorder %v1211, 0.0
  %vm1228 = vcmp.ge.f32.partialorder %v1212, 0.0
  %vm1229 = vcmp.ge.f32.partialorder %v1213, 0.0
  %vm1230 = vcmp.ge.f32.partialorder %v1214, 0.0
  %v1231 = vmul.f32 %v1199, 0.0
  %v1232 = vmul.f32 %v1200, 0.0
  %v1233 = vmul.f32 %v1201, 0.0
  %v1234 = vmul.f32 %v1202, 0.0
  %v1235 = vmul.f32 %v1203, 0.0
  %v1236 = vmul.f32 %v1204, 0.0
  %v1237 = vmul.f32 %v1205, 0.0
  %v1238 = vmul.f32 %v1206, 0.0
  %v1239 = vmul.f32 %v1207, 0.0
  %v1240 = vmul.f32 %v1208, 0.0
  %v1241 = vmul.f32 %v1209, 0.0
  %v1242 = vmul.f32 %v1210, 0.0
  %v1243 = vmul.f32 %v1211, 0.0
  %v1244 = vmul.f32 %v1212, 0.0
  %v1245 = vmul.f32 %v1213, 0.0
  %v1246 = vmul.f32 %v1214, 0.0
  %v1247 = vsel %vm1215, %v1199, %v1231
  %v1248 = vsel %vm1216, %v1200, %v1232
  %v1249 = vsel %vm1217, %v1201, %v1233
  %v1250 = vsel %vm1218, %v1202, %v1234
  %v1251 = vsel %vm1219, %v1203, %v1235
  %v1252 = vsel %vm1220, %v1204, %v1236
  %v1253 = vsel %vm1221, %v1205, %v1237
  %v1254 = vsel %vm1222, %v1206, %v1238
  %v1255 = vsel %vm1223, %v1207, %v1239
  %v1256 = vsel %vm1224, %v1208, %v1240
  %v1257 = vsel %vm1225, %v1209, %v1241
  %v1258 = vsel %vm1226, %v1210, %v1242
  %v1259 = vsel %vm1227, %v1211, %v1243
  %v1260 = vsel %vm1228, %v1212, %v1244
  %v1261 = vsel %vm1229, %v1213, %v1245
  %v1262 = vsel %vm1230, %v1214, %v1246
  %1263 = vst.msk [vmem:[%s4] sm:$0xff] %vm731, %v1247
  %1264 = vst.msk [vmem:[%s4 + $0x8] sm:$0xff] %vm731, %v1248
  %1265 = vst.msk [vmem:[%s4 + $0x10] sm:$0xff] %vm731, %v1249
  %1266 = vst.msk [vmem:[%s4 + $0x18] sm:$0xff] %vm731, %v1250
  %1267 = vst.msk [vmem:[%s4 + $0x20] sm:$0xff] %vm731, %v1251
  %1268 = vst.msk [vmem:[%s4 + $0x28] sm:$0xff] %vm731, %v1252
  %1269 = vst.msk [vmem:[%s4 + $0x30] sm:$0xff] %vm731, %v1253
  %1270 = vst.msk [vmem:[%s4 + $0x38] sm:$0xff] %vm731, %v1254
  %1271 = vst.msk [vmem:[%s4 + $0x40] sm:$0xff] %vm731, %v1255
  %1272 = vst.msk [vmem:[%s4 + $0x48] sm:$0xff] %vm731, %v1256
  %1273 = vst.msk [vmem:[%s4 + $0x50] sm:$0xff] %vm731, %v1257
  %1274 = vst.msk [vmem:[%s4 + $0x58] sm:$0xff] %vm731, %v1258
  %1275 = vst.msk [vmem:[%s4 + $0x60] sm:$0xff] %vm731, %v1259
  %1276 = vst.msk [vmem:[%s4 + $0x68] sm:$0xff] %vm731, %v1260
  %1277 = vst.msk [vmem:[%s4 + $0x70] sm:$0xff] %vm731, %v1261
  %1278 = vst.msk [vmem:[%s4 + $0x78] sm:$0xff] %vm731, %v1262
  %v1279 = vmul.f32 %v295, %v1175
  %v1280 = vmul.f32 %v300, %v1175
  %v1281 = vmul.f32 %v305, %v1175
  %v1282 = vmul.f32 %v310, %v1175
  %v1283 = vmul.f32 %v315, %v1175
  %v1284 = vmul.f32 %v320, %v1175
  %v1285 = vmul.f32 %v325, %v1175
  %v1286 = vmul.f32 %v330, %v1175
  %v1287 = vmul.f32 %v335, %v1175
  %v1288 = vmul.f32 %v340, %v1175
  %v1289 = vmul.f32 %v345, %v1175
  %v1290 = vmul.f32 %v350, %v1175
  %v1291 = vmul.f32 %v355, %v1175
  %v1292 = vmul.f32 %v360, %v1175
  %v1293 = vmul.f32 %v365, %v1175
  %v1294 = vmul.f32 %v370, %v1175
  %v1295 = vadd.f32 %v1279, %v1197
  %v1296 = vadd.f32 %v1280, %v1197
  %v1297 = vadd.f32 %v1281, %v1197
  %v1298 = vadd.f32 %v1282, %v1197
  %v1299 = vadd.f32 %v1283, %v1197
  %v1300 = vadd.f32 %v1284, %v1197
  %v1301 = vadd.f32 %v1285, %v1197
  %v1302 = vadd.f32 %v1286, %v1197
  %v1303 = vadd.f32 %v1287, %v1197
  %v1304 = vadd.f32 %v1288, %v1197
  %v1305 = vadd.f32 %v1289, %v1197
  %v1306 = vadd.f32 %v1290, %v1197
  %v1307 = vadd.f32 %v1291, %v1197
  %v1308 = vadd.f32 %v1292, %v1197
  %v1309 = vadd.f32 %v1293, %v1197
  %v1310 = vadd.f32 %v1294, %v1197
  %vm1311 = vcmp.ge.f32.partialorder %v1295, 0.0
  %vm1312 = vcmp.ge.f32.partialorder %v1296, 0.0
  %vm1313 = vcmp.ge.f32.partialorder %v1297, 0.0
  %vm1314 = vcmp.ge.f32.partialorder %v1298, 0.0
  %vm1315 = vcmp.ge.f32.partialorder %v1299, 0.0
  %vm1316 = vcmp.ge.f32.partialorder %v1300, 0.0
  %vm1317 = vcmp.ge.f32.partialorder %v1301, 0.0
  %vm1318 = vcmp.ge.f32.partialorder %v1302, 0.0
  %vm1319 = vcmp.ge.f32.partialorder %v1303, 0.0
  %vm1320 = vcmp.ge.f32.partialorder %v1304, 0.0
  %vm1321 = vcmp.ge.f32.partialorder %v1305, 0.0
  %vm1322 = vcmp.ge.f32.partialorder %v1306, 0.0
  %vm1323 = vcmp.ge.f32.partialorder %v1307, 0.0
  %vm1324 = vcmp.ge.f32.partialorder %v1308, 0.0
  %vm1325 = vcmp.ge.f32.partialorder %v1309, 0.0
  %vm1326 = vcmp.ge.f32.partialorder %v1310, 0.0
  %v1327 = vmul.f32 %v1295, 0.0
  %v1328 = vmul.f32 %v1296, 0.0
  %v1329 = vmul.f32 %v1297, 0.0
  %v1330 = vmul.f32 %v1298, 0.0
  %v1331 = vmul.f32 %v1299, 0.0
  %v1332 = vmul.f32 %v1300, 0.0
  %v1333 = vmul.f32 %v1301, 0.0
  %v1334 = vmul.f32 %v1302, 0.0
  %v1335 = vmul.f32 %v1303, 0.0
  %v1336 = vmul.f32 %v1304, 0.0
  %v1337 = vmul.f32 %v1305, 0.0
  %v1338 = vmul.f32 %v1306, 0.0
  %v1339 = vmul.f32 %v1307, 0.0
  %v1340 = vmul.f32 %v1308, 0.0
  %v1341 = vmul.f32 %v1309, 0.0
  %v1342 = vmul.f32 %v1310, 0.0
  %v1343 = vsel %vm1311, %v1295, %v1327
  %v1344 = vsel %vm1312, %v1296, %v1328
  %v1345 = vsel %vm1313, %v1297, %v1329
  %v1346 = vsel %vm1314, %v1298, %v1330
  %v1347 = vsel %vm1315, %v1299, %v1331
  %v1348 = vsel %vm1316, %v1300, %v1332
  %v1349 = vsel %vm1317, %v1301, %v1333
  %v1350 = vsel %vm1318, %v1302, %v1334
  %v1351 = vsel %vm1319, %v1303, %v1335
  %v1352 = vsel %vm1320, %v1304, %v1336
  %v1353 = vsel %vm1321, %v1305, %v1337
  %v1354 = vsel %vm1322, %v1306, %v1338
  %v1355 = vsel %vm1323, %v1307, %v1339
  %v1356 = vsel %vm1324, %v1308, %v1340
  %v1357 = vsel %vm1325, %v1309, %v1341
  %v1358 = vsel %vm1326, %v1310, %v1342
  %s1359 = scalar_lea.vmem %s4, 128
  %1360 = vst.msk [vmem:[%s1359] sm:$0xff] %vm731, %v1343
  %1361 = vst.msk [vmem:[%s1359 + $0x8] sm:$0xff] %vm731, %v1344
  %1362 = vst.msk [vmem:[%s1359 + $0x10] sm:$0xff] %vm731, %v1345
  %1363 = vst.msk [vmem:[%s1359 + $0x18] sm:$0xff] %vm731, %v1346
  %1364 = vst.msk [vmem:[%s1359 + $0x20] sm:$0xff] %vm731, %v1347
  %1365 = vst.msk [vmem:[%s1359 + $0x28] sm:$0xff] %vm731, %v1348
  %1366 = vst.msk [vmem:[%s1359 + $0x30] sm:$0xff] %vm731, %v1349
  %1367 = vst.msk [vmem:[%s1359 + $0x38] sm:$0xff] %vm731, %v1350
  %1368 = vst.msk [vmem:[%s1359 + $0x40] sm:$0xff] %vm731, %v1351
  %1369 = vst.msk [vmem:[%s1359 + $0x48] sm:$0xff] %vm731, %v1352
  %1370 = vst.msk [vmem:[%s1359 + $0x50] sm:$0xff] %vm731, %v1353
  %1371 = vst.msk [vmem:[%s1359 + $0x58] sm:$0xff] %vm731, %v1354
  %1372 = vst.msk [vmem:[%s1359 + $0x60] sm:$0xff] %vm731, %v1355
  %1373 = vst.msk [vmem:[%s1359 + $0x68] sm:$0xff] %vm731, %v1356
  %1374 = vst.msk [vmem:[%s1359 + $0x70] sm:$0xff] %vm731, %v1357
  %1375 = vst.msk [vmem:[%s1359 + $0x78] sm:$0xff] %vm731, %v1358
  %v1376 = vmul.f32 %v474, %v1175
  %v1377 = vmul.f32 %v479, %v1175
  %v1378 = vmul.f32 %v484, %v1175
  %v1379 = vmul.f32 %v489, %v1175
  %v1380 = vmul.f32 %v494, %v1175
  %v1381 = vmul.f32 %v499, %v1175
  %v1382 = vmul.f32 %v504, %v1175
  %v1383 = vmul.f32 %v509, %v1175
  %v1384 = vmul.f32 %v514, %v1175
  %v1385 = vmul.f32 %v519, %v1175
  %v1386 = vmul.f32 %v524, %v1175
  %v1387 = vmul.f32 %v529, %v1175
  %v1388 = vmul.f32 %v534, %v1175
  %v1389 = vmul.f32 %v539, %v1175
  %v1390 = vmul.f32 %v544, %v1175
  %v1391 = vmul.f32 %v549, %v1175
  %v1392 = vadd.f32 %v1376, %v1197
  %v1393 = vadd.f32 %v1377, %v1197
  %v1394 = vadd.f32 %v1378, %v1197
  %v1395 = vadd.f32 %v1379, %v1197
  %v1396 = vadd.f32 %v1380, %v1197
  %v1397 = vadd.f32 %v1381, %v1197
  %v1398 = vadd.f32 %v1382, %v1197
  %v1399 = vadd.f32 %v1383, %v1197
  %v1400 = vadd.f32 %v1384, %v1197
  %v1401 = vadd.f32 %v1385, %v1197
  %v1402 = vadd.f32 %v1386, %v1197
  %v1403 = vadd.f32 %v1387, %v1197
  %v1404 = vadd.f32 %v1388, %v1197
  %v1405 = vadd.f32 %v1389, %v1197
  %v1406 = vadd.f32 %v1390, %v1197
  %v1407 = vadd.f32 %v1391, %v1197
  %vm1408 = vcmp.ge.f32.partialorder %v1392, 0.0
  %vm1409 = vcmp.ge.f32.partialorder %v1393, 0.0
  %vm1410 = vcmp.ge.f32.partialorder %v1394, 0.0
  %vm1411 = vcmp.ge.f32.partialorder %v1395, 0.0
  %vm1412 = vcmp.ge.f32.partialorder %v1396, 0.0
  %vm1413 = vcmp.ge.f32.partialorder %v1397, 0.0
  %vm1414 = vcmp.ge.f32.partialorder %v1398, 0.0
  %vm1415 = vcmp.ge.f32.partialorder %v1399, 0.0
  %vm1416 = vcmp.ge.f32.partialorder %v1400, 0.0
  %vm1417 = vcmp.ge.f32.partialorder %v1401, 0.0
  %vm1418 = vcmp.ge.f32.partialorder %v1402, 0.0
  %vm1419 = vcmp.ge.f32.partialorder %v1403, 0.0
  %vm1420 = vcmp.ge.f32.partialorder %v1404, 0.0
  %vm1421 = vcmp.ge.f32.partialorder %v1405, 0.0
  %vm1422 = vcmp.ge.f32.partialorder %v1406, 0.0
  %vm1423 = vcmp.ge.f32.partialorder %v1407, 0.0
  %v1424 = vmul.f32 %v1392, 0.0
  %v1425 = vmul.f32 %v1393, 0.0
  %v1426 = vmul.f32 %v1394, 0.0
  %v1427 = vmul.f32 %v1395, 0.0
  %v1428 = vmul.f32 %v1396, 0.0
  %v1429 = vmul.f32 %v1397, 0.0
  %v1430 = vmul.f32 %v1398, 0.0
  %v1431 = vmul.f32 %v1399, 0.0
  %v1432 = vmul.f32 %v1400, 0.0
  %v1433 = vmul.f32 %v1401, 0.0
  %v1434 = vmul.f32 %v1402, 0.0
  %v1435 = vmul.f32 %v1403, 0.0
  %v1436 = vmul.f32 %v1404, 0.0
  %v1437 = vmul.f32 %v1405, 0.0
  %v1438 = vmul.f32 %v1406, 0.0
  %v1439 = vmul.f32 %v1407, 0.0
  %v1440 = vsel %vm1408, %v1392, %v1424
  %v1441 = vsel %vm1409, %v1393, %v1425
  %v1442 = vsel %vm1410, %v1394, %v1426
  %v1443 = vsel %vm1411, %v1395, %v1427
  %v1444 = vsel %vm1412, %v1396, %v1428
  %v1445 = vsel %vm1413, %v1397, %v1429
  %v1446 = vsel %vm1414, %v1398, %v1430
  %v1447 = vsel %vm1415, %v1399, %v1431
  %v1448 = vsel %vm1416, %v1400, %v1432
  %v1449 = vsel %vm1417, %v1401, %v1433
  %v1450 = vsel %vm1418, %v1402, %v1434
  %v1451 = vsel %vm1419, %v1403, %v1435
  %v1452 = vsel %vm1420, %v1404, %v1436
  %v1453 = vsel %vm1421, %v1405, %v1437
  %v1454 = vsel %vm1422, %v1406, %v1438
  %v1455 = vsel %vm1423, %v1407, %v1439
  %s1456 = scalar_lea.vmem %s4, 256
  %1457 = vst.msk [vmem:[%s1456] sm:$0xff] %vm731, %v1440
  %1458 = vst.msk [vmem:[%s1456 + $0x8] sm:$0xff] %vm731, %v1441
  %1459 = vst.msk [vmem:[%s1456 + $0x10] sm:$0xff] %vm731, %v1442
  %1460 = vst.msk [vmem:[%s1456 + $0x18] sm:$0xff] %vm731, %v1443
  %1461 = vst.msk [vmem:[%s1456 + $0x20] sm:$0xff] %vm731, %v1444
  %1462 = vst.msk [vmem:[%s1456 + $0x28] sm:$0xff] %vm731, %v1445
  %1463 = vst.msk [vmem:[%s1456 + $0x30] sm:$0xff] %vm731, %v1446
  %1464 = vst.msk [vmem:[%s1456 + $0x38] sm:$0xff] %vm731, %v1447
  %1465 = vst.msk [vmem:[%s1456 + $0x40] sm:$0xff] %vm731, %v1448
  %1466 = vst.msk [vmem:[%s1456 + $0x48] sm:$0xff] %vm731, %v1449
  %1467 = vst.msk [vmem:[%s1456 + $0x50] sm:$0xff] %vm731, %v1450
  %1468 = vst.msk [vmem:[%s1456 + $0x58] sm:$0xff] %vm731, %v1451
  %1469 = vst.msk [vmem:[%s1456 + $0x60] sm:$0xff] %vm731, %v1452
  %1470 = vst.msk [vmem:[%s1456 + $0x68] sm:$0xff] %vm731, %v1453
  %1471 = vst.msk [vmem:[%s1456 + $0x70] sm:$0xff] %vm731, %v1454
  %1472 = vst.msk [vmem:[%s1456 + $0x78] sm:$0xff] %vm731, %v1455
  %v1473 = vmul.f32 %v653, %v1175
  %v1474 = vmul.f32 %v658, %v1175
  %v1475 = vmul.f32 %v663, %v1175
  %v1476 = vmul.f32 %v668, %v1175
  %v1477 = vmul.f32 %v673, %v1175
  %v1478 = vmul.f32 %v678, %v1175
  %v1479 = vmul.f32 %v683, %v1175
  %v1480 = vmul.f32 %v688, %v1175
  %v1481 = vmul.f32 %v693, %v1175
  %v1482 = vmul.f32 %v698, %v1175
  %v1483 = vmul.f32 %v703, %v1175
  %v1484 = vmul.f32 %v708, %v1175
  %v1485 = vmul.f32 %v713, %v1175
  %v1486 = vmul.f32 %v718, %v1175
  %v1487 = vmul.f32 %v723, %v1175
  %v1488 = vmul.f32 %v728, %v1175
  %v1489 = vadd.f32 %v1473, %v1197
  %v1490 = vadd.f32 %v1474, %v1197
  %v1491 = vadd.f32 %v1475, %v1197
  %v1492 = vadd.f32 %v1476, %v1197
  %v1493 = vadd.f32 %v1477, %v1197
  %v1494 = vadd.f32 %v1478, %v1197
  %v1495 = vadd.f32 %v1479, %v1197
  %v1496 = vadd.f32 %v1480, %v1197
  %v1497 = vadd.f32 %v1481, %v1197
  %v1498 = vadd.f32 %v1482, %v1197
  %v1499 = vadd.f32 %v1483, %v1197
  %v1500 = vadd.f32 %v1484, %v1197
  %v1501 = vadd.f32 %v1485, %v1197
  %v1502 = vadd.f32 %v1486, %v1197
  %v1503 = vadd.f32 %v1487, %v1197
  %v1504 = vadd.f32 %v1488, %v1197
  %vm1505 = vcmp.ge.f32.partialorder %v1489, 0.0
  %vm1506 = vcmp.ge.f32.partialorder %v1490, 0.0
  %vm1507 = vcmp.ge.f32.partialorder %v1491, 0.0
  %vm1508 = vcmp.ge.f32.partialorder %v1492, 0.0
  %vm1509 = vcmp.ge.f32.partialorder %v1493, 0.0
  %vm1510 = vcmp.ge.f32.partialorder %v1494, 0.0
  %vm1511 = vcmp.ge.f32.partialorder %v1495, 0.0
  %vm1512 = vcmp.ge.f32.partialorder %v1496, 0.0
  %vm1513 = vcmp.ge.f32.partialorder %v1497, 0.0
  %vm1514 = vcmp.ge.f32.partialorder %v1498, 0.0
  %vm1515 = vcmp.ge.f32.partialorder %v1499, 0.0
  %vm1516 = vcmp.ge.f32.partialorder %v1500, 0.0
  %vm1517 = vcmp.ge.f32.partialorder %v1501, 0.0
  %vm1518 = vcmp.ge.f32.partialorder %v1502, 0.0
  %vm1519 = vcmp.ge.f32.partialorder %v1503, 0.0
  %vm1520 = vcmp.ge.f32.partialorder %v1504, 0.0
  %v1521 = vmul.f32 %v1489, 0.0
  %v1522 = vmul.f32 %v1490, 0.0
  %v1523 = vmul.f32 %v1491, 0.0
  %v1524 = vmul.f32 %v1492, 0.0
  %v1525 = vmul.f32 %v1493, 0.0
  %v1526 = vmul.f32 %v1494, 0.0
  %v1527 = vmul.f32 %v1495, 0.0
  %v1528 = vmul.f32 %v1496, 0.0
  %v1529 = vmul.f32 %v1497, 0.0
  %v1530 = vmul.f32 %v1498, 0.0
  %v1531 = vmul.f32 %v1499, 0.0
  %v1532 = vmul.f32 %v1500, 0.0
  %v1533 = vmul.f32 %v1501, 0.0
  %v1534 = vmul.f32 %v1502, 0.0
  %v1535 = vmul.f32 %v1503, 0.0
  %v1536 = vmul.f32 %v1504, 0.0
  %v1537 = vsel %vm1505, %v1489, %v1521
  %v1538 = vsel %vm1506, %v1490, %v1522
  %v1539 = vsel %vm1507, %v1491, %v1523
  %v1540 = vsel %vm1508, %v1492, %v1524
  %v1541 = vsel %vm1509, %v1493, %v1525
  %v1542 = vsel %vm1510, %v1494, %v1526
  %v1543 = vsel %vm1511, %v1495, %v1527
  %v1544 = vsel %vm1512, %v1496, %v1528
  %v1545 = vsel %vm1513, %v1497, %v1529
  %v1546 = vsel %vm1514, %v1498, %v1530
  %v1547 = vsel %vm1515, %v1499, %v1531
  %v1548 = vsel %vm1516, %v1500, %v1532
  %v1549 = vsel %vm1517, %v1501, %v1533
  %v1550 = vsel %vm1518, %v1502, %v1534
  %v1551 = vsel %vm1519, %v1503, %v1535
  %v1552 = vsel %vm1520, %v1504, %v1536
  %s1553 = scalar_lea.vmem %s4, 384
  %1554 = vst.msk [vmem:[%s1553] sm:$0xff] %vm731, %v1537
  %1555 = vst.msk [vmem:[%s1553 + $0x8] sm:$0xff] %vm731, %v1538
  %1556 = vst.msk [vmem:[%s1553 + $0x10] sm:$0xff] %vm731, %v1539
  %1557 = vst.msk [vmem:[%s1553 + $0x18] sm:$0xff] %vm731, %v1540
  %1558 = vst.msk [vmem:[%s1553 + $0x20] sm:$0xff] %vm731, %v1541
  %1559 = vst.msk [vmem:[%s1553 + $0x28] sm:$0xff] %vm731, %v1542
  %1560 = vst.msk [vmem:[%s1553 + $0x30] sm:$0xff] %vm731, %v1543
  %1561 = vst.msk [vmem:[%s1553 + $0x38] sm:$0xff] %vm731, %v1544
  %1562 = vst.msk [vmem:[%s1553 + $0x40] sm:$0xff] %vm731, %v1545
  %1563 = vst.msk [vmem:[%s1553 + $0x48] sm:$0xff] %vm731, %v1546
  %1564 = vst.msk [vmem:[%s1553 + $0x50] sm:$0xff] %vm731, %v1547
  %1565 = vst.msk [vmem:[%s1553 + $0x58] sm:$0xff] %vm731, %v1548
  %1566 = vst.msk [vmem:[%s1553 + $0x60] sm:$0xff] %vm731, %v1549
  %1567 = vst.msk [vmem:[%s1553 + $0x68] sm:$0xff] %vm731, %v1550
  %1568 = vst.msk [vmem:[%s1553 + $0x70] sm:$0xff] %vm731, %v1551
  %1569 = vst.msk [vmem:[%s1553 + $0x78] sm:$0xff] %vm731, %v1552
  // Predicated region
  $region18: #{unet_forward.15} parent=0 // pred_check
    _
  $region19: #{unet_forward.15} parent=0 // pred_check_branch
    %1571 = sbr.rel (0) target = $region21
  $region20: #{unet_forward.15} parent=0 // pred_region
    _
  $region21: #{unet_forward.15} parent=0 // pred_fallthru
    _
  // Predicated region
  $region22: #{unet_forward.15} parent=0 // pred_check
    _
  $region23: #{unet_forward.15} parent=0 // pred_check_branch
    %1573 = sbr.rel (0) target = $region25
  $region24: #{unet_forward.15} parent=0 // pred_region
    _
  $region25: #{unet_forward.15} parent=0 // pred_fallthru
    _

// kernel: unet_forward.17
$region0: #{unet_forward.17}
  #allocation0 [shape = 'u32[]', space=smem, size = 0x4, offset = 0x4, fixed_abs, tag = 'smem constant byte address 0x4 - core index']
  #allocation1 [shape = 'u32[144,128]{1,0:T(1,128)}', space=vmem, size = 0x12000, scoped, tag = 'internal scratch']
  %s0 = inlined_call_operand.vmem [shape: f32[2,3,16,16], index: 0, kind: input, shape index: {}]
  %s1 = inlined_call_operand.vmem [shape: f32[256,16], index: 1, kind: input, shape index: {}]
  %s2 = inlined_call_operand.hbm [shape: f32[16,256], index: 2, kind: input, shape index: {}]
  %s3 = inlined_call_operand.hbm [shape: f32[2,3,256,256], index: 3, kind: output, shape index: {}]
  %s4 = sld [smem:[#allocation0]]
  $region49: #{unet_forward.17} parent=0
    _
  %s6 = ssub.s32 1, %s4
  %s7 = scalar_select 0, %s6, %s4
  $region1: #{unet_forward.17} parent=0
    #allocation2 [shape = 'u8[16384]{0}', space=vmem, size = 0x4000, scoped, tag = 'input window, operand 2, single buffered']
    #allocation3 [shape = 's32[2]{0}', space=sflag, size = 0x8, scoped, tag = 'scoped memory for unet_forward.17']
    #allocation4 [shape = 's32[2]{0}', space=sflag, size = 0x8, scoped, tag = 'scoped memory for unet_forward.17']
    #allocation5 [shape = 'u8[1572864]{0}', space=vmem, size = 0x180000, scoped, tag = 'output window, operand 0']
    %8 = vsyncpa [#allocation3], 0
    %9 = vsyncpa [#allocation4], 0
    %s10 = scalar_lea.sflag [#allocation4], 1
    %11 = vsyncpa %s10, 0
    loop: start=0, step=1, limit=4
    $region2: #{unet_forward.17} parent=1 // loop_pre_header
      _
    $region3: #{unet_forward.17} parent=1 // loop_header
      %s13 = sphi 0, %s17
      %p14 = scmp.ge.s32.totalorder %s13, 4
      %s23 = sphi 0, %s25
      %s26 = sphi 0, %s23
      %s27 = sphi 0, %s26
      %s43 = sphi 0, %s27
      %s47 = sphi 0, %s47
      %s49 = sphi 0, %s47
      %s50 = sphi 0, %s49
      %s64 = sphi 0, %s50
      %s68 = sphi 0, %s68
      %s70 = sphi 0, %s68
      %s71 = sphi 0, %s70
      %s85 = sphi 0, %s71
      %s91 = sphi 0, %s93
      %s94 = sphi 0, %s91
      %s95 = sphi 0, %s94
      %s111 = sphi 0, %s95
    $region4: #{unet_forward.17} parent=1 // loop_header_branch
      %16 = sbr.rel (%p14) target = $region8
    $region5: #{unet_forward.17} parent=1 // loop_body
      %s18 = ssub.s32 %s13, 1
      %s19 = ssub.s32 %s13, 2
      %s20 = sadd.s32 %s13, 1
      %s21 = ssub.s32 %s13, %s20
      %p22 = scmp.eq.s32.totalorder %s21, 0
      %s24 = sadd.s32 %s23, 1
      %s25 = scalar_select %p22, %s23, %s24
      %p28 = pneg %p22
      %p29 = scmp.eq.s32.totalorder %s13, 1
      %p30 = por %p28, %p29
      %p31 = scmp.ne.s32.totalorder %s23, %s26
      %p32 = scmp.eq.s32.totalorder %s13, 0
      %p33 = por %p31, %p32
      %p34 = scmp.ne.s32.totalorder %s23, %s26
      %p35 = scmp.eq.s32.totalorder %s18, 1
      %p36 = por %p34, %p35
      %p37 = scmp.ne.s32.totalorder %s26, %s27
      %p38 = scmp.eq.s32.totalorder %s18, 0
      %p39 = por %p37, %p38
      %p40 = scmp.ne.s32.totalorder %s26, %s27
      %p41 = scmp.eq.s32.totalorder %s19, 1
      %p42 = por %p40, %p41
      %p44 = scmp.ne.s32.totalorder %s27, %s43
      %p45 = scmp.eq.s32.totalorder %s19, 0
      %p46 = por %p44, %p45
      %s48 = sadd.s32 %s47, 1
      %p51 = scmp.eq.s32.totalorder %s13, 1
      %p52 = scmp.ne.s32.totalorder %s47, %s49
      %p53 = scmp.eq.s32.totalorder %s13, 0
      %p54 = por %p52, %p53
      %p55 = scmp.ne.s32.totalorder %s47, %s49
      %p56 = scmp.eq.s32.totalorder %s18, 1
      %p57 = por %p55, %p56
      %p58 = scmp.ne.s32.totalorder %s49, %s50
      %p59 = scmp.eq.s32.totalorder %s18, 0
      %p60 = por %p58, %p59
      %p61 = scmp.ne.s32.totalorder %s49, %s50
      %p62 = scmp.eq.s32.totalorder %s19, 1
      %p63 = por %p61, %p62
      %p65 = scmp.ne.s32.totalorder %s50, %s64
      %p66 = scmp.eq.s32.totalorder %s19, 0
      %p67 = por %p65, %p66
      %s69 = sadd.s32 %s68, 1
      %p72 = scmp.eq.s32.totalorder %s13, 1
      %p73 = scmp.ne.s32.totalorder %s68, %s70
      %p74 = scmp.eq.s32.totalorder %s13, 0
      %p75 = por %p73, %p74
      %p76 = scmp.ne.s32.totalorder %s68, %s70
      %p77 = scmp.eq.s32.totalorder %s18, 1
      %p78 = por %p76, %p77
      %p79 = scmp.ne.s32.totalorder %s70, %s71
      %p80 = scmp.eq.s32.totalorder %s18, 0
      %p81 = por %p79, %p80
      %p82 = scmp.ne.s32.totalorder %s70, %s71
      %p83 = scmp.eq.s32.totalorder %s19, 1
      %p84 = por %p82, %p83
      %p86 = scmp.ne.s32.totalorder %s71, %s85
      %p87 = scmp.eq.s32.totalorder %s19, 0
      %p88 = por %p86, %p87
      %s89 = ssub.s32 %s13, %s20
      %p90 = scmp.eq.s32.totalorder %s89, 0
      %s92 = sadd.s32 %s91, 1
      %s93 = scalar_select %p90, %s91, %s92
      %p96 = pneg %p90
      %p97 = scmp.eq.s32.totalorder %s13, 1
      %p98 = por %p96, %p97
      %p99 = scmp.ne.s32.totalorder %s91, %s94
      %p100 = scmp.eq.s32.totalorder %s13, 0
      %p101 = por %p99, %p100
      %p102 = scmp.ne.s32.totalorder %s91, %s94
      %p103 = scmp.eq.s32.totalorder %s18, 1
      %p104 = por %p102, %p103
      %p105 = scmp.ne.s32.totalorder %s94, %s95
      %p106 = scmp.eq.s32.totalorder %s18, 0
      %p107 = por %p105, %p106
      %p108 = scmp.ne.s32.totalorder %s94, %s95
      %p109 = scmp.eq.s32.totalorder %s19, 1
      %p110 = por %p108, %p109
      %p112 = scmp.ne.s32.totalorder %s95, %s111
      %p113 = scmp.eq.s32.totalorder %s19, 0
      %p114 = por %p112, %p113
      %p115 = scmp.le.s32.totalorder 1, %s13
      %p116 = scmp.lt.s32.totalorder %s13, 3
      %p117 = pnand %p115, %p116
      %p118 = pneg %p117
      // Predicated region
      $region9: #{unet_forward.17} parent=5 // pred_check
        _
      $region10: #{unet_forward.17} parent=5 // pred_check_branch
        %120 = sbr.rel (%p117) target = $region12
      $region11: #{unet_forward.17} parent=5 // pred_region
        %s121 = ssub.s32 %s13, 1
        // Predicated region
        $region13: #{unet_forward.17} parent=11 // pred_check
          %p122 = pneg %p60
        $region14: #{unet_forward.17} parent=11 // pred_check_branch
          %124 = sbr.rel (%p122) target = $region16
        $region15: #{unet_forward.17} parent=11 // pred_region
          _
        $region16: #{unet_forward.17} parent=11 // pred_fallthru
          _
        // Predicated region
        $region17: #{unet_forward.17} parent=11 // pred_check
          %p125 = pneg %p81
        $region18: #{unet_forward.17} parent=11 // pred_check_branch
          %127 = sbr.rel (%p125) target = $region20
        $region19: #{unet_forward.17} parent=11 // pred_region
          %s129 = ssub.s32 512, 512
          %130 = vsyncadd [#allocation3], %s129
          %s131 = sshll.u32 [#allocation2], 4
          %s132 = int_to_ptr.vmem [resolvable:$true] %s131
          %137 = dma.hbm_to_vmem [thread:$0]  %s2, 512, %s132, [#allocation3], 256, 256, 16
        $region20: #{unet_forward.17} parent=11 // pred_fallthru
          _
      $region12: #{unet_forward.17} parent=5 // pred_fallthru
        _
      %p138 = scmp.lt.s32.totalorder %s13, 2
      // Predicated region
      $region21: #{unet_forward.17} parent=5 // pred_check
        %p139 = pneg %p138
      $region22: #{unet_forward.17} parent=5 // pred_check_branch
        %141 = sbr.rel (%p139) target = $region24
      $region23: #{unet_forward.17} parent=5 // pred_region
        // Predicated region
        $region25: #{unet_forward.17} parent=23 // pred_check
          %p142 = pneg %p33
        $region26: #{unet_forward.17} parent=23 // pred_check_branch
          %144 = sbr.rel (%p142) target = $region28
        $region27: #{unet_forward.17} parent=23 // pred_region
          %p145 = scmp.lt.s32.totalorder %s13, 1
          %s146 = scalar_select %p145, %s13, 1
          %s147 = smul.addr %s146, 6
          %s148 = smul.addr %s147, 8
          %s149 = scalar_lea.vmem %s0, %s148
        $region28: #{unet_forward.17} parent=23 // pred_fallthru
          _
      $region24: #{unet_forward.17} parent=5 // pred_fallthru
        _
      %p150 = scmp.le.s32.totalorder 1, %s13
      %p151 = scmp.lt.s32.totalorder %s13, 3
      %p152 = pnand %p150, %p151
      %p153 = pneg %p152
      // Predicated region
      $region29: #{unet_forward.17} parent=5 // pred_check
        _
      $region30: #{unet_forward.17} parent=5 // pred_check_branch
        %155 = sbr.rel (%p152) target = $region32
      $region31: #{unet_forward.17} parent=5 // pred_region
        %s156 = ssub.s32 %s13, 1
        // Predicated region
        $region33: #{unet_forward.17} parent=31 // pred_check
          %p157 = pneg %p81
        $region34: #{unet_forward.17} parent=31 // pred_check_branch
          %159 = sbr.rel (%p157) target = $region36
        $region35: #{unet_forward.17} parent=31 // pred_region
          %160 = dma.done [#allocation3], 512
        $region36: #{unet_forward.17} parent=31 // pred_fallthru
          _
        %p161 = scmp.lt.s32.totalorder %s18, 1
        %s162 = scalar_select %p161, %s18, 1
        %s163 = smul.addr %s162, 6
        %s164 = smul.addr %s163, 8
        %s165 = scalar_lea.vmem %s0, %s164
        %p166 = pneg %p39
        %p167 = pneg %p36
        %p168 = pneg %p60
        %p169 = pneg %p57
        %p170 = pneg %p81
        %p171 = pneg %p78
        %p172 = pneg %p107
        %p173 = pneg %p104
        %s174 = sand.u32 %s94, 1
        %s175 = scalar_lea.sflag [#allocation4], %s174
        %s176 = sand.u32 %s94, 1
        %s177 = smul.addr %s176, 1536
        %s178 = scalar_lea.vmem [#allocation5], %s177
        %p179 = scmp.lt.s32.totalorder %s18, 1
        %s180 = scalar_select %p179, %s18, 1
        %s181 = smul.addr %s180, 6
        %s182 = smul.addr %s181, 8
        %s183 = scalar_lea.vmem %s0, %s182
        %v184 = vld [vmem:[%s1] sm:$0xff]
        %v185 = vld [vmem:[%s1 + $0x8] sm:$0xff]
        %v186 = vld [vmem:[%s1 + $0x10] sm:$0xff]
        %v187 = vld [vmem:[%s1 + $0x18] sm:$0xff]
        %v188 = vld [vmem:[%s1 + $0x20] sm:$0xff]
        %v189 = vld [vmem:[%s1 + $0x28] sm:$0xff]
        %v190 = vld [vmem:[%s1 + $0x30] sm:$0xff]
        %v191 = vld [vmem:[%s1 + $0x38] sm:$0xff]
        %v192 = vld [vmem:[%s1 + $0x40] sm:$0xff]
        %v193 = vld [vmem:[%s1 + $0x48] sm:$0xff]
        %v194 = vld [vmem:[%s1 + $0x50] sm:$0xff]
        %v195 = vld [vmem:[%s1 + $0x58] sm:$0xff]
        %v196 = vld [vmem:[%s1 + $0x60] sm:$0xff]
        %v197 = vld [vmem:[%s1 + $0x68] sm:$0xff]
        %v198 = vld [vmem:[%s1 + $0x70] sm:$0xff]
        %v199 = vld [vmem:[%s1 + $0x78] sm:$0xff]
        %v200 = vld [vmem:[%s1 + $0x80] sm:$0xff]
        %v201 = vld [vmem:[%s1 + $0x88] sm:$0xff]
        %v202 = vld [vmem:[%s1 + $0x90] sm:$0xff]
        %v203 = vld [vmem:[%s1 + $0x98] sm:$0xff]
        %v204 = vld [vmem:[%s1 + $0xa0] sm:$0xff]
        %v205 = vld [vmem:[%s1 + $0xa8] sm:$0xff]
        %v206 = vld [vmem:[%s1 + $0xb0] sm:$0xff]
        %v207 = vld [vmem:[%s1 + $0xb8] sm:$0xff]
        %v208 = vld [vmem:[%s1 + $0xc0] sm:$0xff]
        %v209 = vld [vmem:[%s1 + $0xc8] sm:$0xff]
        %v210 = vld [vmem:[%s1 + $0xd0] sm:$0xff]
        %v211 = vld [vmem:[%s1 + $0xd8] sm:$0xff]
        %v212 = vld [vmem:[%s1 + $0xe0] sm:$0xff]
        %v213 = vld [vmem:[%s1 + $0xe8] sm:$0xff]
        %v214 = vld [vmem:[%s1 + $0xf0] sm:$0xff]
        %v215 = vld [vmem:[%s1 + $0xf8] sm:$0xff]
        %v216 = vld [vmem:[#allocation2] sm:$0xff]
        %v217 = vld [vmem:[#allocation2 + $0x8] sm:$0xff]
        %v218 = vld [vmem:[#allocation2 + $0x10] sm:$0xff]
        %v219 = vld [vmem:[#allocation2 + $0x18] sm:$0xff]
        %v220 = vld [vmem:[%s183] sm:$0xff]
        %v221 = vld [vmem:[%s183 + $0x8] sm:$0xff]
        %vm222 = vcmask 130048
        %v224 = vsel %vm222, %v220, 0
        %v227 = vsel %vm222, %v221, 0
        %229 = vmatprep.subr.mxu0 %v217
        %230 = vmatpush1.msra.mxu0 %v216
        %231 = vmatprep.subr.mxu0 %v219
        %232 = vmatpush1.msra.mxu0 %v218
        %233 = vmatprep.subr.mxu0 0.0
        %234 = vmatpush1.msra.mxu0 0.0
        %235 = vmatprep.subr.mxu0 0.0
        %236 = vmatpush1.msra.mxu0 0.0
        %237 = vmatprep.subr.mxu0 0.0
        %238 = vmatpush1.msra.mxu0 0.0
        %239 = vmatprep.subr.mxu0 0.0
        %240 = vmatpush1.msra.mxu0 0.0
        %241 = vmatprep.subr.mxu0 0.0
        %242 = vmatpush1.msra.mxu0 0.0
        %243 = vmatprep.subr.mxu0 0.0
        %244 = vmatpush1.msra.mxu0 0.0
        %245 = vmatprep.subr.mxu0 0.0
        %246 = vmatpush1.msra.mxu0 0.0
        %247 = vmatprep.subr.mxu0 0.0
        %248 = vmatpush1.msra.mxu0 0.0
        %249 = vmatprep.subr.mxu0 0.0
        %250 = vmatpush1.msra.mxu0 0.0
        %251 = vmatprep.subr.mxu0 0.0
        %252 = vmatpush1.msra.mxu0 0.0
        %253 = vmatprep.subr.mxu0 0.0
        %254 = vmatpush1.msra.mxu0 0.0
        %255 = vmatprep.subr.mxu0 0.0
        %256 = vmatpush1.msra.mxu0 0.0
        %257 = vmatprep.subr.mxu0 0.0
        %258 = vmatpush1.msra.mxu0 0.0
        %259 = vmatprep.subr.mxu0 0.0
        %260 = vmatpush1.msra.mxu0 0.0
        %261 = vmatprep.subr.mxu0 0.0
        %262 = vmatpush1.msra.mxu0 0.0
        %263 = vmatprep.subr.mxu0 0.0
        %264 = vmatpush1.msra.mxu0 0.0
        %265 = vmatprep.subr.mxu0 0.0
        %266 = vmatpush1.msra.mxu0 0.0
        %267 = vmatprep.subr.mxu0 0.0
        %268 = vmatpush1.msra.mxu0 0.0
        %269 = vmatprep.subr.mxu0 0.0
        %270 = vmatpush1.msra.mxu0 0.0
        %271 = vmatprep.subr.mxu0 0.0
        %272 = vmatpush1.msra.mxu0 0.0
        %273 = vmatprep.subr.mxu0 0.0
        %274 = vmatpush1.msra.mxu0 0.0
        %275 = vmatprep.subr.mxu0 0.0
        %276 = vmatpush1.msra.mxu0 0.0
        %277 = vmatprep.subr.mxu0 0.0
        %278 = vmatpush1.msra.mxu0 0.0
        %279 = vmatprep.subr.mxu0 0.0
        %280 = vmatpush1.msra.mxu0 0.0
        %281 = vmatprep.subr.mxu0 0.0
        %282 = vmatpush1.msra.mxu0 0.0
        %283 = vmatprep.subr.mxu0 0.0
        %284 = vmatpush1.msra.mxu0 0.0
        %285 = vmatprep.subr.mxu0 0.0
        %286 = vmatpush1.msra.mxu0 0.0
        %287 = vmatprep.subr.mxu0 0.0
        %288 = vmatpush1.msra.mxu0 0.0
        %289 = vmatprep.subr.mxu0 0.0
        %290 = vmatpush1.msra.mxu0 0.0
        %291 = vmatprep.subr.mxu0 0.0
        %292 = vmatpush1.msra.mxu0 0.0
        %293 = vmatprep.mubr.f32.mxu0 0.0
        %294 = vmatmul.mubr.f32.gmra.mrb[0].mxu0 %v224
        %v295 = vpop.f32.mrb[0].mxu0
        %v296 = vadd.f32 0.0, %v295
        %v297 = vpop.f32.mrb[0].mxu0
        %v298 = vadd.f32 0.0, %v297
        %299 = vmatprep.mubr.f32.mxu0 0.0
        %300 = vmatmul.mubr.f32.gmra.mrb[0].mxu0 %v227
        %v301 = vpop.f32.mrb[0].mxu0
        %v302 = vadd.f32 0.0, %v301
        %v303 = vpop.f32.mrb[0].mxu0
        %v304 = vadd.f32 0.0, %v303
        %305 = vdwg.mxu0
        %v307 = vsel %vm222, %v184, 0
        %v310 = vsel %vm222, %v185, 0
        %v313 = vsel %vm222, %v186, 0
        %v316 = vsel %vm222, %v187, 0
        %v319 = vsel %vm222, %v188, 0
        %v322 = vsel %vm222, %v189, 0
        %v325 = vsel %vm222, %v190, 0
        %v328 = vsel %vm222, %v191, 0
        %v331 = vsel %vm222, %v192, 0
        %v334 = vsel %vm222, %v193, 0
        %v337 = vsel %vm222, %v194, 0
        %v340 = vsel %vm222, %v195, 0
        %v343 = vsel %vm222, %v196, 0
        %v346 = vsel %vm222, %v197, 0
        %v349 = vsel %vm222, %v198, 0
        %v352 = vsel %vm222, %v199, 0
        %v355 = vsel %vm222, %v200, 0
        %v358 = vsel %vm222, %v201, 0
        %v361 = vsel %vm222, %v202, 0
        %v364 = vsel %vm222, %v203, 0
        %v367 = vsel %vm222, %v204, 0
        %v370 = vsel %vm222, %v205, 0
        %v373 = vsel %vm222, %v206, 0
        %v376 = vsel %vm222, %v207, 0
        %v379 = vsel %vm222, %v208, 0
        %v382 = vsel %vm222, %v209, 0
        %v385 = vsel %vm222, %v210, 0
        %v388 = vsel %vm222, %v211, 0
        %v391 = vsel %vm222, %v212, 0
        %v394 = vsel %vm222, %v213, 0
        %v397 = vsel %vm222, %v214, 0
        %v400 = vsel %vm222, %v215, 0
        %402 = vmatprep.subr.mxu0 %v298
        %403 = vmatpush1.msra.mxu0 %v296
        %404 = vmatprep.subr.mxu0 %v304
        %405 = vmatpush1.msra.mxu0 %v302
        %406 = vmatprep.subr.mxu0 0.0
        %407 = vmatpush1.msra.mxu0 0.0
        %408 = vmatprep.subr.mxu0 0.0
        %409 = vmatpush1.msra.mxu0 0.0
        %410 = vmatprep.subr.mxu0 0.0
        %411 = vmatpush1.msra.mxu0 0.0
        %412 = vmatprep.subr.mxu0 0.0
        %413 = vmatpush1.msra.mxu0 0.0
        %414 = vmatprep.subr.mxu0 0.0
        %415 = vmatpush1.msra.mxu0 0.0
        %416 = vmatprep.subr.mxu0 0.0
        %417 = vmatpush1.msra.mxu0 0.0
        %418 = vmatprep.subr.mxu0 0.0
        %419 = vmatpush1.msra.mxu0 0.0
        %420 = vmatprep.subr.mxu0 0.0
        %421 = vmatpush1.msra.mxu0 0.0
        %422 = vmatprep.subr.mxu0 0.0
        %423 = vmatpush1.msra.mxu0 0.0
        %424 = vmatprep.subr.mxu0 0.0
        %425 = vmatpush1.msra.mxu0 0.0
        %426 = vmatprep.subr.mxu0 0.0
        %427 = vmatpush1.msra.mxu0 0.0
        %428 = vmatprep.subr.mxu0 0.0
        %429 = vmatpush1.msra.mxu0 0.0
        %430 = vmatprep.subr.mxu0 0.0
        %431 = vmatpush1.msra.mxu0 0.0
        %432 = vmatprep.subr.mxu0 0.0
        %433 = vmatpush1.msra.mxu0 0.0
        %434 = vmatprep.subr.mxu0 0.0
        %435 = vmatpush1.msra.mxu0 0.0
        %436 = vmatprep.subr.mxu0 0.0
        %437 = vmatpush1.msra.mxu0 0.0
        %438 = vmatprep.subr.mxu0 0.0
        %439 = vmatpush1.msra.mxu0 0.0
        %440 = vmatprep.subr.mxu0 0.0
        %441 = vmatpush1.msra.mxu0 0.0
        %442 = vmatprep.subr.mxu0 0.0
        %443 = vmatpush1.msra.mxu0 0.0
        %444 = vmatprep.subr.mxu0 0.0
        %445 = vmatpush1.msra.mxu0 0.0
        %446 = vmatprep.subr.mxu0 0.0
        %447 = vmatpush1.msra.mxu0 0.0
        %448 = vmatprep.subr.mxu0 0.0
        %449 = vmatpush1.msra.mxu0 0.0
        %450 = vmatprep.subr.mxu0 0.0
        %451 = vmatpush1.msra.mxu0 0.0
        %452 = vmatprep.subr.mxu0 0.0
        %453 = vmatpush1.msra.mxu0 0.0
        %454 = vmatprep.subr.mxu0 0.0
        %455 = vmatpush1.msra.mxu0 0.0
        %456 = vmatprep.subr.mxu0 0.0
        %457 = vmatpush1.msra.mxu0 0.0
        %458 = vmatprep.subr.mxu0 0.0
        %459 = vmatpush1.msra.mxu0 0.0
        %460 = vmatprep.subr.mxu0 0.0
        %461 = vmatpush1.msra.mxu0 0.0
        %462 = vmatprep.subr.mxu0 0.0
        %463 = vmatpush1.msra.mxu0 0.0
        %464 = vmatprep.subr.mxu0 0.0
        %465 = vmatpush1.msra.mxu0 0.0
        %466 = vmatprep.mubr.f32.mxu0 0.0
        %467 = vmatmul.mubr.f32.gmra.mrb[0].mxu0 %v307
        %v468 = vpop.f32.mrb[0].mxu0
        %v469 = vadd.f32 0.0, %v468
        %v470 = vpop.f32.mrb[0].mxu0
        %v471 = vadd.f32 0.0, %v470
        %472 = vmatprep.mubr.f32.mxu0 0.0
        %473 = vmatmul.mubr.f32.gmra.mrb[0].mxu0 %v310
        %v474 = vpop.f32.mrb[0].mxu0
        %v475 = vadd.f32 0.0, %v474
        %v476 = vpop.f32.mrb[0].mxu0
        %v477 = vadd.f32 0.0, %v476
        %478 = vmatprep.mubr.f32.mxu0 0.0
        %479 = vmatmul.mubr.f32.gmra.mrb[0].mxu0 %v313
        %v480 = vpop.f32.mrb[0].mxu0
        %v481 = vadd.f32 0.0, %v480
        %v482 = vpop.f32.mrb[0].mxu0
        %v483 = vadd.f32 0.0, %v482
        %484 = vmatprep.mubr.f32.mxu0 0.0
        %485 = vmatmul.mubr.f32.gmra.mrb[0].mxu0 %v316
        %v486 = vpop.f32.mrb[0].mxu0
        %v487 = vadd.f32 0.0, %v486
        %v488 = vpop.f32.mrb[0].mxu0
        %v489 = vadd.f32 0.0, %v488
        %490 = vmatprep.mubr.f32.mxu0 0.0
        %491 = vmatmul.mubr.f32.gmra.mrb[0].mxu0 %v319
        %v492 = vpop.f32.mrb[0].mxu0
        %v493 = vadd.f32 0.0, %v492
        %v494 = vpop.f32.mrb[0].mxu0
        %v495 = vadd.f32 0.0, %v494
        %496 = vmatprep.mubr.f32.mxu0 0.0
        %497 = vmatmul.mubr.f32.gmra.mrb[0].mxu0 %v322
        %v498 = vpop.f32.mrb[0].mxu0
        %v499 = vadd.f32 0.0, %v498
        %v500 = vpop.f32.mrb[0].mxu0
        %v501 = vadd.f32 0.0, %v500
        %502 = vmatprep.mubr.f32.mxu0 0.0
        %503 = vmatmul.mubr.f32.gmra.mrb[0].mxu0 %v325
        %v504 = vpop.f32.mrb[0].mxu0
        %v505 = vadd.f32 0.0, %v504
        %v506 = vpop.f32.mrb[0].mxu0
        %v507 = vadd.f32 0.0, %v506
        %508 = vmatprep.mubr.f32.mxu0 0.0
        %509 = vmatmul.mubr.f32.gmra.mrb[0].mxu0 %v328
        %v510 = vpop.f32.mrb[0].mxu0
        %v511 = vadd.f32 0.0, %v510
        %v512 = vpop.f32.mrb[0].mxu0
        %v513 = vadd.f32 0.0, %v512
        %514 = vmatprep.mubr.f32.mxu0 0.0
        %515 = vmatmul.mubr.f32.gmra.mrb[0].mxu0 %v331
        %v516 = vpop.f32.mrb[0].mxu0
        %v517 = vadd.f32 0.0, %v516
        %v518 = vpop.f32.mrb[0].mxu0
        %v519 = vadd.f32 0.0, %v518
        %520 = vmatprep.mubr.f32.mxu0 0.0
        %521 = vmatmul.mubr.f32.gmra.mrb[0].mxu0 %v334
        %v522 = vpop.f32.mrb[0].mxu0
        %v523 = vadd.f32 0.0, %v522
        %v524 = vpop.f32.mrb[0].mxu0
        %v525 = vadd.f32 0.0, %v524
        %526 = vmatprep.mubr.f32.mxu0 0.0
        %527 = vmatmul.mubr.f32.gmra.mrb[0].mxu0 %v337
        %v528 = vpop.f32.mrb[0].mxu0
        %v529 = vadd.f32 0.0, %v528
        %v530 = vpop.f32.mrb[0].mxu0
        %v531 = vadd.f32 0.0, %v530
        %532 = vmatprep.mubr.f32.mxu0 0.0
        %533 = vmatmul.mubr.f32.gmra.mrb[0].mxu0 %v340
        %v534 = vpop.f32.mrb[0].mxu0
        %v535 = vadd.f32 0.0, %v534
        %v536 = vpop.f32.mrb[0].mxu0
        %v537 = vadd.f32 0.0, %v536
        %538 = vmatprep.mubr.f32.mxu0 0.0
        %539 = vmatmul.mubr.f32.gmra.mrb[0].mxu0 %v343
        %v540 = vpop.f32.mrb[0].mxu0
        %v541 = vadd.f32 0.0, %v540
        %v542 = vpop.f32.mrb[0].mxu0
        %v543 = vadd.f32 0.0, %v542
        %544 = vmatprep.mubr.f32.mxu0 0.0
        %545 = vmatmul.mubr.f32.gmra.mrb[0].mxu0 %v346
        %v546 = vpop.f32.mrb[0].mxu0
        %v547 = vadd.f32 0.0, %v546
        %v548 = vpop.f32.mrb[0].mxu0
        %v549 = vadd.f32 0.0, %v548
        %550 = vmatprep.mubr.f32.mxu0 0.0
        %551 = vmatmul.mubr.f32.gmra.mrb[0].mxu0 %v349
        %v552 = vpop.f32.mrb[0].mxu0
        %v553 = vadd.f32 0.0, %v552
        %v554 = vpop.f32.mrb[0].mxu0
        %v555 = vadd.f32 0.0, %v554
        %556 = vmatprep.mubr.f32.mxu0 0.0
        %557 = vmatmul.mubr.f32.gmra.mrb[0].mxu0 %v352
        %v558 = vpop.f32.mrb[0].mxu0
        %v559 = vadd.f32 0.0, %v558
        %v560 = vpop.f32.mrb[0].mxu0
        %v561 = vadd.f32 0.0, %v560
        %562 = vmatprep.mubr.f32.mxu0 0.0
        %563 = vmatmul.mubr.f32.gmra.mrb[0].mxu0 %v355
        %v564 = vpop.f32.mrb[0].mxu0
        %v565 = vadd.f32 0.0, %v564
        %v566 = vpop.f32.mrb[0].mxu0
        %v567 = vadd.f32 0.0, %v566
        %568 = vmatprep.mubr.f32.mxu0 0.0
        %569 = vmatmul.mubr.f32.gmra.mrb[0].mxu0 %v358
        %v570 = vpop.f32.mrb[0].mxu0
        %v571 = vadd.f32 0.0, %v570
        %v572 = vpop.f32.mrb[0].mxu0
        %v573 = vadd.f32 0.0, %v572
        %574 = vmatprep.mubr.f32.mxu0 0.0
        %575 = vmatmul.mubr.f32.gmra.mrb[0].mxu0 %v361
        %v576 = vpop.f32.mrb[0].mxu0
        %v577 = vadd.f32 0.0, %v576
        %v578 = vpop.f32.mrb[0].mxu0
        %v579 = vadd.f32 0.0, %v578
        %580 = vmatprep.mubr.f32.mxu0 0.0
        %581 = vmatmul.mubr.f32.gmra.mrb[0].mxu0 %v364
        %v582 = vpop.f32.mrb[0].mxu0
        %v583 = vadd.f32 0.0, %v582
        %v584 = vpop.f32.mrb[0].mxu0
        %v585 = vadd.f32 0.0, %v584
        %586 = vmatprep.mubr.f32.mxu0 0.0
        %587 = vmatmul.mubr.f32.gmra.mrb[0].mxu0 %v367
        %v588 = vpop.f32.mrb[0].mxu0
        %v589 = vadd.f32 0.0, %v588
        %v590 = vpop.f32.mrb[0].mxu0
        %v591 = vadd.f32 0.0, %v590
        %592 = vmatprep.mubr.f32.mxu0 0.0
        %593 = vmatmul.mubr.f32.gmra.mrb[0].mxu0 %v370
        %v594 = vpop.f32.mrb[0].mxu0
        %v595 = vadd.f32 0.0, %v594
        %v596 = vpop.f32.mrb[0].mxu0
        %v597 = vadd.f32 0.0, %v596
        %598 = vmatprep.mubr.f32.mxu0 0.0
        %599 = vmatmul.mubr.f32.gmra.mrb[0].mxu0 %v373
        %v600 = vpop.f32.mrb[0].mxu0
        %v601 = vadd.f32 0.0, %v600
        %v602 = vpop.f32.mrb[0].mxu0
        %v603 = vadd.f32 0.0, %v602
        %604 = vmatprep.mubr.f32.mxu0 0.0
        %605 = vmatmul.mubr.f32.gmra.mrb[0].mxu0 %v376
        %v606 = vpop.f32.mrb[0].mxu0
        %v607 = vadd.f32 0.0, %v606
        %v608 = vpop.f32.mrb[0].mxu0
        %v609 = vadd.f32 0.0, %v608
        %610 = vmatprep.mubr.f32.mxu0 0.0
        %611 = vmatmul.mubr.f32.gmra.mrb[0].mxu0 %v379
        %v612 = vpop.f32.mrb[0].mxu0
        %v613 = vadd.f32 0.0, %v612
        %v614 = vpop.f32.mrb[0].mxu0
        %v615 = vadd.f32 0.0, %v614
        %616 = vmatprep.mubr.f32.mxu0 0.0
        %617 = vmatmul.mubr.f32.gmra.mrb[0].mxu0 %v382
        %v618 = vpop.f32.mrb[0].mxu0
        %v619 = vadd.f32 0.0, %v618
        %v620 = vpop.f32.mrb[0].mxu0
        %v621 = vadd.f32 0.0, %v620
        %622 = vmatprep.mubr.f32.mxu0 0.0
        %623 = vmatmul.mubr.f32.gmra.mrb[0].mxu0 %v385
        %v624 = vpop.f32.mrb[0].mxu0
        %v625 = vadd.f32 0.0, %v624
        %v626 = vpop.f32.mrb[0].mxu0
        %v627 = vadd.f32 0.0, %v626
        %628 = vmatprep.mubr.f32.mxu0 0.0
        %629 = vmatmul.mubr.f32.gmra.mrb[0].mxu0 %v388
        %v630 = vpop.f32.mrb[0].mxu0
        %v631 = vadd.f32 0.0, %v630
        %v632 = vpop.f32.mrb[0].mxu0
        %v633 = vadd.f32 0.0, %v632
        %634 = vmatprep.mubr.f32.mxu0 0.0
        %635 = vmatmul.mubr.f32.gmra.mrb[0].mxu0 %v391
        %v636 = vpop.f32.mrb[0].mxu0
        %v637 = vadd.f32 0.0, %v636
        %v638 = vpop.f32.mrb[0].mxu0
        %v639 = vadd.f32 0.0, %v638
        %640 = vmatprep.mubr.f32.mxu0 0.0
        %641 = vmatmul.mubr.f32.gmra.mrb[0].mxu0 %v394
        %v642 = vpop.f32.mrb[0].mxu0
        %v643 = vadd.f32 0.0, %v642
        %v644 = vpop.f32.mrb[0].mxu0
        %v645 = vadd.f32 0.0, %v644
        %646 = vmatprep.mubr.f32.mxu0 0.0
        %647 = vmatmul.mubr.f32.gmra.mrb[0].mxu0 %v397
        %v648 = vpop.f32.mrb[0].mxu0
        %v649 = vadd.f32 0.0, %v648
        %v650 = vpop.f32.mrb[0].mxu0
        %v651 = vadd.f32 0.0, %v650
        %652 = vmatprep.mubr.f32.mxu0 0.0
        %653 = vmatmul.mubr.f32.gmra.mrb[0].mxu0 %v400
        %v654 = vpop.f32.mrb[0].mxu0
        %v655 = vadd.f32 0.0, %v654
        %v656 = vpop.f32.mrb[0].mxu0
        %v657 = vadd.f32 0.0, %v656
        %658 = vdwg.mxu0
        %v659 = vtanh.pop %v469
        %v660 = vtanh.pop %v471
        %v661 = vtanh.pop %v475
        %v662 = vtanh.pop %v477
        %v663 = vtanh.pop %v481
        %v664 = vtanh.pop %v483
        %v665 = vtanh.pop %v487
        %v666 = vtanh.pop %v489
        %v667 = vtanh.pop %v493
        %v668 = vtanh.pop %v495
        %v669 = vtanh.pop %v499
        %v670 = vtanh.pop %v501
        %v671 = vtanh.pop %v505
        %v672 = vtanh.pop %v507
        %v673 = vtanh.pop %v511
        %v674 = vtanh.pop %v513
        %v675 = vtanh.pop %v517
        %v676 = vtanh.pop %v519
        %v677 = vtanh.pop %v523
        %v678 = vtanh.pop %v525
        %v679 = vtanh.pop %v529
        %v680 = vtanh.pop %v531
        %v681 = vtanh.pop %v535
        %v682 = vtanh.pop %v537
        %v683 = vtanh.pop %v541
        %v684 = vtanh.pop %v543
        %v685 = vtanh.pop %v547
        %v686 = vtanh.pop %v549
        %v687 = vtanh.pop %v553
        %v688 = vtanh.pop %v555
        %v689 = vtanh.pop %v559
        %v690 = vtanh.pop %v561
        %v691 = vtanh.pop %v565
        %v692 = vtanh.pop %v567
        %v693 = vtanh.pop %v571
        %v694 = vtanh.pop %v573
        %v695 = vtanh.pop %v577
        %v696 = vtanh.pop %v579
        %v697 = vtanh.pop %v583
        %v698 = vtanh.pop %v585
        %v699 = vtanh.pop %v589
        %v700 = vtanh.pop %v591
        %v701 = vtanh.pop %v595
        %v702 = vtanh.pop %v597
        %v703 = vtanh.pop %v601
        %v704 = vtanh.pop %v603
        %v705 = vtanh.pop %v607
        %v706 = vtanh.pop %v609
        %v707 = vtanh.pop %v613
        %v708 = vtanh.pop %v615
        %v709 = vtanh.pop %v619
        %v710 = vtanh.pop %v621
        %v711 = vtanh.pop %v625
        %v712 = vtanh.pop %v627
        %v713 = vtanh.pop %v631
        %v714 = vtanh.pop %v633
        %v715 = vtanh.pop %v637
        %v716 = vtanh.pop %v639
        %v717 = vtanh.pop %v643
        %v718 = vtanh.pop %v645
        %v719 = vtanh.pop %v649
        %v720 = vtanh.pop %v651
        %v721 = vtanh.pop %v655
        %v722 = vtanh.pop %v657
        %723 = vst [vmem:[%s178] sm:$0xff] %v659
        %724 = vst [vmem:[%s178 + $0x8] sm:$0xff] %v660
        %725 = vst [vmem:[%s178 + $0x10] sm:$0xff] %v661
        %726 = vst [vmem:[%s178 + $0x18] sm:$0xff] %v662
        %727 = vst [vmem:[%s178 + $0x20] sm:$0xff] %v663
        %728 = vst [vmem:[%s178 + $0x28] sm:$0xff] %v664
        %729 = vst [vmem:[%s178 + $0x30] sm:$0xff] %v665
        %730 = vst [vmem:[%s178 + $0x38] sm:$0xff] %v666
        %731 = vst [vmem:[%s178 + $0x40] sm:$0xff] %v667
        %732 = vst [vmem:[%s178 + $0x48] sm:$0xff] %v668
        %733 = vst [vmem:[%s178 + $0x50] sm:$0xff] %v669
        %734 = vst [vmem:[%s178 + $0x58] sm:$0xff] %v670
        %735 = vst [vmem:[%s178 + $0x60] sm:$0xff] %v671
        %736 = vst [vmem:[%s178 + $0x68] sm:$0xff] %v672
        %737 = vst [vmem:[%s178 + $0x70] sm:$0xff] %v673
        %738 = vst [vmem:[%s178 + $0x78] sm:$0xff] %v674
        %739 = vst [vmem:[%s178 + $0x80] sm:$0xff] %v675
        %740 = vst [vmem:[%s178 + $0x88] sm:$0xff] %v676
        %741 = vst [vmem:[%s178 + $0x90] sm:$0xff] %v677
        %742 = vst [vmem:[%s178 + $0x98] sm:$0xff] %v678
        %743 = vst [vmem:[%s178 + $0xa0] sm:$0xff] %v679
        %744 = vst [vmem:[%s178 + $0xa8] sm:$0xff] %v680
        %745 = vst [vmem:[%s178 + $0xb0] sm:$0xff] %v681
        %746 = vst [vmem:[%s178 + $0xb8] sm:$0xff] %v682
        %747 = vst [vmem:[%s178 + $0xc0] sm:$0xff] %v683
        %748 = vst [vmem:[%s178 + $0xc8] sm:$0xff] %v684
        %749 = vst [vmem:[%s178 + $0xd0] sm:$0xff] %v685
        %750 = vst [vmem:[%s178 + $0xd8] sm:$0xff] %v686
        %751 = vst [vmem:[%s178 + $0xe0] sm:$0xff] %v687
        %752 = vst [vmem:[%s178 + $0xe8] sm:$0xff] %v688
        %753 = vst [vmem:[%s178 + $0xf0] sm:$0xff] %v689
        %754 = vst [vmem:[%s178 + $0xf8] sm:$0xff] %v690
        %755 = vst [vmem:[%s178 + $0x100] sm:$0xff] %v691
        %756 = vst [vmem:[%s178 + $0x108] sm:$0xff] %v692
        %757 = vst [vmem:[%s178 + $0x110] sm:$0xff] %v693
        %758 = vst [vmem:[%s178 + $0x118] sm:$0xff] %v694
        %759 = vst [vmem:[%s178 + $0x120] sm:$0xff] %v695
        %760 = vst [vmem:[%s178 + $0x128] sm:$0xff] %v696
        %761 = vst [vmem:[%s178 + $0x130] sm:$0xff] %v697
        %762 = vst [vmem:[%s178 + $0x138] sm:$0xff] %v698
        %763 = vst [vmem:[%s178 + $0x140] sm:$0xff] %v699
        %764 = vst [vmem:[%s178 + $0x148] sm:$0xff] %v700
        %765 = vst [vmem:[%s178 + $0x150] sm:$0xff] %v701
        %766 = vst [vmem:[%s178 + $0x158] sm:$0xff] %v702
        %767 = vst [vmem:[%s178 + $0x160] sm:$0xff] %v703
        %768 = vst [vmem:[%s178 + $0x168] sm:$0xff] %v704
        %769 = vst [vmem:[%s178 + $0x170] sm:$0xff] %v705
        %770 = vst [vmem:[%s178 + $0x178] sm:$0xff] %v706
        %771 = vst [vmem:[%s178 + $0x180] sm:$0xff] %v707
        %772 = vst [vmem:[%s178 + $0x188] sm:$0xff] %v708
        %773 = vst [vmem:[%s178 + $0x190] sm:$0xff] %v709
        %774 = vst [vmem:[%s178 + $0x198] sm:$0xff] %v710
        %775 = vst [vmem:[%s178 + $0x1a0] sm:$0xff] %v711
        %776 = vst [vmem:[%s178 + $0x1a8] sm:$0xff] %v712
        %777 = vst [vmem:[%s178 + $0x1b0] sm:$0xff] %v713
        %778 = vst [vmem:[%s178 + $0x1b8] sm:$0xff] %v714
        %779 = vst [vmem:[%s178 + $0x1c0] sm:$0xff] %v715
        %780 = vst [vmem:[%s178 + $0x1c8] sm:$0xff] %v716
        %781 = vst [vmem:[%s178 + $0x1d0] sm:$0xff] %v717
        %782 = vst [vmem:[%s178 + $0x1d8] sm:$0xff] %v718
        %783 = vst [vmem:[%s178 + $0x1e0] sm:$0xff] %v719
        %784 = vst [vmem:[%s178 + $0x1e8] sm:$0xff] %v720
        %785 = vst [vmem:[%s178 + $0x1f0] sm:$0xff] %v721
        %786 = vst [vmem:[%s178 + $0x1f8] sm:$0xff] %v722
        %s787 = scalar_lea.vmem %s183, 16
        %v788 = vld [vmem:[%s787] sm:$0xff]
        %v789 = vld [vmem:[%s787 + $0x8] sm:$0xff]
        %v791 = vsel %vm222, %v788, 0
        %v794 = vsel %vm222, %v789, 0
        %796 = vmatprep.subr.mxu0 %v217
        %797 = vmatpush1.msra.mxu0 %v216
        %798 = vmatprep.subr.mxu0 %v219
        %799 = vmatpush1.msra.mxu0 %v218
        %800 = vmatprep.subr.mxu0 0.0
        %801 = vmatpush1.msra.mxu0 0.0
        %802 = vmatprep.subr.mxu0 0.0
        %803 = vmatpush1.msra.mxu0 0.0
        %804 = vmatprep.subr.mxu0 0.0
        %805 = vmatpush1.msra.mxu0 0.0
        %806 = vmatprep.subr.mxu0 0.0
        %807 = vmatpush1.msra.mxu0 0.0
        %808 = vmatprep.subr.mxu0 0.0
        %809 = vmatpush1.msra.mxu0 0.0
        %810 = vmatprep.subr.mxu0 0.0
        %811 = vmatpush1.msra.mxu0 0.0
        %812 = vmatprep.subr.mxu0 0.0
        %813 = vmatpush1.msra.mxu0 0.0
        %814 = vmatprep.subr.mxu0 0.0
        %815 = vmatpush1.msra.mxu0 0.0
        %816 = vmatprep.subr.mxu0 0.0
        %817 = vmatpush1.msra.mxu0 0.0
        %818 = vmatprep.subr.mxu0 0.0
        %819 = vmatpush1.msra.mxu0 0.0
        %820 = vmatprep.subr.mxu0 0.0
        %821 = vmatpush1.msra.mxu0 0.0
        %822 = vmatprep.subr.mxu0 0.0
        %823 = vmatpush1.msra.mxu0 0.0
        %824 = vmatprep.subr.mxu0 0.0
        %825 = vmatpush1.msra.mxu0 0.0
        %826 = vmatprep.subr.mxu0 0.0
        %827 = vmatpush1.msra.mxu0 0.0
        %828 = vmatprep.subr.mxu0 0.0
        %829 = vmatpush1.msra.mxu0 0.0
        %830 = vmatprep.subr.mxu0 0.0
        %831 = vmatpush1.msra.mxu0 0.0
        %832 = vmatprep.subr.mxu0 0.0
        %833 = vmatpush1.msra.mxu0 0.0
        %834 = vmatprep.subr.mxu0 0.0
        %835 = vmatpush1.msra.mxu0 0.0
        %836 = vmatprep.subr.mxu0 0.0
        %837 = vmatpush1.msra.mxu0 0.0
        %838 = vmatprep.subr.mxu0 0.0
        %839 = vmatpush1.msra.mxu0 0.0
        %840 = vmatprep.subr.mxu0 0.0
        %841 = vmatpush1.msra.mxu0 0.0
        %842 = vmatprep.subr.mxu0 0.0
        %843 = vmatpush1.msra.mxu0 0.0
        %844 = vmatprep.subr.mxu0 0.0
        %845 = vmatpush1.msra.mxu0 0.0
        %846 = vmatprep.subr.mxu0 0.0
        %847 = vmatpush1.msra.mxu0 0.0
        %848 = vmatprep.subr.mxu0 0.0
        %849 = vmatpush1.msra.mxu0 0.0
        %850 = vmatprep.subr.mxu0 0.0
        %851 = vmatpush1.msra.mxu0 0.0
        %852 = vmatprep.subr.mxu0 0.0
        %853 = vmatpush1.msra.mxu0 0.0
        %854 = vmatprep.subr.mxu0 0.0
        %855 = vmatpush1.msra.mxu0 0.0
        %856 = vmatprep.subr.mxu0 0.0
        %857 = vmatpush1.msra.mxu0 0.0
        %858 = vmatprep.subr.mxu0 0.0
        %859 = vmatpush1.msra.mxu0 0.0
        %860 = vmatprep.mubr.f32.mxu0 0.0
        %861 = vmatmul.mubr.f32.gmra.mrb[0].mxu0 %v791
        %v862 = vpop.f32.mrb[0].mxu0
        %v863 = vadd.f32 0.0, %v862
        %v864 = vpop.f32.mrb[0].mxu0
        %v865 = vadd.f32 0.0, %v864
        %866 = vmatprep.mubr.f32.mxu0 0.0
        %867 = vmatmul.mubr.f32.gmra.mrb[0].mxu0 %v794
        %v868 = vpop.f32.mrb[0].mxu0
        %v869 = vadd.f32 0.0, %v868
        %v870 = vpop.f32.mrb[0].mxu0
        %v871 = vadd.f32 0.0, %v870
        %872 = vdwg.mxu0
        %873 = vmatprep.subr.mxu0 %v865
        %874 = vmatpush1.msra.mxu0 %v863
        %875 = vmatprep.subr.mxu0 %v871
        %876 = vmatpush1.msra.mxu0 %v869
        %877 = vmatprep.subr.mxu0 0.0
        %878 = vmatpush1.msra.mxu0 0.0
        %879 = vmatprep.subr.mxu0 0.0
        %880 = vmatpush1.msra.mxu0 0.0
        %881 = vmatprep.subr.mxu0 0.0
        %882 = vmatpush1.msra.mxu0 0.0
        %883 = vmatprep.subr.mxu0 0.0
        %884 = vmatpush1.msra.mxu0 0.0
        %885 = vmatprep.subr.mxu0 0.0
        %886 = vmatpush1.msra.mxu0 0.0
        %887 = vmatprep.subr.mxu0 0.0
        %888 = vmatpush1.msra.mxu0 0.0
        %889 = vmatprep.subr.mxu0 0.0
        %890 = vmatpush1.msra.mxu0 0.0
        %891 = vmatprep.subr.mxu0 0.0
        %892 = vmatpush1.msra.mxu0 0.0
        %893 = vmatprep.subr.mxu0 0.0
        %894 = vmatpush1.msra.mxu0 0.0
        %895 = vmatprep.subr.mxu0 0.0
        %896 = vmatpush1.msra.mxu0 0.0
        %897 = vmatprep.subr.mxu0 0.0
        %898 = vmatpush1.msra.mxu0 0.0
        %899 = vmatprep.subr.mxu0 0.0
        %900 = vmatpush1.msra.mxu0 0.0
        %901 = vmatprep.subr.mxu0 0.0
        %902 = vmatpush1.msra.mxu0 0.0
        %903 = vmatprep.subr.mxu0 0.0
        %904 = vmatpush1.msra.mxu0 0.0
        %905 = vmatprep.subr.mxu0 0.0
        %906 = vmatpush1.msra.mxu0 0.0
        %907 = vmatprep.subr.mxu0 0.0
        %908 = vmatpush1.msra.mxu0 0.0
        %909 = vmatprep.subr.mxu0 0.0
        %910 = vmatpush1.msra.mxu0 0.0
        %911 = vmatprep.subr.mxu0 0.0
        %912 = vmatpush1.msra.mxu0 0.0
        %913 = vmatprep.subr.mxu0 0.0
        %914 = vmatpush1.msra.mxu0 0.0
        %915 = vmatprep.subr.mxu0 0.0
        %916 = vmatpush1.msra.mxu0 0.0
        %917 = vmatprep.subr.mxu0 0.0
        %918 = vmatpush1.msra.mxu0 0.0
        %919 = vmatprep.subr.mxu0 0.0
        %920 = vmatpush1.msra.mxu0 0.0
        %921 = vmatprep.subr.mxu0 0.0
        %922 = vmatpush1.msra.mxu0 0.0
        %923 = vmatprep.subr.mxu0 0.0
        %924 = vmatpush1.msra.mxu0 0.0
        %925 = vmatprep.subr.mxu0 0.0
        %926 = vmatpush1.msra.mxu0 0.0
        %927 = vmatprep.subr.mxu0 0.0
        %928 = vmatpush1.msra.mxu0 0.0
        %929 = vmatprep.subr.mxu0 0.0
        %930 = vmatpush1.msra.mxu0 0.0
        %931 = vmatprep.subr.mxu0 0.0
        %932 = vmatpush1.msra.mxu0 0.0
        %933 = vmatprep.subr.mxu0 0.0
        %934 = vmatpush1.msra.mxu0 0.0
        %935 = vmatprep.subr.mxu0 0.0
        %936 = vmatpush1.msra.mxu0 0.0
        %937 = vmatprep.mubr.f32.mxu0 0.0
        %938 = vmatmul.mubr.f32.gmra.mrb[0].mxu0 %v307
        %v939 = vpop.f32.mrb[0].mxu0
        %v940 = vadd.f32 0.0, %v939
        %v941 = vpop.f32.mrb[0].mxu0
        %v942 = vadd.f32 0.0, %v941
        %943 = vmatprep.mubr.f32.mxu0 0.0
        %944 = vmatmul.mubr.f32.gmra.mrb[0].mxu0 %v310
        %v945 = vpop.f32.mrb[0].mxu0
        %v946 = vadd.f32 0.0, %v945
        %v947 = vpop.f32.mrb[0].mxu0
        %v948 = vadd.f32 0.0, %v947
        %949 = vmatprep.mubr.f32.mxu0 0.0
        %950 = vmatmul.mubr.f32.gmra.mrb[0].mxu0 %v313
        %v951 = vpop.f32.mrb[0].mxu0
        %v952 = vadd.f32 0.0, %v951
        %v953 = vpop.f32.mrb[0].mxu0
        %v954 = vadd.f32 0.0, %v953
        %955 = vmatprep.mubr.f32.mxu0 0.0
        %956 = vmatmul.mubr.f32.gmra.mrb[0].mxu0 %v316
        %v957 = vpop.f32.mrb[0].mxu0
        %v958 = vadd.f32 0.0, %v957
        %v959 = vpop.f32.mrb[0].mxu0
        %v960 = vadd.f32 0.0, %v959
        %961 = vmatprep.mubr.f32.mxu0 0.0
        %962 = vmatmul.mubr.f32.gmra.mrb[0].mxu0 %v319
        %v963 = vpop.f32.mrb[0].mxu0
        %v964 = vadd.f32 0.0, %v963
        %v965 = vpop.f32.mrb[0].mxu0
        %v966 = vadd.f32 0.0, %v965
        %967 = vmatprep.mubr.f32.mxu0 0.0
        %968 = vmatmul.mubr.f32.gmra.mrb[0].mxu0 %v322
        %v969 = vpop.f32.mrb[0].mxu0
        %v970 = vadd.f32 0.0, %v969
        %v971 = vpop.f32.mrb[0].mxu0
        %v972 = vadd.f32 0.0, %v971
        %973 = vmatprep.mubr.f32.mxu0 0.0
        %974 = vmatmul.mubr.f32.gmra.mrb[0].mxu0 %v325
        %v975 = vpop.f32.mrb[0].mxu0
        %v976 = vadd.f32 0.0, %v975
        %v977 = vpop.f32.mrb[0].mxu0
        %v978 = vadd.f32 0.0, %v977
        %979 = vmatprep.mubr.f32.mxu0 0.0
        %980 = vmatmul.mubr.f32.gmra.mrb[0].mxu0 %v328
        %v981 = vpop.f32.mrb[0].mxu0
        %v982 = vadd.f32 0.0, %v981
        %v983 = vpop.f32.mrb[0].mxu0
        %v984 = vadd.f32 0.0, %v983
        %985 = vmatprep.mubr.f32.mxu0 0.0
        %986 = vmatmul.mubr.f32.gmra.mrb[0].mxu0 %v331
        %v987 = vpop.f32.mrb[0].mxu0
        %v988 = vadd.f32 0.0, %v987
        %v989 = vpop.f32.mrb[0].mxu0
        %v990 = vadd.f32 0.0, %v989
        %991 = vmatprep.mubr.f32.mxu0 0.0
        %992 = vmatmul.mubr.f32.gmra.mrb[0].mxu0 %v334
        %v993 = vpop.f32.mrb[0].mxu0
        %v994 = vadd.f32 0.0, %v993
        %v995 = vpop.f32.mrb[0].mxu0
        %v996 = vadd.f32 0.0, %v995
        %997 = vmatprep.mubr.f32.mxu0 0.0
        %998 = vmatmul.mubr.f32.gmra.mrb[0].mxu0 %v337
        %v999 = vpop.f32.mrb[0].mxu0
        %v1000 = vadd.f32 0.0, %v999
        %v1001 = vpop.f32.mrb[0].mxu0
        %v1002 = vadd.f32 0.0, %v1001
        %1003 = vmatprep.mubr.f32.mxu0 0.0
        %1004 = vmatmul.mubr.f32.gmra.mrb[0].mxu0 %v340
        %v1005 = vpop.f32.mrb[0].mxu0
        %v1006 = vadd.f32 0.0, %v1005
        %v1007 = vpop.f32.mrb[0].mxu0
        %v1008 = vadd.f32 0.0, %v1007
        %1009 = vmatprep.mubr.f32.mxu0 0.0
        %1010 = vmatmul.mubr.f32.gmra.mrb[0].mxu0 %v343
        %v1011 = vpop.f32.mrb[0].mxu0
        %v1012 = vadd.f32 0.0, %v1011
        %v1013 = vpop.f32.mrb[0].mxu0
        %v1014 = vadd.f32 0.0, %v1013
        %1015 = vmatprep.mubr.f32.mxu0 0.0
        %1016 = vmatmul.mubr.f32.gmra.mrb[0].mxu0 %v346
        %v1017 = vpop.f32.mrb[0].mxu0
        %v1018 = vadd.f32 0.0, %v1017
        %v1019 = vpop.f32.mrb[0].mxu0
        %v1020 = vadd.f32 0.0, %v1019
        %1021 = vmatprep.mubr.f32.mxu0 0.0
        %1022 = vmatmul.mubr.f32.gmra.mrb[0].mxu0 %v349
        %v1023 = vpop.f32.mrb[0].mxu0
        %v1024 = vadd.f32 0.0, %v1023
        %v1025 = vpop.f32.mrb[0].mxu0
        %v1026 = vadd.f32 0.0, %v1025
        %1027 = vmatprep.mubr.f32.mxu0 0.0
        %1028 = vmatmul.mubr.f32.gmra.mrb[0].mxu0 %v352
        %v1029 = vpop.f32.mrb[0].mxu0
        %v1030 = vadd.f32 0.0, %v1029
        %v1031 = vpop.f32.mrb[0].mxu0
        %v1032 = vadd.f32 0.0, %v1031
        %1033 = vmatprep.mubr.f32.mxu0 0.0
        %1034 = vmatmul.mubr.f32.gmra.mrb[0].mxu0 %v355
        %v1035 = vpop.f32.mrb[0].mxu0
        %v1036 = vadd.f32 0.0, %v1035
        %v1037 = vpop.f32.mrb[0].mxu0
        %v1038 = vadd.f32 0.0, %v1037
        %1039 = vmatprep.mubr.f32.mxu0 0.0
        %1040 = vmatmul.mubr.f32.gmra.mrb[0].mxu0 %v358
        %v1041 = vpop.f32.mrb[0].mxu0
        %v1042 = vadd.f32 0.0, %v1041
        %v1043 = vpop.f32.mrb[0].mxu0
        %v1044 = vadd.f32 0.0, %v1043
        %1045 = vmatprep.mubr.f32.mxu0 0.0
        %1046 = vmatmul.mubr.f32.gmra.mrb[0].mxu0 %v361
        %v1047 = vpop.f32.mrb[0].mxu0
        %v1048 = vadd.f32 0.0, %v1047
        %v1049 = vpop.f32.mrb[0].mxu0
        %v1050 = vadd.f32 0.0, %v1049
        %1051 = vmatprep.mubr.f32.mxu0 0.0
        %1052 = vmatmul.mubr.f32.gmra.mrb[0].mxu0 %v364
        %v1053 = vpop.f32.mrb[0].mxu0
        %v1054 = vadd.f32 0.0, %v1053
        %v1055 = vpop.f32.mrb[0].mxu0
        %v1056 = vadd.f32 0.0, %v1055
        %1057 = vmatprep.mubr.f32.mxu0 0.0
        %1058 = vmatmul.mubr.f32.gmra.mrb[0].mxu0 %v367
        %v1059 = vpop.f32.mrb[0].mxu0
        %v1060 = vadd.f32 0.0, %v1059
        %v1061 = vpop.f32.mrb[0].mxu0
        %v1062 = vadd.f32 0.0, %v1061
        %1063 = vmatprep.mubr.f32.mxu0 0.0
        %1064 = vmatmul.mubr.f32.gmra.mrb[0].mxu0 %v370
        %v1065 = vpop.f32.mrb[0].mxu0
        %v1066 = vadd.f32 0.0, %v1065
        %v1067 = vpop.f32.mrb[0].mxu0
        %v1068 = vadd.f32 0.0, %v1067
        %1069 = vmatprep.mubr.f32.mxu0 0.0
        %1070 = vmatmul.mubr.f32.gmra.mrb[0].mxu0 %v373
        %v1071 = vpop.f32.mrb[0].mxu0
        %v1072 = vadd.f32 0.0, %v1071
        %v1073 = vpop.f32.mrb[0].mxu0
        %v1074 = vadd.f32 0.0, %v1073
        %1075 = vmatprep.mubr.f32.mxu0 0.0
        %1076 = vmatmul.mubr.f32.gmra.mrb[0].mxu0 %v376
        %v1077 = vpop.f32.mrb[0].mxu0
        %v1078 = vadd.f32 0.0, %v1077
        %v1079 = vpop.f32.mrb[0].mxu0
        %v1080 = vadd.f32 0.0, %v1079
        %1081 = vmatprep.mubr.f32.mxu0 0.0
        %1082 = vmatmul.mubr.f32.gmra.mrb[0].mxu0 %v379
        %v1083 = vpop.f32.mrb[0].mxu0
        %v1084 = vadd.f32 0.0, %v1083
        %v1085 = vpop.f32.mrb[0].mxu0
        %v1086 = vadd.f32 0.0, %v1085
        %1087 = vmatprep.mubr.f32.mxu0 0.0
        %1088 = vmatmul.mubr.f32.gmra.mrb[0].mxu0 %v382
        %v1089 = vpop.f32.mrb[0].mxu0
        %v1090 = vadd.f32 0.0, %v1089
        %v1091 = vpop.f32.mrb[0].mxu0
        %v1092 = vadd.f32 0.0, %v1091
        %1093 = vmatprep.mubr.f32.mxu0 0.0
        %1094 = vmatmul.mubr.f32.gmra.mrb[0].mxu0 %v385
        %v1095 = vpop.f32.mrb[0].mxu0
        %v1096 = vadd.f32 0.0, %v1095
        %v1097 = vpop.f32.mrb[0].mxu0
        %v1098 = vadd.f32 0.0, %v1097
        %1099 = vmatprep.mubr.f32.mxu0 0.0
        %1100 = vmatmul.mubr.f32.gmra.mrb[0].mxu0 %v388
        %v1101 = vpop.f32.mrb[0].mxu0
        %v1102 = vadd.f32 0.0, %v1101
        %v1103 = vpop.f32.mrb[0].mxu0
        %v1104 = vadd.f32 0.0, %v1103
        %1105 = vmatprep.mubr.f32.mxu0 0.0
        %1106 = vmatmul.mubr.f32.gmra.mrb[0].mxu0 %v391
        %v1107 = vpop.f32.mrb[0].mxu0
        %v1108 = vadd.f32 0.0, %v1107
        %v1109 = vpop.f32.mrb[0].mxu0
        %v1110 = vadd.f32 0.0, %v1109
        %1111 = vmatprep.mubr.f32.mxu0 0.0
        %1112 = vmatmul.mubr.f32.gmra.mrb[0].mxu0 %v394
        %v1113 = vpop.f32.mrb[0].mxu0
        %v1114 = vadd.f32 0.0, %v1113
        %v1115 = vpop.f32.mrb[0].mxu0
        %v1116 = vadd.f32 0.0, %v1115
        %1117 = vmatprep.mubr.f32.mxu0 0.0
        %1118 = vmatmul.mubr.f32.gmra.mrb[0].mxu0 %v397
        %v1119 = vpop.f32.mrb[0].mxu0
        %v1120 = vadd.f32 0.0, %v1119
        %v1121 = vpop.f32.mrb[0].mxu0
        %v1122 = vadd.f32 0.0, %v1121
        %1123 = vmatprep.mubr.f32.mxu0 0.0
        %1124 = vmatmul.mubr.f32.gmra.mrb[0].mxu0 %v400
        %v1125 = vpop.f32.mrb[0].mxu0
        %v1126 = vadd.f32 0.0, %v1125
        %v1127 = vpop.f32.mrb[0].mxu0
        %v1128 = vadd.f32 0.0, %v1127
        %1129 = vdwg.mxu0
        %v1130 = vtanh.pop %v940
        %v1131 = vtanh.pop %v942
        %v1132 = vtanh.pop %v946
        %v1133 = vtanh.pop %v948
        %v1134 = vtanh.pop %v952
        %v1135 = vtanh.pop %v954
        %v1136 = vtanh.pop %v958
        %v1137 = vtanh.pop %v960
        %v1138 = vtanh.pop %v964
        %v1139 = vtanh.pop %v966
        %v1140 = vtanh.pop %v970
        %v1141 = vtanh.pop %v972
        %v1142 = vtanh.pop %v976
        %v1143 = vtanh.pop %v978
        %v1144 = vtanh.pop %v982
        %v1145 = vtanh.pop %v984
        %v1146 = vtanh.pop %v988
        %v1147 = vtanh.pop %v990
        %v1148 = vtanh.pop %v994
        %v1149 = vtanh.pop %v996
        %v1150 = vtanh.pop %v1000
        %v1151 = vtanh.pop %v1002
        %v1152 = vtanh.pop %v1006
        %v1153 = vtanh.pop %v1008
        %v1154 = vtanh.pop %v1012
        %v1155 = vtanh.pop %v1014
        %v1156 = vtanh.pop %v1018
        %v1157 = vtanh.pop %v1020
        %v1158 = vtanh.pop %v1024
        %v1159 = vtanh.pop %v1026
        %v1160 = vtanh.pop %v1030
        %v1161 = vtanh.pop %v1032
        %v1162 = vtanh.pop %v1036
        %v1163 = vtanh.pop %v1038
        %v1164 = vtanh.pop %v1042
        %v1165 = vtanh.pop %v1044
        %v1166 = vtanh.pop %v1048
        %v1167 = vtanh.pop %v1050
        %v1168 = vtanh.pop %v1054
        %v1169 = vtanh.pop %v1056
        %v1170 = vtanh.pop %v1060
        %v1171 = vtanh.pop %v1062
        %v1172 = vtanh.pop %v1066
        %v1173 = vtanh.pop %v1068
        %v1174 = vtanh.pop %v1072
        %v1175 = vtanh.pop %v1074
        %v1176 = vtanh.pop %v1078
        %v1177 = vtanh.pop %v1080
        %v1178 = vtanh.pop %v1084
        %v1179 = vtanh.pop %v1086
        %v1180 = vtanh.pop %v1090
        %v1181 = vtanh.pop %v1092
        %v1182 = vtanh.pop %v1096
        %v1183 = vtanh.pop %v1098
        %v1184 = vtanh.pop %v1102
        %v1185 = vtanh.pop %v1104
        %v1186 = vtanh.pop %v1108
        %v1187 = vtanh.pop %v1110
        %v1188 = vtanh.pop %v1114
        %v1189 = vtanh.pop %v1116
        %v1190 = vtanh.pop %v1120
        %v1191 = vtanh.pop %v1122
        %v1192 = vtanh.pop %v1126
        %v1193 = vtanh.pop %v1128
        %s1194 = scalar_lea.vmem %s178, 512 [#allocation5]
        %1195 = vst [vmem:[%s1194] sm:$0xff] %v1130
        %1196 = vst [vmem:[%s1194 + $0x8] sm:$0xff] %v1131
        %1197 = vst [vmem:[%s1194 + $0x10] sm:$0xff] %v1132
        %1198 = vst [vmem:[%s1194 + $0x18] sm:$0xff] %v1133
        %1199 = vst [vmem:[%s1194 + $0x20] sm:$0xff] %v1134
        %1200 = vst [vmem:[%s1194 + $0x28] sm:$0xff] %v1135
        %1201 = vst [vmem:[%s1194 + $0x30] sm:$0xff] %v1136
        %1202 = vst [vmem:[%s1194 + $0x38] sm:$0xff] %v1137
        %1203 = vst [vmem:[%s1194 + $0x40] sm:$0xff] %v1138
        %1204 = vst [vmem:[%s1194 + $0x48] sm:$0xff] %v1139
        %1205 = vst [vmem:[%s1194 + $0x50] sm:$0xff] %v1140
        %1206 = vst [vmem:[%s1194 + $0x58] sm:$0xff] %v1141
        %1207 = vst [vmem:[%s1194 + $0x60] sm:$0xff] %v1142
        %1208 = vst [vmem:[%s1194 + $0x68] sm:$0xff] %v1143
        %1209 = vst [vmem:[%s1194 + $0x70] sm:$0xff] %v1144
        %1210 = vst [vmem:[%s1194 + $0x78] sm:$0xff] %v1145
        %1211 = vst [vmem:[%s1194 + $0x80] sm:$0xff] %v1146
        %1212 = vst [vmem:[%s1194 + $0x88] sm:$0xff] %v1147
        %1213 = vst [vmem:[%s1194 + $0x90] sm:$0xff] %v1148
        %1214 = vst [vmem:[%s1194 + $0x98] sm:$0xff] %v1149
        %1215 = vst [vmem:[%s1194 + $0xa0] sm:$0xff] %v1150
        %1216 = vst [vmem:[%s1194 + $0xa8] sm:$0xff] %v1151
        %1217 = vst [vmem:[%s1194 + $0xb0] sm:$0xff] %v1152
        %1218 = vst [vmem:[%s1194 + $0xb8] sm:$0xff] %v1153
        %1219 = vst [vmem:[%s1194 + $0xc0] sm:$0xff] %v1154
        %1220 = vst [vmem:[%s1194 + $0xc8] sm:$0xff] %v1155
        %1221 = vst [vmem:[%s1194 + $0xd0] sm:$0xff] %v1156
        %1222 = vst [vmem:[%s1194 + $0xd8] sm:$0xff] %v1157
        %1223 = vst [vmem:[%s1194 + $0xe0] sm:$0xff] %v1158
        %1224 = vst [vmem:[%s1194 + $0xe8] sm:$0xff] %v1159
        %1225 = vst [vmem:[%s1194 + $0xf0] sm:$0xff] %v1160
        %1226 = vst [vmem:[%s1194 + $0xf8] sm:$0xff] %v1161
        %1227 = vst [vmem:[%s1194 + $0x100] sm:$0xff] %v1162
        %1228 = vst [vmem:[%s1194 + $0x108] sm:$0xff] %v1163
        %1229 = vst [vmem:[%s1194 + $0x110] sm:$0xff] %v1164
        %1230 = vst [vmem:[%s1194 + $0x118] sm:$0xff] %v1165
        %1231 = vst [vmem:[%s1194 + $0x120] sm:$0xff] %v1166
        %1232 = vst [vmem:[%s1194 + $0x128] sm:$0xff] %v1167
        %1233 = vst [vmem:[%s1194 + $0x130] sm:$0xff] %v1168
        %1234 = vst [vmem:[%s1194 + $0x138] sm:$0xff] %v1169
        %1235 = vst [vmem:[%s1194 + $0x140] sm:$0xff] %v1170
        %1236 = vst [vmem:[%s1194 + $0x148] sm:$0xff] %v1171
        %1237 = vst [vmem:[%s1194 + $0x150] sm:$0xff] %v1172
        %1238 = vst [vmem:[%s1194 + $0x158] sm:$0xff] %v1173
        %1239 = vst [vmem:[%s1194 + $0x160] sm:$0xff] %v1174
        %1240 = vst [vmem:[%s1194 + $0x168] sm:$0xff] %v1175
        %1241 = vst [vmem:[%s1194 + $0x170] sm:$0xff] %v1176
        %1242 = vst [vmem:[%s1194 + $0x178] sm:$0xff] %v1177
        %1243 = vst [vmem:[%s1194 + $0x180] sm:$0xff] %v1178
        %1244 = vst [vmem:[%s1194 + $0x188] sm:$0xff] %v1179
        %1245 = vst [vmem:[%s1194 + $0x190] sm:$0xff] %v1180
        %1246 = vst [vmem:[%s1194 + $0x198] sm:$0xff] %v1181
        %1247 = vst [vmem:[%s1194 + $0x1a0] sm:$0xff] %v1182
        %1248 = vst [vmem:[%s1194 + $0x1a8] sm:$0xff] %v1183
        %1249 = vst [vmem:[%s1194 + $0x1b0] sm:$0xff] %v1184
        %1250 = vst [vmem:[%s1194 + $0x1b8] sm:$0xff] %v1185
        %1251 = vst [vmem:[%s1194 + $0x1c0] sm:$0xff] %v1186
        %1252 = vst [vmem:[%s1194 + $0x1c8] sm:$0xff] %v1187
        %1253 = vst [vmem:[%s1194 + $0x1d0] sm:$0xff] %v1188
        %1254 = vst [vmem:[%s1194 + $0x1d8] sm:$0xff] %v1189
        %1255 = vst [vmem:[%s1194 + $0x1e0] sm:$0xff] %v1190
        %1256 = vst [vmem:[%s1194 + $0x1e8] sm:$0xff] %v1191
        %1257 = vst [vmem:[%s1194 + $0x1f0] sm:$0xff] %v1192
        %1258 = vst [vmem:[%s1194 + $0x1f8] sm:$0xff] %v1193
        %s1259 = scalar_lea.vmem %s183, 32
        %v1260 = vld [vmem:[%s1259] sm:$0xff]
        %v1261 = vld [vmem:[%s1259 + $0x8] sm:$0xff]
        %v1263 = vsel %vm222, %v1260, 0
        %v1266 = vsel %vm222, %v1261, 0
        %1268 = vmatprep.subr.mxu0 %v217
        %1269 = vmatpush1.msra.mxu0 %v216
        %1270 = vmatprep.subr.mxu0 %v219
        %1271 = vmatpush1.msra.mxu0 %v218
        %1272 = vmatprep.subr.mxu0 0.0
        %1273 = vmatpush1.msra.mxu0 0.0
        %1274 = vmatprep.subr.mxu0 0.0
        %1275 = vmatpush1.msra.mxu0 0.0
        %1276 = vmatprep.subr.mxu0 0.0
        %1277 = vmatpush1.msra.mxu0 0.0
        %1278 = vmatprep.subr.mxu0 0.0
        %1279 = vmatpush1.msra.mxu0 0.0
        %1280 = vmatprep.subr.mxu0 0.0
        %1281 = vmatpush1.msra.mxu0 0.0
        %1282 = vmatprep.subr.mxu0 0.0
        %1283 = vmatpush1.msra.mxu0 0.0
        %1284 = vmatprep.subr.mxu0 0.0
        %1285 = vmatpush1.msra.mxu0 0.0
        %1286 = vmatprep.subr.mxu0 0.0
        %1287 = vmatpush1.msra.mxu0 0.0
        %1288 = vmatprep.subr.mxu0 0.0
        %1289 = vmatpush1.msra.mxu0 0.0
        %1290 = vmatprep.subr.mxu0 0.0
        %1291 = vmatpush1.msra.mxu0 0.0
        %1292 = vmatprep.subr.mxu0 0.0
        %1293 = vmatpush1.msra.mxu0 0.0
        %1294 = vmatprep.subr.mxu0 0.0
        %1295 = vmatpush1.msra.mxu0 0.0
        %1296 = vmatprep.subr.mxu0 0.0
        %1297 = vmatpush1.msra.mxu0 0.0
        %1298 = vmatprep.subr.mxu0 0.0
        %1299 = vmatpush1.msra.mxu0 0.0
        %1300 = vmatprep.subr.mxu0 0.0
        %1301 = vmatpush1.msra.mxu0 0.0
        %1302 = vmatprep.subr.mxu0 0.0
        %1303 = vmatpush1.msra.mxu0 0.0
        %1304 = vmatprep.subr.mxu0 0.0
        %1305 = vmatpush1.msra.mxu0 0.0
        %1306 = vmatprep.subr.mxu0 0.0
        %1307 = vmatpush1.msra.mxu0 0.0
        %1308 = vmatprep.subr.mxu0 0.0
        %1309 = vmatpush1.msra.mxu0 0.0
        %1310 = vmatprep.subr.mxu0 0.0
        %1311 = vmatpush1.msra.mxu0 0.0
        %1312 = vmatprep.subr.mxu0 0.0
        %1313 = vmatpush1.msra.mxu0 0.0
        %1314 = vmatprep.subr.mxu0 0.0
        %1315 = vmatpush1.msra.mxu0 0.0
        %1316 = vmatprep.subr.mxu0 0.0
        %1317 = vmatpush1.msra.mxu0 0.0
        %1318 = vmatprep.subr.mxu0 0.0
        %1319 = vmatpush1.msra.mxu0 0.0
        %1320 = vmatprep.subr.mxu0 0.0
        %1321 = vmatpush1.msra.mxu0 0.0
        %1322 = vmatprep.subr.mxu0 0.0
        %1323 = vmatpush1.msra.mxu0 0.0
        %1324 = vmatprep.subr.mxu0 0.0
        %1325 = vmatpush1.msra.mxu0 0.0
        %1326 = vmatprep.subr.mxu0 0.0
        %1327 = vmatpush1.msra.mxu0 0.0
        %1328 = vmatprep.subr.mxu0 0.0
        %1329 = vmatpush1.msra.mxu0 0.0
        %1330 = vmatprep.subr.mxu0 0.0
        %1331 = vmatpush1.msra.mxu0 0.0
        %1332 = vmatprep.mubr.f32.mxu0 0.0
        %1333 = vmatmul.mubr.f32.gmra.mrb[0].mxu0 %v1263
        %v1334 = vpop.f32.mrb[0].mxu0
        %v1335 = vadd.f32 0.0, %v1334
        %v1336 = vpop.f32.mrb[0].mxu0
        %v1337 = vadd.f32 0.0, %v1336
        %1338 = vmatprep.mubr.f32.mxu0 0.0
        %1339 = vmatmul.mubr.f32.gmra.mrb[0].mxu0 %v1266
        %v1340 = vpop.f32.mrb[0].mxu0
        %v1341 = vadd.f32 0.0, %v1340
        %v1342 = vpop.f32.mrb[0].mxu0
        %v1343 = vadd.f32 0.0, %v1342
        %1344 = vdwg.mxu0
        %1345 = vmatprep.subr.mxu0 %v1337
        %1346 = vmatpush1.msra.mxu0 %v1335
        %1347 = vmatprep.subr.mxu0 %v1343
        %1348 = vmatpush1.msra.mxu0 %v1341
        %1349 = vmatprep.subr.mxu0 0.0
        %1350 = vmatpush1.msra.mxu0 0.0
        %1351 = vmatprep.subr.mxu0 0.0
        %1352 = vmatpush1.msra.mxu0 0.0
        %1353 = vmatprep.subr.mxu0 0.0
        %1354 = vmatpush1.msra.mxu0 0.0
        %1355 = vmatprep.subr.mxu0 0.0
        %1356 = vmatpush1.msra.mxu0 0.0
        %1357 = vmatprep.subr.mxu0 0.0
        %1358 = vmatpush1.msra.mxu0 0.0
        %1359 = vmatprep.subr.mxu0 0.0
        %1360 = vmatpush1.msra.mxu0 0.0
        %1361 = vmatprep.subr.mxu0 0.0
        %1362 = vmatpush1.msra.mxu0 0.0
        %1363 = vmatprep.subr.mxu0 0.0
        %1364 = vmatpush1.msra.mxu0 0.0
        %1365 = vmatprep.subr.mxu0 0.0
        %1366 = vmatpush1.msra.mxu0 0.0
        %1367 = vmatprep.subr.mxu0 0.0
        %1368 = vmatpush1.msra.mxu0 0.0
        %1369 = vmatprep.subr.mxu0 0.0
        %1370 = vmatpush1.msra.mxu0 0.0
        %1371 = vmatprep.subr.mxu0 0.0
        %1372 = vmatpush1.msra.mxu0 0.0
        %1373 = vmatprep.subr.mxu0 0.0
        %1374 = vmatpush1.msra.mxu0 0.0
        %1375 = vmatprep.subr.mxu0 0.0
        %1376 = vmatpush1.msra.mxu0 0.0
        %1377 = vmatprep.subr.mxu0 0.0
        %1378 = vmatpush1.msra.mxu0 0.0
        %1379 = vmatprep.subr.mxu0 0.0
        %1380 = vmatpush1.msra.mxu0 0.0
        %1381 = vmatprep.subr.mxu0 0.0
        %1382 = vmatpush1.msra.mxu0 0.0
        %1383 = vmatprep.subr.mxu0 0.0
        %1384 = vmatpush1.msra.mxu0 0.0
        %1385 = vmatprep.subr.mxu0 0.0
        %1386 = vmatpush1.msra.mxu0 0.0
        %1387 = vmatprep.subr.mxu0 0.0
        %1388 = vmatpush1.msra.mxu0 0.0
        %1389 = vmatprep.subr.mxu0 0.0
        %1390 = vmatpush1.msra.mxu0 0.0
        %1391 = vmatprep.subr.mxu0 0.0
        %1392 = vmatpush1.msra.mxu0 0.0
        %1393 = vmatprep.subr.mxu0 0.0
        %1394 = vmatpush1.msra.mxu0 0.0
        %1395 = vmatprep.subr.mxu0 0.0
        %1396 = vmatpush1.msra.mxu0 0.0
        %1397 = vmatprep.subr.mxu0 0.0
        %1398 = vmatpush1.msra.mxu0 0.0
        %1399 = vmatprep.subr.mxu0 0.0
        %1400 = vmatpush1.msra.mxu0 0.0
        %1401 = vmatprep.subr.mxu0 0.0
        %1402 = vmatpush1.msra.mxu0 0.0
        %1403 = vmatprep.subr.mxu0 0.0
        %1404 = vmatpush1.msra.mxu0 0.0
        %1405 = vmatprep.subr.mxu0 0.0
        %1406 = vmatpush1.msra.mxu0 0.0
        %1407 = vmatprep.subr.mxu0 0.0
        %1408 = vmatpush1.msra.mxu0 0.0
        %1409 = vmatprep.mubr.f32.mxu0 0.0
        %1410 = vmatmul.mubr.f32.gmra.mrb[0].mxu0 %v307
        %v1411 = vpop.f32.mrb[0].mxu0
        %v1412 = vadd.f32 0.0, %v1411
        %v1413 = vpop.f32.mrb[0].mxu0
        %v1414 = vadd.f32 0.0, %v1413
        %1415 = vmatprep.mubr.f32.mxu0 0.0
        %1416 = vmatmul.mubr.f32.gmra.mrb[0].mxu0 %v310
        %v1417 = vpop.f32.mrb[0].mxu0
        %v1418 = vadd.f32 0.0, %v1417
        %v1419 = vpop.f32.mrb[0].mxu0
        %v1420 = vadd.f32 0.0, %v1419
        %1421 = vmatprep.mubr.f32.mxu0 0.0
        %1422 = vmatmul.mubr.f32.gmra.mrb[0].mxu0 %v313
        %v1423 = vpop.f32.mrb[0].mxu0
        %v1424 = vadd.f32 0.0, %v1423
        %v1425 = vpop.f32.mrb[0].mxu0
        %v1426 = vadd.f32 0.0, %v1425
        %1427 = vmatprep.mubr.f32.mxu0 0.0
        %1428 = vmatmul.mubr.f32.gmra.mrb[0].mxu0 %v316
        %v1429 = vpop.f32.mrb[0].mxu0
        %v1430 = vadd.f32 0.0, %v1429
        %v1431 = vpop.f32.mrb[0].mxu0
        %v1432 = vadd.f32 0.0, %v1431
        %1433 = vmatprep.mubr.f32.mxu0 0.0
        %1434 = vmatmul.mubr.f32.gmra.mrb[0].mxu0 %v319
        %v1435 = vpop.f32.mrb[0].mxu0
        %v1436 = vadd.f32 0.0, %v1435
        %v1437 = vpop.f32.mrb[0].mxu0
        %v1438 = vadd.f32 0.0, %v1437
        %1439 = vmatprep.mubr.f32.mxu0 0.0
        %1440 = vmatmul.mubr.f32.gmra.mrb[0].mxu0 %v322
        %v1441 = vpop.f32.mrb[0].mxu0
        %v1442 = vadd.f32 0.0, %v1441
        %v1443 = vpop.f32.mrb[0].mxu0
        %v1444 = vadd.f32 0.0, %v1443
        %1445 = vmatprep.mubr.f32.mxu0 0.0
        %1446 = vmatmul.mubr.f32.gmra.mrb[0].mxu0 %v325
        %v1447 = vpop.f32.mrb[0].mxu0
        %v1448 = vadd.f32 0.0, %v1447
        %v1449 = vpop.f32.mrb[0].mxu0
        %v1450 = vadd.f32 0.0, %v1449
        %1451 = vmatprep.mubr.f32.mxu0 0.0
        %1452 = vmatmul.mubr.f32.gmra.mrb[0].mxu0 %v328
        %v1453 = vpop.f32.mrb[0].mxu0
        %v1454 = vadd.f32 0.0, %v1453
        %v1455 = vpop.f32.mrb[0].mxu0
        %v1456 = vadd.f32 0.0, %v1455
        %1457 = vmatprep.mubr.f32.mxu0 0.0
        %1458 = vmatmul.mubr.f32.gmra.mrb[0].mxu0 %v331
        %v1459 = vpop.f32.mrb[0].mxu0
        %v1460 = vadd.f32 0.0, %v1459
        %v1461 = vpop.f32.mrb[0].mxu0
        %v1462 = vadd.f32 0.0, %v1461
        %1463 = vmatprep.mubr.f32.mxu0 0.0
        %1464 = vmatmul.mubr.f32.gmra.mrb[0].mxu0 %v334
        %v1465 = vpop.f32.mrb[0].mxu0
        %v1466 = vadd.f32 0.0, %v1465
        %v1467 = vpop.f32.mrb[0].mxu0
        %v1468 = vadd.f32 0.0, %v1467
        %1469 = vmatprep.mubr.f32.mxu0 0.0
        %1470 = vmatmul.mubr.f32.gmra.mrb[0].mxu0 %v337
        %v1471 = vpop.f32.mrb[0].mxu0
        %v1472 = vadd.f32 0.0, %v1471
        %v1473 = vpop.f32.mrb[0].mxu0
        %v1474 = vadd.f32 0.0, %v1473
        %1475 = vmatprep.mubr.f32.mxu0 0.0
        %1476 = vmatmul.mubr.f32.gmra.mrb[0].mxu0 %v340
        %v1477 = vpop.f32.mrb[0].mxu0
        %v1478 = vadd.f32 0.0, %v1477
        %v1479 = vpop.f32.mrb[0].mxu0
        %v1480 = vadd.f32 0.0, %v1479
        %1481 = vmatprep.mubr.f32.mxu0 0.0
        %1482 = vmatmul.mubr.f32.gmra.mrb[0].mxu0 %v343
        %v1483 = vpop.f32.mrb[0].mxu0
        %v1484 = vadd.f32 0.0, %v1483
        %v1485 = vpop.f32.mrb[0].mxu0
        %v1486 = vadd.f32 0.0, %v1485
        %1487 = vmatprep.mubr.f32.mxu0 0.0
        %1488 = vmatmul.mubr.f32.gmra.mrb[0].mxu0 %v346
        %v1489 = vpop.f32.mrb[0].mxu0
        %v1490 = vadd.f32 0.0, %v1489
        %v1491 = vpop.f32.mrb[0].mxu0
        %v1492 = vadd.f32 0.0, %v1491
        %1493 = vmatprep.mubr.f32.mxu0 0.0
        %1494 = vmatmul.mubr.f32.gmra.mrb[0].mxu0 %v349
        %v1495 = vpop.f32.mrb[0].mxu0
        %v1496 = vadd.f32 0.0, %v1495
        %v1497 = vpop.f32.mrb[0].mxu0
        %v1498 = vadd.f32 0.0, %v1497
        %1499 = vmatprep.mubr.f32.mxu0 0.0
        %1500 = vmatmul.mubr.f32.gmra.mrb[0].mxu0 %v352
        %v1501 = vpop.f32.mrb[0].mxu0
        %v1502 = vadd.f32 0.0, %v1501
        %v1503 = vpop.f32.mrb[0].mxu0
        %v1504 = vadd.f32 0.0, %v1503
        %1505 = vmatprep.mubr.f32.mxu0 0.0
        %1506 = vmatmul.mubr.f32.gmra.mrb[0].mxu0 %v355
        %v1507 = vpop.f32.mrb[0].mxu0
        %v1508 = vadd.f32 0.0, %v1507
        %v1509 = vpop.f32.mrb[0].mxu0
        %v1510 = vadd.f32 0.0, %v1509
        %1511 = vmatprep.mubr.f32.mxu0 0.0
        %1512 = vmatmul.mubr.f32.gmra.mrb[0].mxu0 %v358
        %v1513 = vpop.f32.mrb[0].mxu0
        %v1514 = vadd.f32 0.0, %v1513
        %v1515 = vpop.f32.mrb[0].mxu0
        %v1516 = vadd.f32 0.0, %v1515
        %1517 = vmatprep.mubr.f32.mxu0 0.0
        %1518 = vmatmul.mubr.f32.gmra.mrb[0].mxu0 %v361
        %v1519 = vpop.f32.mrb[0].mxu0
        %v1520 = vadd.f32 0.0, %v1519
        %v1521 = vpop.f32.mrb[0].mxu0
        %v1522 = vadd.f32 0.0, %v1521
        %1523 = vmatprep.mubr.f32.mxu0 0.0
        %1524 = vmatmul.mubr.f32.gmra.mrb[0].mxu0 %v364
        %v1525 = vpop.f32.mrb[0].mxu0
        %v1526 = vadd.f32 0.0, %v1525
        %v1527 = vpop.f32.mrb[0].mxu0
        %v1528 = vadd.f32 0.0, %v1527
        %1529 = vmatprep.mubr.f32.mxu0 0.0
        %1530 = vmatmul.mubr.f32.gmra.mrb[0].mxu0 %v367
        %v1531 = vpop.f32.mrb[0].mxu0
        %v1532 = vadd.f32 0.0, %v1531
        %v1533 = vpop.f32.mrb[0].mxu0
        %v1534 = vadd.f32 0.0, %v1533
        %1535 = vmatprep.mubr.f32.mxu0 0.0
        %1536 = vmatmul.mubr.f32.gmra.mrb[0].mxu0 %v370
        %v1537 = vpop.f32.mrb[0].mxu0
        %v1538 = vadd.f32 0.0, %v1537
        %v1539 = vpop.f32.mrb[0].mxu0
        %v1540 = vadd.f32 0.0, %v1539
        %1541 = vmatprep.mubr.f32.mxu0 0.0
        %1542 = vmatmul.mubr.f32.gmra.mrb[0].mxu0 %v373
        %v1543 = vpop.f32.mrb[0].mxu0
        %v1544 = vadd.f32 0.0, %v1543
        %v1545 = vpop.f32.mrb[0].mxu0
        %v1546 = vadd.f32 0.0, %v1545
        %1547 = vmatprep.mubr.f32.mxu0 0.0
        %1548 = vmatmul.mubr.f32.gmra.mrb[0].mxu0 %v376
        %v1549 = vpop.f32.mrb[0].mxu0
        %v1550 = vadd.f32 0.0, %v1549
        %v1551 = vpop.f32.mrb[0].mxu0
        %v1552 = vadd.f32 0.0, %v1551
        %1553 = vmatprep.mubr.f32.mxu0 0.0
        %1554 = vmatmul.mubr.f32.gmra.mrb[0].mxu0 %v379
        %v1555 = vpop.f32.mrb[0].mxu0
        %v1556 = vadd.f32 0.0, %v1555
        %v1557 = vpop.f32.mrb[0].mxu0
        %v1558 = vadd.f32 0.0, %v1557
        %1559 = vmatprep.mubr.f32.mxu0 0.0
        %1560 = vmatmul.mubr.f32.gmra.mrb[0].mxu0 %v382
        %v1561 = vpop.f32.mrb[0].mxu0
        %v1562 = vadd.f32 0.0, %v1561
        %v1563 = vpop.f32.mrb[0].mxu0
        %v1564 = vadd.f32 0.0, %v1563
        %1565 = vmatprep.mubr.f32.mxu0 0.0
        %1566 = vmatmul.mubr.f32.gmra.mrb[0].mxu0 %v385
        %v1567 = vpop.f32.mrb[0].mxu0
        %v1568 = vadd.f32 0.0, %v1567
        %v1569 = vpop.f32.mrb[0].mxu0
        %v1570 = vadd.f32 0.0, %v1569
        %1571 = vmatprep.mubr.f32.mxu0 0.0
        %1572 = vmatmul.mubr.f32.gmra.mrb[0].mxu0 %v388
        %v1573 = vpop.f32.mrb[0].mxu0
        %v1574 = vadd.f32 0.0, %v1573
        %v1575 = vpop.f32.mrb[0].mxu0
        %v1576 = vadd.f32 0.0, %v1575
        %1577 = vmatprep.mubr.f32.mxu0 0.0
        %1578 = vmatmul.mubr.f32.gmra.mrb[0].mxu0 %v391
        %v1579 = vpop.f32.mrb[0].mxu0
        %v1580 = vadd.f32 0.0, %v1579
        %v1581 = vpop.f32.mrb[0].mxu0
        %v1582 = vadd.f32 0.0, %v1581
        %1583 = vmatprep.mubr.f32.mxu0 0.0
        %1584 = vmatmul.mubr.f32.gmra.mrb[0].mxu0 %v394
        %v1585 = vpop.f32.mrb[0].mxu0
        %v1586 = vadd.f32 0.0, %v1585
        %v1587 = vpop.f32.mrb[0].mxu0
        %v1588 = vadd.f32 0.0, %v1587
        %1589 = vmatprep.mubr.f32.mxu0 0.0
        %1590 = vmatmul.mubr.f32.gmra.mrb[0].mxu0 %v397
        %v1591 = vpop.f32.mrb[0].mxu0
        %v1592 = vadd.f32 0.0, %v1591
        %v1593 = vpop.f32.mrb[0].mxu0
        %v1594 = vadd.f32 0.0, %v1593
        %1595 = vmatprep.mubr.f32.mxu0 0.0
        %1596 = vmatmul.mubr.f32.gmra.mrb[0].mxu0 %v400
        %v1597 = vpop.f32.mrb[0].mxu0
        %v1598 = vadd.f32 0.0, %v1597
        %v1599 = vpop.f32.mrb[0].mxu0
        %v1600 = vadd.f32 0.0, %v1599
        %1601 = vdwg.mxu0
        %v1602 = vtanh.pop %v1412
        %v1603 = vtanh.pop %v1414
        %v1604 = vtanh.pop %v1418
        %v1605 = vtanh.pop %v1420
        %v1606 = vtanh.pop %v1424
        %v1607 = vtanh.pop %v1426
        %v1608 = vtanh.pop %v1430
        %v1609 = vtanh.pop %v1432
        %v1610 = vtanh.pop %v1436
        %v1611 = vtanh.pop %v1438
        %v1612 = vtanh.pop %v1442
        %v1613 = vtanh.pop %v1444
        %v1614 = vtanh.pop %v1448
        %v1615 = vtanh.pop %v1450
        %v1616 = vtanh.pop %v1454
        %v1617 = vtanh.pop %v1456
        %v1618 = vtanh.pop %v1460
        %v1619 = vtanh.pop %v1462
        %v1620 = vtanh.pop %v1466
        %v1621 = vtanh.pop %v1468
        %v1622 = vtanh.pop %v1472
        %v1623 = vtanh.pop %v1474
        %v1624 = vtanh.pop %v1478
        %v1625 = vtanh.pop %v1480
        %v1626 = vtanh.pop %v1484
        %v1627 = vtanh.pop %v1486
        %v1628 = vtanh.pop %v1490
        %v1629 = vtanh.pop %v1492
        %v1630 = vtanh.pop %v1496
        %v1631 = vtanh.pop %v1498
        %v1632 = vtanh.pop %v1502
        %v1633 = vtanh.pop %v1504
        %v1634 = vtanh.pop %v1508
        %v1635 = vtanh.pop %v1510
        %v1636 = vtanh.pop %v1514
        %v1637 = vtanh.pop %v1516
        %v1638 = vtanh.pop %v1520
        %v1639 = vtanh.pop %v1522
        %v1640 = vtanh.pop %v1526
        %v1641 = vtanh.pop %v1528
        %v1642 = vtanh.pop %v1532
        %v1643 = vtanh.pop %v1534
        %v1644 = vtanh.pop %v1538
        %v1645 = vtanh.pop %v1540
        %v1646 = vtanh.pop %v1544
        %v1647 = vtanh.pop %v1546
        %v1648 = vtanh.pop %v1550
        %v1649 = vtanh.pop %v1552
        %v1650 = vtanh.pop %v1556
        %v1651 = vtanh.pop %v1558
        %v1652 = vtanh.pop %v1562
        %v1653 = vtanh.pop %v1564
        %v1654 = vtanh.pop %v1568
        %v1655 = vtanh.pop %v1570
        %v1656 = vtanh.pop %v1574
        %v1657 = vtanh.pop %v1576
        %v1658 = vtanh.pop %v1580
        %v1659 = vtanh.pop %v1582
        %v1660 = vtanh.pop %v1586
        %v1661 = vtanh.pop %v1588
        %v1662 = vtanh.pop %v1592
        %v1663 = vtanh.pop %v1594
        %v1664 = vtanh.pop %v1598
        %v1665 = vtanh.pop %v1600
        %s1666 = scalar_lea.vmem %s178, 1024 [#allocation5]
        %1667 = vst [vmem:[%s1666] sm:$0xff] %v1602
        %1668 = vst [vmem:[%s1666 + $0x8] sm:$0xff] %v1603
        %1669 = vst [vmem:[%s1666 + $0x10] sm:$0xff] %v1604
        %1670 = vst [vmem:[%s1666 + $0x18] sm:$0xff] %v1605
        %1671 = vst [vmem:[%s1666 + $0x20] sm:$0xff] %v1606
        %1672 = vst [vmem:[%s1666 + $0x28] sm:$0xff] %v1607
        %1673 = vst [vmem:[%s1666 + $0x30] sm:$0xff] %v1608
        %1674 = vst [vmem:[%s1666 + $0x38] sm:$0xff] %v1609
        %1675 = vst [vmem:[%s1666 + $0x40] sm:$0xff] %v1610
        %1676 = vst [vmem:[%s1666 + $0x48] sm:$0xff] %v1611
        %1677 = vst [vmem:[%s1666 + $0x50] sm:$0xff] %v1612
        %1678 = vst [vmem:[%s1666 + $0x58] sm:$0xff] %v1613
        %1679 = vst [vmem:[%s1666 + $0x60] sm:$0xff] %v1614
        %1680 = vst [vmem:[%s1666 + $0x68] sm:$0xff] %v1615
        %1681 = vst [vmem:[%s1666 + $0x70] sm:$0xff] %v1616
        %1682 = vst [vmem:[%s1666 + $0x78] sm:$0xff] %v1617
        %1683 = vst [vmem:[%s1666 + $0x80] sm:$0xff] %v1618
        %1684 = vst [vmem:[%s1666 + $0x88] sm:$0xff] %v1619
        %1685 = vst [vmem:[%s1666 + $0x90] sm:$0xff] %v1620
        %1686 = vst [vmem:[%s1666 + $0x98] sm:$0xff] %v1621
        %1687 = vst [vmem:[%s1666 + $0xa0] sm:$0xff] %v1622
        %1688 = vst [vmem:[%s1666 + $0xa8] sm:$0xff] %v1623
        %1689 = vst [vmem:[%s1666 + $0xb0] sm:$0xff] %v1624
        %1690 = vst [vmem:[%s1666 + $0xb8] sm:$0xff] %v1625
        %1691 = vst [vmem:[%s1666 + $0xc0] sm:$0xff] %v1626
        %1692 = vst [vmem:[%s1666 + $0xc8] sm:$0xff] %v1627
        %1693 = vst [vmem:[%s1666 + $0xd0] sm:$0xff] %v1628
        %1694 = vst [vmem:[%s1666 + $0xd8] sm:$0xff] %v1629
        %1695 = vst [vmem:[%s1666 + $0xe0] sm:$0xff] %v1630
        %1696 = vst [vmem:[%s1666 + $0xe8] sm:$0xff] %v1631
        %1697 = vst [vmem:[%s1666 + $0xf0] sm:$0xff] %v1632
        %1698 = vst [vmem:[%s1666 + $0xf8] sm:$0xff] %v1633
        %1699 = vst [vmem:[%s1666 + $0x100] sm:$0xff] %v1634
        %1700 = vst [vmem:[%s1666 + $0x108] sm:$0xff] %v1635
        %1701 = vst [vmem:[%s1666 + $0x110] sm:$0xff] %v1636
        %1702 = vst [vmem:[%s1666 + $0x118] sm:$0xff] %v1637
        %1703 = vst [vmem:[%s1666 + $0x120] sm:$0xff] %v1638
        %1704 = vst [vmem:[%s1666 + $0x128] sm:$0xff] %v1639
        %1705 = vst [vmem:[%s1666 + $0x130] sm:$0xff] %v1640
        %1706 = vst [vmem:[%s1666 + $0x138] sm:$0xff] %v1641
        %1707 = vst [vmem:[%s1666 + $0x140] sm:$0xff] %v1642
        %1708 = vst [vmem:[%s1666 + $0x148] sm:$0xff] %v1643
        %1709 = vst [vmem:[%s1666 + $0x150] sm:$0xff] %v1644
        %1710 = vst [vmem:[%s1666 + $0x158] sm:$0xff] %v1645
        %1711 = vst [vmem:[%s1666 + $0x160] sm:$0xff] %v1646
        %1712 = vst [vmem:[%s1666 + $0x168] sm:$0xff] %v1647
        %1713 = vst [vmem:[%s1666 + $0x170] sm:$0xff] %v1648
        %1714 = vst [vmem:[%s1666 + $0x178] sm:$0xff] %v1649
        %1715 = vst [vmem:[%s1666 + $0x180] sm:$0xff] %v1650
        %1716 = vst [vmem:[%s1666 + $0x188] sm:$0xff] %v1651
        %1717 = vst [vmem:[%s1666 + $0x190] sm:$0xff] %v1652
        %1718 = vst [vmem:[%s1666 + $0x198] sm:$0xff] %v1653
        %1719 = vst [vmem:[%s1666 + $0x1a0] sm:$0xff] %v1654
        %1720 = vst [vmem:[%s1666 + $0x1a8] sm:$0xff] %v1655
        %1721 = vst [vmem:[%s1666 + $0x1b0] sm:$0xff] %v1656
        %1722 = vst [vmem:[%s1666 + $0x1b8] sm:$0xff] %v1657
        %1723 = vst [vmem:[%s1666 + $0x1c0] sm:$0xff] %v1658
        %1724 = vst [vmem:[%s1666 + $0x1c8] sm:$0xff] %v1659
        %1725 = vst [vmem:[%s1666 + $0x1d0] sm:$0xff] %v1660
        %1726 = vst [vmem:[%s1666 + $0x1d8] sm:$0xff] %v1661
        %1727 = vst [vmem:[%s1666 + $0x1e0] sm:$0xff] %v1662
        %1728 = vst [vmem:[%s1666 + $0x1e8] sm:$0xff] %v1663
        %1729 = vst [vmem:[%s1666 + $0x1f0] sm:$0xff] %v1664
        %1730 = vst [vmem:[%s1666 + $0x1f8] sm:$0xff] %v1665
        %s1731 = sand.u32 %s94, 1
        %s1732 = scalar_lea.sflag [#allocation4], %s1731
        %s1733 = sand.u32 %s94, 1
        %s1734 = smul.addr %s1733, 1536
        %s1735 = scalar_lea.vmem [#allocation5], %s1734
        // Predicated region
        $region37: #{unet_forward.17} parent=31 // pred_check
          %p1736 = pneg %p104
        $region38: #{unet_forward.17} parent=31 // pred_check_branch
          %1738 = sbr.rel (%p1736) target = $region40
        $region39: #{unet_forward.17} parent=31 // pred_region
          %s1740 = ssub.s32 24576, 24576
          %1741 = vsyncadd %s1732, %s1740
          %s1742 = smul.addr %s18, 192
          %s1743 = smul.addr %s1742, 128
          %s1744 = scalar_lea.hbm %s3, %s1743
          %s1745 = sshll.u32 %s1735, 4
          %s1746 = int_to_ptr.vmem [resolvable:$true] %s1745
          %1751 = dma.vmem_to_hbm [thread:$0]  %s1746, 24576, %s1744, %s1732, 256, 256, 16
        $region40: #{unet_forward.17} parent=31 // pred_fallthru
          _
      $region32: #{unet_forward.17} parent=5 // pred_fallthru
        _
      %p1752 = scmp.le.s32.totalorder 2, %s13
      // Predicated region
      $region41: #{unet_forward.17} parent=5 // pred_check
        %p1753 = pneg %p1752
      $region42: #{unet_forward.17} parent=5 // pred_check_branch
        %1755 = sbr.rel (%p1753) target = $region44
      $region43: #{unet_forward.17} parent=5 // pred_region
        %s1756 = ssub.s32 %s13, 2
        // Predicated region
        $region45: #{unet_forward.17} parent=43 // pred_check
          %p1757 = pneg %p110
        $region46: #{unet_forward.17} parent=43 // pred_check_branch
          %1759 = sbr.rel (%p1757) target = $region48
        $region47: #{unet_forward.17} parent=43 // pred_region
          %s1760 = sand.u32 %s95, 1
          %s1761 = scalar_lea.sflag [#allocation4], %s1760
          %s1762 = sand.u32 %s95, 1
          %s1763 = smul.addr %s1762, 1536
          %s1764 = scalar_lea.vmem [#allocation5], %s1763
          %1765 = dma.done %s1761, 24576
        $region48: #{unet_forward.17} parent=43 // pred_fallthru
          _
      $region44: #{unet_forward.17} parent=5 // pred_fallthru
        _
    $region6: #{unet_forward.17} parent=1 // loop_footer
      %s17 = sadd.s32 1, %s13
    $region7: #{unet_forward.17} parent=1 // loop_footer_branch
      %12 = sbr.rel target = $region3
    $region8: #{unet_forward.17} parent=1 // loop_exit
      _
    %1766 = vsyncpa [#allocation3], 1
    %s1767 = scalar_lea.sflag [#allocation3], 1
    %1768 = vsyncpa %s1767, 1
    %1769 = vsyncpa [#allocation4], 1
    %s1770 = scalar_lea.sflag [#allocation4], 1
    %1771 = vsyncpa %s1770, 1

</llo_original>
